<compile_context>
chip_gen: v6e
topology: v6e:2x2x1
jax: 0.10.0
libtpu: 0.0.40
codegen_flags: <defaults>
</compile_context>

<pallas_src>
import jax
import jax.numpy as jnp
from jax import lax
from jax.experimental import pallas as pl
from jax.experimental.pallas import tpu as pltpu

H, W = 64, 64                    # input spatial size implied by lf: 32*32*24 after one 2x2 pool
HP, WP = H // 2, W // 2          # 32, 32
C_IN, C1, C2 = 3, 12, 24
NUM_CLASSES = 5
KS = 3                           # conv kernel size
NPIX = H * W                     # 4096
NPOOL = HP * WP                  # 1024
PAD = WP + 1                     # 33: leading lane pad of the pooled scratch
SCR_LANES = 1152                 # 9*128 >= 33 + 1024 + 33


# ---------------------------------------------------------------------------
# Fused kernel: one batch element per grid step.
# ---------------------------------------------------------------------------
def fused_flower_kernel(p_ref, w1_ref, w2_ref, b2_ref, wf_ref, bf_ref, o_ref, h1_ref):
    # p_ref  : (1, 28, 4096)   conv1 im2col (27 taps + ones row), pool-ordered columns
    # w1_ref : (12, 28)        conv1 weight with bias folded in as last column
    # w2_ref : (9, 24, 12)     conv2 weight per tap [dy*3+dx, co, ci]
    # b2_ref : (24, 1)
    # wf_ref : (5, 24, 1024)   linear weight in native PyTorch (c, y, x) order
    # bf_ref : (5, 1)
    # o_ref  : (1, 5, 1)
    # h1_ref : (12, 1152)      VMEM scratch: flattened, lane-padded pooled conv1 output

    # ---- conv1 (+bias via ones row) + ReLU : one lane-dense MXU matmul ----
    y1 = jnp.dot(w1_ref[...], p_ref[0], preferred_element_type=jnp.float32)   # (12, 4096)
    y1 = jnp.maximum(y1, 0.0)

    # ---- 2x2 maxpool: columns are (sub, py, px)-ordered -> 3 aligned lane maxes ----
    pooled = jnp.maximum(
        jnp.maximum(y1[:, 0:NPOOL], y1[:, NPOOL:2 * NPOOL]),
        jnp.maximum(y1[:, 2 * NPOOL:3 * NPOOL], y1[:, 3 * NPOOL:4 * NPOOL]))   # (12, 1024)

    # ---- stage pooled map in the lane-padded scratch (border tiles only are zeroed) ----
    h1_ref[:, 0:128] = jnp.zeros((C1, 128), jnp.float32)
    h1_ref[:, NPOOL:SCR_LANES] = jnp.zeros((C1, SCR_LANES - NPOOL), jnp.float32)
    h1_ref[:, PAD:PAD + NPOOL] = pooled

    # x-border masks (y borders are handled by the zero lane padding)
    px = lax.broadcasted_iota(jnp.int32, (1, NPOOL), 1) & (WP - 1)
    not_left = px != 0
    not_right = px != WP - 1

    # ---- conv2 (3x3, pad=1) + ReLU: 9 tap matmuls on lane-shifted views ----
    y2 = jnp.zeros((C2, NPOOL), jnp.float32)
    for dy in range(KS):
        for dx in range(KS):
            start = dy * WP + dx                       # == PAD + (dy-1)*WP + (dx-1)
            tap = h1_ref[:, start:start + NPOOL]       # (12, 1024)
            if dx == 0:
                tap = jnp.where(not_left, tap, 0.0)
            elif dx == KS - 1:
                tap = jnp.where(not_right, tap, 0.0)
            y2 = y2 + jnp.dot(w2_ref[dy * KS + dx], tap,
                              preferred_element_type=jnp.float32)
    y2 = jnp.maximum(y2 + b2_ref[...], 0.0)            # (24, 1024)

    # ---- linear: contract over (channel, pixel) against the lane-dense lf weight ----
    prod = wf_ref[...] * y2[None, :, :]                # (5, 24, 1024)
    s = jnp.sum(prod, axis=2)                          # (5, 24)   lane reduce
    logits = jnp.sum(s, axis=1, keepdims=True)         # (5, 1)    lane reduce
    o_ref[0] = logits + bf_ref[...]


# ---------------------------------------------------------------------------
# Wrapper
# ---------------------------------------------------------------------------
def flower_forward(x_nchw, params):
    B = x_nchw.shape[0]
    x = x_nchw.astype(jnp.float32)
    xp = jnp.pad(x, ((0, 0), (0, 0), (1, 1), (1, 1)))               # (B, 3, 66, 66)

    # conv1 im2col: columns ordered (sub=(sy,sx), py, px), rows ordered ((dy,dx), c),
    # plus a ones row so the conv1 bias folds into the matmul.
    sub_blocks = []
    for sy in range(2):
        for sx in range(2):
            taps = []
            for dy in range(KS):
                for dx in range(KS):
                    t = xp[:, :, sy + dy::2, sx + dx::2][:, :, :HP, :WP]   # (B,3,32,32)
                    taps.append(t)
            tp = jnp.stack(taps, axis=1)                             # (B, 9, 3, 32, 32)
            sub_blocks.append(tp.reshape(B, KS * KS * C_IN, NPOOL))
    patches = jnp.concatenate(sub_blocks, axis=2)                    # (B, 27, 4096)
    patches = jnp.concatenate(
        [patches, jnp.ones((B, 1, NPIX), jnp.float32)], axis=1)      # (B, 28, 4096)

    # One-time (trace-time) weight repacking.
    w1a = jnp.concatenate(
        [jnp.transpose(params["conv1_w"], (0, 2, 3, 1)).reshape(C1, KS * KS * C_IN),
         params["conv1_b"].reshape(C1, 1)], axis=1)                  # (12, 28)
    w2p = jnp.transpose(params["conv2_w"], (2, 3, 0, 1)).reshape(KS * KS, C2, C1)  # (9,24,12)
    b2 = params["conv2_b"].reshape(C2, 1)
    wf = params["lf_w"].reshape(NUM_CLASSES, C2, NPOOL)              # native (c,y,x) order
    bf = params["lf_b"].reshape(NUM_CLASSES, 1)

    out = pl.pallas_call(
        fused_flower_kernel,
        out_shape=jax.ShapeDtypeStruct((B, NUM_CLASSES, 1), jnp.float32),
        grid=(B,),
        in_specs=[
            pl.BlockSpec((1, KS * KS * C_IN + 1, NPIX), lambda b: (b, 0, 0)),
            pl.BlockSpec((C1, KS * KS * C_IN + 1), lambda b: (0, 0)),
            pl.BlockSpec((KS * KS, C2, C1), lambda b: (0, 0, 0)),
            pl.BlockSpec((C2, 1), lambda b: (0, 0)),
            pl.BlockSpec((NUM_CLASSES, C2, NPOOL), lambda b: (0, 0, 0)),
            pl.BlockSpec((NUM_CLASSES, 1), lambda b: (0, 0)),
        ],
        out_specs=pl.BlockSpec((1, NUM_CLASSES, 1), lambda b: (b, 0, 0)),
        scratch_shapes=[pltpu.VMEM((C1, SCR_LANES), jnp.float32)],
        compiler_params=pltpu.CompilerParams(dimension_semantics=("parallel",)),
    )(patches, w1a, w2p, b2, wf, bf)
    return out.reshape(B, NUM_CLASSES)


# ---------------------------------------------------------------------------
# Pure-JAX reference (PyTorch semantics) for correctness
# ---------------------------------------------------------------------------
def reference_forward(x_nchw, params):
    dn = ("NCHW", "OIHW", "NCHW")
    y = lax.conv_general_dilated(x_nchw, params["conv1_w"], (1, 1), "SAME",
                                 dimension_numbers=dn)
    y = jnp.maximum(y + params["conv1_b"][None, :, None, None], 0.0)
    y = lax.reduce_window(y, -jnp.inf, lax.max, (1, 1, 2, 2), (1, 1, 2, 2), "VALID")
    y = lax.conv_general_dilated(y, params["conv2_w"], (1, 1), "SAME",
                                 dimension_numbers=dn)
    y = jnp.maximum(y + params["conv2_b"][None, :, None, None], 0.0)
    y = y.reshape(y.shape[0], -1)
    return y @ params["lf_w"].T + params["lf_b"]


if __name__ == "__main__":
    key = jax.random.PRNGKey(0)
    k = jax.random.split(key, 7)
    B = 2

    params = {
        "conv1_w": 0.1 * jax.random.normal(k[0], (C1, C_IN, KS, KS), jnp.float32),
        "conv1_b": 0.1 * jax.random.normal(k[1], (C1,), jnp.float32),
        "conv2_w": 0.1 * jax.random.normal(k[2], (C2, C1, KS, KS), jnp.float32),
        "conv2_b": 0.1 * jax.random.normal(k[3], (C2,), jnp.float32),
        "lf_w": 0.01 * jax.random.normal(k[4], (NUM_CLASSES, C2 * HP * WP), jnp.float32),
        "lf_b": 0.01 * jax.random.normal(k[5], (NUM_CLASSES,), jnp.float32),
    }
    x = jax.random.normal(k[6], (B, C_IN, H, W), jnp.float32)

    out = jax.block_until_ready(flower_forward(x, params))
    ref = jax.block_until_ready(reference_forward(x, params))

    assert out.shape == (B, NUM_CLASSES), out.shape
    assert jnp.allclose(out, ref, rtol=2e-3, atol=2e-3), (
        f"max abs err {jnp.max(jnp.abs(out - ref))}")
    print("KERNEL_OK")
</pallas_src>

<mosaic_0001>
module attributes {stable_mosaic.version = 11 : i64} {
  func.func @fused_flower_kernel(%arg0: i32, %arg1: memref<1x28x4096xf32, #tpu.memory_space<vmem>>, %arg2: memref<12x28xf32, #tpu.memory_space<vmem>>, %arg3: memref<9x24x12xf32, #tpu.memory_space<vmem>>, %arg4: memref<24x1xf32, #tpu.memory_space<vmem>>, %arg5: memref<5x24x1024xf32, #tpu.memory_space<vmem>>, %arg6: memref<5x1xf32, #tpu.memory_space<vmem>>, %arg7: memref<1x5x1xf32, #tpu.memory_space<vmem>>, %arg8: memref<12x1152xf32, #tpu.memory_space<vmem>>) attributes {dimension_semantics = [#tpu.dimension_semantics<parallel>], iteration_bounds = array<i64: 2>, scalar_prefetch = 0 : i64, scratch_operands = 1 : i64, tpu.core_type = #tpu.core_type<tc>, window_params = [{transform_indices = @transform_0, window_bounds = array<i64: 1, 28, 4096>}, {pipeline_mode = #tpu.pipeline_mode<synchronous>, transform_indices = @transform_1, window_bounds = array<i64: 12, 28>}, {pipeline_mode = #tpu.pipeline_mode<synchronous>, transform_indices = @transform_2, window_bounds = array<i64: 9, 24, 12>}, {pipeline_mode = #tpu.pipeline_mode<synchronous>, transform_indices = @transform_3, window_bounds = array<i64: 24, 1>}, {pipeline_mode = #tpu.pipeline_mode<synchronous>, transform_indices = @transform_4, window_bounds = array<i64: 5, 24, 1024>}, {pipeline_mode = #tpu.pipeline_mode<synchronous>, transform_indices = @transform_5, window_bounds = array<i64: 5, 1>}, {transform_indices = @transform_6, window_bounds = array<i64: 1, 5, 1>}]} {
    %c0 = arith.constant 0 : index
    %c0_0 = arith.constant 0 : index
    %0 = vector.load %arg2[%c0, %c0_0] : memref<12x28xf32, #tpu.memory_space<vmem>>, vector<12x28xf32>
    %c0_1 = arith.constant 0 : index
    %c0_2 = arith.constant 0 : index
    %c0_3 = arith.constant 0 : index
    %1 = vector.load %arg1[%c0_1, %c0_2, %c0_3] : memref<1x28x4096xf32, #tpu.memory_space<vmem>>, vector<1x28x4096xf32>
    %2 = vector.shape_cast %1 : vector<1x28x4096xf32> to vector<28x4096xf32>
    %cst = arith.constant dense<0.000000e+00> : vector<12x4096xf32>
    %3 = tpu.matmul %0, %2, %cst {dimension_numbers = #tpu.dot_dimension_numbers<[1], [0], [0], [1], [0, 0, 1, 1], [], []>} : vector<12x28xf32>, vector<28x4096xf32>, vector<12x4096xf32> -> vector<12x4096xf32>
    %cst_4 = arith.constant 0.000000e+00 : f32
    %4 = vector.broadcast %cst_4 : f32 to vector<12x4096xf32>
    %5 = arith.maximumf %3, %4 : vector<12x4096xf32>
    %6 = vector.extract_strided_slice %5 {offsets = [0, 0], sizes = [12, 1024], strides = [1, 1]} : vector<12x4096xf32> to vector<12x1024xf32>
    %7 = vector.extract_strided_slice %5 {offsets = [0, 1024], sizes = [12, 1024], strides = [1, 1]} : vector<12x4096xf32> to vector<12x1024xf32>
    %8 = arith.maximumf %6, %7 : vector<12x1024xf32>
    %9 = vector.extract_strided_slice %5 {offsets = [0, 2048], sizes = [12, 1024], strides = [1, 1]} : vector<12x4096xf32> to vector<12x1024xf32>
    %10 = vector.extract_strided_slice %5 {offsets = [0, 3072], sizes = [12, 1024], strides = [1, 1]} : vector<12x4096xf32> to vector<12x1024xf32>
    %11 = arith.maximumf %9, %10 : vector<12x1024xf32>
    %12 = arith.maximumf %8, %11 : vector<12x1024xf32>
    %cst_5 = arith.constant 0.000000e+00 : f32
    %13 = vector.broadcast %cst_5 : f32 to vector<12x128xf32>
    %c0_6 = arith.constant 0 : index
    %c0_7 = arith.constant 0 : index
    %14 = vector.load %arg8[%c0_6, %c0_7] : memref<12x1152xf32, #tpu.memory_space<vmem>>, vector<12x128xf32>
    tpu.vector_store %arg8[%c0_6, %c0_7], %13 {strides = array<i32>} : memref<12x1152xf32, #tpu.memory_space<vmem>>, vector<12x128xf32>,
    %cst_8 = arith.constant 0.000000e+00 : f32
    %15 = vector.broadcast %cst_8 : f32 to vector<12x128xf32>
    %c0_9 = arith.constant 0 : index
    %c1024 = arith.constant 1024 : index
    %16 = vector.load %arg8[%c0_9, %c1024] : memref<12x1152xf32, #tpu.memory_space<vmem>>, vector<12x128xf32>
    tpu.vector_store %arg8[%c0_9, %c1024], %15 {strides = array<i32>} : memref<12x1152xf32, #tpu.memory_space<vmem>>, vector<12x128xf32>,
    %c0_10 = arith.constant 0 : index
    %c33 = arith.constant 33 : index
    %17 = vector.load %arg8[%c0_10, %c33] : memref<12x1152xf32, #tpu.memory_space<vmem>>, vector<12x1024xf32>
    tpu.vector_store %arg8[%c0_10, %c33], %12 {strides = array<i32>} : memref<12x1152xf32, #tpu.memory_space<vmem>>, vector<12x1024xf32>,
    %18 = tpu.iota {dimensions = array<i32: 1>} : vector<1x1024xi32>
    %c31_i32 = arith.constant 31 : i32
    %19 = vector.broadcast %c31_i32 : i32 to vector<1x1024xi32>
    %20 = arith.andi %18, %19 : vector<1x1024xi32>
    %c0_i32 = arith.constant 0 : i32
    %21 = vector.broadcast %c0_i32 : i32 to vector<1x1024xi32>
    %22 = arith.cmpi ne, %20, %21 : vector<1x1024xi32>
    %c31_i32_11 = arith.constant 31 : i32
    %23 = vector.broadcast %c31_i32_11 : i32 to vector<1x1024xi32>
    %24 = arith.cmpi ne, %20, %23 : vector<1x1024xi32>
    %cst_12 = arith.constant 0.000000e+00 : f32
    %25 = vector.broadcast %cst_12 : f32 to vector<24x1024xf32>
    %c0_13 = arith.constant 0 : index
    %c0_14 = arith.constant 0 : index
    %26 = vector.load %arg8[%c0_13, %c0_14] : memref<12x1152xf32, #tpu.memory_space<vmem>>, vector<12x1024xf32>
    %cst_15 = arith.constant 0.000000e+00 : f32
    %27 = vector.shape_cast %22 : vector<1x1024xi1> to vector<1x1024xi1>
    %28 = vector.broadcast %27 : vector<1x1024xi1> to vector<12x1024xi1>
    %29 = vector.broadcast %cst_15 : f32 to vector<12x1024xf32>
    %30 = arith.select %28, %26, %29 : vector<12x1024xi1>, vector<12x1024xf32>
    %c0_16 = arith.constant 0 : index
    %c0_17 = arith.constant 0 : index
    %c0_18 = arith.constant 0 : index
    %31 = vector.load %arg3[%c0_16, %c0_17, %c0_18] : memref<9x24x12xf32, #tpu.memory_space<vmem>>, vector<1x24x12xf32>
    %32 = vector.shape_cast %31 : vector<1x24x12xf32> to vector<24x12xf32>
    %cst_19 = arith.constant dense<0.000000e+00> : vector<24x1024xf32>
    %33 = tpu.matmul %32, %30, %cst_19 {dimension_numbers = #tpu.dot_dimension_numbers<[1], [0], [0], [1], [0, 0, 1, 1], [], []>} : vector<24x12xf32>, vector<12x1024xf32>, vector<24x1024xf32> -> vector<24x1024xf32>
    %34 = arith.addf %25, %33 : vector<24x1024xf32>
    %c0_20 = arith.constant 0 : index
    %c1 = arith.constant 1 : index
    %35 = vector.load %arg8[%c0_20, %c1] : memref<12x1152xf32, #tpu.memory_space<vmem>>, vector<12x1024xf32>
    %c1_21 = arith.constant 1 : index
    %c0_22 = arith.constant 0 : index
    %c0_23 = arith.constant 0 : index
    %36 = vector.load %arg3[%c1_21, %c0_22, %c0_23] : memref<9x24x12xf32, #tpu.memory_space<vmem>>, vector<1x24x12xf32>
    %37 = vector.shape_cast %36 : vector<1x24x12xf32> to vector<24x12xf32>
    %cst_24 = arith.constant dense<0.000000e+00> : vector<24x1024xf32>
    %38 = tpu.matmul %37, %35, %cst_24 {dimension_numbers = #tpu.dot_dimension_numbers<[1], [0], [0], [1], [0, 0, 1, 1], [], []>} : vector<24x12xf32>, vector<12x1024xf32>, vector<24x1024xf32> -> vector<24x1024xf32>
    %39 = arith.addf %34, %38 : vector<24x1024xf32>
    %c0_25 = arith.constant 0 : index
    %c2 = arith.constant 2 : index
    %40 = vector.load %arg8[%c0_25, %c2] : memref<12x1152xf32, #tpu.memory_space<vmem>>, vector<12x1024xf32>
    %cst_26 = arith.constant 0.000000e+00 : f32
    %41 = vector.shape_cast %24 : vector<1x1024xi1> to vector<1x1024xi1>
    %42 = vector.broadcast %41 : vector<1x1024xi1> to vector<12x1024xi1>
    %43 = vector.broadcast %cst_26 : f32 to vector<12x1024xf32>
    %44 = arith.select %42, %40, %43 : vector<12x1024xi1>, vector<12x1024xf32>
    %c2_27 = arith.constant 2 : index
    %c0_28 = arith.constant 0 : index
    %c0_29 = arith.constant 0 : index
    %45 = vector.load %arg3[%c2_27, %c0_28, %c0_29] : memref<9x24x12xf32, #tpu.memory_space<vmem>>, vector<1x24x12xf32>
    %46 = vector.shape_cast %45 : vector<1x24x12xf32> to vector<24x12xf32>
    %cst_30 = arith.constant dense<0.000000e+00> : vector<24x1024xf32>
    %47 = tpu.matmul %46, %44, %cst_30 {dimension_numbers = #tpu.dot_dimension_numbers<[1], [0], [0], [1], [0, 0, 1, 1], [], []>} : vector<24x12xf32>, vector<12x1024xf32>, vector<24x1024xf32> -> vector<24x1024xf32>
    %48 = arith.addf %39, %47 : vector<24x1024xf32>
    %c0_31 = arith.constant 0 : index
    %c32 = arith.constant 32 : index
    %49 = vector.load %arg8[%c0_31, %c32] : memref<12x1152xf32, #tpu.memory_space<vmem>>, vector<12x1024xf32>
    %cst_32 = arith.constant 0.000000e+00 : f32
    %50 = vector.shape_cast %22 : vector<1x1024xi1> to vector<1x1024xi1>
    %51 = vector.broadcast %50 : vector<1x1024xi1> to vector<12x1024xi1>
    %52 = vector.broadcast %cst_32 : f32 to vector<12x1024xf32>
    %53 = arith.select %51, %49, %52 : vector<12x1024xi1>, vector<12x1024xf32>
    %c3 = arith.constant 3 : index
    %c0_33 = arith.constant 0 : index
    %c0_34 = arith.constant 0 : index
    %54 = vector.load %arg3[%c3, %c0_33, %c0_34] : memref<9x24x12xf32, #tpu.memory_space<vmem>>, vector<1x24x12xf32>
    %55 = vector.shape_cast %54 : vector<1x24x12xf32> to vector<24x12xf32>
    %cst_35 = arith.constant dense<0.000000e+00> : vector<24x1024xf32>
    %56 = tpu.matmul %55, %53, %cst_35 {dimension_numbers = #tpu.dot_dimension_numbers<[1], [0], [0], [1], [0, 0, 1, 1], [], []>} : vector<24x12xf32>, vector<12x1024xf32>, vector<24x1024xf32> -> vector<24x1024xf32>
    %57 = arith.addf %48, %56 : vector<24x1024xf32>
    %c0_36 = arith.constant 0 : index
    %c33_37 = arith.constant 33 : index
    %58 = vector.load %arg8[%c0_36, %c33_37] : memref<12x1152xf32, #tpu.memory_space<vmem>>, vector<12x1024xf32>
    %c4 = arith.constant 4 : index
    %c0_38 = arith.constant 0 : index
    %c0_39 = arith.constant 0 : index
    %59 = vector.load %arg3[%c4, %c0_38, %c0_39] : memref<9x24x12xf32, #tpu.memory_space<vmem>>, vector<1x24x12xf32>
    %60 = vector.shape_cast %59 : vector<1x24x12xf32> to vector<24x12xf32>
    %cst_40 = arith.constant dense<0.000000e+00> : vector<24x1024xf32>
    %61 = tpu.matmul %60, %58, %cst_40 {dimension_numbers = #tpu.dot_dimension_numbers<[1], [0], [0], [1], [0, 0, 1, 1], [], []>} : vector<24x12xf32>, vector<12x1024xf32>, vector<24x1024xf32> -> vector<24x1024xf32>
    %62 = arith.addf %57, %61 : vector<24x1024xf32>
    %c0_41 = arith.constant 0 : index
    %c34 = arith.constant 34 : index
    %63 = vector.load %arg8[%c0_41, %c34] : memref<12x1152xf32, #tpu.memory_space<vmem>>, vector<12x1024xf32>
    %cst_42 = arith.constant 0.000000e+00 : f32
    %64 = vector.shape_cast %24 : vector<1x1024xi1> to vector<1x1024xi1>
    %65 = vector.broadcast %64 : vector<1x1024xi1> to vector<12x1024xi1>
    %66 = vector.broadcast %cst_42 : f32 to vector<12x1024xf32>
    %67 = arith.select %65, %63, %66 : vector<12x1024xi1>, vector<12x1024xf32>
    %c5 = arith.constant 5 : index
    %c0_43 = arith.constant 0 : index
    %c0_44 = arith.constant 0 : index
    %68 = vector.load %arg3[%c5, %c0_43, %c0_44] : memref<9x24x12xf32, #tpu.memory_space<vmem>>, vector<1x24x12xf32>
    %69 = vector.shape_cast %68 : vector<1x24x12xf32> to vector<24x12xf32>
    %cst_45 = arith.constant dense<0.000000e+00> : vector<24x1024xf32>
    %70 = tpu.matmul %69, %67, %cst_45 {dimension_numbers = #tpu.dot_dimension_numbers<[1], [0], [0], [1], [0, 0, 1, 1], [], []>} : vector<24x12xf32>, vector<12x1024xf32>, vector<24x1024xf32> -> vector<24x1024xf32>
    %71 = arith.addf %62, %70 : vector<24x1024xf32>
    %c0_46 = arith.constant 0 : index
    %c64 = arith.constant 64 : index
    %72 = vector.load %arg8[%c0_46, %c64] : memref<12x1152xf32, #tpu.memory_space<vmem>>, vector<12x1024xf32>
    %cst_47 = arith.constant 0.000000e+00 : f32
    %73 = vector.shape_cast %22 : vector<1x1024xi1> to vector<1x1024xi1>
    %74 = vector.broadcast %73 : vector<1x1024xi1> to vector<12x1024xi1>
    %75 = vector.broadcast %cst_47 : f32 to vector<12x1024xf32>
    %76 = arith.select %74, %72, %75 : vector<12x1024xi1>, vector<12x1024xf32>
    %c6 = arith.constant 6 : index
    %c0_48 = arith.constant 0 : index
    %c0_49 = arith.constant 0 : index
    %77 = vector.load %arg3[%c6, %c0_48, %c0_49] : memref<9x24x12xf32, #tpu.memory_space<vmem>>, vector<1x24x12xf32>
    %78 = vector.shape_cast %77 : vector<1x24x12xf32> to vector<24x12xf32>
    %cst_50 = arith.constant dense<0.000000e+00> : vector<24x1024xf32>
    %79 = tpu.matmul %78, %76, %cst_50 {dimension_numbers = #tpu.dot_dimension_numbers<[1], [0], [0], [1], [0, 0, 1, 1], [], []>} : vector<24x12xf32>, vector<12x1024xf32>, vector<24x1024xf32> -> vector<24x1024xf32>
    %80 = arith.addf %71, %79 : vector<24x1024xf32>
    %c0_51 = arith.constant 0 : index
    %c65 = arith.constant 65 : index
    %81 = vector.load %arg8[%c0_51, %c65] : memref<12x1152xf32, #tpu.memory_space<vmem>>, vector<12x1024xf32>
    %c7 = arith.constant 7 : index
    %c0_52 = arith.constant 0 : index
    %c0_53 = arith.constant 0 : index
    %82 = vector.load %arg3[%c7, %c0_52, %c0_53] : memref<9x24x12xf32, #tpu.memory_space<vmem>>, vector<1x24x12xf32>
    %83 = vector.shape_cast %82 : vector<1x24x12xf32> to vector<24x12xf32>
    %cst_54 = arith.constant dense<0.000000e+00> : vector<24x1024xf32>
    %84 = tpu.matmul %83, %81, %cst_54 {dimension_numbers = #tpu.dot_dimension_numbers<[1], [0], [0], [1], [0, 0, 1, 1], [], []>} : vector<24x12xf32>, vector<12x1024xf32>, vector<24x1024xf32> -> vector<24x1024xf32>
    %85 = arith.addf %80, %84 : vector<24x1024xf32>
    %c0_55 = arith.constant 0 : index
    %c66 = arith.constant 66 : index
    %86 = vector.load %arg8[%c0_55, %c66] : memref<12x1152xf32, #tpu.memory_space<vmem>>, vector<12x1024xf32>
    %cst_56 = arith.constant 0.000000e+00 : f32
    %87 = vector.shape_cast %24 : vector<1x1024xi1> to vector<1x1024xi1>
    %88 = vector.broadcast %87 : vector<1x1024xi1> to vector<12x1024xi1>
    %89 = vector.broadcast %cst_56 : f32 to vector<12x1024xf32>
    %90 = arith.select %88, %86, %89 : vector<12x1024xi1>, vector<12x1024xf32>
    %c8 = arith.constant 8 : index
    %c0_57 = arith.constant 0 : index
    %c0_58 = arith.constant 0 : index
    %91 = vector.load %arg3[%c8, %c0_57, %c0_58] : memref<9x24x12xf32, #tpu.memory_space<vmem>>, vector<1x24x12xf32>
    %92 = vector.shape_cast %91 : vector<1x24x12xf32> to vector<24x12xf32>
    %cst_59 = arith.constant dense<0.000000e+00> : vector<24x1024xf32>
    %93 = tpu.matmul %92, %90, %cst_59 {dimension_numbers = #tpu.dot_dimension_numbers<[1], [0], [0], [1], [0, 0, 1, 1], [], []>} : vector<24x12xf32>, vector<12x1024xf32>, vector<24x1024xf32> -> vector<24x1024xf32>
    %94 = arith.addf %85, %93 : vector<24x1024xf32>
    %c0_60 = arith.constant 0 : index
    %c0_61 = arith.constant 0 : index
    %95 = vector.load %arg4[%c0_60, %c0_61] : memref<24x1xf32, #tpu.memory_space<vmem>>, vector<24x1xf32>
    %96 = vector.broadcast %95 : vector<24x1xf32> to vector<24x1024xf32>
    %97 = arith.addf %94, %96 : vector<24x1024xf32>
    %cst_62 = arith.constant 0.000000e+00 : f32
    %98 = vector.broadcast %cst_62 : f32 to vector<24x1024xf32>
    %99 = arith.maximumf %97, %98 : vector<24x1024xf32>
    %c0_63 = arith.constant 0 : index
    %c0_64 = arith.constant 0 : index
    %c0_65 = arith.constant 0 : index
    %100 = vector.load %arg5[%c0_63, %c0_64, %c0_65] : memref<5x24x1024xf32, #tpu.memory_space<vmem>>, vector<5x24x1024xf32>
    %101 = vector.shape_cast %99 : vector<24x1024xf32> to vector<1x24x1024xf32>
    %102 = vector.broadcast %101 : vector<1x24x1024xf32> to vector<5x24x1024xf32>
    %103 = arith.mulf %100, %102 : vector<5x24x1024xf32>
    %cst_66 = arith.constant dense<0.000000e+00> : vector<5x24xf32>
    %104 = vector.multi_reduction <add>, %103, %cst_66 [2] : vector<5x24x1024xf32> to vector<5x24xf32>
    %cst_67 = arith.constant dense<0.000000e+00> : vector<5xf32>
    %105 = vector.multi_reduction <add>, %104, %cst_67 [1] : vector<5x24xf32> to vector<5xf32>
    %106 = vector.shape_cast %105 : vector<5xf32> to vector<5x1xf32>
    %c0_68 = arith.constant 0 : index
    %c0_69 = arith.constant 0 : index
    %107 = vector.load %arg6[%c0_68, %c0_69] : memref<5x1xf32, #tpu.memory_space<vmem>>, vector<5x1xf32>
    %108 = arith.addf %106, %107 : vector<5x1xf32>
    %c0_70 = arith.constant 0 : index
    %c0_71 = arith.constant 0 : index
    %c0_72 = arith.constant 0 : index
    %109 = vector.load %arg7[%c0_70, %c0_71, %c0_72] : memref<1x5x1xf32, #tpu.memory_space<vmem>>, vector<1x5x1xf32>
    %110 = vector.shape_cast %109 : vector<1x5x1xf32> to vector<5x1xf32>
    %111 = vector.shape_cast %108 : vector<5x1xf32> to vector<1x5x1xf32>
    tpu.vector_store %arg7[%c0_70, %c0_71, %c0_72], %111 {strides = array<i32>} : memref<1x5x1xf32, #tpu.memory_space<vmem>>, vector<1x5x1xf32>,
    return
  }
  func.func @transform_0(%arg0: i32) -> (i32, i32, i32) {
    %c0_i32 = arith.constant 0 : i32
    %c0_i32_0 = arith.constant 0 : i32
    %c0_i32_1 = arith.constant 0 : i32
    return %arg0, %c0_i32, %c0_i32_0 : i32, i32, i32
  }
  func.func @transform_1(%arg0: i32) -> (i32, i32) {
    %c0_i32 = arith.constant 0 : i32
    %c0_i32_0 = arith.constant 0 : i32
    %c0_i32_1 = arith.constant 0 : i32
    return %c0_i32, %c0_i32_0 : i32, i32
  }
  func.func @transform_2(%arg0: i32) -> (i32, i32, i32) {
    %c0_i32 = arith.constant 0 : i32
    %c0_i32_0 = arith.constant 0 : i32
    %c0_i32_1 = arith.constant 0 : i32
    %c0_i32_2 = arith.constant 0 : i32
    return %c0_i32, %c0_i32_0, %c0_i32_1 : i32, i32, i32
  }
  func.func @transform_3(%arg0: i32) -> (i32, i32) {
    %c0_i32 = arith.constant 0 : i32
    %c0_i32_0 = arith.constant 0 : i32
    %c0_i32_1 = arith.constant 0 : i32
    return %c0_i32, %c0_i32_0 : i32, i32
  }
  func.func @transform_4(%arg0: i32) -> (i32, i32, i32) {
    %c0_i32 = arith.constant 0 : i32
    %c0_i32_0 = arith.constant 0 : i32
    %c0_i32_1 = arith.constant 0 : i32
    %c0_i32_2 = arith.constant 0 : i32
    return %c0_i32, %c0_i32_0, %c0_i32_1 : i32, i32, i32
  }
  func.func @transform_5(%arg0: i32) -> (i32, i32) {
    %c0_i32 = arith.constant 0 : i32
    %c0_i32_0 = arith.constant 0 : i32
    %c0_i32_1 = arith.constant 0 : i32
    return %c0_i32, %c0_i32_0 : i32, i32
  }
  func.func @transform_6(%arg0: i32) -> (i32, i32, i32) {
    %c0_i32 = arith.constant 0 : i32
    %c0_i32_0 = arith.constant 0 : i32
    %c0_i32_1 = arith.constant 0 : i32
    return %arg0, %c0_i32, %c0_i32_0 : i32, i32, i32
  }
}

</mosaic_0001>

<llo_original>
// kernel: tpu_custom_call.1
$region0: #{tpu_custom_call.1}
  #allocation0 [shape = 'u32[]', space=smem, size = 0x4, offset = 0x4, fixed_abs, tag = 'smem constant byte address 0x4 - core index']
  #allocation1 [shape = 'u32[144,128]{1,0:T(1,128)}', space=vmem, size = 0x12000, scoped, tag = 'internal scratch']
  #allocation2 [shape = 'f32[12,1152]{1,0:T(8,128)}', space=vmem, size = 0x12000, scoped, tag = 'scratch operand']
  %s0 = inlined_call_operand.vmem [shape: f32[2,28,4096], index: 0, kind: input, shape index: {}]
  %s1 = inlined_call_operand.vmem [shape: f32[12,28], index: 1, kind: input, shape index: {}]
  %s2 = inlined_call_operand.vmem [shape: f32[9,24,12], index: 2, kind: input, shape index: {}]
  %s3 = inlined_call_operand.vmem [shape: f32[24,1], index: 3, kind: input, shape index: {}]
  %s4 = inlined_call_operand.vmem [shape: f32[5,24,1024], index: 4, kind: input, shape index: {}]
  %s5 = inlined_call_operand.vmem [shape: f32[5,1], index: 5, kind: input, shape index: {}]
  %s6 = inlined_call_operand.vmem [shape: f32[2,5,1], index: 6, kind: output, shape index: {}]
  %s7 = sld [smem:[#allocation0]]
  $region57: #{tpu_custom_call.1} parent=0
    _
  %s9 = ssub.s32 1, %s7
  %s10 = scalar_select 0, %s9, %s7
  loop: start=0, step=1, limit=4
  $region2: #{tpu_custom_call.1} parent=0 // loop_pre_header
    _
  $region3: #{tpu_custom_call.1} parent=0 // loop_header
    %s12 = sphi 0, %s16
    %p13 = scmp.ge.s32.totalorder %s12, 4
    %s22 = sphi 0, %s24
    %s25 = sphi 0, %s22
    %s26 = sphi 0, %s25
    %s42 = sphi 0, %s26
    %s46 = sphi 0, %s46
    %s48 = sphi 0, %s46
    %s49 = sphi 0, %s48
    %s63 = sphi 0, %s49
    %s67 = sphi 0, %s67
    %s69 = sphi 0, %s67
    %s70 = sphi 0, %s69
    %s84 = sphi 0, %s70
    %s88 = sphi 0, %s88
    %s90 = sphi 0, %s88
    %s91 = sphi 0, %s90
    %s105 = sphi 0, %s91
    %s109 = sphi 0, %s109
    %s111 = sphi 0, %s109
    %s112 = sphi 0, %s111
    %s126 = sphi 0, %s112
    %s130 = sphi 0, %s130
    %s132 = sphi 0, %s130
    %s133 = sphi 0, %s132
    %s147 = sphi 0, %s133
    %s153 = sphi 0, %s155
    %s156 = sphi 0, %s153
    %s157 = sphi 0, %s156
    %s173 = sphi 0, %s157
  $region4: #{tpu_custom_call.1} parent=0 // loop_header_branch
    %15 = sbr.rel (%p13) target = $region8
  $region5: #{tpu_custom_call.1} parent=0 // loop_body
    %s17 = ssub.s32 %s12, 1
    %s18 = ssub.s32 %s12, 2
    %s19 = sadd.s32 %s12, 1
    %s20 = ssub.s32 %s12, %s19
    %p21 = scmp.eq.s32.totalorder %s20, 0
    %s23 = sadd.s32 %s22, 1
    %s24 = scalar_select %p21, %s22, %s23
    %p27 = pneg %p21
    %p28 = scmp.eq.s32.totalorder %s12, 1
    %p29 = por %p27, %p28
    %p30 = scmp.ne.s32.totalorder %s22, %s25
    %p31 = scmp.eq.s32.totalorder %s12, 0
    %p32 = por %p30, %p31
    %p33 = scmp.ne.s32.totalorder %s22, %s25
    %p34 = scmp.eq.s32.totalorder %s17, 1
    %p35 = por %p33, %p34
    %p36 = scmp.ne.s32.totalorder %s25, %s26
    %p37 = scmp.eq.s32.totalorder %s17, 0
    %p38 = por %p36, %p37
    %p39 = scmp.ne.s32.totalorder %s25, %s26
    %p40 = scmp.eq.s32.totalorder %s18, 1
    %p41 = por %p39, %p40
    %p43 = scmp.ne.s32.totalorder %s26, %s42
    %p44 = scmp.eq.s32.totalorder %s18, 0
    %p45 = por %p43, %p44
    %s47 = sadd.s32 %s46, 1
    %p50 = scmp.eq.s32.totalorder %s12, 1
    %p51 = scmp.ne.s32.totalorder %s46, %s48
    %p52 = scmp.eq.s32.totalorder %s12, 0
    %p53 = por %p51, %p52
    %p54 = scmp.ne.s32.totalorder %s46, %s48
    %p55 = scmp.eq.s32.totalorder %s17, 1
    %p56 = por %p54, %p55
    %p57 = scmp.ne.s32.totalorder %s48, %s49
    %p58 = scmp.eq.s32.totalorder %s17, 0
    %p59 = por %p57, %p58
    %p60 = scmp.ne.s32.totalorder %s48, %s49
    %p61 = scmp.eq.s32.totalorder %s18, 1
    %p62 = por %p60, %p61
    %p64 = scmp.ne.s32.totalorder %s49, %s63
    %p65 = scmp.eq.s32.totalorder %s18, 0
    %p66 = por %p64, %p65
    %s68 = sadd.s32 %s67, 1
    %p71 = scmp.eq.s32.totalorder %s12, 1
    %p72 = scmp.ne.s32.totalorder %s67, %s69
    %p73 = scmp.eq.s32.totalorder %s12, 0
    %p74 = por %p72, %p73
    %p75 = scmp.ne.s32.totalorder %s67, %s69
    %p76 = scmp.eq.s32.totalorder %s17, 1
    %p77 = por %p75, %p76
    %p78 = scmp.ne.s32.totalorder %s69, %s70
    %p79 = scmp.eq.s32.totalorder %s17, 0
    %p80 = por %p78, %p79
    %p81 = scmp.ne.s32.totalorder %s69, %s70
    %p82 = scmp.eq.s32.totalorder %s18, 1
    %p83 = por %p81, %p82
    %p85 = scmp.ne.s32.totalorder %s70, %s84
    %p86 = scmp.eq.s32.totalorder %s18, 0
    %p87 = por %p85, %p86
    %s89 = sadd.s32 %s88, 1
    %p92 = scmp.eq.s32.totalorder %s12, 1
    %p93 = scmp.ne.s32.totalorder %s88, %s90
    %p94 = scmp.eq.s32.totalorder %s12, 0
    %p95 = por %p93, %p94
    %p96 = scmp.ne.s32.totalorder %s88, %s90
    %p97 = scmp.eq.s32.totalorder %s17, 1
    %p98 = por %p96, %p97
    %p99 = scmp.ne.s32.totalorder %s90, %s91
    %p100 = scmp.eq.s32.totalorder %s17, 0
    %p101 = por %p99, %p100
    %p102 = scmp.ne.s32.totalorder %s90, %s91
    %p103 = scmp.eq.s32.totalorder %s18, 1
    %p104 = por %p102, %p103
    %p106 = scmp.ne.s32.totalorder %s91, %s105
    %p107 = scmp.eq.s32.totalorder %s18, 0
    %p108 = por %p106, %p107
    %s110 = sadd.s32 %s109, 1
    %p113 = scmp.eq.s32.totalorder %s12, 1
    %p114 = scmp.ne.s32.totalorder %s109, %s111
    %p115 = scmp.eq.s32.totalorder %s12, 0
    %p116 = por %p114, %p115
    %p117 = scmp.ne.s32.totalorder %s109, %s111
    %p118 = scmp.eq.s32.totalorder %s17, 1
    %p119 = por %p117, %p118
    %p120 = scmp.ne.s32.totalorder %s111, %s112
    %p121 = scmp.eq.s32.totalorder %s17, 0
    %p122 = por %p120, %p121
    %p123 = scmp.ne.s32.totalorder %s111, %s112
    %p124 = scmp.eq.s32.totalorder %s18, 1
    %p125 = por %p123, %p124
    %p127 = scmp.ne.s32.totalorder %s112, %s126
    %p128 = scmp.eq.s32.totalorder %s18, 0
    %p129 = por %p127, %p128
    %s131 = sadd.s32 %s130, 1
    %p134 = scmp.eq.s32.totalorder %s12, 1
    %p135 = scmp.ne.s32.totalorder %s130, %s132
    %p136 = scmp.eq.s32.totalorder %s12, 0
    %p137 = por %p135, %p136
    %p138 = scmp.ne.s32.totalorder %s130, %s132
    %p139 = scmp.eq.s32.totalorder %s17, 1
    %p140 = por %p138, %p139
    %p141 = scmp.ne.s32.totalorder %s132, %s133
    %p142 = scmp.eq.s32.totalorder %s17, 0
    %p143 = por %p141, %p142
    %p144 = scmp.ne.s32.totalorder %s132, %s133
    %p145 = scmp.eq.s32.totalorder %s18, 1
    %p146 = por %p144, %p145
    %p148 = scmp.ne.s32.totalorder %s133, %s147
    %p149 = scmp.eq.s32.totalorder %s18, 0
    %p150 = por %p148, %p149
    %s151 = ssub.s32 %s12, %s19
    %p152 = scmp.eq.s32.totalorder %s151, 0
    %s154 = sadd.s32 %s153, 1
    %s155 = scalar_select %p152, %s153, %s154
    %p158 = pneg %p152
    %p159 = scmp.eq.s32.totalorder %s12, 1
    %p160 = por %p158, %p159
    %p161 = scmp.ne.s32.totalorder %s153, %s156
    %p162 = scmp.eq.s32.totalorder %s12, 0
    %p163 = por %p161, %p162
    %p164 = scmp.ne.s32.totalorder %s153, %s156
    %p165 = scmp.eq.s32.totalorder %s17, 1
    %p166 = por %p164, %p165
    %p167 = scmp.ne.s32.totalorder %s156, %s157
    %p168 = scmp.eq.s32.totalorder %s17, 0
    %p169 = por %p167, %p168
    %p170 = scmp.ne.s32.totalorder %s156, %s157
    %p171 = scmp.eq.s32.totalorder %s18, 1
    %p172 = por %p170, %p171
    %p174 = scmp.ne.s32.totalorder %s157, %s173
    %p175 = scmp.eq.s32.totalorder %s18, 0
    %p176 = por %p174, %p175
    %p177 = scmp.le.s32.totalorder 1, %s12
    %p178 = scmp.lt.s32.totalorder %s12, 3
    %p179 = pnand %p177, %p178
    %p180 = pneg %p179
    // Predicated region
    $region9: #{tpu_custom_call.1} parent=5 // pred_check
      _
    $region10: #{tpu_custom_call.1} parent=5 // pred_check_branch
      %182 = sbr.rel (%p179) target = $region12
    $region11: #{tpu_custom_call.1} parent=5 // pred_region
      %s183 = ssub.s32 %s12, 1
      // Predicated region
      $region13: #{tpu_custom_call.1} parent=11 // pred_check
        %p184 = pneg %p59
      $region14: #{tpu_custom_call.1} parent=11 // pred_check_branch
        %186 = sbr.rel (%p184) target = $region16
      $region15: #{tpu_custom_call.1} parent=11 // pred_region
        _
      $region16: #{tpu_custom_call.1} parent=11 // pred_fallthru
        _
      // Predicated region
      $region17: #{tpu_custom_call.1} parent=11 // pred_check
        %p187 = pneg %p80
      $region18: #{tpu_custom_call.1} parent=11 // pred_check_branch
        %189 = sbr.rel (%p187) target = $region20
      $region19: #{tpu_custom_call.1} parent=11 // pred_region
        _
      $region20: #{tpu_custom_call.1} parent=11 // pred_fallthru
        _
      // Predicated region
      $region21: #{tpu_custom_call.1} parent=11 // pred_check
        %p190 = pneg %p101
      $region22: #{tpu_custom_call.1} parent=11 // pred_check_branch
        %192 = sbr.rel (%p190) target = $region24
      $region23: #{tpu_custom_call.1} parent=11 // pred_region
        _
      $region24: #{tpu_custom_call.1} parent=11 // pred_fallthru
        _
      // Predicated region
      $region25: #{tpu_custom_call.1} parent=11 // pred_check
        %p193 = pneg %p122
      $region26: #{tpu_custom_call.1} parent=11 // pred_check_branch
        %195 = sbr.rel (%p193) target = $region28
      $region27: #{tpu_custom_call.1} parent=11 // pred_region
        _
      $region28: #{tpu_custom_call.1} parent=11 // pred_fallthru
        _
      // Predicated region
      $region29: #{tpu_custom_call.1} parent=11 // pred_check
        %p196 = pneg %p143
      $region30: #{tpu_custom_call.1} parent=11 // pred_check_branch
        %198 = sbr.rel (%p196) target = $region32
      $region31: #{tpu_custom_call.1} parent=11 // pred_region
        _
      $region32: #{tpu_custom_call.1} parent=11 // pred_fallthru
        _
    $region12: #{tpu_custom_call.1} parent=5 // pred_fallthru
      _
    %p199 = scmp.lt.s32.totalorder %s12, 2
    // Predicated region
    $region33: #{tpu_custom_call.1} parent=5 // pred_check
      %p200 = pneg %p199
    $region34: #{tpu_custom_call.1} parent=5 // pred_check_branch
      %202 = sbr.rel (%p200) target = $region36
    $region35: #{tpu_custom_call.1} parent=5 // pred_region
      // Predicated region
      $region37: #{tpu_custom_call.1} parent=35 // pred_check
        %p203 = pneg %p32
      $region38: #{tpu_custom_call.1} parent=35 // pred_check_branch
        %205 = sbr.rel (%p203) target = $region40
      $region39: #{tpu_custom_call.1} parent=35 // pred_region
        %p206 = scmp.lt.s32.totalorder %s12, 1
        %s207 = scalar_select %p206, %s12, 1
        %s208 = smul.addr %s207, 128
        %s209 = smul.addr %s208, 8
        %s210 = scalar_lea.vmem %s0, %s209
      $region40: #{tpu_custom_call.1} parent=35 // pred_fallthru
        _
    $region36: #{tpu_custom_call.1} parent=5 // pred_fallthru
      _
    %p211 = scmp.le.s32.totalorder 1, %s12
    %p212 = scmp.lt.s32.totalorder %s12, 3
    %p213 = pnand %p211, %p212
    %p214 = pneg %p213
    // Predicated region
    $region41: #{tpu_custom_call.1} parent=5 // pred_check
      _
    $region42: #{tpu_custom_call.1} parent=5 // pred_check_branch
      %216 = sbr.rel (%p213) target = $region44
    $region43: #{tpu_custom_call.1} parent=5 // pred_region
      %s217 = ssub.s32 %s12, 1
      %p218 = scmp.lt.s32.totalorder %s17, 1
      %s219 = scalar_select %p218, %s17, 1
      %s220 = smul.addr %s219, 128
      %s221 = smul.addr %s220, 8
      %s222 = scalar_lea.vmem %s0, %s221
      %p223 = pneg %p38
      %p224 = pneg %p35
      %p225 = pneg %p59
      %p226 = pneg %p56
      %p227 = pneg %p80
      %p228 = pneg %p77
      %p229 = pneg %p101
      %p230 = pneg %p98
      %p231 = pneg %p122
      %p232 = pneg %p119
      %p233 = pneg %p143
      %p234 = pneg %p140
      %p235 = pneg %p169
      %p236 = pneg %p166
      %p237 = scmp.lt.s32.totalorder %s17, 1
      %s238 = scalar_select %p237, %s17, 1
      %s239 = smul.addr %s238, 8
      %s240 = scalar_lea.vmem %s6, %s239
      %p241 = scmp.lt.s32.totalorder %s17, 1
      %s242 = scalar_select %p241, %s17, 1
      %s243 = smul.addr %s242, 128
      %s244 = smul.addr %s243, 8
      %s245 = scalar_lea.vmem %s0, %s244
      %p246 = scmp.lt.s32.totalorder %s17, 1
      %s247 = scalar_select %p246, %s17, 1
      %s248 = smul.addr %s247, 8
      %s249 = scalar_lea.vmem %s6, %s248
      %v250 = vld [vmem:[%s1] sm:$0xff]
      %v251 = vld [vmem:[%s1 + $0x8] sm:$0xf]
      %v252 = vld [vmem:[%s245] sm:$0xff]
      %v253 = vld [vmem:[%s245 + $0x8] sm:$0xff]
      %v254 = vld [vmem:[%s245 + $0x10] sm:$0xff]
      %v255 = vld [vmem:[%s245 + $0x18] sm:$0xff]
      %v256 = vld [vmem:[%s245 + $0x20] sm:$0xff]
      %v257 = vld [vmem:[%s245 + $0x28] sm:$0xff]
      %v258 = vld [vmem:[%s245 + $0x30] sm:$0xff]
      %v259 = vld [vmem:[%s245 + $0x38] sm:$0xff]
      %v260 = vld [vmem:[%s245 + $0x40] sm:$0xff]
      %v261 = vld [vmem:[%s245 + $0x48] sm:$0xff]
      %v262 = vld [vmem:[%s245 + $0x50] sm:$0xff]
      %v263 = vld [vmem:[%s245 + $0x58] sm:$0xff]
      %v264 = vld [vmem:[%s245 + $0x60] sm:$0xff]
      %v265 = vld [vmem:[%s245 + $0x68] sm:$0xff]
      %v266 = vld [vmem:[%s245 + $0x70] sm:$0xff]
      %v267 = vld [vmem:[%s245 + $0x78] sm:$0xff]
      %v268 = vld [vmem:[%s245 + $0x80] sm:$0xff]
      %v269 = vld [vmem:[%s245 + $0x88] sm:$0xff]
      %v270 = vld [vmem:[%s245 + $0x90] sm:$0xff]
      %v271 = vld [vmem:[%s245 + $0x98] sm:$0xff]
      %v272 = vld [vmem:[%s245 + $0xa0] sm:$0xff]
      %v273 = vld [vmem:[%s245 + $0xa8] sm:$0xff]
      %v274 = vld [vmem:[%s245 + $0xb0] sm:$0xff]
      %v275 = vld [vmem:[%s245 + $0xb8] sm:$0xff]
      %v276 = vld [vmem:[%s245 + $0xc0] sm:$0xff]
      %v277 = vld [vmem:[%s245 + $0xc8] sm:$0xff]
      %v278 = vld [vmem:[%s245 + $0xd0] sm:$0xff]
      %v279 = vld [vmem:[%s245 + $0xd8] sm:$0xff]
      %v280 = vld [vmem:[%s245 + $0xe0] sm:$0xff]
      %v281 = vld [vmem:[%s245 + $0xe8] sm:$0xff]
      %v282 = vld [vmem:[%s245 + $0xf0] sm:$0xff]
      %v283 = vld [vmem:[%s245 + $0xf8] sm:$0xff]
      %v284 = vld [vmem:[%s245 + $0x100] sm:$0xff]
      %v285 = vld [vmem:[%s245 + $0x108] sm:$0xff]
      %v286 = vld [vmem:[%s245 + $0x110] sm:$0xff]
      %v287 = vld [vmem:[%s245 + $0x118] sm:$0xff]
      %v288 = vld [vmem:[%s245 + $0x120] sm:$0xff]
      %v289 = vld [vmem:[%s245 + $0x128] sm:$0xff]
      %v290 = vld [vmem:[%s245 + $0x130] sm:$0xff]
      %v291 = vld [vmem:[%s245 + $0x138] sm:$0xff]
      %v292 = vld [vmem:[%s245 + $0x140] sm:$0xff]
      %v293 = vld [vmem:[%s245 + $0x148] sm:$0xff]
      %v294 = vld [vmem:[%s245 + $0x150] sm:$0xff]
      %v295 = vld [vmem:[%s245 + $0x158] sm:$0xff]
      %v296 = vld [vmem:[%s245 + $0x160] sm:$0xff]
      %v297 = vld [vmem:[%s245 + $0x168] sm:$0xff]
      %v298 = vld [vmem:[%s245 + $0x170] sm:$0xff]
      %v299 = vld [vmem:[%s245 + $0x178] sm:$0xff]
      %v300 = vld [vmem:[%s245 + $0x180] sm:$0xff]
      %v301 = vld [vmem:[%s245 + $0x188] sm:$0xff]
      %v302 = vld [vmem:[%s245 + $0x190] sm:$0xff]
      %v303 = vld [vmem:[%s245 + $0x198] sm:$0xff]
      %v304 = vld [vmem:[%s245 + $0x1a0] sm:$0xff]
      %v305 = vld [vmem:[%s245 + $0x1a8] sm:$0xff]
      %v306 = vld [vmem:[%s245 + $0x1b0] sm:$0xff]
      %v307 = vld [vmem:[%s245 + $0x1b8] sm:$0xff]
      %v308 = vld [vmem:[%s245 + $0x1c0] sm:$0xff]
      %v309 = vld [vmem:[%s245 + $0x1c8] sm:$0xff]
      %v310 = vld [vmem:[%s245 + $0x1d0] sm:$0xff]
      %v311 = vld [vmem:[%s245 + $0x1d8] sm:$0xff]
      %v312 = vld [vmem:[%s245 + $0x1e0] sm:$0xff]
      %v313 = vld [vmem:[%s245 + $0x1e8] sm:$0xff]
      %v314 = vld [vmem:[%s245 + $0x1f0] sm:$0xff]
      %v315 = vld [vmem:[%s245 + $0x1f8] sm:$0xff]
      %v316 = vld [vmem:[%s245 + $0x200] sm:$0xff]
      %v317 = vld [vmem:[%s245 + $0x208] sm:$0xff]
      %v318 = vld [vmem:[%s245 + $0x210] sm:$0xff]
      %v319 = vld [vmem:[%s245 + $0x218] sm:$0xff]
      %v320 = vld [vmem:[%s245 + $0x220] sm:$0xff]
      %v321 = vld [vmem:[%s245 + $0x228] sm:$0xff]
      %v322 = vld [vmem:[%s245 + $0x230] sm:$0xff]
      %v323 = vld [vmem:[%s245 + $0x238] sm:$0xff]
      %v324 = vld [vmem:[%s245 + $0x240] sm:$0xff]
      %v325 = vld [vmem:[%s245 + $0x248] sm:$0xff]
      %v326 = vld [vmem:[%s245 + $0x250] sm:$0xff]
      %v327 = vld [vmem:[%s245 + $0x258] sm:$0xff]
      %v328 = vld [vmem:[%s245 + $0x260] sm:$0xff]
      %v329 = vld [vmem:[%s245 + $0x268] sm:$0xff]
      %v330 = vld [vmem:[%s245 + $0x270] sm:$0xff]
      %v331 = vld [vmem:[%s245 + $0x278] sm:$0xff]
      %v332 = vld [vmem:[%s245 + $0x280] sm:$0xff]
      %v333 = vld [vmem:[%s245 + $0x288] sm:$0xff]
      %v334 = vld [vmem:[%s245 + $0x290] sm:$0xff]
      %v335 = vld [vmem:[%s245 + $0x298] sm:$0xff]
      %v336 = vld [vmem:[%s245 + $0x2a0] sm:$0xff]
      %v337 = vld [vmem:[%s245 + $0x2a8] sm:$0xff]
      %v338 = vld [vmem:[%s245 + $0x2b0] sm:$0xff]
      %v339 = vld [vmem:[%s245 + $0x2b8] sm:$0xff]
      %v340 = vld [vmem:[%s245 + $0x2c0] sm:$0xff]
      %v341 = vld [vmem:[%s245 + $0x2c8] sm:$0xff]
      %v342 = vld [vmem:[%s245 + $0x2d0] sm:$0xff]
      %v343 = vld [vmem:[%s245 + $0x2d8] sm:$0xff]
      %v344 = vld [vmem:[%s245 + $0x2e0] sm:$0xff]
      %v345 = vld [vmem:[%s245 + $0x2e8] sm:$0xff]
      %v346 = vld [vmem:[%s245 + $0x2f0] sm:$0xff]
      %v347 = vld [vmem:[%s245 + $0x2f8] sm:$0xff]
      %v348 = vld [vmem:[%s245 + $0x300] sm:$0xf]
      %v349 = vld [vmem:[%s245 + $0x308] sm:$0xf]
      %v350 = vld [vmem:[%s245 + $0x310] sm:$0xf]
      %v351 = vld [vmem:[%s245 + $0x318] sm:$0xf]
      %v352 = vld [vmem:[%s245 + $0x320] sm:$0xf]
      %v353 = vld [vmem:[%s245 + $0x328] sm:$0xf]
      %v354 = vld [vmem:[%s245 + $0x330] sm:$0xf]
      %v355 = vld [vmem:[%s245 + $0x338] sm:$0xf]
      %v356 = vld [vmem:[%s245 + $0x340] sm:$0xf]
      %v357 = vld [vmem:[%s245 + $0x348] sm:$0xf]
      %v358 = vld [vmem:[%s245 + $0x350] sm:$0xf]
      %v359 = vld [vmem:[%s245 + $0x358] sm:$0xf]
      %v360 = vld [vmem:[%s245 + $0x360] sm:$0xf]
      %v361 = vld [vmem:[%s245 + $0x368] sm:$0xf]
      %v362 = vld [vmem:[%s245 + $0x370] sm:$0xf]
      %v363 = vld [vmem:[%s245 + $0x378] sm:$0xf]
      %v364 = vld [vmem:[%s245 + $0x380] sm:$0xf]
      %v365 = vld [vmem:[%s245 + $0x388] sm:$0xf]
      %v366 = vld [vmem:[%s245 + $0x390] sm:$0xf]
      %v367 = vld [vmem:[%s245 + $0x398] sm:$0xf]
      %v368 = vld [vmem:[%s245 + $0x3a0] sm:$0xf]
      %v369 = vld [vmem:[%s245 + $0x3a8] sm:$0xf]
      %v370 = vld [vmem:[%s245 + $0x3b0] sm:$0xf]
      %v371 = vld [vmem:[%s245 + $0x3b8] sm:$0xf]
      %v372 = vld [vmem:[%s245 + $0x3c0] sm:$0xf]
      %v373 = vld [vmem:[%s245 + $0x3c8] sm:$0xf]
      %v374 = vld [vmem:[%s245 + $0x3d0] sm:$0xf]
      %v375 = vld [vmem:[%s245 + $0x3d8] sm:$0xf]
      %v376 = vld [vmem:[%s245 + $0x3e0] sm:$0xf]
      %v377 = vld [vmem:[%s245 + $0x3e8] sm:$0xf]
      %v378 = vld [vmem:[%s245 + $0x3f0] sm:$0xf]
      %v379 = vld [vmem:[%s245 + $0x3f8] sm:$0xf]
      %vm380 = vcmask 228352
      %v382 = vsel %vm380, %v250, 0
      %v385 = vsel %vm380, %v251, 0
      %vm387 = vcmask 1043456
      %v389 = vsel %vm387, %v348, 0
      %v392 = vsel %vm387, %v349, 0
      %v395 = vsel %vm387, %v350, 0
      %v398 = vsel %vm387, %v351, 0
      %v401 = vsel %vm387, %v352, 0
      %v404 = vsel %vm387, %v353, 0
      %v407 = vsel %vm387, %v354, 0
      %v410 = vsel %vm387, %v355, 0
      %v413 = vsel %vm387, %v356, 0
      %v416 = vsel %vm387, %v357, 0
      %v419 = vsel %vm387, %v358, 0
      %v422 = vsel %vm387, %v359, 0
      %v425 = vsel %vm387, %v360, 0
      %v428 = vsel %vm387, %v361, 0
      %v431 = vsel %vm387, %v362, 0
      %v434 = vsel %vm387, %v363, 0
      %v437 = vsel %vm387, %v364, 0
      %v440 = vsel %vm387, %v365, 0
      %v443 = vsel %vm387, %v366, 0
      %v446 = vsel %vm387, %v367, 0
      %v449 = vsel %vm387, %v368, 0
      %v452 = vsel %vm387, %v369, 0
      %v455 = vsel %vm387, %v370, 0
      %v458 = vsel %vm387, %v371, 0
      %v461 = vsel %vm387, %v372, 0
      %v464 = vsel %vm387, %v373, 0
      %v467 = vsel %vm387, %v374, 0
      %v470 = vsel %vm387, %v375, 0
      %v473 = vsel %vm387, %v376, 0
      %v476 = vsel %vm387, %v377, 0
      %v479 = vsel %vm387, %v378, 0
      %v482 = vsel %vm387, %v379, 0
      %484 = vmatprep.subr.mxu0 0.0
      %485 = vmatpush1.msra.mxu0 0.0
      %486 = vmatprep.subr.mxu0 0.0
      %487 = vmatpush1.msra.mxu0 0.0
      %488 = vmatprep.subr.mxu0 0.0
      %489 = vmatpush1.msra.mxu0 0.0
      %490 = vmatprep.subr.mxu0 0.0
      %491 = vmatpush1.msra.mxu0 0.0
      %492 = vmatprep.subr.mxu0 0.0
      %493 = vmatpush1.msra.mxu0 0.0
      %494 = vmatprep.subr.mxu0 0.0
      %495 = vmatpush1.msra.mxu0 0.0
      %496 = vmatprep.subr.mxu0 0.0
      %497 = vmatpush1.msra.mxu0 0.0
      %498 = vmatprep.subr.mxu0 0.0
      %499 = vmatpush1.msra.mxu0 0.0
      %500 = vmatprep.subr.mxu0 0.0
      %501 = vmatpush1.msra.mxu0 0.0
      %502 = vmatprep.subr.mxu0 0.0
      %503 = vmatpush1.msra.mxu0 0.0
      %504 = vmatprep.subr.mxu0 0.0
      %505 = vmatpush1.msra.mxu0 0.0
      %506 = vmatprep.subr.mxu0 0.0
      %507 = vmatpush1.msra.mxu0 0.0
      %508 = vmatprep.subr.mxu0 %v392
      %509 = vmatpush1.msra.mxu0 %v389
      %510 = vmatprep.subr.mxu0 %v317
      %511 = vmatpush1.msra.mxu0 %v316
      %512 = vmatprep.subr.mxu0 %v285
      %513 = vmatpush1.msra.mxu0 %v284
      %514 = vmatprep.subr.mxu0 %v253
      %515 = vmatpush1.msra.mxu0 %v252
      %516 = vmatprep.subr.mxu0 0.0
      %517 = vmatpush2.msra.mxu0 0.0
      %518 = vmatprep.subr.mxu0 0.0
      %519 = vmatpush2.msra.mxu0 0.0
      %520 = vmatprep.subr.mxu0 0.0
      %521 = vmatpush2.msra.mxu0 0.0
      %522 = vmatprep.subr.mxu0 0.0
      %523 = vmatpush2.msra.mxu0 0.0
      %524 = vmatprep.subr.mxu0 0.0
      %525 = vmatpush2.msra.mxu0 0.0
      %526 = vmatprep.subr.mxu0 0.0
      %527 = vmatpush2.msra.mxu0 0.0
      %528 = vmatprep.subr.mxu0 0.0
      %529 = vmatpush2.msra.mxu0 0.0
      %530 = vmatprep.subr.mxu0 0.0
      %531 = vmatpush2.msra.mxu0 0.0
      %532 = vmatprep.subr.mxu0 0.0
      %533 = vmatpush2.msra.mxu0 0.0
      %534 = vmatprep.subr.mxu0 0.0
      %535 = vmatpush2.msra.mxu0 0.0
      %536 = vmatprep.subr.mxu0 0.0
      %537 = vmatpush2.msra.mxu0 0.0
      %538 = vmatprep.subr.mxu0 0.0
      %539 = vmatpush2.msra.mxu0 0.0
      %540 = vmatprep.subr.mxu0 0.0
      %541 = vmatpush2.msra.mxu0 0.0
      %542 = vmatprep.subr.mxu0 0.0
      %543 = vmatpush2.msra.mxu0 0.0
      %544 = vmatprep.subr.mxu0 0.0
      %545 = vmatpush2.msra.mxu0 0.0
      %546 = vmatprep.subr.mxu0 0.0
      %547 = vmatpush2.msra.mxu0 0.0
      %548 = vmatprep.mubr.f32.mxu0 0.0
      %549 = vmatmul.mubr.f32.gmra.mxu0 %v382
      %v550 = vpop.f32.mrf.mxu0
      %v551 = vadd.f32 0.0, %v550
      %v552 = vpop.f32.mrf.mxu0
      %v553 = vadd.f32 0.0, %v552
      %554 = vmatprep.mubr.f32.mxu0 0.0
      %555 = vmatmul.mubr.f32.gmra.mxu0 %v385
      %v556 = vpop.f32.mrf.mxu0
      %v557 = vadd.f32 0.0, %v556
      %v558 = vpop.f32.mrf.mxu0
      %v559 = vadd.f32 0.0, %v558
      %560 = vdwg.mxu0
      %561 = vmatprep.subr.mxu0 0.0
      %562 = vmatpush1.msra.mxu0 0.0
      %563 = vmatprep.subr.mxu0 0.0
      %564 = vmatpush1.msra.mxu0 0.0
      %565 = vmatprep.subr.mxu0 0.0
      %566 = vmatpush1.msra.mxu0 0.0
      %567 = vmatprep.subr.mxu0 0.0
      %568 = vmatpush1.msra.mxu0 0.0
      %569 = vmatprep.subr.mxu0 0.0
      %570 = vmatpush1.msra.mxu0 0.0
      %571 = vmatprep.subr.mxu0 0.0
      %572 = vmatpush1.msra.mxu0 0.0
      %573 = vmatprep.subr.mxu0 0.0
      %574 = vmatpush1.msra.mxu0 0.0
      %575 = vmatprep.subr.mxu0 0.0
      %576 = vmatpush1.msra.mxu0 0.0
      %577 = vmatprep.subr.mxu0 0.0
      %578 = vmatpush1.msra.mxu0 0.0
      %579 = vmatprep.subr.mxu0 0.0
      %580 = vmatpush1.msra.mxu0 0.0
      %581 = vmatprep.subr.mxu0 0.0
      %582 = vmatpush1.msra.mxu0 0.0
      %583 = vmatprep.subr.mxu0 0.0
      %584 = vmatpush1.msra.mxu0 0.0
      %585 = vmatprep.subr.mxu0 %v398
      %586 = vmatpush1.msra.mxu0 %v395
      %587 = vmatprep.subr.mxu0 %v319
      %588 = vmatpush1.msra.mxu0 %v318
      %589 = vmatprep.subr.mxu0 %v287
      %590 = vmatpush1.msra.mxu0 %v286
      %591 = vmatprep.subr.mxu0 %v255
      %592 = vmatpush1.msra.mxu0 %v254
      %593 = vmatprep.subr.mxu0 0.0
      %594 = vmatpush2.msra.mxu0 0.0
      %595 = vmatprep.subr.mxu0 0.0
      %596 = vmatpush2.msra.mxu0 0.0
      %597 = vmatprep.subr.mxu0 0.0
      %598 = vmatpush2.msra.mxu0 0.0
      %599 = vmatprep.subr.mxu0 0.0
      %600 = vmatpush2.msra.mxu0 0.0
      %601 = vmatprep.subr.mxu0 0.0
      %602 = vmatpush2.msra.mxu0 0.0
      %603 = vmatprep.subr.mxu0 0.0
      %604 = vmatpush2.msra.mxu0 0.0
      %605 = vmatprep.subr.mxu0 0.0
      %606 = vmatpush2.msra.mxu0 0.0
      %607 = vmatprep.subr.mxu0 0.0
      %608 = vmatpush2.msra.mxu0 0.0
      %609 = vmatprep.subr.mxu0 0.0
      %610 = vmatpush2.msra.mxu0 0.0
      %611 = vmatprep.subr.mxu0 0.0
      %612 = vmatpush2.msra.mxu0 0.0
      %613 = vmatprep.subr.mxu0 0.0
      %614 = vmatpush2.msra.mxu0 0.0
      %615 = vmatprep.subr.mxu0 0.0
      %616 = vmatpush2.msra.mxu0 0.0
      %617 = vmatprep.subr.mxu0 0.0
      %618 = vmatpush2.msra.mxu0 0.0
      %619 = vmatprep.subr.mxu0 0.0
      %620 = vmatpush2.msra.mxu0 0.0
      %621 = vmatprep.subr.mxu0 0.0
      %622 = vmatpush2.msra.mxu0 0.0
      %623 = vmatprep.subr.mxu0 0.0
      %624 = vmatpush2.msra.mxu0 0.0
      %625 = vmatprep.mubr.f32.mxu0 0.0
      %626 = vmatmul.mubr.f32.gmra.mxu0 %v382
      %v627 = vpop.f32.mrf.mxu0
      %v628 = vadd.f32 0.0, %v627
      %v629 = vpop.f32.mrf.mxu0
      %v630 = vadd.f32 0.0, %v629
      %631 = vmatprep.mubr.f32.mxu0 0.0
      %632 = vmatmul.mubr.f32.gmra.mxu0 %v385
      %v633 = vpop.f32.mrf.mxu0
      %v634 = vadd.f32 0.0, %v633
      %v635 = vpop.f32.mrf.mxu0
      %v636 = vadd.f32 0.0, %v635
      %637 = vdwg.mxu0
      %638 = vmatprep.subr.mxu0 0.0
      %639 = vmatpush1.msra.mxu0 0.0
      %640 = vmatprep.subr.mxu0 0.0
      %641 = vmatpush1.msra.mxu0 0.0
      %642 = vmatprep.subr.mxu0 0.0
      %643 = vmatpush1.msra.mxu0 0.0
      %644 = vmatprep.subr.mxu0 0.0
      %645 = vmatpush1.msra.mxu0 0.0
      %646 = vmatprep.subr.mxu0 0.0
      %647 = vmatpush1.msra.mxu0 0.0
      %648 = vmatprep.subr.mxu0 0.0
      %649 = vmatpush1.msra.mxu0 0.0
      %650 = vmatprep.subr.mxu0 0.0
      %651 = vmatpush1.msra.mxu0 0.0
      %652 = vmatprep.subr.mxu0 0.0
      %653 = vmatpush1.msra.mxu0 0.0
      %654 = vmatprep.subr.mxu0 0.0
      %655 = vmatpush1.msra.mxu0 0.0
      %656 = vmatprep.subr.mxu0 0.0
      %657 = vmatpush1.msra.mxu0 0.0
      %658 = vmatprep.subr.mxu0 0.0
      %659 = vmatpush1.msra.mxu0 0.0
      %660 = vmatprep.subr.mxu0 0.0
      %661 = vmatpush1.msra.mxu0 0.0
      %662 = vmatprep.subr.mxu0 %v404
      %663 = vmatpush1.msra.mxu0 %v401
      %664 = vmatprep.subr.mxu0 %v321
      %665 = vmatpush1.msra.mxu0 %v320
      %666 = vmatprep.subr.mxu0 %v289
      %667 = vmatpush1.msra.mxu0 %v288
      %668 = vmatprep.subr.mxu0 %v257
      %669 = vmatpush1.msra.mxu0 %v256
      %670 = vmatprep.subr.mxu0 0.0
      %671 = vmatpush2.msra.mxu0 0.0
      %672 = vmatprep.subr.mxu0 0.0
      %673 = vmatpush2.msra.mxu0 0.0
      %674 = vmatprep.subr.mxu0 0.0
      %675 = vmatpush2.msra.mxu0 0.0
      %676 = vmatprep.subr.mxu0 0.0
      %677 = vmatpush2.msra.mxu0 0.0
      %678 = vmatprep.subr.mxu0 0.0
      %679 = vmatpush2.msra.mxu0 0.0
      %680 = vmatprep.subr.mxu0 0.0
      %681 = vmatpush2.msra.mxu0 0.0
      %682 = vmatprep.subr.mxu0 0.0
      %683 = vmatpush2.msra.mxu0 0.0
      %684 = vmatprep.subr.mxu0 0.0
      %685 = vmatpush2.msra.mxu0 0.0
      %686 = vmatprep.subr.mxu0 0.0
      %687 = vmatpush2.msra.mxu0 0.0
      %688 = vmatprep.subr.mxu0 0.0
      %689 = vmatpush2.msra.mxu0 0.0
      %690 = vmatprep.subr.mxu0 0.0
      %691 = vmatpush2.msra.mxu0 0.0
      %692 = vmatprep.subr.mxu0 0.0
      %693 = vmatpush2.msra.mxu0 0.0
      %694 = vmatprep.subr.mxu0 0.0
      %695 = vmatpush2.msra.mxu0 0.0
      %696 = vmatprep.subr.mxu0 0.0
      %697 = vmatpush2.msra.mxu0 0.0
      %698 = vmatprep.subr.mxu0 0.0
      %699 = vmatpush2.msra.mxu0 0.0
      %700 = vmatprep.subr.mxu0 0.0
      %701 = vmatpush2.msra.mxu0 0.0
      %702 = vmatprep.mubr.f32.mxu0 0.0
      %703 = vmatmul.mubr.f32.gmra.mxu0 %v382
      %v704 = vpop.f32.mrf.mxu0
      %v705 = vadd.f32 0.0, %v704
      %v706 = vpop.f32.mrf.mxu0
      %v707 = vadd.f32 0.0, %v706
      %708 = vmatprep.mubr.f32.mxu0 0.0
      %709 = vmatmul.mubr.f32.gmra.mxu0 %v385
      %v710 = vpop.f32.mrf.mxu0
      %v711 = vadd.f32 0.0, %v710
      %v712 = vpop.f32.mrf.mxu0
      %v713 = vadd.f32 0.0, %v712
      %714 = vdwg.mxu0
      %715 = vmatprep.subr.mxu0 0.0
      %716 = vmatpush1.msra.mxu0 0.0
      %717 = vmatprep.subr.mxu0 0.0
      %718 = vmatpush1.msra.mxu0 0.0
      %719 = vmatprep.subr.mxu0 0.0
      %720 = vmatpush1.msra.mxu0 0.0
      %721 = vmatprep.subr.mxu0 0.0
      %722 = vmatpush1.msra.mxu0 0.0
      %723 = vmatprep.subr.mxu0 0.0
      %724 = vmatpush1.msra.mxu0 0.0
      %725 = vmatprep.subr.mxu0 0.0
      %726 = vmatpush1.msra.mxu0 0.0
      %727 = vmatprep.subr.mxu0 0.0
      %728 = vmatpush1.msra.mxu0 0.0
      %729 = vmatprep.subr.mxu0 0.0
      %730 = vmatpush1.msra.mxu0 0.0
      %731 = vmatprep.subr.mxu0 0.0
      %732 = vmatpush1.msra.mxu0 0.0
      %733 = vmatprep.subr.mxu0 0.0
      %734 = vmatpush1.msra.mxu0 0.0
      %735 = vmatprep.subr.mxu0 0.0
      %736 = vmatpush1.msra.mxu0 0.0
      %737 = vmatprep.subr.mxu0 0.0
      %738 = vmatpush1.msra.mxu0 0.0
      %739 = vmatprep.subr.mxu0 %v410
      %740 = vmatpush1.msra.mxu0 %v407
      %741 = vmatprep.subr.mxu0 %v323
      %742 = vmatpush1.msra.mxu0 %v322
      %743 = vmatprep.subr.mxu0 %v291
      %744 = vmatpush1.msra.mxu0 %v290
      %745 = vmatprep.subr.mxu0 %v259
      %746 = vmatpush1.msra.mxu0 %v258
      %747 = vmatprep.subr.mxu0 0.0
      %748 = vmatpush2.msra.mxu0 0.0
      %749 = vmatprep.subr.mxu0 0.0
      %750 = vmatpush2.msra.mxu0 0.0
      %751 = vmatprep.subr.mxu0 0.0
      %752 = vmatpush2.msra.mxu0 0.0
      %753 = vmatprep.subr.mxu0 0.0
      %754 = vmatpush2.msra.mxu0 0.0
      %755 = vmatprep.subr.mxu0 0.0
      %756 = vmatpush2.msra.mxu0 0.0
      %757 = vmatprep.subr.mxu0 0.0
      %758 = vmatpush2.msra.mxu0 0.0
      %759 = vmatprep.subr.mxu0 0.0
      %760 = vmatpush2.msra.mxu0 0.0
      %761 = vmatprep.subr.mxu0 0.0
      %762 = vmatpush2.msra.mxu0 0.0
      %763 = vmatprep.subr.mxu0 0.0
      %764 = vmatpush2.msra.mxu0 0.0
      %765 = vmatprep.subr.mxu0 0.0
      %766 = vmatpush2.msra.mxu0 0.0
      %767 = vmatprep.subr.mxu0 0.0
      %768 = vmatpush2.msra.mxu0 0.0
      %769 = vmatprep.subr.mxu0 0.0
      %770 = vmatpush2.msra.mxu0 0.0
      %771 = vmatprep.subr.mxu0 0.0
      %772 = vmatpush2.msra.mxu0 0.0
      %773 = vmatprep.subr.mxu0 0.0
      %774 = vmatpush2.msra.mxu0 0.0
      %775 = vmatprep.subr.mxu0 0.0
      %776 = vmatpush2.msra.mxu0 0.0
      %777 = vmatprep.subr.mxu0 0.0
      %778 = vmatpush2.msra.mxu0 0.0
      %779 = vmatprep.mubr.f32.mxu0 0.0
      %780 = vmatmul.mubr.f32.gmra.mxu0 %v382
      %v781 = vpop.f32.mrf.mxu0
      %v782 = vadd.f32 0.0, %v781
      %v783 = vpop.f32.mrf.mxu0
      %v784 = vadd.f32 0.0, %v783
      %785 = vmatprep.mubr.f32.mxu0 0.0
      %786 = vmatmul.mubr.f32.gmra.mxu0 %v385
      %v787 = vpop.f32.mrf.mxu0
      %v788 = vadd.f32 0.0, %v787
      %v789 = vpop.f32.mrf.mxu0
      %v790 = vadd.f32 0.0, %v789
      %791 = vdwg.mxu0
      %792 = vmatprep.subr.mxu0 0.0
      %793 = vmatpush1.msra.mxu0 0.0
      %794 = vmatprep.subr.mxu0 0.0
      %795 = vmatpush1.msra.mxu0 0.0
      %796 = vmatprep.subr.mxu0 0.0
      %797 = vmatpush1.msra.mxu0 0.0
      %798 = vmatprep.subr.mxu0 0.0
      %799 = vmatpush1.msra.mxu0 0.0
      %800 = vmatprep.subr.mxu0 0.0
      %801 = vmatpush1.msra.mxu0 0.0
      %802 = vmatprep.subr.mxu0 0.0
      %803 = vmatpush1.msra.mxu0 0.0
      %804 = vmatprep.subr.mxu0 0.0
      %805 = vmatpush1.msra.mxu0 0.0
      %806 = vmatprep.subr.mxu0 0.0
      %807 = vmatpush1.msra.mxu0 0.0
      %808 = vmatprep.subr.mxu0 0.0
      %809 = vmatpush1.msra.mxu0 0.0
      %810 = vmatprep.subr.mxu0 0.0
      %811 = vmatpush1.msra.mxu0 0.0
      %812 = vmatprep.subr.mxu0 0.0
      %813 = vmatpush1.msra.mxu0 0.0
      %814 = vmatprep.subr.mxu0 0.0
      %815 = vmatpush1.msra.mxu0 0.0
      %816 = vmatprep.subr.mxu0 %v416
      %817 = vmatpush1.msra.mxu0 %v413
      %818 = vmatprep.subr.mxu0 %v325
      %819 = vmatpush1.msra.mxu0 %v324
      %820 = vmatprep.subr.mxu0 %v293
      %821 = vmatpush1.msra.mxu0 %v292
      %822 = vmatprep.subr.mxu0 %v261
      %823 = vmatpush1.msra.mxu0 %v260
      %824 = vmatprep.subr.mxu0 0.0
      %825 = vmatpush2.msra.mxu0 0.0
      %826 = vmatprep.subr.mxu0 0.0
      %827 = vmatpush2.msra.mxu0 0.0
      %828 = vmatprep.subr.mxu0 0.0
      %829 = vmatpush2.msra.mxu0 0.0
      %830 = vmatprep.subr.mxu0 0.0
      %831 = vmatpush2.msra.mxu0 0.0
      %832 = vmatprep.subr.mxu0 0.0
      %833 = vmatpush2.msra.mxu0 0.0
      %834 = vmatprep.subr.mxu0 0.0
      %835 = vmatpush2.msra.mxu0 0.0
      %836 = vmatprep.subr.mxu0 0.0
      %837 = vmatpush2.msra.mxu0 0.0
      %838 = vmatprep.subr.mxu0 0.0
      %839 = vmatpush2.msra.mxu0 0.0
      %840 = vmatprep.subr.mxu0 0.0
      %841 = vmatpush2.msra.mxu0 0.0
      %842 = vmatprep.subr.mxu0 0.0
      %843 = vmatpush2.msra.mxu0 0.0
      %844 = vmatprep.subr.mxu0 0.0
      %845 = vmatpush2.msra.mxu0 0.0
      %846 = vmatprep.subr.mxu0 0.0
      %847 = vmatpush2.msra.mxu0 0.0
      %848 = vmatprep.subr.mxu0 0.0
      %849 = vmatpush2.msra.mxu0 0.0
      %850 = vmatprep.subr.mxu0 0.0
      %851 = vmatpush2.msra.mxu0 0.0
      %852 = vmatprep.subr.mxu0 0.0
      %853 = vmatpush2.msra.mxu0 0.0
      %854 = vmatprep.subr.mxu0 0.0
      %855 = vmatpush2.msra.mxu0 0.0
      %856 = vmatprep.mubr.f32.mxu0 0.0
      %857 = vmatmul.mubr.f32.gmra.mxu0 %v382
      %v858 = vpop.f32.mrf.mxu0
      %v859 = vadd.f32 0.0, %v858
      %v860 = vpop.f32.mrf.mxu0
      %v861 = vadd.f32 0.0, %v860
      %862 = vmatprep.mubr.f32.mxu0 0.0
      %863 = vmatmul.mubr.f32.gmra.mxu0 %v385
      %v864 = vpop.f32.mrf.mxu0
      %v865 = vadd.f32 0.0, %v864
      %v866 = vpop.f32.mrf.mxu0
      %v867 = vadd.f32 0.0, %v866
      %868 = vdwg.mxu0
      %869 = vmatprep.subr.mxu0 0.0
      %870 = vmatpush1.msra.mxu0 0.0
      %871 = vmatprep.subr.mxu0 0.0
      %872 = vmatpush1.msra.mxu0 0.0
      %873 = vmatprep.subr.mxu0 0.0
      %874 = vmatpush1.msra.mxu0 0.0
      %875 = vmatprep.subr.mxu0 0.0
      %876 = vmatpush1.msra.mxu0 0.0
      %877 = vmatprep.subr.mxu0 0.0
      %878 = vmatpush1.msra.mxu0 0.0
      %879 = vmatprep.subr.mxu0 0.0
      %880 = vmatpush1.msra.mxu0 0.0
      %881 = vmatprep.subr.mxu0 0.0
      %882 = vmatpush1.msra.mxu0 0.0
      %883 = vmatprep.subr.mxu0 0.0
      %884 = vmatpush1.msra.mxu0 0.0
      %885 = vmatprep.subr.mxu0 0.0
      %886 = vmatpush1.msra.mxu0 0.0
      %887 = vmatprep.subr.mxu0 0.0
      %888 = vmatpush1.msra.mxu0 0.0
      %889 = vmatprep.subr.mxu0 0.0
      %890 = vmatpush1.msra.mxu0 0.0
      %891 = vmatprep.subr.mxu0 0.0
      %892 = vmatpush1.msra.mxu0 0.0
      %893 = vmatprep.subr.mxu0 %v422
      %894 = vmatpush1.msra.mxu0 %v419
      %895 = vmatprep.subr.mxu0 %v327
      %896 = vmatpush1.msra.mxu0 %v326
      %897 = vmatprep.subr.mxu0 %v295
      %898 = vmatpush1.msra.mxu0 %v294
      %899 = vmatprep.subr.mxu0 %v263
      %900 = vmatpush1.msra.mxu0 %v262
      %901 = vmatprep.subr.mxu0 0.0
      %902 = vmatpush2.msra.mxu0 0.0
      %903 = vmatprep.subr.mxu0 0.0
      %904 = vmatpush2.msra.mxu0 0.0
      %905 = vmatprep.subr.mxu0 0.0
      %906 = vmatpush2.msra.mxu0 0.0
      %907 = vmatprep.subr.mxu0 0.0
      %908 = vmatpush2.msra.mxu0 0.0
      %909 = vmatprep.subr.mxu0 0.0
      %910 = vmatpush2.msra.mxu0 0.0
      %911 = vmatprep.subr.mxu0 0.0
      %912 = vmatpush2.msra.mxu0 0.0
      %913 = vmatprep.subr.mxu0 0.0
      %914 = vmatpush2.msra.mxu0 0.0
      %915 = vmatprep.subr.mxu0 0.0
      %916 = vmatpush2.msra.mxu0 0.0
      %917 = vmatprep.subr.mxu0 0.0
      %918 = vmatpush2.msra.mxu0 0.0
      %919 = vmatprep.subr.mxu0 0.0
      %920 = vmatpush2.msra.mxu0 0.0
      %921 = vmatprep.subr.mxu0 0.0
      %922 = vmatpush2.msra.mxu0 0.0
      %923 = vmatprep.subr.mxu0 0.0
      %924 = vmatpush2.msra.mxu0 0.0
      %925 = vmatprep.subr.mxu0 0.0
      %926 = vmatpush2.msra.mxu0 0.0
      %927 = vmatprep.subr.mxu0 0.0
      %928 = vmatpush2.msra.mxu0 0.0
      %929 = vmatprep.subr.mxu0 0.0
      %930 = vmatpush2.msra.mxu0 0.0
      %931 = vmatprep.subr.mxu0 0.0
      %932 = vmatpush2.msra.mxu0 0.0
      %933 = vmatprep.mubr.f32.mxu0 0.0
      %934 = vmatmul.mubr.f32.gmra.mxu0 %v382
      %v935 = vpop.f32.mrf.mxu0
      %v936 = vadd.f32 0.0, %v935
      %v937 = vpop.f32.mrf.mxu0
      %v938 = vadd.f32 0.0, %v937
      %939 = vmatprep.mubr.f32.mxu0 0.0
      %940 = vmatmul.mubr.f32.gmra.mxu0 %v385
      %v941 = vpop.f32.mrf.mxu0
      %v942 = vadd.f32 0.0, %v941
      %v943 = vpop.f32.mrf.mxu0
      %v944 = vadd.f32 0.0, %v943
      %945 = vdwg.mxu0
      %946 = vmatprep.subr.mxu0 0.0
      %947 = vmatpush1.msra.mxu0 0.0
      %948 = vmatprep.subr.mxu0 0.0
      %949 = vmatpush1.msra.mxu0 0.0
      %950 = vmatprep.subr.mxu0 0.0
      %951 = vmatpush1.msra.mxu0 0.0
      %952 = vmatprep.subr.mxu0 0.0
      %953 = vmatpush1.msra.mxu0 0.0
      %954 = vmatprep.subr.mxu0 0.0
      %955 = vmatpush1.msra.mxu0 0.0
      %956 = vmatprep.subr.mxu0 0.0
      %957 = vmatpush1.msra.mxu0 0.0
      %958 = vmatprep.subr.mxu0 0.0
      %959 = vmatpush1.msra.mxu0 0.0
      %960 = vmatprep.subr.mxu0 0.0
      %961 = vmatpush1.msra.mxu0 0.0
      %962 = vmatprep.subr.mxu0 0.0
      %963 = vmatpush1.msra.mxu0 0.0
      %964 = vmatprep.subr.mxu0 0.0
      %965 = vmatpush1.msra.mxu0 0.0
      %966 = vmatprep.subr.mxu0 0.0
      %967 = vmatpush1.msra.mxu0 0.0
      %968 = vmatprep.subr.mxu0 0.0
      %969 = vmatpush1.msra.mxu0 0.0
      %970 = vmatprep.subr.mxu0 %v428
      %971 = vmatpush1.msra.mxu0 %v425
      %972 = vmatprep.subr.mxu0 %v329
      %973 = vmatpush1.msra.mxu0 %v328
      %974 = vmatprep.subr.mxu0 %v297
      %975 = vmatpush1.msra.mxu0 %v296
      %976 = vmatprep.subr.mxu0 %v265
      %977 = vmatpush1.msra.mxu0 %v264
      %978 = vmatprep.subr.mxu0 0.0
      %979 = vmatpush2.msra.mxu0 0.0
      %980 = vmatprep.subr.mxu0 0.0
      %981 = vmatpush2.msra.mxu0 0.0
      %982 = vmatprep.subr.mxu0 0.0
      %983 = vmatpush2.msra.mxu0 0.0
      %984 = vmatprep.subr.mxu0 0.0
      %985 = vmatpush2.msra.mxu0 0.0
      %986 = vmatprep.subr.mxu0 0.0
      %987 = vmatpush2.msra.mxu0 0.0
      %988 = vmatprep.subr.mxu0 0.0
      %989 = vmatpush2.msra.mxu0 0.0
      %990 = vmatprep.subr.mxu0 0.0
      %991 = vmatpush2.msra.mxu0 0.0
      %992 = vmatprep.subr.mxu0 0.0
      %993 = vmatpush2.msra.mxu0 0.0
      %994 = vmatprep.subr.mxu0 0.0
      %995 = vmatpush2.msra.mxu0 0.0
      %996 = vmatprep.subr.mxu0 0.0
      %997 = vmatpush2.msra.mxu0 0.0
      %998 = vmatprep.subr.mxu0 0.0
      %999 = vmatpush2.msra.mxu0 0.0
      %1000 = vmatprep.subr.mxu0 0.0
      %1001 = vmatpush2.msra.mxu0 0.0
      %1002 = vmatprep.subr.mxu0 0.0
      %1003 = vmatpush2.msra.mxu0 0.0
      %1004 = vmatprep.subr.mxu0 0.0
      %1005 = vmatpush2.msra.mxu0 0.0
      %1006 = vmatprep.subr.mxu0 0.0
      %1007 = vmatpush2.msra.mxu0 0.0
      %1008 = vmatprep.subr.mxu0 0.0
      %1009 = vmatpush2.msra.mxu0 0.0
      %1010 = vmatprep.mubr.f32.mxu0 0.0
      %1011 = vmatmul.mubr.f32.gmra.mxu0 %v382
      %v1012 = vpop.f32.mrf.mxu0
      %v1013 = vadd.f32 0.0, %v1012
      %v1014 = vpop.f32.mrf.mxu0
      %v1015 = vadd.f32 0.0, %v1014
      %1016 = vmatprep.mubr.f32.mxu0 0.0
      %1017 = vmatmul.mubr.f32.gmra.mxu0 %v385
      %v1018 = vpop.f32.mrf.mxu0
      %v1019 = vadd.f32 0.0, %v1018
      %v1020 = vpop.f32.mrf.mxu0
      %v1021 = vadd.f32 0.0, %v1020
      %1022 = vdwg.mxu0
      %1023 = vmatprep.subr.mxu0 0.0
      %1024 = vmatpush1.msra.mxu0 0.0
      %1025 = vmatprep.subr.mxu0 0.0
      %1026 = vmatpush1.msra.mxu0 0.0
      %1027 = vmatprep.subr.mxu0 0.0
      %1028 = vmatpush1.msra.mxu0 0.0
      %1029 = vmatprep.subr.mxu0 0.0
      %1030 = vmatpush1.msra.mxu0 0.0
      %1031 = vmatprep.subr.mxu0 0.0
      %1032 = vmatpush1.msra.mxu0 0.0
      %1033 = vmatprep.subr.mxu0 0.0
      %1034 = vmatpush1.msra.mxu0 0.0
      %1035 = vmatprep.subr.mxu0 0.0
      %1036 = vmatpush1.msra.mxu0 0.0
      %1037 = vmatprep.subr.mxu0 0.0
      %1038 = vmatpush1.msra.mxu0 0.0
      %1039 = vmatprep.subr.mxu0 0.0
      %1040 = vmatpush1.msra.mxu0 0.0
      %1041 = vmatprep.subr.mxu0 0.0
      %1042 = vmatpush1.msra.mxu0 0.0
      %1043 = vmatprep.subr.mxu0 0.0
      %1044 = vmatpush1.msra.mxu0 0.0
      %1045 = vmatprep.subr.mxu0 0.0
      %1046 = vmatpush1.msra.mxu0 0.0
      %1047 = vmatprep.subr.mxu0 %v434
      %1048 = vmatpush1.msra.mxu0 %v431
      %1049 = vmatprep.subr.mxu0 %v331
      %1050 = vmatpush1.msra.mxu0 %v330
      %1051 = vmatprep.subr.mxu0 %v299
      %1052 = vmatpush1.msra.mxu0 %v298
      %1053 = vmatprep.subr.mxu0 %v267
      %1054 = vmatpush1.msra.mxu0 %v266
      %1055 = vmatprep.subr.mxu0 0.0
      %1056 = vmatpush2.msra.mxu0 0.0
      %1057 = vmatprep.subr.mxu0 0.0
      %1058 = vmatpush2.msra.mxu0 0.0
      %1059 = vmatprep.subr.mxu0 0.0
      %1060 = vmatpush2.msra.mxu0 0.0
      %1061 = vmatprep.subr.mxu0 0.0
      %1062 = vmatpush2.msra.mxu0 0.0
      %1063 = vmatprep.subr.mxu0 0.0
      %1064 = vmatpush2.msra.mxu0 0.0
      %1065 = vmatprep.subr.mxu0 0.0
      %1066 = vmatpush2.msra.mxu0 0.0
      %1067 = vmatprep.subr.mxu0 0.0
      %1068 = vmatpush2.msra.mxu0 0.0
      %1069 = vmatprep.subr.mxu0 0.0
      %1070 = vmatpush2.msra.mxu0 0.0
      %1071 = vmatprep.subr.mxu0 0.0
      %1072 = vmatpush2.msra.mxu0 0.0
      %1073 = vmatprep.subr.mxu0 0.0
      %1074 = vmatpush2.msra.mxu0 0.0
      %1075 = vmatprep.subr.mxu0 0.0
      %1076 = vmatpush2.msra.mxu0 0.0
      %1077 = vmatprep.subr.mxu0 0.0
      %1078 = vmatpush2.msra.mxu0 0.0
      %1079 = vmatprep.subr.mxu0 0.0
      %1080 = vmatpush2.msra.mxu0 0.0
      %1081 = vmatprep.subr.mxu0 0.0
      %1082 = vmatpush2.msra.mxu0 0.0
      %1083 = vmatprep.subr.mxu0 0.0
      %1084 = vmatpush2.msra.mxu0 0.0
      %1085 = vmatprep.subr.mxu0 0.0
      %1086 = vmatpush2.msra.mxu0 0.0
      %1087 = vmatprep.mubr.f32.mxu0 0.0
      %1088 = vmatmul.mubr.f32.gmra.mxu0 %v382
      %v1089 = vpop.f32.mrf.mxu0
      %v1090 = vadd.f32 0.0, %v1089
      %v1091 = vpop.f32.mrf.mxu0
      %v1092 = vadd.f32 0.0, %v1091
      %1093 = vmatprep.mubr.f32.mxu0 0.0
      %1094 = vmatmul.mubr.f32.gmra.mxu0 %v385
      %v1095 = vpop.f32.mrf.mxu0
      %v1096 = vadd.f32 0.0, %v1095
      %v1097 = vpop.f32.mrf.mxu0
      %v1098 = vadd.f32 0.0, %v1097
      %1099 = vdwg.mxu0
      %1100 = vmatprep.subr.mxu0 0.0
      %1101 = vmatpush1.msra.mxu0 0.0
      %1102 = vmatprep.subr.mxu0 0.0
      %1103 = vmatpush1.msra.mxu0 0.0
      %1104 = vmatprep.subr.mxu0 0.0
      %1105 = vmatpush1.msra.mxu0 0.0
      %1106 = vmatprep.subr.mxu0 0.0
      %1107 = vmatpush1.msra.mxu0 0.0
      %1108 = vmatprep.subr.mxu0 0.0
      %1109 = vmatpush1.msra.mxu0 0.0
      %1110 = vmatprep.subr.mxu0 0.0
      %1111 = vmatpush1.msra.mxu0 0.0
      %1112 = vmatprep.subr.mxu0 0.0
      %1113 = vmatpush1.msra.mxu0 0.0
      %1114 = vmatprep.subr.mxu0 0.0
      %1115 = vmatpush1.msra.mxu0 0.0
      %1116 = vmatprep.subr.mxu0 0.0
      %1117 = vmatpush1.msra.mxu0 0.0
      %1118 = vmatprep.subr.mxu0 0.0
      %1119 = vmatpush1.msra.mxu0 0.0
      %1120 = vmatprep.subr.mxu0 0.0
      %1121 = vmatpush1.msra.mxu0 0.0
      %1122 = vmatprep.subr.mxu0 0.0
      %1123 = vmatpush1.msra.mxu0 0.0
      %1124 = vmatprep.subr.mxu0 %v440
      %1125 = vmatpush1.msra.mxu0 %v437
      %1126 = vmatprep.subr.mxu0 %v333
      %1127 = vmatpush1.msra.mxu0 %v332
      %1128 = vmatprep.subr.mxu0 %v301
      %1129 = vmatpush1.msra.mxu0 %v300
      %1130 = vmatprep.subr.mxu0 %v269
      %1131 = vmatpush1.msra.mxu0 %v268
      %1132 = vmatprep.subr.mxu0 0.0
      %1133 = vmatpush2.msra.mxu0 0.0
      %1134 = vmatprep.subr.mxu0 0.0
      %1135 = vmatpush2.msra.mxu0 0.0
      %1136 = vmatprep.subr.mxu0 0.0
      %1137 = vmatpush2.msra.mxu0 0.0
      %1138 = vmatprep.subr.mxu0 0.0
      %1139 = vmatpush2.msra.mxu0 0.0
      %1140 = vmatprep.subr.mxu0 0.0
      %1141 = vmatpush2.msra.mxu0 0.0
      %1142 = vmatprep.subr.mxu0 0.0
      %1143 = vmatpush2.msra.mxu0 0.0
      %1144 = vmatprep.subr.mxu0 0.0
      %1145 = vmatpush2.msra.mxu0 0.0
      %1146 = vmatprep.subr.mxu0 0.0
      %1147 = vmatpush2.msra.mxu0 0.0
      %1148 = vmatprep.subr.mxu0 0.0
      %1149 = vmatpush2.msra.mxu0 0.0
      %1150 = vmatprep.subr.mxu0 0.0
      %1151 = vmatpush2.msra.mxu0 0.0
      %1152 = vmatprep.subr.mxu0 0.0
      %1153 = vmatpush2.msra.mxu0 0.0
      %1154 = vmatprep.subr.mxu0 0.0
      %1155 = vmatpush2.msra.mxu0 0.0
      %1156 = vmatprep.subr.mxu0 0.0
      %1157 = vmatpush2.msra.mxu0 0.0
      %1158 = vmatprep.subr.mxu0 0.0
      %1159 = vmatpush2.msra.mxu0 0.0
      %1160 = vmatprep.subr.mxu0 0.0
      %1161 = vmatpush2.msra.mxu0 0.0
      %1162 = vmatprep.subr.mxu0 0.0
      %1163 = vmatpush2.msra.mxu0 0.0
      %1164 = vmatprep.mubr.f32.mxu0 0.0
      %1165 = vmatmul.mubr.f32.gmra.mxu0 %v382
      %v1166 = vpop.f32.mrf.mxu0
      %v1167 = vadd.f32 0.0, %v1166
      %v1168 = vpop.f32.mrf.mxu0
      %v1169 = vadd.f32 0.0, %v1168
      %1170 = vmatprep.mubr.f32.mxu0 0.0
      %1171 = vmatmul.mubr.f32.gmra.mxu0 %v385
      %v1172 = vpop.f32.mrf.mxu0
      %v1173 = vadd.f32 0.0, %v1172
      %v1174 = vpop.f32.mrf.mxu0
      %v1175 = vadd.f32 0.0, %v1174
      %1176 = vdwg.mxu0
      %1177 = vmatprep.subr.mxu0 0.0
      %1178 = vmatpush1.msra.mxu0 0.0
      %1179 = vmatprep.subr.mxu0 0.0
      %1180 = vmatpush1.msra.mxu0 0.0
      %1181 = vmatprep.subr.mxu0 0.0
      %1182 = vmatpush1.msra.mxu0 0.0
      %1183 = vmatprep.subr.mxu0 0.0
      %1184 = vmatpush1.msra.mxu0 0.0
      %1185 = vmatprep.subr.mxu0 0.0
      %1186 = vmatpush1.msra.mxu0 0.0
      %1187 = vmatprep.subr.mxu0 0.0
      %1188 = vmatpush1.msra.mxu0 0.0
      %1189 = vmatprep.subr.mxu0 0.0
      %1190 = vmatpush1.msra.mxu0 0.0
      %1191 = vmatprep.subr.mxu0 0.0
      %1192 = vmatpush1.msra.mxu0 0.0
      %1193 = vmatprep.subr.mxu0 0.0
      %1194 = vmatpush1.msra.mxu0 0.0
      %1195 = vmatprep.subr.mxu0 0.0
      %1196 = vmatpush1.msra.mxu0 0.0
      %1197 = vmatprep.subr.mxu0 0.0
      %1198 = vmatpush1.msra.mxu0 0.0
      %1199 = vmatprep.subr.mxu0 0.0
      %1200 = vmatpush1.msra.mxu0 0.0
      %1201 = vmatprep.subr.mxu0 %v446
      %1202 = vmatpush1.msra.mxu0 %v443
      %1203 = vmatprep.subr.mxu0 %v335
      %1204 = vmatpush1.msra.mxu0 %v334
      %1205 = vmatprep.subr.mxu0 %v303
      %1206 = vmatpush1.msra.mxu0 %v302
      %1207 = vmatprep.subr.mxu0 %v271
      %1208 = vmatpush1.msra.mxu0 %v270
      %1209 = vmatprep.subr.mxu0 0.0
      %1210 = vmatpush2.msra.mxu0 0.0
      %1211 = vmatprep.subr.mxu0 0.0
      %1212 = vmatpush2.msra.mxu0 0.0
      %1213 = vmatprep.subr.mxu0 0.0
      %1214 = vmatpush2.msra.mxu0 0.0
      %1215 = vmatprep.subr.mxu0 0.0
      %1216 = vmatpush2.msra.mxu0 0.0
      %1217 = vmatprep.subr.mxu0 0.0
      %1218 = vmatpush2.msra.mxu0 0.0
      %1219 = vmatprep.subr.mxu0 0.0
      %1220 = vmatpush2.msra.mxu0 0.0
      %1221 = vmatprep.subr.mxu0 0.0
      %1222 = vmatpush2.msra.mxu0 0.0
      %1223 = vmatprep.subr.mxu0 0.0
      %1224 = vmatpush2.msra.mxu0 0.0
      %1225 = vmatprep.subr.mxu0 0.0
      %1226 = vmatpush2.msra.mxu0 0.0
      %1227 = vmatprep.subr.mxu0 0.0
      %1228 = vmatpush2.msra.mxu0 0.0
      %1229 = vmatprep.subr.mxu0 0.0
      %1230 = vmatpush2.msra.mxu0 0.0
      %1231 = vmatprep.subr.mxu0 0.0
      %1232 = vmatpush2.msra.mxu0 0.0
      %1233 = vmatprep.subr.mxu0 0.0
      %1234 = vmatpush2.msra.mxu0 0.0
      %1235 = vmatprep.subr.mxu0 0.0
      %1236 = vmatpush2.msra.mxu0 0.0
      %1237 = vmatprep.subr.mxu0 0.0
      %1238 = vmatpush2.msra.mxu0 0.0
      %1239 = vmatprep.subr.mxu0 0.0
      %1240 = vmatpush2.msra.mxu0 0.0
      %1241 = vmatprep.mubr.f32.mxu0 0.0
      %1242 = vmatmul.mubr.f32.gmra.mxu0 %v382
      %v1243 = vpop.f32.mrf.mxu0
      %v1244 = vadd.f32 0.0, %v1243
      %v1245 = vpop.f32.mrf.mxu0
      %v1246 = vadd.f32 0.0, %v1245
      %1247 = vmatprep.mubr.f32.mxu0 0.0
      %1248 = vmatmul.mubr.f32.gmra.mxu0 %v385
      %v1249 = vpop.f32.mrf.mxu0
      %v1250 = vadd.f32 0.0, %v1249
      %v1251 = vpop.f32.mrf.mxu0
      %v1252 = vadd.f32 0.0, %v1251
      %1253 = vdwg.mxu0
      %1254 = vmatprep.subr.mxu0 0.0
      %1255 = vmatpush1.msra.mxu0 0.0
      %1256 = vmatprep.subr.mxu0 0.0
      %1257 = vmatpush1.msra.mxu0 0.0
      %1258 = vmatprep.subr.mxu0 0.0
      %1259 = vmatpush1.msra.mxu0 0.0
      %1260 = vmatprep.subr.mxu0 0.0
      %1261 = vmatpush1.msra.mxu0 0.0
      %1262 = vmatprep.subr.mxu0 0.0
      %1263 = vmatpush1.msra.mxu0 0.0
      %1264 = vmatprep.subr.mxu0 0.0
      %1265 = vmatpush1.msra.mxu0 0.0
      %1266 = vmatprep.subr.mxu0 0.0
      %1267 = vmatpush1.msra.mxu0 0.0
      %1268 = vmatprep.subr.mxu0 0.0
      %1269 = vmatpush1.msra.mxu0 0.0
      %1270 = vmatprep.subr.mxu0 0.0
      %1271 = vmatpush1.msra.mxu0 0.0
      %1272 = vmatprep.subr.mxu0 0.0
      %1273 = vmatpush1.msra.mxu0 0.0
      %1274 = vmatprep.subr.mxu0 0.0
      %1275 = vmatpush1.msra.mxu0 0.0
      %1276 = vmatprep.subr.mxu0 0.0
      %1277 = vmatpush1.msra.mxu0 0.0
      %1278 = vmatprep.subr.mxu0 %v452
      %1279 = vmatpush1.msra.mxu0 %v449
      %1280 = vmatprep.subr.mxu0 %v337
      %1281 = vmatpush1.msra.mxu0 %v336
      %1282 = vmatprep.subr.mxu0 %v305
      %1283 = vmatpush1.msra.mxu0 %v304
      %1284 = vmatprep.subr.mxu0 %v273
      %1285 = vmatpush1.msra.mxu0 %v272
      %1286 = vmatprep.subr.mxu0 0.0
      %1287 = vmatpush2.msra.mxu0 0.0
      %1288 = vmatprep.subr.mxu0 0.0
      %1289 = vmatpush2.msra.mxu0 0.0
      %1290 = vmatprep.subr.mxu0 0.0
      %1291 = vmatpush2.msra.mxu0 0.0
      %1292 = vmatprep.subr.mxu0 0.0
      %1293 = vmatpush2.msra.mxu0 0.0
      %1294 = vmatprep.subr.mxu0 0.0
      %1295 = vmatpush2.msra.mxu0 0.0
      %1296 = vmatprep.subr.mxu0 0.0
      %1297 = vmatpush2.msra.mxu0 0.0
      %1298 = vmatprep.subr.mxu0 0.0
      %1299 = vmatpush2.msra.mxu0 0.0
      %1300 = vmatprep.subr.mxu0 0.0
      %1301 = vmatpush2.msra.mxu0 0.0
      %1302 = vmatprep.subr.mxu0 0.0
      %1303 = vmatpush2.msra.mxu0 0.0
      %1304 = vmatprep.subr.mxu0 0.0
      %1305 = vmatpush2.msra.mxu0 0.0
      %1306 = vmatprep.subr.mxu0 0.0
      %1307 = vmatpush2.msra.mxu0 0.0
      %1308 = vmatprep.subr.mxu0 0.0
      %1309 = vmatpush2.msra.mxu0 0.0
      %1310 = vmatprep.subr.mxu0 0.0
      %1311 = vmatpush2.msra.mxu0 0.0
      %1312 = vmatprep.subr.mxu0 0.0
      %1313 = vmatpush2.msra.mxu0 0.0
      %1314 = vmatprep.subr.mxu0 0.0
      %1315 = vmatpush2.msra.mxu0 0.0
      %1316 = vmatprep.subr.mxu0 0.0
      %1317 = vmatpush2.msra.mxu0 0.0
      %1318 = vmatprep.mubr.f32.mxu0 0.0
      %1319 = vmatmul.mubr.f32.gmra.mxu0 %v382
      %v1320 = vpop.f32.mrf.mxu0
      %v1321 = vadd.f32 0.0, %v1320
      %v1322 = vpop.f32.mrf.mxu0
      %v1323 = vadd.f32 0.0, %v1322
      %1324 = vmatprep.mubr.f32.mxu0 0.0
      %1325 = vmatmul.mubr.f32.gmra.mxu0 %v385
      %v1326 = vpop.f32.mrf.mxu0
      %v1327 = vadd.f32 0.0, %v1326
      %v1328 = vpop.f32.mrf.mxu0
      %v1329 = vadd.f32 0.0, %v1328
      %1330 = vdwg.mxu0
      %1331 = vmatprep.subr.mxu0 0.0
      %1332 = vmatpush1.msra.mxu0 0.0
      %1333 = vmatprep.subr.mxu0 0.0
      %1334 = vmatpush1.msra.mxu0 0.0
      %1335 = vmatprep.subr.mxu0 0.0
      %1336 = vmatpush1.msra.mxu0 0.0
      %1337 = vmatprep.subr.mxu0 0.0
      %1338 = vmatpush1.msra.mxu0 0.0
      %1339 = vmatprep.subr.mxu0 0.0
      %1340 = vmatpush1.msra.mxu0 0.0
      %1341 = vmatprep.subr.mxu0 0.0
      %1342 = vmatpush1.msra.mxu0 0.0
      %1343 = vmatprep.subr.mxu0 0.0
      %1344 = vmatpush1.msra.mxu0 0.0
      %1345 = vmatprep.subr.mxu0 0.0
      %1346 = vmatpush1.msra.mxu0 0.0
      %1347 = vmatprep.subr.mxu0 0.0
      %1348 = vmatpush1.msra.mxu0 0.0
      %1349 = vmatprep.subr.mxu0 0.0
      %1350 = vmatpush1.msra.mxu0 0.0
      %1351 = vmatprep.subr.mxu0 0.0
      %1352 = vmatpush1.msra.mxu0 0.0
      %1353 = vmatprep.subr.mxu0 0.0
      %1354 = vmatpush1.msra.mxu0 0.0
      %1355 = vmatprep.subr.mxu0 %v458
      %1356 = vmatpush1.msra.mxu0 %v455
      %1357 = vmatprep.subr.mxu0 %v339
      %1358 = vmatpush1.msra.mxu0 %v338
      %1359 = vmatprep.subr.mxu0 %v307
      %1360 = vmatpush1.msra.mxu0 %v306
      %1361 = vmatprep.subr.mxu0 %v275
      %1362 = vmatpush1.msra.mxu0 %v274
      %1363 = vmatprep.subr.mxu0 0.0
      %1364 = vmatpush2.msra.mxu0 0.0
      %1365 = vmatprep.subr.mxu0 0.0
      %1366 = vmatpush2.msra.mxu0 0.0
      %1367 = vmatprep.subr.mxu0 0.0
      %1368 = vmatpush2.msra.mxu0 0.0
      %1369 = vmatprep.subr.mxu0 0.0
      %1370 = vmatpush2.msra.mxu0 0.0
      %1371 = vmatprep.subr.mxu0 0.0
      %1372 = vmatpush2.msra.mxu0 0.0
      %1373 = vmatprep.subr.mxu0 0.0
      %1374 = vmatpush2.msra.mxu0 0.0
      %1375 = vmatprep.subr.mxu0 0.0
      %1376 = vmatpush2.msra.mxu0 0.0
      %1377 = vmatprep.subr.mxu0 0.0
      %1378 = vmatpush2.msra.mxu0 0.0
      %1379 = vmatprep.subr.mxu0 0.0
      %1380 = vmatpush2.msra.mxu0 0.0
      %1381 = vmatprep.subr.mxu0 0.0
      %1382 = vmatpush2.msra.mxu0 0.0
      %1383 = vmatprep.subr.mxu0 0.0
      %1384 = vmatpush2.msra.mxu0 0.0
      %1385 = vmatprep.subr.mxu0 0.0
      %1386 = vmatpush2.msra.mxu0 0.0
      %1387 = vmatprep.subr.mxu0 0.0
      %1388 = vmatpush2.msra.mxu0 0.0
      %1389 = vmatprep.subr.mxu0 0.0
      %1390 = vmatpush2.msra.mxu0 0.0
      %1391 = vmatprep.subr.mxu0 0.0
      %1392 = vmatpush2.msra.mxu0 0.0
      %1393 = vmatprep.subr.mxu0 0.0
      %1394 = vmatpush2.msra.mxu0 0.0
      %1395 = vmatprep.mubr.f32.mxu0 0.0
      %1396 = vmatmul.mubr.f32.gmra.mxu0 %v382
      %v1397 = vpop.f32.mrf.mxu0
      %v1398 = vadd.f32 0.0, %v1397
      %v1399 = vpop.f32.mrf.mxu0
      %v1400 = vadd.f32 0.0, %v1399
      %1401 = vmatprep.mubr.f32.mxu0 0.0
      %1402 = vmatmul.mubr.f32.gmra.mxu0 %v385
      %v1403 = vpop.f32.mrf.mxu0
      %v1404 = vadd.f32 0.0, %v1403
      %v1405 = vpop.f32.mrf.mxu0
      %v1406 = vadd.f32 0.0, %v1405
      %1407 = vdwg.mxu0
      %1408 = vmatprep.subr.mxu0 0.0
      %1409 = vmatpush1.msra.mxu0 0.0
      %1410 = vmatprep.subr.mxu0 0.0
      %1411 = vmatpush1.msra.mxu0 0.0
      %1412 = vmatprep.subr.mxu0 0.0
      %1413 = vmatpush1.msra.mxu0 0.0
      %1414 = vmatprep.subr.mxu0 0.0
      %1415 = vmatpush1.msra.mxu0 0.0
      %1416 = vmatprep.subr.mxu0 0.0
      %1417 = vmatpush1.msra.mxu0 0.0
      %1418 = vmatprep.subr.mxu0 0.0
      %1419 = vmatpush1.msra.mxu0 0.0
      %1420 = vmatprep.subr.mxu0 0.0
      %1421 = vmatpush1.msra.mxu0 0.0
      %1422 = vmatprep.subr.mxu0 0.0
      %1423 = vmatpush1.msra.mxu0 0.0
      %1424 = vmatprep.subr.mxu0 0.0
      %1425 = vmatpush1.msra.mxu0 0.0
      %1426 = vmatprep.subr.mxu0 0.0
      %1427 = vmatpush1.msra.mxu0 0.0
      %1428 = vmatprep.subr.mxu0 0.0
      %1429 = vmatpush1.msra.mxu0 0.0
      %1430 = vmatprep.subr.mxu0 0.0
      %1431 = vmatpush1.msra.mxu0 0.0
      %1432 = vmatprep.subr.mxu0 %v464
      %1433 = vmatpush1.msra.mxu0 %v461
      %1434 = vmatprep.subr.mxu0 %v341
      %1435 = vmatpush1.msra.mxu0 %v340
      %1436 = vmatprep.subr.mxu0 %v309
      %1437 = vmatpush1.msra.mxu0 %v308
      %1438 = vmatprep.subr.mxu0 %v277
      %1439 = vmatpush1.msra.mxu0 %v276
      %1440 = vmatprep.subr.mxu0 0.0
      %1441 = vmatpush2.msra.mxu0 0.0
      %1442 = vmatprep.subr.mxu0 0.0
      %1443 = vmatpush2.msra.mxu0 0.0
      %1444 = vmatprep.subr.mxu0 0.0
      %1445 = vmatpush2.msra.mxu0 0.0
      %1446 = vmatprep.subr.mxu0 0.0
      %1447 = vmatpush2.msra.mxu0 0.0
      %1448 = vmatprep.subr.mxu0 0.0
      %1449 = vmatpush2.msra.mxu0 0.0
      %1450 = vmatprep.subr.mxu0 0.0
      %1451 = vmatpush2.msra.mxu0 0.0
      %1452 = vmatprep.subr.mxu0 0.0
      %1453 = vmatpush2.msra.mxu0 0.0
      %1454 = vmatprep.subr.mxu0 0.0
      %1455 = vmatpush2.msra.mxu0 0.0
      %1456 = vmatprep.subr.mxu0 0.0
      %1457 = vmatpush2.msra.mxu0 0.0
      %1458 = vmatprep.subr.mxu0 0.0
      %1459 = vmatpush2.msra.mxu0 0.0
      %1460 = vmatprep.subr.mxu0 0.0
      %1461 = vmatpush2.msra.mxu0 0.0
      %1462 = vmatprep.subr.mxu0 0.0
      %1463 = vmatpush2.msra.mxu0 0.0
      %1464 = vmatprep.subr.mxu0 0.0
      %1465 = vmatpush2.msra.mxu0 0.0
      %1466 = vmatprep.subr.mxu0 0.0
      %1467 = vmatpush2.msra.mxu0 0.0
      %1468 = vmatprep.subr.mxu0 0.0
      %1469 = vmatpush2.msra.mxu0 0.0
      %1470 = vmatprep.subr.mxu0 0.0
      %1471 = vmatpush2.msra.mxu0 0.0
      %1472 = vmatprep.mubr.f32.mxu0 0.0
      %1473 = vmatmul.mubr.f32.gmra.mxu0 %v382
      %v1474 = vpop.f32.mrf.mxu0
      %v1475 = vadd.f32 0.0, %v1474
      %v1476 = vpop.f32.mrf.mxu0
      %v1477 = vadd.f32 0.0, %v1476
      %1478 = vmatprep.mubr.f32.mxu0 0.0
      %1479 = vmatmul.mubr.f32.gmra.mxu0 %v385
      %v1480 = vpop.f32.mrf.mxu0
      %v1481 = vadd.f32 0.0, %v1480
      %v1482 = vpop.f32.mrf.mxu0
      %v1483 = vadd.f32 0.0, %v1482
      %1484 = vdwg.mxu0
      %1485 = vmatprep.subr.mxu0 0.0
      %1486 = vmatpush1.msra.mxu0 0.0
      %1487 = vmatprep.subr.mxu0 0.0
      %1488 = vmatpush1.msra.mxu0 0.0
      %1489 = vmatprep.subr.mxu0 0.0
      %1490 = vmatpush1.msra.mxu0 0.0
      %1491 = vmatprep.subr.mxu0 0.0
      %1492 = vmatpush1.msra.mxu0 0.0
      %1493 = vmatprep.subr.mxu0 0.0
      %1494 = vmatpush1.msra.mxu0 0.0
      %1495 = vmatprep.subr.mxu0 0.0
      %1496 = vmatpush1.msra.mxu0 0.0
      %1497 = vmatprep.subr.mxu0 0.0
      %1498 = vmatpush1.msra.mxu0 0.0
      %1499 = vmatprep.subr.mxu0 0.0
      %1500 = vmatpush1.msra.mxu0 0.0
      %1501 = vmatprep.subr.mxu0 0.0
      %1502 = vmatpush1.msra.mxu0 0.0
      %1503 = vmatprep.subr.mxu0 0.0
      %1504 = vmatpush1.msra.mxu0 0.0
      %1505 = vmatprep.subr.mxu0 0.0
      %1506 = vmatpush1.msra.mxu0 0.0
      %1507 = vmatprep.subr.mxu0 0.0
      %1508 = vmatpush1.msra.mxu0 0.0
      %1509 = vmatprep.subr.mxu0 %v470
      %1510 = vmatpush1.msra.mxu0 %v467
      %1511 = vmatprep.subr.mxu0 %v343
      %1512 = vmatpush1.msra.mxu0 %v342
      %1513 = vmatprep.subr.mxu0 %v311
      %1514 = vmatpush1.msra.mxu0 %v310
      %1515 = vmatprep.subr.mxu0 %v279
      %1516 = vmatpush1.msra.mxu0 %v278
      %1517 = vmatprep.subr.mxu0 0.0
      %1518 = vmatpush2.msra.mxu0 0.0
      %1519 = vmatprep.subr.mxu0 0.0
      %1520 = vmatpush2.msra.mxu0 0.0
      %1521 = vmatprep.subr.mxu0 0.0
      %1522 = vmatpush2.msra.mxu0 0.0
      %1523 = vmatprep.subr.mxu0 0.0
      %1524 = vmatpush2.msra.mxu0 0.0
      %1525 = vmatprep.subr.mxu0 0.0
      %1526 = vmatpush2.msra.mxu0 0.0
      %1527 = vmatprep.subr.mxu0 0.0
      %1528 = vmatpush2.msra.mxu0 0.0
      %1529 = vmatprep.subr.mxu0 0.0
      %1530 = vmatpush2.msra.mxu0 0.0
      %1531 = vmatprep.subr.mxu0 0.0
      %1532 = vmatpush2.msra.mxu0 0.0
      %1533 = vmatprep.subr.mxu0 0.0
      %1534 = vmatpush2.msra.mxu0 0.0
      %1535 = vmatprep.subr.mxu0 0.0
      %1536 = vmatpush2.msra.mxu0 0.0
      %1537 = vmatprep.subr.mxu0 0.0
      %1538 = vmatpush2.msra.mxu0 0.0
      %1539 = vmatprep.subr.mxu0 0.0
      %1540 = vmatpush2.msra.mxu0 0.0
      %1541 = vmatprep.subr.mxu0 0.0
      %1542 = vmatpush2.msra.mxu0 0.0
      %1543 = vmatprep.subr.mxu0 0.0
      %1544 = vmatpush2.msra.mxu0 0.0
      %1545 = vmatprep.subr.mxu0 0.0
      %1546 = vmatpush2.msra.mxu0 0.0
      %1547 = vmatprep.subr.mxu0 0.0
      %1548 = vmatpush2.msra.mxu0 0.0
      %1549 = vmatprep.mubr.f32.mxu0 0.0
      %1550 = vmatmul.mubr.f32.gmra.mxu0 %v382
      %v1551 = vpop.f32.mrf.mxu0
      %v1552 = vadd.f32 0.0, %v1551
      %v1553 = vpop.f32.mrf.mxu0
      %v1554 = vadd.f32 0.0, %v1553
      %1555 = vmatprep.mubr.f32.mxu0 0.0
      %1556 = vmatmul.mubr.f32.gmra.mxu0 %v385
      %v1557 = vpop.f32.mrf.mxu0
      %v1558 = vadd.f32 0.0, %v1557
      %v1559 = vpop.f32.mrf.mxu0
      %v1560 = vadd.f32 0.0, %v1559
      %1561 = vdwg.mxu0
      %1562 = vmatprep.subr.mxu0 0.0
      %1563 = vmatpush1.msra.mxu0 0.0
      %1564 = vmatprep.subr.mxu0 0.0
      %1565 = vmatpush1.msra.mxu0 0.0
      %1566 = vmatprep.subr.mxu0 0.0
      %1567 = vmatpush1.msra.mxu0 0.0
      %1568 = vmatprep.subr.mxu0 0.0
      %1569 = vmatpush1.msra.mxu0 0.0
      %1570 = vmatprep.subr.mxu0 0.0
      %1571 = vmatpush1.msra.mxu0 0.0
      %1572 = vmatprep.subr.mxu0 0.0
      %1573 = vmatpush1.msra.mxu0 0.0
      %1574 = vmatprep.subr.mxu0 0.0
      %1575 = vmatpush1.msra.mxu0 0.0
      %1576 = vmatprep.subr.mxu0 0.0
      %1577 = vmatpush1.msra.mxu0 0.0
      %1578 = vmatprep.subr.mxu0 0.0
      %1579 = vmatpush1.msra.mxu0 0.0
      %1580 = vmatprep.subr.mxu0 0.0
      %1581 = vmatpush1.msra.mxu0 0.0
      %1582 = vmatprep.subr.mxu0 0.0
      %1583 = vmatpush1.msra.mxu0 0.0
      %1584 = vmatprep.subr.mxu0 0.0
      %1585 = vmatpush1.msra.mxu0 0.0
      %1586 = vmatprep.subr.mxu0 %v476
      %1587 = vmatpush1.msra.mxu0 %v473
      %1588 = vmatprep.subr.mxu0 %v345
      %1589 = vmatpush1.msra.mxu0 %v344
      %1590 = vmatprep.subr.mxu0 %v313
      %1591 = vmatpush1.msra.mxu0 %v312
      %1592 = vmatprep.subr.mxu0 %v281
      %1593 = vmatpush1.msra.mxu0 %v280
      %1594 = vmatprep.subr.mxu0 0.0
      %1595 = vmatpush2.msra.mxu0 0.0
      %1596 = vmatprep.subr.mxu0 0.0
      %1597 = vmatpush2.msra.mxu0 0.0
      %1598 = vmatprep.subr.mxu0 0.0
      %1599 = vmatpush2.msra.mxu0 0.0
      %1600 = vmatprep.subr.mxu0 0.0
      %1601 = vmatpush2.msra.mxu0 0.0
      %1602 = vmatprep.subr.mxu0 0.0
      %1603 = vmatpush2.msra.mxu0 0.0
      %1604 = vmatprep.subr.mxu0 0.0
      %1605 = vmatpush2.msra.mxu0 0.0
      %1606 = vmatprep.subr.mxu0 0.0
      %1607 = vmatpush2.msra.mxu0 0.0
      %1608 = vmatprep.subr.mxu0 0.0
      %1609 = vmatpush2.msra.mxu0 0.0
      %1610 = vmatprep.subr.mxu0 0.0
      %1611 = vmatpush2.msra.mxu0 0.0
      %1612 = vmatprep.subr.mxu0 0.0
      %1613 = vmatpush2.msra.mxu0 0.0
      %1614 = vmatprep.subr.mxu0 0.0
      %1615 = vmatpush2.msra.mxu0 0.0
      %1616 = vmatprep.subr.mxu0 0.0
      %1617 = vmatpush2.msra.mxu0 0.0
      %1618 = vmatprep.subr.mxu0 0.0
      %1619 = vmatpush2.msra.mxu0 0.0
      %1620 = vmatprep.subr.mxu0 0.0
      %1621 = vmatpush2.msra.mxu0 0.0
      %1622 = vmatprep.subr.mxu0 0.0
      %1623 = vmatpush2.msra.mxu0 0.0
      %1624 = vmatprep.subr.mxu0 0.0
      %1625 = vmatpush2.msra.mxu0 0.0
      %1626 = vmatprep.mubr.f32.mxu0 0.0
      %1627 = vmatmul.mubr.f32.gmra.mxu0 %v382
      %v1628 = vpop.f32.mrf.mxu0
      %v1629 = vadd.f32 0.0, %v1628
      %v1630 = vpop.f32.mrf.mxu0
      %v1631 = vadd.f32 0.0, %v1630
      %1632 = vmatprep.mubr.f32.mxu0 0.0
      %1633 = vmatmul.mubr.f32.gmra.mxu0 %v385
      %v1634 = vpop.f32.mrf.mxu0
      %v1635 = vadd.f32 0.0, %v1634
      %v1636 = vpop.f32.mrf.mxu0
      %v1637 = vadd.f32 0.0, %v1636
      %1638 = vdwg.mxu0
      %1639 = vmatprep.subr.mxu0 0.0
      %1640 = vmatpush1.msra.mxu0 0.0
      %1641 = vmatprep.subr.mxu0 0.0
      %1642 = vmatpush1.msra.mxu0 0.0
      %1643 = vmatprep.subr.mxu0 0.0
      %1644 = vmatpush1.msra.mxu0 0.0
      %1645 = vmatprep.subr.mxu0 0.0
      %1646 = vmatpush1.msra.mxu0 0.0
      %1647 = vmatprep.subr.mxu0 0.0
      %1648 = vmatpush1.msra.mxu0 0.0
      %1649 = vmatprep.subr.mxu0 0.0
      %1650 = vmatpush1.msra.mxu0 0.0
      %1651 = vmatprep.subr.mxu0 0.0
      %1652 = vmatpush1.msra.mxu0 0.0
      %1653 = vmatprep.subr.mxu0 0.0
      %1654 = vmatpush1.msra.mxu0 0.0
      %1655 = vmatprep.subr.mxu0 0.0
      %1656 = vmatpush1.msra.mxu0 0.0
      %1657 = vmatprep.subr.mxu0 0.0
      %1658 = vmatpush1.msra.mxu0 0.0
      %1659 = vmatprep.subr.mxu0 0.0
      %1660 = vmatpush1.msra.mxu0 0.0
      %1661 = vmatprep.subr.mxu0 0.0
      %1662 = vmatpush1.msra.mxu0 0.0
      %1663 = vmatprep.subr.mxu0 %v482
      %1664 = vmatpush1.msra.mxu0 %v479
      %1665 = vmatprep.subr.mxu0 %v347
      %1666 = vmatpush1.msra.mxu0 %v346
      %1667 = vmatprep.subr.mxu0 %v315
      %1668 = vmatpush1.msra.mxu0 %v314
      %1669 = vmatprep.subr.mxu0 %v283
      %1670 = vmatpush1.msra.mxu0 %v282
      %1671 = vmatprep.subr.mxu0 0.0
      %1672 = vmatpush2.msra.mxu0 0.0
      %1673 = vmatprep.subr.mxu0 0.0
      %1674 = vmatpush2.msra.mxu0 0.0
      %1675 = vmatprep.subr.mxu0 0.0
      %1676 = vmatpush2.msra.mxu0 0.0
      %1677 = vmatprep.subr.mxu0 0.0
      %1678 = vmatpush2.msra.mxu0 0.0
      %1679 = vmatprep.subr.mxu0 0.0
      %1680 = vmatpush2.msra.mxu0 0.0
      %1681 = vmatprep.subr.mxu0 0.0
      %1682 = vmatpush2.msra.mxu0 0.0
      %1683 = vmatprep.subr.mxu0 0.0
      %1684 = vmatpush2.msra.mxu0 0.0
      %1685 = vmatprep.subr.mxu0 0.0
      %1686 = vmatpush2.msra.mxu0 0.0
      %1687 = vmatprep.subr.mxu0 0.0
      %1688 = vmatpush2.msra.mxu0 0.0
      %1689 = vmatprep.subr.mxu0 0.0
      %1690 = vmatpush2.msra.mxu0 0.0
      %1691 = vmatprep.subr.mxu0 0.0
      %1692 = vmatpush2.msra.mxu0 0.0
      %1693 = vmatprep.subr.mxu0 0.0
      %1694 = vmatpush2.msra.mxu0 0.0
      %1695 = vmatprep.subr.mxu0 0.0
      %1696 = vmatpush2.msra.mxu0 0.0
      %1697 = vmatprep.subr.mxu0 0.0
      %1698 = vmatpush2.msra.mxu0 0.0
      %1699 = vmatprep.subr.mxu0 0.0
      %1700 = vmatpush2.msra.mxu0 0.0
      %1701 = vmatprep.subr.mxu0 0.0
      %1702 = vmatpush2.msra.mxu0 0.0
      %1703 = vmatprep.mubr.f32.mxu0 0.0
      %1704 = vmatmul.mubr.f32.gmra.mxu0 %v382
      %v1705 = vpop.f32.mrf.mxu0
      %v1706 = vadd.f32 0.0, %v1705
      %v1707 = vpop.f32.mrf.mxu0
      %v1708 = vadd.f32 0.0, %v1707
      %1709 = vmatprep.mubr.f32.mxu0 0.0
      %1710 = vmatmul.mubr.f32.gmra.mxu0 %v385
      %v1711 = vpop.f32.mrf.mxu0
      %v1712 = vadd.f32 0.0, %v1711
      %v1713 = vpop.f32.mrf.mxu0
      %v1714 = vadd.f32 0.0, %v1713
      %1715 = vdwg.mxu0
      %v1716 = vmax.f32 %v551, 0.0
      %v1717 = vmax.f32 %v553, 0.0
      %v1718 = vmax.f32 %v628, 0.0
      %v1719 = vmax.f32 %v630, 0.0
      %v1720 = vmax.f32 %v705, 0.0
      %v1721 = vmax.f32 %v707, 0.0
      %v1722 = vmax.f32 %v782, 0.0
      %v1723 = vmax.f32 %v784, 0.0
      %v1724 = vmax.f32 %v859, 0.0
      %v1725 = vmax.f32 %v861, 0.0
      %v1726 = vmax.f32 %v936, 0.0
      %v1727 = vmax.f32 %v938, 0.0
      %v1728 = vmax.f32 %v1013, 0.0
      %v1729 = vmax.f32 %v1015, 0.0
      %v1730 = vmax.f32 %v1090, 0.0
      %v1731 = vmax.f32 %v1092, 0.0
      %v1732 = vmax.f32 %v1167, 0.0
      %v1733 = vmax.f32 %v1169, 0.0
      %v1734 = vmax.f32 %v1244, 0.0
      %v1735 = vmax.f32 %v1246, 0.0
      %v1736 = vmax.f32 %v1321, 0.0
      %v1737 = vmax.f32 %v1323, 0.0
      %v1738 = vmax.f32 %v1398, 0.0
      %v1739 = vmax.f32 %v1400, 0.0
      %v1740 = vmax.f32 %v1475, 0.0
      %v1741 = vmax.f32 %v1477, 0.0
      %v1742 = vmax.f32 %v1552, 0.0
      %v1743 = vmax.f32 %v1554, 0.0
      %v1744 = vmax.f32 %v1629, 0.0
      %v1745 = vmax.f32 %v1631, 0.0
      %v1746 = vmax.f32 %v1706, 0.0
      %v1747 = vmax.f32 %v1708, 0.0
      %v1748 = vmax.f32 %v557, 0.0
      %v1749 = vmax.f32 %v559, 0.0
      %v1750 = vmax.f32 %v634, 0.0
      %v1751 = vmax.f32 %v636, 0.0
      %v1752 = vmax.f32 %v711, 0.0
      %v1753 = vmax.f32 %v713, 0.0
      %v1754 = vmax.f32 %v788, 0.0
      %v1755 = vmax.f32 %v790, 0.0
      %v1756 = vmax.f32 %v865, 0.0
      %v1757 = vmax.f32 %v867, 0.0
      %v1758 = vmax.f32 %v942, 0.0
      %v1759 = vmax.f32 %v944, 0.0
      %v1760 = vmax.f32 %v1019, 0.0
      %v1761 = vmax.f32 %v1021, 0.0
      %v1762 = vmax.f32 %v1096, 0.0
      %v1763 = vmax.f32 %v1098, 0.0
      %v1764 = vmax.f32 %v1173, 0.0
      %v1765 = vmax.f32 %v1175, 0.0
      %v1766 = vmax.f32 %v1250, 0.0
      %v1767 = vmax.f32 %v1252, 0.0
      %v1768 = vmax.f32 %v1327, 0.0
      %v1769 = vmax.f32 %v1329, 0.0
      %v1770 = vmax.f32 %v1404, 0.0
      %v1771 = vmax.f32 %v1406, 0.0
      %v1772 = vmax.f32 %v1481, 0.0
      %v1773 = vmax.f32 %v1483, 0.0
      %v1774 = vmax.f32 %v1558, 0.0
      %v1775 = vmax.f32 %v1560, 0.0
      %v1776 = vmax.f32 %v1635, 0.0
      %v1777 = vmax.f32 %v1637, 0.0
      %v1778 = vmax.f32 %v1712, 0.0
      %v1779 = vmax.f32 %v1714, 0.0
      %v1780 = vmax.f32 %v1716, %v1724
      %v1781 = vmax.f32 %v1717, %v1725
      %v1782 = vmax.f32 %v1718, %v1726
      %v1783 = vmax.f32 %v1719, %v1727
      %v1784 = vmax.f32 %v1720, %v1728
      %v1785 = vmax.f32 %v1721, %v1729
      %v1786 = vmax.f32 %v1722, %v1730
      %v1787 = vmax.f32 %v1723, %v1731
      %v1788 = vmax.f32 %v1748, %v1756
      %v1789 = vmax.f32 %v1749, %v1757
      %v1790 = vmax.f32 %v1750, %v1758
      %v1791 = vmax.f32 %v1751, %v1759
      %v1792 = vmax.f32 %v1752, %v1760
      %v1793 = vmax.f32 %v1753, %v1761
      %v1794 = vmax.f32 %v1754, %v1762
      %v1795 = vmax.f32 %v1755, %v1763
      %v1796 = vmax.f32 %v1732, %v1740
      %v1797 = vmax.f32 %v1733, %v1741
      %v1798 = vmax.f32 %v1734, %v1742
      %v1799 = vmax.f32 %v1735, %v1743
      %v1800 = vmax.f32 %v1736, %v1744
      %v1801 = vmax.f32 %v1737, %v1745
      %v1802 = vmax.f32 %v1738, %v1746
      %v1803 = vmax.f32 %v1739, %v1747
      %v1804 = vmax.f32 %v1764, %v1772
      %v1805 = vmax.f32 %v1765, %v1773
      %v1806 = vmax.f32 %v1766, %v1774
      %v1807 = vmax.f32 %v1767, %v1775
      %v1808 = vmax.f32 %v1768, %v1776
      %v1809 = vmax.f32 %v1769, %v1777
      %v1810 = vmax.f32 %v1770, %v1778
      %v1811 = vmax.f32 %v1771, %v1779
      %v1812 = vmax.f32 %v1780, %v1796
      %v1813 = vmax.f32 %v1781, %v1797
      %v1814 = vmax.f32 %v1782, %v1798
      %v1815 = vmax.f32 %v1783, %v1799
      %v1816 = vmax.f32 %v1784, %v1800
      %v1817 = vmax.f32 %v1785, %v1801
      %v1818 = vmax.f32 %v1786, %v1802
      %v1819 = vmax.f32 %v1787, %v1803
      %v1820 = vmax.f32 %v1788, %v1804
      %v1821 = vmax.f32 %v1789, %v1805
      %v1822 = vmax.f32 %v1790, %v1806
      %v1823 = vmax.f32 %v1791, %v1807
      %v1824 = vmax.f32 %v1792, %v1808
      %v1825 = vmax.f32 %v1793, %v1809
      %v1826 = vmax.f32 %v1794, %v1810
      %v1827 = vmax.f32 %v1795, %v1811
      %1828 = vst [vmem:[#allocation2] sm:$0xff] 0.0
      %1829 = vst [vmem:[#allocation2 + $0x48] sm:$0xf] 0.0
      %1830 = vst [vmem:[#allocation2 + $0x40] sm:$0xff] 0.0
      %1831 = vst [vmem:[#allocation2 + $0x88] sm:$0xf] 0.0
      %1848 = vrot.lane.b32.xlu0 %v1812, 33
      %v1849 = vpop.permute.xlu0 %1848
      %1850 = vrot.lane.b32.xlu0 %v1813, 33
      %v1851 = vpop.permute.xlu0 %1850
      %1852 = vrot.lane.b32.xlu0 %v1814, 33
      %v1853 = vpop.permute.xlu0 %1852
      %1854 = vrot.lane.b32.xlu0 %v1815, 33
      %v1855 = vpop.permute.xlu0 %1854
      %1856 = vrot.lane.b32.xlu0 %v1816, 33
      %v1857 = vpop.permute.xlu0 %1856
      %1858 = vrot.lane.b32.xlu0 %v1817, 33
      %v1859 = vpop.permute.xlu0 %1858
      %1860 = vrot.lane.b32.xlu0 %v1818, 33
      %v1861 = vpop.permute.xlu0 %1860
      %1862 = vrot.lane.b32.xlu0 %v1819, 33
      %v1863 = vpop.permute.xlu0 %1862
      %1864 = vrot.lane.b32.xlu0 %v1820, 33
      %v1865 = vpop.permute.xlu0 %1864
      %1866 = vrot.lane.b32.xlu0 %v1821, 33
      %v1867 = vpop.permute.xlu0 %1866
      %1868 = vrot.lane.b32.xlu0 %v1822, 33
      %v1869 = vpop.permute.xlu0 %1868
      %1870 = vrot.lane.b32.xlu0 %v1823, 33
      %v1871 = vpop.permute.xlu0 %1870
      %1872 = vrot.lane.b32.xlu0 %v1824, 33
      %v1873 = vpop.permute.xlu0 %1872
      %1874 = vrot.lane.b32.xlu0 %v1825, 33
      %v1875 = vpop.permute.xlu0 %1874
      %1876 = vrot.lane.b32.xlu0 %v1826, 33
      %v1877 = vpop.permute.xlu0 %1876
      %1878 = vrot.lane.b32.xlu0 %v1827, 33
      %v1879 = vpop.permute.xlu0 %1878
      %vm1880 = vcmask 269312
      %v1881 = vsel %vm1880, %v1849, %v1851
      %v1882 = vsel %vm1880, %v1851, %v1853
      %v1883 = vsel %vm1880, %v1853, %v1855
      %v1884 = vsel %vm1880, %v1855, %v1857
      %v1885 = vsel %vm1880, %v1857, %v1859
      %v1886 = vsel %vm1880, %v1859, %v1861
      %v1887 = vsel %vm1880, %v1861, %v1863
      %v1888 = vsel %vm1880, %v1865, %v1867
      %v1889 = vsel %vm1880, %v1867, %v1869
      %v1890 = vsel %vm1880, %v1869, %v1871
      %v1891 = vsel %vm1880, %v1871, %v1873
      %v1892 = vsel %vm1880, %v1873, %v1875
      %v1893 = vsel %vm1880, %v1875, %v1877
      %v1894 = vsel %vm1880, %v1877, %v1879
      %vm1913 = vcmask 1047816
      %1914 = vst.msk [vmem:[#allocation2] sm:$0xff] %vm1913, %v1849
      %1915 = vst [vmem:[#allocation2 + $0x8] sm:$0xff] %v1881
      %1916 = vst [vmem:[#allocation2 + $0x10] sm:$0xff] %v1882
      %1917 = vst [vmem:[#allocation2 + $0x18] sm:$0xff] %v1883
      %1918 = vst [vmem:[#allocation2 + $0x20] sm:$0xff] %v1884
      %1919 = vst [vmem:[#allocation2 + $0x28] sm:$0xff] %v1885
      %1920 = vst [vmem:[#allocation2 + $0x30] sm:$0xff] %v1886
      %1921 = vst [vmem:[#allocation2 + $0x38] sm:$0xff] %v1887
      %1922 = vst.msk [vmem:[#allocation2 + $0x40] sm:$0xff] %vm1880, %v1863
      %vm1923 = vcmask 1043720
      %1924 = vst.msk [vmem:[#allocation2 + $0x48] sm:$0xf] %vm1923, %v1865
      %1925 = vst [vmem:[#allocation2 + $0x50] sm:$0xf] %v1888
      %1926 = vst [vmem:[#allocation2 + $0x58] sm:$0xf] %v1889
      %1927 = vst [vmem:[#allocation2 + $0x60] sm:$0xf] %v1890
      %1928 = vst [vmem:[#allocation2 + $0x68] sm:$0xf] %v1891
      %1929 = vst [vmem:[#allocation2 + $0x70] sm:$0xf] %v1892
      %1930 = vst [vmem:[#allocation2 + $0x78] sm:$0xf] %v1893
      %1931 = vst [vmem:[#allocation2 + $0x80] sm:$0xf] %v1894
      %vm1932 = vcmask 265216
      %1933 = vst.msk [vmem:[#allocation2 + $0x88] sm:$0xf] %vm1932, %v1879
      %v1934 = vlaneseq
      %v1935 = vand.u32 %v1934, 127
      %v1936 = vadd.s32 %v1935, 128
      %v1937 = vadd.s32 %v1935, 256
      %v1938 = vadd.s32 %v1935, 384
      %v1939 = vadd.s32 %v1935, 512
      %v1940 = vadd.s32 %v1935, 640
      %v1941 = vadd.s32 %v1935, 768
      %v1942 = vadd.s32 %v1935, 896
      %v1943 = vand.u32 %v1935, 31
      %v1944 = vand.u32 %v1936, 31
      %v1945 = vand.u32 %v1937, 31
      %v1946 = vand.u32 %v1938, 31
      %v1947 = vand.u32 %v1939, 31
      %v1948 = vand.u32 %v1940, 31
      %v1949 = vand.u32 %v1941, 31
      %v1950 = vand.u32 %v1942, 31
      %vm1951 = vcmp.ne.s32.totalorder %v1943, 0
      %vm1952 = vcmp.ne.s32.totalorder %v1944, 0
      %vm1953 = vcmp.ne.s32.totalorder %v1945, 0
      %vm1954 = vcmp.ne.s32.totalorder %v1946, 0
      %vm1955 = vcmp.ne.s32.totalorder %v1947, 0
      %vm1956 = vcmp.ne.s32.totalorder %v1948, 0
      %vm1957 = vcmp.ne.s32.totalorder %v1949, 0
      %vm1958 = vcmp.ne.s32.totalorder %v1950, 0
      %vm1959 = vcmp.ne.s32.totalorder %v1943, 31
      %vm1960 = vcmp.ne.s32.totalorder %v1944, 31
      %vm1961 = vcmp.ne.s32.totalorder %v1945, 31
      %vm1962 = vcmp.ne.s32.totalorder %v1946, 31
      %vm1963 = vcmp.ne.s32.totalorder %v1947, 31
      %vm1964 = vcmp.ne.s32.totalorder %v1948, 31
      %vm1965 = vcmp.ne.s32.totalorder %v1949, 31
      %vm1966 = vcmp.ne.s32.totalorder %v1950, 31
      %v1967 = vld [vmem:[#allocation2] sm:$0xff]
      %v1968 = vld [vmem:[#allocation2 + $0x8] sm:$0xff]
      %v1969 = vld [vmem:[#allocation2 + $0x10] sm:$0xff]
      %v1970 = vld [vmem:[#allocation2 + $0x18] sm:$0xff]
      %v1971 = vld [vmem:[#allocation2 + $0x20] sm:$0xff]
      %v1972 = vld [vmem:[#allocation2 + $0x28] sm:$0xff]
      %v1973 = vld [vmem:[#allocation2 + $0x30] sm:$0xff]
      %v1974 = vld [vmem:[#allocation2 + $0x38] sm:$0xff]
      %v1975 = vld [vmem:[#allocation2 + $0x48] sm:$0xf]
      %v1976 = vld [vmem:[#allocation2 + $0x50] sm:$0xf]
      %v1977 = vld [vmem:[#allocation2 + $0x58] sm:$0xf]
      %v1978 = vld [vmem:[#allocation2 + $0x60] sm:$0xf]
      %v1979 = vld [vmem:[#allocation2 + $0x68] sm:$0xf]
      %v1980 = vld [vmem:[#allocation2 + $0x70] sm:$0xf]
      %v1981 = vld [vmem:[#allocation2 + $0x78] sm:$0xf]
      %v1982 = vld [vmem:[#allocation2 + $0x80] sm:$0xf]
      %v1983 = vsel %vm1951, 1, 0
      %v1984 = vsel %vm1952, 1, 0
      %v1985 = vsel %vm1953, 1, 0
      %v1986 = vsel %vm1954, 1, 0
      %v1987 = vsel %vm1955, 1, 0
      %v1988 = vsel %vm1956, 1, 0
      %v1989 = vsel %vm1957, 1, 0
      %v1990 = vsel %vm1958, 1, 0
      %vm1991 = vcmp.eq.s32.totalorder %v1983, 1
      %vm1992 = vcmp.eq.s32.totalorder %v1984, 1
      %vm1993 = vcmp.eq.s32.totalorder %v1985, 1
      %vm1994 = vcmp.eq.s32.totalorder %v1986, 1
      %vm1995 = vcmp.eq.s32.totalorder %v1987, 1
      %vm1996 = vcmp.eq.s32.totalorder %v1988, 1
      %vm1997 = vcmp.eq.s32.totalorder %v1989, 1
      %vm1998 = vcmp.eq.s32.totalorder %v1990, 1
      %v1999 = vsel %vm1991, %v1967, 0.0
      %v2000 = vsel %vm1992, %v1968, 0.0
      %v2001 = vsel %vm1993, %v1969, 0.0
      %v2002 = vsel %vm1994, %v1970, 0.0
      %v2003 = vsel %vm1995, %v1971, 0.0
      %v2004 = vsel %vm1996, %v1972, 0.0
      %v2005 = vsel %vm1997, %v1973, 0.0
      %v2006 = vsel %vm1998, %v1974, 0.0
      %v2007 = vsel %vm1991, %v1975, 0.0
      %v2008 = vsel %vm1992, %v1976, 0.0
      %v2009 = vsel %vm1993, %v1977, 0.0
      %v2010 = vsel %vm1994, %v1978, 0.0
      %v2011 = vsel %vm1995, %v1979, 0.0
      %v2012 = vsel %vm1996, %v1980, 0.0
      %v2013 = vsel %vm1997, %v1981, 0.0
      %v2014 = vsel %vm1998, %v1982, 0.0
      %v2015 = vld [vmem:[%s2] sm:$0xff]
      %v2016 = vld [vmem:[%s2 + $0x8] sm:$0xff]
      %v2017 = vld [vmem:[%s2 + $0x10] sm:$0xff]
      %v2018 = vld [vmem:[#allocation2 + $0x40] sm:$0xff]
      %v2019 = vld [vmem:[#allocation2 + $0x88] sm:$0xf]
      %s2020 = scalar_lea.vmem %s2, 24
      %v2021 = vld [vmem:[%s2020] sm:$0xff]
      %v2022 = vld [vmem:[%s2020 + $0x8] sm:$0xff]
      %v2023 = vld [vmem:[%s2020 + $0x10] sm:$0xff]
      %2042 = vrot.lane.b32.xlu0 %v1967, 127
      %v2043 = vpop.permute.xlu0 %2042
      %2044 = vrot.lane.b32.xlu0 %v1968, 127
      %v2045 = vpop.permute.xlu0 %2044
      %2046 = vrot.lane.b32.xlu0 %v1969, 127
      %v2047 = vpop.permute.xlu0 %2046
      %2048 = vrot.lane.b32.xlu0 %v1970, 127
      %v2049 = vpop.permute.xlu0 %2048
      %2050 = vrot.lane.b32.xlu0 %v1971, 127
      %v2051 = vpop.permute.xlu0 %2050
      %2052 = vrot.lane.b32.xlu0 %v1972, 127
      %v2053 = vpop.permute.xlu0 %2052
      %2054 = vrot.lane.b32.xlu0 %v1973, 127
      %v2055 = vpop.permute.xlu0 %2054
      %2056 = vrot.lane.b32.xlu0 %v1974, 127
      %v2057 = vpop.permute.xlu0 %2056
      %2058 = vrot.lane.b32.xlu0 %v2018, 127
      %v2059 = vpop.permute.xlu0 %2058
      %2060 = vrot.lane.b32.xlu0 %v1975, 127
      %v2061 = vpop.permute.xlu0 %2060
      %2062 = vrot.lane.b32.xlu0 %v1976, 127
      %v2063 = vpop.permute.xlu0 %2062
      %2064 = vrot.lane.b32.xlu0 %v1977, 127
      %v2065 = vpop.permute.xlu0 %2064
      %2066 = vrot.lane.b32.xlu0 %v1978, 127
      %v2067 = vpop.permute.xlu0 %2066
      %2068 = vrot.lane.b32.xlu0 %v1979, 127
      %v2069 = vpop.permute.xlu0 %2068
      %2070 = vrot.lane.b32.xlu0 %v1980, 127
      %v2071 = vpop.permute.xlu0 %2070
      %2072 = vrot.lane.b32.xlu0 %v1981, 127
      %v2073 = vpop.permute.xlu0 %2072
      %2074 = vrot.lane.b32.xlu0 %v1982, 127
      %v2075 = vpop.permute.xlu0 %2074
      %2076 = vrot.lane.b32.xlu0 %v2019, 127
      %v2077 = vpop.permute.xlu0 %2076
      %vm2078 = vcmask 1039360
      %v2079 = vsel %vm2078, %v2043, %v2045
      %v2080 = vsel %vm2078, %v2045, %v2047
      %v2081 = vsel %vm2078, %v2047, %v2049
      %v2082 = vsel %vm2078, %v2049, %v2051
      %v2083 = vsel %vm2078, %v2051, %v2053
      %v2084 = vsel %vm2078, %v2053, %v2055
      %v2085 = vsel %vm2078, %v2055, %v2057
      %v2086 = vsel %vm2078, %v2057, %v2059
      %v2087 = vsel %vm2078, %v2061, %v2063
      %v2088 = vsel %vm2078, %v2063, %v2065
      %v2089 = vsel %vm2078, %v2065, %v2067
      %v2090 = vsel %vm2078, %v2067, %v2069
      %v2091 = vsel %vm2078, %v2069, %v2071
      %v2092 = vsel %vm2078, %v2071, %v2073
      %v2093 = vsel %vm2078, %v2073, %v2075
      %v2094 = vsel %vm2078, %v2075, %v2077
      %vm2103 = vcmask 97280
      %v2105 = vsel %vm2103, %v2021, 0
      %v2108 = vsel %vm2103, %v2022, 0
      %v2111 = vsel %vm2103, %v2023, 0
      %v2113 = vsel %vm387, %v2087, 0
      %v2115 = vsel %vm387, %v2088, 0
      %v2117 = vsel %vm387, %v2089, 0
      %v2119 = vsel %vm387, %v2090, 0
      %v2121 = vsel %vm387, %v2091, 0
      %v2123 = vsel %vm387, %v2092, 0
      %v2125 = vsel %vm387, %v2093, 0
      %v2127 = vsel %vm387, %v2094, 0
      %2129 = vmatprep.subr.mxu0 0.0
      %2130 = vmatpush1.msra.mxu0 0.0
      %2131 = vmatprep.subr.mxu0 0.0
      %2132 = vmatpush1.msra.mxu0 0.0
      %2133 = vmatprep.subr.mxu0 0.0
      %2134 = vmatpush1.msra.mxu0 0.0
      %2135 = vmatprep.subr.mxu0 0.0
      %2136 = vmatpush1.msra.mxu0 0.0
      %2137 = vmatprep.subr.mxu0 0.0
      %2138 = vmatpush1.msra.mxu0 0.0
      %2139 = vmatprep.subr.mxu0 0.0
      %2140 = vmatpush1.msra.mxu0 0.0
      %2141 = vmatprep.subr.mxu0 0.0
      %2142 = vmatpush1.msra.mxu0 0.0
      %2143 = vmatprep.subr.mxu0 0.0
      %2144 = vmatpush1.msra.mxu0 0.0
      %2145 = vmatprep.subr.mxu0 0.0
      %2146 = vmatpush1.msra.mxu0 0.0
      %2147 = vmatprep.subr.mxu0 0.0
      %2148 = vmatpush1.msra.mxu0 0.0
      %2149 = vmatprep.subr.mxu0 0.0
      %2150 = vmatpush1.msra.mxu0 0.0
      %2151 = vmatprep.subr.mxu0 0.0
      %2152 = vmatpush1.msra.mxu0 0.0
      %2153 = vmatprep.subr.mxu0 0.0
      %2154 = vmatpush1.msra.mxu0 0.0
      %2155 = vmatprep.subr.mxu0 0.0
      %2156 = vmatpush1.msra.mxu0 0.0
      %2157 = vmatprep.subr.mxu0 %v2115
      %2158 = vmatpush1.msra.mxu0 %v2113
      %2159 = vmatprep.subr.mxu0 %v2080
      %2160 = vmatpush1.msra.mxu0 %v2079
      %2161 = vmatprep.subr.mxu0 0.0
      %2162 = vmatpush2.msra.mxu0 0.0
      %2163 = vmatprep.subr.mxu0 0.0
      %2164 = vmatpush2.msra.mxu0 0.0
      %2165 = vmatprep.subr.mxu0 0.0
      %2166 = vmatpush2.msra.mxu0 0.0
      %2167 = vmatprep.subr.mxu0 0.0
      %2168 = vmatpush2.msra.mxu0 0.0
      %2169 = vmatprep.subr.mxu0 0.0
      %2170 = vmatpush2.msra.mxu0 0.0
      %2171 = vmatprep.subr.mxu0 0.0
      %2172 = vmatpush2.msra.mxu0 0.0
      %2173 = vmatprep.subr.mxu0 0.0
      %2174 = vmatpush2.msra.mxu0 0.0
      %2175 = vmatprep.subr.mxu0 0.0
      %2176 = vmatpush2.msra.mxu0 0.0
      %2177 = vmatprep.subr.mxu0 0.0
      %2178 = vmatpush2.msra.mxu0 0.0
      %2179 = vmatprep.subr.mxu0 0.0
      %2180 = vmatpush2.msra.mxu0 0.0
      %2181 = vmatprep.subr.mxu0 0.0
      %2182 = vmatpush2.msra.mxu0 0.0
      %2183 = vmatprep.subr.mxu0 0.0
      %2184 = vmatpush2.msra.mxu0 0.0
      %2185 = vmatprep.subr.mxu0 0.0
      %2186 = vmatpush2.msra.mxu0 0.0
      %2187 = vmatprep.subr.mxu0 0.0
      %2188 = vmatpush2.msra.mxu0 0.0
      %2189 = vmatprep.subr.mxu0 0.0
      %2190 = vmatpush2.msra.mxu0 0.0
      %2191 = vmatprep.subr.mxu0 0.0
      %2192 = vmatpush2.msra.mxu0 0.0
      %2193 = vmatprep.mubr.f32.mxu0 0.0
      %2194 = vmatmul.mubr.f32.gmra.mxu0 %v2105
      %v2195 = vpop.f32.mrf.mxu0
      %v2196 = vadd.f32 0.0, %v2195
      %v2197 = vpop.f32.mrf.mxu0
      %v2198 = vadd.f32 0.0, %v2197
      %2199 = vmatprep.mubr.f32.mxu0 0.0
      %2200 = vmatmul.mubr.f32.gmra.mxu0 %v2108
      %v2201 = vpop.f32.mrf.mxu0
      %v2202 = vadd.f32 0.0, %v2201
      %v2203 = vpop.f32.mrf.mxu0
      %v2204 = vadd.f32 0.0, %v2203
      %2205 = vmatprep.mubr.f32.mxu0 0.0
      %2206 = vmatmul.mubr.f32.gmra.mxu0 %v2111
      %v2207 = vpop.f32.mrf.mxu0
      %v2208 = vadd.f32 0.0, %v2207
      %v2209 = vpop.f32.mrf.mxu0
      %v2210 = vadd.f32 0.0, %v2209
      %2211 = vdwg.mxu0
      %2212 = vmatprep.subr.mxu0 0.0
      %2213 = vmatpush1.msra.mxu0 0.0
      %2214 = vmatprep.subr.mxu0 0.0
      %2215 = vmatpush1.msra.mxu0 0.0
      %2216 = vmatprep.subr.mxu0 0.0
      %2217 = vmatpush1.msra.mxu0 0.0
      %2218 = vmatprep.subr.mxu0 0.0
      %2219 = vmatpush1.msra.mxu0 0.0
      %2220 = vmatprep.subr.mxu0 0.0
      %2221 = vmatpush1.msra.mxu0 0.0
      %2222 = vmatprep.subr.mxu0 0.0
      %2223 = vmatpush1.msra.mxu0 0.0
      %2224 = vmatprep.subr.mxu0 0.0
      %2225 = vmatpush1.msra.mxu0 0.0
      %2226 = vmatprep.subr.mxu0 0.0
      %2227 = vmatpush1.msra.mxu0 0.0
      %2228 = vmatprep.subr.mxu0 0.0
      %2229 = vmatpush1.msra.mxu0 0.0
      %2230 = vmatprep.subr.mxu0 0.0
      %2231 = vmatpush1.msra.mxu0 0.0
      %2232 = vmatprep.subr.mxu0 0.0
      %2233 = vmatpush1.msra.mxu0 0.0
      %2234 = vmatprep.subr.mxu0 0.0
      %2235 = vmatpush1.msra.mxu0 0.0
      %2236 = vmatprep.subr.mxu0 0.0
      %2237 = vmatpush1.msra.mxu0 0.0
      %2238 = vmatprep.subr.mxu0 0.0
      %2239 = vmatpush1.msra.mxu0 0.0
      %2240 = vmatprep.subr.mxu0 %v2119
      %2241 = vmatpush1.msra.mxu0 %v2117
      %2242 = vmatprep.subr.mxu0 %v2082
      %2243 = vmatpush1.msra.mxu0 %v2081
      %2244 = vmatprep.subr.mxu0 0.0
      %2245 = vmatpush2.msra.mxu0 0.0
      %2246 = vmatprep.subr.mxu0 0.0
      %2247 = vmatpush2.msra.mxu0 0.0
      %2248 = vmatprep.subr.mxu0 0.0
      %2249 = vmatpush2.msra.mxu0 0.0
      %2250 = vmatprep.subr.mxu0 0.0
      %2251 = vmatpush2.msra.mxu0 0.0
      %2252 = vmatprep.subr.mxu0 0.0
      %2253 = vmatpush2.msra.mxu0 0.0
      %2254 = vmatprep.subr.mxu0 0.0
      %2255 = vmatpush2.msra.mxu0 0.0
      %2256 = vmatprep.subr.mxu0 0.0
      %2257 = vmatpush2.msra.mxu0 0.0
      %2258 = vmatprep.subr.mxu0 0.0
      %2259 = vmatpush2.msra.mxu0 0.0
      %2260 = vmatprep.subr.mxu0 0.0
      %2261 = vmatpush2.msra.mxu0 0.0
      %2262 = vmatprep.subr.mxu0 0.0
      %2263 = vmatpush2.msra.mxu0 0.0
      %2264 = vmatprep.subr.mxu0 0.0
      %2265 = vmatpush2.msra.mxu0 0.0
      %2266 = vmatprep.subr.mxu0 0.0
      %2267 = vmatpush2.msra.mxu0 0.0
      %2268 = vmatprep.subr.mxu0 0.0
      %2269 = vmatpush2.msra.mxu0 0.0
      %2270 = vmatprep.subr.mxu0 0.0
      %2271 = vmatpush2.msra.mxu0 0.0
      %2272 = vmatprep.subr.mxu0 0.0
      %2273 = vmatpush2.msra.mxu0 0.0
      %2274 = vmatprep.subr.mxu0 0.0
      %2275 = vmatpush2.msra.mxu0 0.0
      %2276 = vmatprep.mubr.f32.mxu0 0.0
      %2277 = vmatmul.mubr.f32.gmra.mxu0 %v2105
      %v2278 = vpop.f32.mrf.mxu0
      %v2279 = vadd.f32 0.0, %v2278
      %v2280 = vpop.f32.mrf.mxu0
      %v2281 = vadd.f32 0.0, %v2280
      %2282 = vmatprep.mubr.f32.mxu0 0.0
      %2283 = vmatmul.mubr.f32.gmra.mxu0 %v2108
      %v2284 = vpop.f32.mrf.mxu0
      %v2285 = vadd.f32 0.0, %v2284
      %v2286 = vpop.f32.mrf.mxu0
      %v2287 = vadd.f32 0.0, %v2286
      %2288 = vmatprep.mubr.f32.mxu0 0.0
      %2289 = vmatmul.mubr.f32.gmra.mxu0 %v2111
      %v2290 = vpop.f32.mrf.mxu0
      %v2291 = vadd.f32 0.0, %v2290
      %v2292 = vpop.f32.mrf.mxu0
      %v2293 = vadd.f32 0.0, %v2292
      %2294 = vdwg.mxu0
      %2295 = vmatprep.subr.mxu0 0.0
      %2296 = vmatpush1.msra.mxu0 0.0
      %2297 = vmatprep.subr.mxu0 0.0
      %2298 = vmatpush1.msra.mxu0 0.0
      %2299 = vmatprep.subr.mxu0 0.0
      %2300 = vmatpush1.msra.mxu0 0.0
      %2301 = vmatprep.subr.mxu0 0.0
      %2302 = vmatpush1.msra.mxu0 0.0
      %2303 = vmatprep.subr.mxu0 0.0
      %2304 = vmatpush1.msra.mxu0 0.0
      %2305 = vmatprep.subr.mxu0 0.0
      %2306 = vmatpush1.msra.mxu0 0.0
      %2307 = vmatprep.subr.mxu0 0.0
      %2308 = vmatpush1.msra.mxu0 0.0
      %2309 = vmatprep.subr.mxu0 0.0
      %2310 = vmatpush1.msra.mxu0 0.0
      %2311 = vmatprep.subr.mxu0 0.0
      %2312 = vmatpush1.msra.mxu0 0.0
      %2313 = vmatprep.subr.mxu0 0.0
      %2314 = vmatpush1.msra.mxu0 0.0
      %2315 = vmatprep.subr.mxu0 0.0
      %2316 = vmatpush1.msra.mxu0 0.0
      %2317 = vmatprep.subr.mxu0 0.0
      %2318 = vmatpush1.msra.mxu0 0.0
      %2319 = vmatprep.subr.mxu0 0.0
      %2320 = vmatpush1.msra.mxu0 0.0
      %2321 = vmatprep.subr.mxu0 0.0
      %2322 = vmatpush1.msra.mxu0 0.0
      %2323 = vmatprep.subr.mxu0 %v2123
      %2324 = vmatpush1.msra.mxu0 %v2121
      %2325 = vmatprep.subr.mxu0 %v2084
      %2326 = vmatpush1.msra.mxu0 %v2083
      %2327 = vmatprep.subr.mxu0 0.0
      %2328 = vmatpush2.msra.mxu0 0.0
      %2329 = vmatprep.subr.mxu0 0.0
      %2330 = vmatpush2.msra.mxu0 0.0
      %2331 = vmatprep.subr.mxu0 0.0
      %2332 = vmatpush2.msra.mxu0 0.0
      %2333 = vmatprep.subr.mxu0 0.0
      %2334 = vmatpush2.msra.mxu0 0.0
      %2335 = vmatprep.subr.mxu0 0.0
      %2336 = vmatpush2.msra.mxu0 0.0
      %2337 = vmatprep.subr.mxu0 0.0
      %2338 = vmatpush2.msra.mxu0 0.0
      %2339 = vmatprep.subr.mxu0 0.0
      %2340 = vmatpush2.msra.mxu0 0.0
      %2341 = vmatprep.subr.mxu0 0.0
      %2342 = vmatpush2.msra.mxu0 0.0
      %2343 = vmatprep.subr.mxu0 0.0
      %2344 = vmatpush2.msra.mxu0 0.0
      %2345 = vmatprep.subr.mxu0 0.0
      %2346 = vmatpush2.msra.mxu0 0.0
      %2347 = vmatprep.subr.mxu0 0.0
      %2348 = vmatpush2.msra.mxu0 0.0
      %2349 = vmatprep.subr.mxu0 0.0
      %2350 = vmatpush2.msra.mxu0 0.0
      %2351 = vmatprep.subr.mxu0 0.0
      %2352 = vmatpush2.msra.mxu0 0.0
      %2353 = vmatprep.subr.mxu0 0.0
      %2354 = vmatpush2.msra.mxu0 0.0
      %2355 = vmatprep.subr.mxu0 0.0
      %2356 = vmatpush2.msra.mxu0 0.0
      %2357 = vmatprep.subr.mxu0 0.0
      %2358 = vmatpush2.msra.mxu0 0.0
      %2359 = vmatprep.mubr.f32.mxu0 0.0
      %2360 = vmatmul.mubr.f32.gmra.mxu0 %v2105
      %v2361 = vpop.f32.mrf.mxu0
      %v2362 = vadd.f32 0.0, %v2361
      %v2363 = vpop.f32.mrf.mxu0
      %v2364 = vadd.f32 0.0, %v2363
      %2365 = vmatprep.mubr.f32.mxu0 0.0
      %2366 = vmatmul.mubr.f32.gmra.mxu0 %v2108
      %v2367 = vpop.f32.mrf.mxu0
      %v2368 = vadd.f32 0.0, %v2367
      %v2369 = vpop.f32.mrf.mxu0
      %v2370 = vadd.f32 0.0, %v2369
      %2371 = vmatprep.mubr.f32.mxu0 0.0
      %2372 = vmatmul.mubr.f32.gmra.mxu0 %v2111
      %v2373 = vpop.f32.mrf.mxu0
      %v2374 = vadd.f32 0.0, %v2373
      %v2375 = vpop.f32.mrf.mxu0
      %v2376 = vadd.f32 0.0, %v2375
      %2377 = vdwg.mxu0
      %2378 = vmatprep.subr.mxu0 0.0
      %2379 = vmatpush1.msra.mxu0 0.0
      %2380 = vmatprep.subr.mxu0 0.0
      %2381 = vmatpush1.msra.mxu0 0.0
      %2382 = vmatprep.subr.mxu0 0.0
      %2383 = vmatpush1.msra.mxu0 0.0
      %2384 = vmatprep.subr.mxu0 0.0
      %2385 = vmatpush1.msra.mxu0 0.0
      %2386 = vmatprep.subr.mxu0 0.0
      %2387 = vmatpush1.msra.mxu0 0.0
      %2388 = vmatprep.subr.mxu0 0.0
      %2389 = vmatpush1.msra.mxu0 0.0
      %2390 = vmatprep.subr.mxu0 0.0
      %2391 = vmatpush1.msra.mxu0 0.0
      %2392 = vmatprep.subr.mxu0 0.0
      %2393 = vmatpush1.msra.mxu0 0.0
      %2394 = vmatprep.subr.mxu0 0.0
      %2395 = vmatpush1.msra.mxu0 0.0
      %2396 = vmatprep.subr.mxu0 0.0
      %2397 = vmatpush1.msra.mxu0 0.0
      %2398 = vmatprep.subr.mxu0 0.0
      %2399 = vmatpush1.msra.mxu0 0.0
      %2400 = vmatprep.subr.mxu0 0.0
      %2401 = vmatpush1.msra.mxu0 0.0
      %2402 = vmatprep.subr.mxu0 0.0
      %2403 = vmatpush1.msra.mxu0 0.0
      %2404 = vmatprep.subr.mxu0 0.0
      %2405 = vmatpush1.msra.mxu0 0.0
      %2406 = vmatprep.subr.mxu0 %v2127
      %2407 = vmatpush1.msra.mxu0 %v2125
      %2408 = vmatprep.subr.mxu0 %v2086
      %2409 = vmatpush1.msra.mxu0 %v2085
      %2410 = vmatprep.subr.mxu0 0.0
      %2411 = vmatpush2.msra.mxu0 0.0
      %2412 = vmatprep.subr.mxu0 0.0
      %2413 = vmatpush2.msra.mxu0 0.0
      %2414 = vmatprep.subr.mxu0 0.0
      %2415 = vmatpush2.msra.mxu0 0.0
      %2416 = vmatprep.subr.mxu0 0.0
      %2417 = vmatpush2.msra.mxu0 0.0
      %2418 = vmatprep.subr.mxu0 0.0
      %2419 = vmatpush2.msra.mxu0 0.0
      %2420 = vmatprep.subr.mxu0 0.0
      %2421 = vmatpush2.msra.mxu0 0.0
      %2422 = vmatprep.subr.mxu0 0.0
      %2423 = vmatpush2.msra.mxu0 0.0
      %2424 = vmatprep.subr.mxu0 0.0
      %2425 = vmatpush2.msra.mxu0 0.0
      %2426 = vmatprep.subr.mxu0 0.0
      %2427 = vmatpush2.msra.mxu0 0.0
      %2428 = vmatprep.subr.mxu0 0.0
      %2429 = vmatpush2.msra.mxu0 0.0
      %2430 = vmatprep.subr.mxu0 0.0
      %2431 = vmatpush2.msra.mxu0 0.0
      %2432 = vmatprep.subr.mxu0 0.0
      %2433 = vmatpush2.msra.mxu0 0.0
      %2434 = vmatprep.subr.mxu0 0.0
      %2435 = vmatpush2.msra.mxu0 0.0
      %2436 = vmatprep.subr.mxu0 0.0
      %2437 = vmatpush2.msra.mxu0 0.0
      %2438 = vmatprep.subr.mxu0 0.0
      %2439 = vmatpush2.msra.mxu0 0.0
      %2440 = vmatprep.subr.mxu0 0.0
      %2441 = vmatpush2.msra.mxu0 0.0
      %2442 = vmatprep.mubr.f32.mxu0 0.0
      %2443 = vmatmul.mubr.f32.gmra.mxu0 %v2105
      %v2444 = vpop.f32.mrf.mxu0
      %v2445 = vadd.f32 0.0, %v2444
      %v2446 = vpop.f32.mrf.mxu0
      %v2447 = vadd.f32 0.0, %v2446
      %2448 = vmatprep.mubr.f32.mxu0 0.0
      %2449 = vmatmul.mubr.f32.gmra.mxu0 %v2108
      %v2450 = vpop.f32.mrf.mxu0
      %v2451 = vadd.f32 0.0, %v2450
      %v2452 = vpop.f32.mrf.mxu0
      %v2453 = vadd.f32 0.0, %v2452
      %2454 = vmatprep.mubr.f32.mxu0 0.0
      %2455 = vmatmul.mubr.f32.gmra.mxu0 %v2111
      %v2456 = vpop.f32.mrf.mxu0
      %v2457 = vadd.f32 0.0, %v2456
      %v2458 = vpop.f32.mrf.mxu0
      %v2459 = vadd.f32 0.0, %v2458
      %2460 = vdwg.mxu0
      %v2462 = vsel %vm2103, %v2015, 0
      %v2465 = vsel %vm2103, %v2016, 0
      %v2468 = vsel %vm2103, %v2017, 0
      %v2471 = vsel %vm387, %v2007, 0
      %v2474 = vsel %vm387, %v2008, 0
      %v2477 = vsel %vm387, %v2009, 0
      %v2480 = vsel %vm387, %v2010, 0
      %v2483 = vsel %vm387, %v2011, 0
      %v2486 = vsel %vm387, %v2012, 0
      %v2489 = vsel %vm387, %v2013, 0
      %v2492 = vsel %vm387, %v2014, 0
      %2494 = vmatprep.subr.mxu0 0.0
      %2495 = vmatpush1.msra.mxu0 0.0
      %2496 = vmatprep.subr.mxu0 0.0
      %2497 = vmatpush1.msra.mxu0 0.0
      %2498 = vmatprep.subr.mxu0 0.0
      %2499 = vmatpush1.msra.mxu0 0.0
      %2500 = vmatprep.subr.mxu0 0.0
      %2501 = vmatpush1.msra.mxu0 0.0
      %2502 = vmatprep.subr.mxu0 0.0
      %2503 = vmatpush1.msra.mxu0 0.0
      %2504 = vmatprep.subr.mxu0 0.0
      %2505 = vmatpush1.msra.mxu0 0.0
      %2506 = vmatprep.subr.mxu0 0.0
      %2507 = vmatpush1.msra.mxu0 0.0
      %2508 = vmatprep.subr.mxu0 0.0
      %2509 = vmatpush1.msra.mxu0 0.0
      %2510 = vmatprep.subr.mxu0 0.0
      %2511 = vmatpush1.msra.mxu0 0.0
      %2512 = vmatprep.subr.mxu0 0.0
      %2513 = vmatpush1.msra.mxu0 0.0
      %2514 = vmatprep.subr.mxu0 0.0
      %2515 = vmatpush1.msra.mxu0 0.0
      %2516 = vmatprep.subr.mxu0 0.0
      %2517 = vmatpush1.msra.mxu0 0.0
      %2518 = vmatprep.subr.mxu0 0.0
      %2519 = vmatpush1.msra.mxu0 0.0
      %2520 = vmatprep.subr.mxu0 0.0
      %2521 = vmatpush1.msra.mxu0 0.0
      %2522 = vmatprep.subr.mxu0 %v2474
      %2523 = vmatpush1.msra.mxu0 %v2471
      %2524 = vmatprep.subr.mxu0 %v2000
      %2525 = vmatpush1.msra.mxu0 %v1999
      %2526 = vmatprep.subr.mxu0 0.0
      %2527 = vmatpush2.msra.mxu0 0.0
      %2528 = vmatprep.subr.mxu0 0.0
      %2529 = vmatpush2.msra.mxu0 0.0
      %2530 = vmatprep.subr.mxu0 0.0
      %2531 = vmatpush2.msra.mxu0 0.0
      %2532 = vmatprep.subr.mxu0 0.0
      %2533 = vmatpush2.msra.mxu0 0.0
      %2534 = vmatprep.subr.mxu0 0.0
      %2535 = vmatpush2.msra.mxu0 0.0
      %2536 = vmatprep.subr.mxu0 0.0
      %2537 = vmatpush2.msra.mxu0 0.0
      %2538 = vmatprep.subr.mxu0 0.0
      %2539 = vmatpush2.msra.mxu0 0.0
      %2540 = vmatprep.subr.mxu0 0.0
      %2541 = vmatpush2.msra.mxu0 0.0
      %2542 = vmatprep.subr.mxu0 0.0
      %2543 = vmatpush2.msra.mxu0 0.0
      %2544 = vmatprep.subr.mxu0 0.0
      %2545 = vmatpush2.msra.mxu0 0.0
      %2546 = vmatprep.subr.mxu0 0.0
      %2547 = vmatpush2.msra.mxu0 0.0
      %2548 = vmatprep.subr.mxu0 0.0
      %2549 = vmatpush2.msra.mxu0 0.0
      %2550 = vmatprep.subr.mxu0 0.0
      %2551 = vmatpush2.msra.mxu0 0.0
      %2552 = vmatprep.subr.mxu0 0.0
      %2553 = vmatpush2.msra.mxu0 0.0
      %2554 = vmatprep.subr.mxu0 0.0
      %2555 = vmatpush2.msra.mxu0 0.0
      %2556 = vmatprep.subr.mxu0 0.0
      %2557 = vmatpush2.msra.mxu0 0.0
      %2558 = vmatprep.mubr.f32.mxu0 0.0
      %2559 = vmatmul.mubr.f32.gmra.mxu0 %v2462
      %v2560 = vpop.f32.mrf.mxu0
      %v2561 = vadd.f32 %v2196, %v2560
      %v2562 = vpop.f32.mrf.mxu0
      %v2563 = vadd.f32 %v2198, %v2562
      %2564 = vmatprep.mubr.f32.mxu0 0.0
      %2565 = vmatmul.mubr.f32.gmra.mxu0 %v2465
      %v2566 = vpop.f32.mrf.mxu0
      %v2567 = vadd.f32 %v2202, %v2566
      %v2568 = vpop.f32.mrf.mxu0
      %v2569 = vadd.f32 %v2204, %v2568
      %2570 = vmatprep.mubr.f32.mxu0 0.0
      %2571 = vmatmul.mubr.f32.gmra.mxu0 %v2468
      %v2572 = vpop.f32.mrf.mxu0
      %v2573 = vadd.f32 %v2208, %v2572
      %v2574 = vpop.f32.mrf.mxu0
      %v2575 = vadd.f32 %v2210, %v2574
      %2576 = vdwg.mxu0
      %2577 = vmatprep.subr.mxu0 0.0
      %2578 = vmatpush1.msra.mxu0 0.0
      %2579 = vmatprep.subr.mxu0 0.0
      %2580 = vmatpush1.msra.mxu0 0.0
      %2581 = vmatprep.subr.mxu0 0.0
      %2582 = vmatpush1.msra.mxu0 0.0
      %2583 = vmatprep.subr.mxu0 0.0
      %2584 = vmatpush1.msra.mxu0 0.0
      %2585 = vmatprep.subr.mxu0 0.0
      %2586 = vmatpush1.msra.mxu0 0.0
      %2587 = vmatprep.subr.mxu0 0.0
      %2588 = vmatpush1.msra.mxu0 0.0
      %2589 = vmatprep.subr.mxu0 0.0
      %2590 = vmatpush1.msra.mxu0 0.0
      %2591 = vmatprep.subr.mxu0 0.0
      %2592 = vmatpush1.msra.mxu0 0.0
      %2593 = vmatprep.subr.mxu0 0.0
      %2594 = vmatpush1.msra.mxu0 0.0
      %2595 = vmatprep.subr.mxu0 0.0
      %2596 = vmatpush1.msra.mxu0 0.0
      %2597 = vmatprep.subr.mxu0 0.0
      %2598 = vmatpush1.msra.mxu0 0.0
      %2599 = vmatprep.subr.mxu0 0.0
      %2600 = vmatpush1.msra.mxu0 0.0
      %2601 = vmatprep.subr.mxu0 0.0
      %2602 = vmatpush1.msra.mxu0 0.0
      %2603 = vmatprep.subr.mxu0 0.0
      %2604 = vmatpush1.msra.mxu0 0.0
      %2605 = vmatprep.subr.mxu0 %v2480
      %2606 = vmatpush1.msra.mxu0 %v2477
      %2607 = vmatprep.subr.mxu0 %v2002
      %2608 = vmatpush1.msra.mxu0 %v2001
      %2609 = vmatprep.subr.mxu0 0.0
      %2610 = vmatpush2.msra.mxu0 0.0
      %2611 = vmatprep.subr.mxu0 0.0
      %2612 = vmatpush2.msra.mxu0 0.0
      %2613 = vmatprep.subr.mxu0 0.0
      %2614 = vmatpush2.msra.mxu0 0.0
      %2615 = vmatprep.subr.mxu0 0.0
      %2616 = vmatpush2.msra.mxu0 0.0
      %2617 = vmatprep.subr.mxu0 0.0
      %2618 = vmatpush2.msra.mxu0 0.0
      %2619 = vmatprep.subr.mxu0 0.0
      %2620 = vmatpush2.msra.mxu0 0.0
      %2621 = vmatprep.subr.mxu0 0.0
      %2622 = vmatpush2.msra.mxu0 0.0
      %2623 = vmatprep.subr.mxu0 0.0
      %2624 = vmatpush2.msra.mxu0 0.0
      %2625 = vmatprep.subr.mxu0 0.0
      %2626 = vmatpush2.msra.mxu0 0.0
      %2627 = vmatprep.subr.mxu0 0.0
      %2628 = vmatpush2.msra.mxu0 0.0
      %2629 = vmatprep.subr.mxu0 0.0
      %2630 = vmatpush2.msra.mxu0 0.0
      %2631 = vmatprep.subr.mxu0 0.0
      %2632 = vmatpush2.msra.mxu0 0.0
      %2633 = vmatprep.subr.mxu0 0.0
      %2634 = vmatpush2.msra.mxu0 0.0
      %2635 = vmatprep.subr.mxu0 0.0
      %2636 = vmatpush2.msra.mxu0 0.0
      %2637 = vmatprep.subr.mxu0 0.0
      %2638 = vmatpush2.msra.mxu0 0.0
      %2639 = vmatprep.subr.mxu0 0.0
      %2640 = vmatpush2.msra.mxu0 0.0
      %2641 = vmatprep.mubr.f32.mxu0 0.0
      %2642 = vmatmul.mubr.f32.gmra.mxu0 %v2462
      %v2643 = vpop.f32.mrf.mxu0
      %v2644 = vadd.f32 %v2279, %v2643
      %v2645 = vpop.f32.mrf.mxu0
      %v2646 = vadd.f32 %v2281, %v2645
      %2647 = vmatprep.mubr.f32.mxu0 0.0
      %2648 = vmatmul.mubr.f32.gmra.mxu0 %v2465
      %v2649 = vpop.f32.mrf.mxu0
      %v2650 = vadd.f32 %v2285, %v2649
      %v2651 = vpop.f32.mrf.mxu0
      %v2652 = vadd.f32 %v2287, %v2651
      %2653 = vmatprep.mubr.f32.mxu0 0.0
      %2654 = vmatmul.mubr.f32.gmra.mxu0 %v2468
      %v2655 = vpop.f32.mrf.mxu0
      %v2656 = vadd.f32 %v2291, %v2655
      %v2657 = vpop.f32.mrf.mxu0
      %v2658 = vadd.f32 %v2293, %v2657
      %2659 = vdwg.mxu0
      %2660 = vmatprep.subr.mxu0 0.0
      %2661 = vmatpush1.msra.mxu0 0.0
      %2662 = vmatprep.subr.mxu0 0.0
      %2663 = vmatpush1.msra.mxu0 0.0
      %2664 = vmatprep.subr.mxu0 0.0
      %2665 = vmatpush1.msra.mxu0 0.0
      %2666 = vmatprep.subr.mxu0 0.0
      %2667 = vmatpush1.msra.mxu0 0.0
      %2668 = vmatprep.subr.mxu0 0.0
      %2669 = vmatpush1.msra.mxu0 0.0
      %2670 = vmatprep.subr.mxu0 0.0
      %2671 = vmatpush1.msra.mxu0 0.0
      %2672 = vmatprep.subr.mxu0 0.0
      %2673 = vmatpush1.msra.mxu0 0.0
      %2674 = vmatprep.subr.mxu0 0.0
      %2675 = vmatpush1.msra.mxu0 0.0
      %2676 = vmatprep.subr.mxu0 0.0
      %2677 = vmatpush1.msra.mxu0 0.0
      %2678 = vmatprep.subr.mxu0 0.0
      %2679 = vmatpush1.msra.mxu0 0.0
      %2680 = vmatprep.subr.mxu0 0.0
      %2681 = vmatpush1.msra.mxu0 0.0
      %2682 = vmatprep.subr.mxu0 0.0
      %2683 = vmatpush1.msra.mxu0 0.0
      %2684 = vmatprep.subr.mxu0 0.0
      %2685 = vmatpush1.msra.mxu0 0.0
      %2686 = vmatprep.subr.mxu0 0.0
      %2687 = vmatpush1.msra.mxu0 0.0
      %2688 = vmatprep.subr.mxu0 %v2486
      %2689 = vmatpush1.msra.mxu0 %v2483
      %2690 = vmatprep.subr.mxu0 %v2004
      %2691 = vmatpush1.msra.mxu0 %v2003
      %2692 = vmatprep.subr.mxu0 0.0
      %2693 = vmatpush2.msra.mxu0 0.0
      %2694 = vmatprep.subr.mxu0 0.0
      %2695 = vmatpush2.msra.mxu0 0.0
      %2696 = vmatprep.subr.mxu0 0.0
      %2697 = vmatpush2.msra.mxu0 0.0
      %2698 = vmatprep.subr.mxu0 0.0
      %2699 = vmatpush2.msra.mxu0 0.0
      %2700 = vmatprep.subr.mxu0 0.0
      %2701 = vmatpush2.msra.mxu0 0.0
      %2702 = vmatprep.subr.mxu0 0.0
      %2703 = vmatpush2.msra.mxu0 0.0
      %2704 = vmatprep.subr.mxu0 0.0
      %2705 = vmatpush2.msra.mxu0 0.0
      %2706 = vmatprep.subr.mxu0 0.0
      %2707 = vmatpush2.msra.mxu0 0.0
      %2708 = vmatprep.subr.mxu0 0.0
      %2709 = vmatpush2.msra.mxu0 0.0
      %2710 = vmatprep.subr.mxu0 0.0
      %2711 = vmatpush2.msra.mxu0 0.0
      %2712 = vmatprep.subr.mxu0 0.0
      %2713 = vmatpush2.msra.mxu0 0.0
      %2714 = vmatprep.subr.mxu0 0.0
      %2715 = vmatpush2.msra.mxu0 0.0
      %2716 = vmatprep.subr.mxu0 0.0
      %2717 = vmatpush2.msra.mxu0 0.0
      %2718 = vmatprep.subr.mxu0 0.0
      %2719 = vmatpush2.msra.mxu0 0.0
      %2720 = vmatprep.subr.mxu0 0.0
      %2721 = vmatpush2.msra.mxu0 0.0
      %2722 = vmatprep.subr.mxu0 0.0
      %2723 = vmatpush2.msra.mxu0 0.0
      %2724 = vmatprep.mubr.f32.mxu0 0.0
      %2725 = vmatmul.mubr.f32.gmra.mxu0 %v2462
      %v2726 = vpop.f32.mrf.mxu0
      %v2727 = vadd.f32 %v2362, %v2726
      %v2728 = vpop.f32.mrf.mxu0
      %v2729 = vadd.f32 %v2364, %v2728
      %2730 = vmatprep.mubr.f32.mxu0 0.0
      %2731 = vmatmul.mubr.f32.gmra.mxu0 %v2465
      %v2732 = vpop.f32.mrf.mxu0
      %v2733 = vadd.f32 %v2368, %v2732
      %v2734 = vpop.f32.mrf.mxu0
      %v2735 = vadd.f32 %v2370, %v2734
      %2736 = vmatprep.mubr.f32.mxu0 0.0
      %2737 = vmatmul.mubr.f32.gmra.mxu0 %v2468
      %v2738 = vpop.f32.mrf.mxu0
      %v2739 = vadd.f32 %v2374, %v2738
      %v2740 = vpop.f32.mrf.mxu0
      %v2741 = vadd.f32 %v2376, %v2740
      %2742 = vdwg.mxu0
      %2743 = vmatprep.subr.mxu0 0.0
      %2744 = vmatpush1.msra.mxu0 0.0
      %2745 = vmatprep.subr.mxu0 0.0
      %2746 = vmatpush1.msra.mxu0 0.0
      %2747 = vmatprep.subr.mxu0 0.0
      %2748 = vmatpush1.msra.mxu0 0.0
      %2749 = vmatprep.subr.mxu0 0.0
      %2750 = vmatpush1.msra.mxu0 0.0
      %2751 = vmatprep.subr.mxu0 0.0
      %2752 = vmatpush1.msra.mxu0 0.0
      %2753 = vmatprep.subr.mxu0 0.0
      %2754 = vmatpush1.msra.mxu0 0.0
      %2755 = vmatprep.subr.mxu0 0.0
      %2756 = vmatpush1.msra.mxu0 0.0
      %2757 = vmatprep.subr.mxu0 0.0
      %2758 = vmatpush1.msra.mxu0 0.0
      %2759 = vmatprep.subr.mxu0 0.0
      %2760 = vmatpush1.msra.mxu0 0.0
      %2761 = vmatprep.subr.mxu0 0.0
      %2762 = vmatpush1.msra.mxu0 0.0
      %2763 = vmatprep.subr.mxu0 0.0
      %2764 = vmatpush1.msra.mxu0 0.0
      %2765 = vmatprep.subr.mxu0 0.0
      %2766 = vmatpush1.msra.mxu0 0.0
      %2767 = vmatprep.subr.mxu0 0.0
      %2768 = vmatpush1.msra.mxu0 0.0
      %2769 = vmatprep.subr.mxu0 0.0
      %2770 = vmatpush1.msra.mxu0 0.0
      %2771 = vmatprep.subr.mxu0 %v2492
      %2772 = vmatpush1.msra.mxu0 %v2489
      %2773 = vmatprep.subr.mxu0 %v2006
      %2774 = vmatpush1.msra.mxu0 %v2005
      %2775 = vmatprep.subr.mxu0 0.0
      %2776 = vmatpush2.msra.mxu0 0.0
      %2777 = vmatprep.subr.mxu0 0.0
      %2778 = vmatpush2.msra.mxu0 0.0
      %2779 = vmatprep.subr.mxu0 0.0
      %2780 = vmatpush2.msra.mxu0 0.0
      %2781 = vmatprep.subr.mxu0 0.0
      %2782 = vmatpush2.msra.mxu0 0.0
      %2783 = vmatprep.subr.mxu0 0.0
      %2784 = vmatpush2.msra.mxu0 0.0
      %2785 = vmatprep.subr.mxu0 0.0
      %2786 = vmatpush2.msra.mxu0 0.0
      %2787 = vmatprep.subr.mxu0 0.0
      %2788 = vmatpush2.msra.mxu0 0.0
      %2789 = vmatprep.subr.mxu0 0.0
      %2790 = vmatpush2.msra.mxu0 0.0
      %2791 = vmatprep.subr.mxu0 0.0
      %2792 = vmatpush2.msra.mxu0 0.0
      %2793 = vmatprep.subr.mxu0 0.0
      %2794 = vmatpush2.msra.mxu0 0.0
      %2795 = vmatprep.subr.mxu0 0.0
      %2796 = vmatpush2.msra.mxu0 0.0
      %2797 = vmatprep.subr.mxu0 0.0
      %2798 = vmatpush2.msra.mxu0 0.0
      %2799 = vmatprep.subr.mxu0 0.0
      %2800 = vmatpush2.msra.mxu0 0.0
      %2801 = vmatprep.subr.mxu0 0.0
      %2802 = vmatpush2.msra.mxu0 0.0
      %2803 = vmatprep.subr.mxu0 0.0
      %2804 = vmatpush2.msra.mxu0 0.0
      %2805 = vmatprep.subr.mxu0 0.0
      %2806 = vmatpush2.msra.mxu0 0.0
      %2807 = vmatprep.mubr.f32.mxu0 0.0
      %2808 = vmatmul.mubr.f32.gmra.mxu0 %v2462
      %v2809 = vpop.f32.mrf.mxu0
      %v2810 = vadd.f32 %v2445, %v2809
      %v2811 = vpop.f32.mrf.mxu0
      %v2812 = vadd.f32 %v2447, %v2811
      %2813 = vmatprep.mubr.f32.mxu0 0.0
      %2814 = vmatmul.mubr.f32.gmra.mxu0 %v2465
      %v2815 = vpop.f32.mrf.mxu0
      %v2816 = vadd.f32 %v2451, %v2815
      %v2817 = vpop.f32.mrf.mxu0
      %v2818 = vadd.f32 %v2453, %v2817
      %2819 = vmatprep.mubr.f32.mxu0 0.0
      %2820 = vmatmul.mubr.f32.gmra.mxu0 %v2468
      %v2821 = vpop.f32.mrf.mxu0
      %v2822 = vadd.f32 %v2457, %v2821
      %v2823 = vpop.f32.mrf.mxu0
      %v2824 = vadd.f32 %v2459, %v2823
      %2825 = vdwg.mxu0
      %v2826 = vsel %vm1959, 1, 0
      %v2827 = vsel %vm1960, 1, 0
      %v2828 = vsel %vm1961, 1, 0
      %v2829 = vsel %vm1962, 1, 0
      %v2830 = vsel %vm1963, 1, 0
      %v2831 = vsel %vm1964, 1, 0
      %v2832 = vsel %vm1965, 1, 0
      %v2833 = vsel %vm1966, 1, 0
      %vm2834 = vcmp.eq.s32.totalorder %v2826, 1
      %vm2835 = vcmp.eq.s32.totalorder %v2827, 1
      %vm2836 = vcmp.eq.s32.totalorder %v2828, 1
      %vm2837 = vcmp.eq.s32.totalorder %v2829, 1
      %vm2838 = vcmp.eq.s32.totalorder %v2830, 1
      %vm2839 = vcmp.eq.s32.totalorder %v2831, 1
      %vm2840 = vcmp.eq.s32.totalorder %v2832, 1
      %vm2841 = vcmp.eq.s32.totalorder %v2833, 1
      %2842 = vrot.lane.b32.xlu0 %v1967, 126
      %v2843 = vpop.permute.xlu0 %2842
      %2844 = vrot.lane.b32.xlu0 %v1968, 126
      %v2845 = vpop.permute.xlu0 %2844
      %2846 = vrot.lane.b32.xlu0 %v1969, 126
      %v2847 = vpop.permute.xlu0 %2846
      %2848 = vrot.lane.b32.xlu0 %v1970, 126
      %v2849 = vpop.permute.xlu0 %2848
      %2850 = vrot.lane.b32.xlu0 %v1971, 126
      %v2851 = vpop.permute.xlu0 %2850
      %2852 = vrot.lane.b32.xlu0 %v1972, 126
      %v2853 = vpop.permute.xlu0 %2852
      %2854 = vrot.lane.b32.xlu0 %v1973, 126
      %v2855 = vpop.permute.xlu0 %2854
      %2856 = vrot.lane.b32.xlu0 %v1974, 126
      %v2857 = vpop.permute.xlu0 %2856
      %2858 = vrot.lane.b32.xlu0 %v2018, 126
      %v2859 = vpop.permute.xlu0 %2858
      %2860 = vrot.lane.b32.xlu0 %v1975, 126
      %v2861 = vpop.permute.xlu0 %2860
      %2862 = vrot.lane.b32.xlu0 %v1976, 126
      %v2863 = vpop.permute.xlu0 %2862
      %2864 = vrot.lane.b32.xlu0 %v1977, 126
      %v2865 = vpop.permute.xlu0 %2864
      %2866 = vrot.lane.b32.xlu0 %v1978, 126
      %v2867 = vpop.permute.xlu0 %2866
      %2868 = vrot.lane.b32.xlu0 %v1979, 126
      %v2869 = vpop.permute.xlu0 %2868
      %2870 = vrot.lane.b32.xlu0 %v1980, 126
      %v2871 = vpop.permute.xlu0 %2870
      %2872 = vrot.lane.b32.xlu0 %v1981, 126
      %v2873 = vpop.permute.xlu0 %2872
      %2874 = vrot.lane.b32.xlu0 %v1982, 126
      %v2875 = vpop.permute.xlu0 %2874
      %2876 = vrot.lane.b32.xlu0 %v2019, 126
      %v2877 = vpop.permute.xlu0 %2876
      %vm2878 = vcmask 1031168
      %v2879 = vsel %vm2878, %v2843, %v2845
      %v2880 = vsel %vm2878, %v2845, %v2847
      %v2881 = vsel %vm2878, %v2847, %v2849
      %v2882 = vsel %vm2878, %v2849, %v2851
      %v2883 = vsel %vm2878, %v2851, %v2853
      %v2884 = vsel %vm2878, %v2853, %v2855
      %v2885 = vsel %vm2878, %v2855, %v2857
      %v2886 = vsel %vm2878, %v2857, %v2859
      %v2887 = vsel %vm2878, %v2861, %v2863
      %v2888 = vsel %vm2878, %v2863, %v2865
      %v2889 = vsel %vm2878, %v2865, %v2867
      %v2890 = vsel %vm2878, %v2867, %v2869
      %v2891 = vsel %vm2878, %v2869, %v2871
      %v2892 = vsel %vm2878, %v2871, %v2873
      %v2893 = vsel %vm2878, %v2873, %v2875
      %v2894 = vsel %vm2878, %v2875, %v2877
      %v2911 = vsel %vm2834, %v2879, 0.0
      %v2912 = vsel %vm2835, %v2880, 0.0
      %v2913 = vsel %vm2836, %v2881, 0.0
      %v2914 = vsel %vm2837, %v2882, 0.0
      %v2915 = vsel %vm2838, %v2883, 0.0
      %v2916 = vsel %vm2839, %v2884, 0.0
      %v2917 = vsel %vm2840, %v2885, 0.0
      %v2918 = vsel %vm2841, %v2886, 0.0
      %v2919 = vsel %vm2834, %v2887, 0.0
      %v2920 = vsel %vm2835, %v2888, 0.0
      %v2921 = vsel %vm2836, %v2889, 0.0
      %v2922 = vsel %vm2837, %v2890, 0.0
      %v2923 = vsel %vm2838, %v2891, 0.0
      %v2924 = vsel %vm2839, %v2892, 0.0
      %v2925 = vsel %vm2840, %v2893, 0.0
      %v2926 = vsel %vm2841, %v2894, 0.0
      %s2927 = scalar_lea.vmem %s2, 48
      %v2928 = vld [vmem:[%s2927] sm:$0xff]
      %v2929 = vld [vmem:[%s2927 + $0x8] sm:$0xff]
      %v2930 = vld [vmem:[%s2927 + $0x10] sm:$0xff]
      %v2932 = vsel %vm2103, %v2928, 0
      %v2935 = vsel %vm2103, %v2929, 0
      %v2938 = vsel %vm2103, %v2930, 0
      %v2941 = vsel %vm387, %v2919, 0
      %v2944 = vsel %vm387, %v2920, 0
      %v2947 = vsel %vm387, %v2921, 0
      %v2950 = vsel %vm387, %v2922, 0
      %v2953 = vsel %vm387, %v2923, 0
      %v2956 = vsel %vm387, %v2924, 0
      %v2959 = vsel %vm387, %v2925, 0
      %v2962 = vsel %vm387, %v2926, 0
      %2964 = vmatprep.subr.mxu0 0.0
      %2965 = vmatpush1.msra.mxu0 0.0
      %2966 = vmatprep.subr.mxu0 0.0
      %2967 = vmatpush1.msra.mxu0 0.0
      %2968 = vmatprep.subr.mxu0 0.0
      %2969 = vmatpush1.msra.mxu0 0.0
      %2970 = vmatprep.subr.mxu0 0.0
      %2971 = vmatpush1.msra.mxu0 0.0
      %2972 = vmatprep.subr.mxu0 0.0
      %2973 = vmatpush1.msra.mxu0 0.0
      %2974 = vmatprep.subr.mxu0 0.0
      %2975 = vmatpush1.msra.mxu0 0.0
      %2976 = vmatprep.subr.mxu0 0.0
      %2977 = vmatpush1.msra.mxu0 0.0
      %2978 = vmatprep.subr.mxu0 0.0
      %2979 = vmatpush1.msra.mxu0 0.0
      %2980 = vmatprep.subr.mxu0 0.0
      %2981 = vmatpush1.msra.mxu0 0.0
      %2982 = vmatprep.subr.mxu0 0.0
      %2983 = vmatpush1.msra.mxu0 0.0
      %2984 = vmatprep.subr.mxu0 0.0
      %2985 = vmatpush1.msra.mxu0 0.0
      %2986 = vmatprep.subr.mxu0 0.0
      %2987 = vmatpush1.msra.mxu0 0.0
      %2988 = vmatprep.subr.mxu0 0.0
      %2989 = vmatpush1.msra.mxu0 0.0
      %2990 = vmatprep.subr.mxu0 0.0
      %2991 = vmatpush1.msra.mxu0 0.0
      %2992 = vmatprep.subr.mxu0 %v2944
      %2993 = vmatpush1.msra.mxu0 %v2941
      %2994 = vmatprep.subr.mxu0 %v2912
      %2995 = vmatpush1.msra.mxu0 %v2911
      %2996 = vmatprep.subr.mxu0 0.0
      %2997 = vmatpush2.msra.mxu0 0.0
      %2998 = vmatprep.subr.mxu0 0.0
      %2999 = vmatpush2.msra.mxu0 0.0
      %3000 = vmatprep.subr.mxu0 0.0
      %3001 = vmatpush2.msra.mxu0 0.0
      %3002 = vmatprep.subr.mxu0 0.0
      %3003 = vmatpush2.msra.mxu0 0.0
      %3004 = vmatprep.subr.mxu0 0.0
      %3005 = vmatpush2.msra.mxu0 0.0
      %3006 = vmatprep.subr.mxu0 0.0
      %3007 = vmatpush2.msra.mxu0 0.0
      %3008 = vmatprep.subr.mxu0 0.0
      %3009 = vmatpush2.msra.mxu0 0.0
      %3010 = vmatprep.subr.mxu0 0.0
      %3011 = vmatpush2.msra.mxu0 0.0
      %3012 = vmatprep.subr.mxu0 0.0
      %3013 = vmatpush2.msra.mxu0 0.0
      %3014 = vmatprep.subr.mxu0 0.0
      %3015 = vmatpush2.msra.mxu0 0.0
      %3016 = vmatprep.subr.mxu0 0.0
      %3017 = vmatpush2.msra.mxu0 0.0
      %3018 = vmatprep.subr.mxu0 0.0
      %3019 = vmatpush2.msra.mxu0 0.0
      %3020 = vmatprep.subr.mxu0 0.0
      %3021 = vmatpush2.msra.mxu0 0.0
      %3022 = vmatprep.subr.mxu0 0.0
      %3023 = vmatpush2.msra.mxu0 0.0
      %3024 = vmatprep.subr.mxu0 0.0
      %3025 = vmatpush2.msra.mxu0 0.0
      %3026 = vmatprep.subr.mxu0 0.0
      %3027 = vmatpush2.msra.mxu0 0.0
      %3028 = vmatprep.mubr.f32.mxu0 0.0
      %3029 = vmatmul.mubr.f32.gmra.mxu0 %v2932
      %v3030 = vpop.f32.mrf.mxu0
      %v3031 = vadd.f32 0.0, %v3030
      %v3032 = vpop.f32.mrf.mxu0
      %v3033 = vadd.f32 0.0, %v3032
      %3034 = vmatprep.mubr.f32.mxu0 0.0
      %3035 = vmatmul.mubr.f32.gmra.mxu0 %v2935
      %v3036 = vpop.f32.mrf.mxu0
      %v3037 = vadd.f32 0.0, %v3036
      %v3038 = vpop.f32.mrf.mxu0
      %v3039 = vadd.f32 0.0, %v3038
      %3040 = vmatprep.mubr.f32.mxu0 0.0
      %3041 = vmatmul.mubr.f32.gmra.mxu0 %v2938
      %v3042 = vpop.f32.mrf.mxu0
      %v3043 = vadd.f32 0.0, %v3042
      %v3044 = vpop.f32.mrf.mxu0
      %v3045 = vadd.f32 0.0, %v3044
      %3046 = vdwg.mxu0
      %3047 = vmatprep.subr.mxu0 0.0
      %3048 = vmatpush1.msra.mxu0 0.0
      %3049 = vmatprep.subr.mxu0 0.0
      %3050 = vmatpush1.msra.mxu0 0.0
      %3051 = vmatprep.subr.mxu0 0.0
      %3052 = vmatpush1.msra.mxu0 0.0
      %3053 = vmatprep.subr.mxu0 0.0
      %3054 = vmatpush1.msra.mxu0 0.0
      %3055 = vmatprep.subr.mxu0 0.0
      %3056 = vmatpush1.msra.mxu0 0.0
      %3057 = vmatprep.subr.mxu0 0.0
      %3058 = vmatpush1.msra.mxu0 0.0
      %3059 = vmatprep.subr.mxu0 0.0
      %3060 = vmatpush1.msra.mxu0 0.0
      %3061 = vmatprep.subr.mxu0 0.0
      %3062 = vmatpush1.msra.mxu0 0.0
      %3063 = vmatprep.subr.mxu0 0.0
      %3064 = vmatpush1.msra.mxu0 0.0
      %3065 = vmatprep.subr.mxu0 0.0
      %3066 = vmatpush1.msra.mxu0 0.0
      %3067 = vmatprep.subr.mxu0 0.0
      %3068 = vmatpush1.msra.mxu0 0.0
      %3069 = vmatprep.subr.mxu0 0.0
      %3070 = vmatpush1.msra.mxu0 0.0
      %3071 = vmatprep.subr.mxu0 0.0
      %3072 = vmatpush1.msra.mxu0 0.0
      %3073 = vmatprep.subr.mxu0 0.0
      %3074 = vmatpush1.msra.mxu0 0.0
      %3075 = vmatprep.subr.mxu0 %v2950
      %3076 = vmatpush1.msra.mxu0 %v2947
      %3077 = vmatprep.subr.mxu0 %v2914
      %3078 = vmatpush1.msra.mxu0 %v2913
      %3079 = vmatprep.subr.mxu0 0.0
      %3080 = vmatpush2.msra.mxu0 0.0
      %3081 = vmatprep.subr.mxu0 0.0
      %3082 = vmatpush2.msra.mxu0 0.0
      %3083 = vmatprep.subr.mxu0 0.0
      %3084 = vmatpush2.msra.mxu0 0.0
      %3085 = vmatprep.subr.mxu0 0.0
      %3086 = vmatpush2.msra.mxu0 0.0
      %3087 = vmatprep.subr.mxu0 0.0
      %3088 = vmatpush2.msra.mxu0 0.0
      %3089 = vmatprep.subr.mxu0 0.0
      %3090 = vmatpush2.msra.mxu0 0.0
      %3091 = vmatprep.subr.mxu0 0.0
      %3092 = vmatpush2.msra.mxu0 0.0
      %3093 = vmatprep.subr.mxu0 0.0
      %3094 = vmatpush2.msra.mxu0 0.0
      %3095 = vmatprep.subr.mxu0 0.0
      %3096 = vmatpush2.msra.mxu0 0.0
      %3097 = vmatprep.subr.mxu0 0.0
      %3098 = vmatpush2.msra.mxu0 0.0
      %3099 = vmatprep.subr.mxu0 0.0
      %3100 = vmatpush2.msra.mxu0 0.0
      %3101 = vmatprep.subr.mxu0 0.0
      %3102 = vmatpush2.msra.mxu0 0.0
      %3103 = vmatprep.subr.mxu0 0.0
      %3104 = vmatpush2.msra.mxu0 0.0
      %3105 = vmatprep.subr.mxu0 0.0
      %3106 = vmatpush2.msra.mxu0 0.0
      %3107 = vmatprep.subr.mxu0 0.0
      %3108 = vmatpush2.msra.mxu0 0.0
      %3109 = vmatprep.subr.mxu0 0.0
      %3110 = vmatpush2.msra.mxu0 0.0
      %3111 = vmatprep.mubr.f32.mxu0 0.0
      %3112 = vmatmul.mubr.f32.gmra.mxu0 %v2932
      %v3113 = vpop.f32.mrf.mxu0
      %v3114 = vadd.f32 0.0, %v3113
      %v3115 = vpop.f32.mrf.mxu0
      %v3116 = vadd.f32 0.0, %v3115
      %3117 = vmatprep.mubr.f32.mxu0 0.0
      %3118 = vmatmul.mubr.f32.gmra.mxu0 %v2935
      %v3119 = vpop.f32.mrf.mxu0
      %v3120 = vadd.f32 0.0, %v3119
      %v3121 = vpop.f32.mrf.mxu0
      %v3122 = vadd.f32 0.0, %v3121
      %3123 = vmatprep.mubr.f32.mxu0 0.0
      %3124 = vmatmul.mubr.f32.gmra.mxu0 %v2938
      %v3125 = vpop.f32.mrf.mxu0
      %v3126 = vadd.f32 0.0, %v3125
      %v3127 = vpop.f32.mrf.mxu0
      %v3128 = vadd.f32 0.0, %v3127
      %3129 = vdwg.mxu0
      %3130 = vmatprep.subr.mxu0 0.0
      %3131 = vmatpush1.msra.mxu0 0.0
      %3132 = vmatprep.subr.mxu0 0.0
      %3133 = vmatpush1.msra.mxu0 0.0
      %3134 = vmatprep.subr.mxu0 0.0
      %3135 = vmatpush1.msra.mxu0 0.0
      %3136 = vmatprep.subr.mxu0 0.0
      %3137 = vmatpush1.msra.mxu0 0.0
      %3138 = vmatprep.subr.mxu0 0.0
      %3139 = vmatpush1.msra.mxu0 0.0
      %3140 = vmatprep.subr.mxu0 0.0
      %3141 = vmatpush1.msra.mxu0 0.0
      %3142 = vmatprep.subr.mxu0 0.0
      %3143 = vmatpush1.msra.mxu0 0.0
      %3144 = vmatprep.subr.mxu0 0.0
      %3145 = vmatpush1.msra.mxu0 0.0
      %3146 = vmatprep.subr.mxu0 0.0
      %3147 = vmatpush1.msra.mxu0 0.0
      %3148 = vmatprep.subr.mxu0 0.0
      %3149 = vmatpush1.msra.mxu0 0.0
      %3150 = vmatprep.subr.mxu0 0.0
      %3151 = vmatpush1.msra.mxu0 0.0
      %3152 = vmatprep.subr.mxu0 0.0
      %3153 = vmatpush1.msra.mxu0 0.0
      %3154 = vmatprep.subr.mxu0 0.0
      %3155 = vmatpush1.msra.mxu0 0.0
      %3156 = vmatprep.subr.mxu0 0.0
      %3157 = vmatpush1.msra.mxu0 0.0
      %3158 = vmatprep.subr.mxu0 %v2956
      %3159 = vmatpush1.msra.mxu0 %v2953
      %3160 = vmatprep.subr.mxu0 %v2916
      %3161 = vmatpush1.msra.mxu0 %v2915
      %3162 = vmatprep.subr.mxu0 0.0
      %3163 = vmatpush2.msra.mxu0 0.0
      %3164 = vmatprep.subr.mxu0 0.0
      %3165 = vmatpush2.msra.mxu0 0.0
      %3166 = vmatprep.subr.mxu0 0.0
      %3167 = vmatpush2.msra.mxu0 0.0
      %3168 = vmatprep.subr.mxu0 0.0
      %3169 = vmatpush2.msra.mxu0 0.0
      %3170 = vmatprep.subr.mxu0 0.0
      %3171 = vmatpush2.msra.mxu0 0.0
      %3172 = vmatprep.subr.mxu0 0.0
      %3173 = vmatpush2.msra.mxu0 0.0
      %3174 = vmatprep.subr.mxu0 0.0
      %3175 = vmatpush2.msra.mxu0 0.0
      %3176 = vmatprep.subr.mxu0 0.0
      %3177 = vmatpush2.msra.mxu0 0.0
      %3178 = vmatprep.subr.mxu0 0.0
      %3179 = vmatpush2.msra.mxu0 0.0
      %3180 = vmatprep.subr.mxu0 0.0
      %3181 = vmatpush2.msra.mxu0 0.0
      %3182 = vmatprep.subr.mxu0 0.0
      %3183 = vmatpush2.msra.mxu0 0.0
      %3184 = vmatprep.subr.mxu0 0.0
      %3185 = vmatpush2.msra.mxu0 0.0
      %3186 = vmatprep.subr.mxu0 0.0
      %3187 = vmatpush2.msra.mxu0 0.0
      %3188 = vmatprep.subr.mxu0 0.0
      %3189 = vmatpush2.msra.mxu0 0.0
      %3190 = vmatprep.subr.mxu0 0.0
      %3191 = vmatpush2.msra.mxu0 0.0
      %3192 = vmatprep.subr.mxu0 0.0
      %3193 = vmatpush2.msra.mxu0 0.0
      %3194 = vmatprep.mubr.f32.mxu0 0.0
      %3195 = vmatmul.mubr.f32.gmra.mxu0 %v2932
      %v3196 = vpop.f32.mrf.mxu0
      %v3197 = vadd.f32 0.0, %v3196
      %v3198 = vpop.f32.mrf.mxu0
      %v3199 = vadd.f32 0.0, %v3198
      %3200 = vmatprep.mubr.f32.mxu0 0.0
      %3201 = vmatmul.mubr.f32.gmra.mxu0 %v2935
      %v3202 = vpop.f32.mrf.mxu0
      %v3203 = vadd.f32 0.0, %v3202
      %v3204 = vpop.f32.mrf.mxu0
      %v3205 = vadd.f32 0.0, %v3204
      %3206 = vmatprep.mubr.f32.mxu0 0.0
      %3207 = vmatmul.mubr.f32.gmra.mxu0 %v2938
      %v3208 = vpop.f32.mrf.mxu0
      %v3209 = vadd.f32 0.0, %v3208
      %v3210 = vpop.f32.mrf.mxu0
      %v3211 = vadd.f32 0.0, %v3210
      %3212 = vdwg.mxu0
      %3213 = vmatprep.subr.mxu0 0.0
      %3214 = vmatpush1.msra.mxu0 0.0
      %3215 = vmatprep.subr.mxu0 0.0
      %3216 = vmatpush1.msra.mxu0 0.0
      %3217 = vmatprep.subr.mxu0 0.0
      %3218 = vmatpush1.msra.mxu0 0.0
      %3219 = vmatprep.subr.mxu0 0.0
      %3220 = vmatpush1.msra.mxu0 0.0
      %3221 = vmatprep.subr.mxu0 0.0
      %3222 = vmatpush1.msra.mxu0 0.0
      %3223 = vmatprep.subr.mxu0 0.0
      %3224 = vmatpush1.msra.mxu0 0.0
      %3225 = vmatprep.subr.mxu0 0.0
      %3226 = vmatpush1.msra.mxu0 0.0
      %3227 = vmatprep.subr.mxu0 0.0
      %3228 = vmatpush1.msra.mxu0 0.0
      %3229 = vmatprep.subr.mxu0 0.0
      %3230 = vmatpush1.msra.mxu0 0.0
      %3231 = vmatprep.subr.mxu0 0.0
      %3232 = vmatpush1.msra.mxu0 0.0
      %3233 = vmatprep.subr.mxu0 0.0
      %3234 = vmatpush1.msra.mxu0 0.0
      %3235 = vmatprep.subr.mxu0 0.0
      %3236 = vmatpush1.msra.mxu0 0.0
      %3237 = vmatprep.subr.mxu0 0.0
      %3238 = vmatpush1.msra.mxu0 0.0
      %3239 = vmatprep.subr.mxu0 0.0
      %3240 = vmatpush1.msra.mxu0 0.0
      %3241 = vmatprep.subr.mxu0 %v2962
      %3242 = vmatpush1.msra.mxu0 %v2959
      %3243 = vmatprep.subr.mxu0 %v2918
      %3244 = vmatpush1.msra.mxu0 %v2917
      %3245 = vmatprep.subr.mxu0 0.0
      %3246 = vmatpush2.msra.mxu0 0.0
      %3247 = vmatprep.subr.mxu0 0.0
      %3248 = vmatpush2.msra.mxu0 0.0
      %3249 = vmatprep.subr.mxu0 0.0
      %3250 = vmatpush2.msra.mxu0 0.0
      %3251 = vmatprep.subr.mxu0 0.0
      %3252 = vmatpush2.msra.mxu0 0.0
      %3253 = vmatprep.subr.mxu0 0.0
      %3254 = vmatpush2.msra.mxu0 0.0
      %3255 = vmatprep.subr.mxu0 0.0
      %3256 = vmatpush2.msra.mxu0 0.0
      %3257 = vmatprep.subr.mxu0 0.0
      %3258 = vmatpush2.msra.mxu0 0.0
      %3259 = vmatprep.subr.mxu0 0.0
      %3260 = vmatpush2.msra.mxu0 0.0
      %3261 = vmatprep.subr.mxu0 0.0
      %3262 = vmatpush2.msra.mxu0 0.0
      %3263 = vmatprep.subr.mxu0 0.0
      %3264 = vmatpush2.msra.mxu0 0.0
      %3265 = vmatprep.subr.mxu0 0.0
      %3266 = vmatpush2.msra.mxu0 0.0
      %3267 = vmatprep.subr.mxu0 0.0
      %3268 = vmatpush2.msra.mxu0 0.0
      %3269 = vmatprep.subr.mxu0 0.0
      %3270 = vmatpush2.msra.mxu0 0.0
      %3271 = vmatprep.subr.mxu0 0.0
      %3272 = vmatpush2.msra.mxu0 0.0
      %3273 = vmatprep.subr.mxu0 0.0
      %3274 = vmatpush2.msra.mxu0 0.0
      %3275 = vmatprep.subr.mxu0 0.0
      %3276 = vmatpush2.msra.mxu0 0.0
      %3277 = vmatprep.mubr.f32.mxu0 0.0
      %3278 = vmatmul.mubr.f32.gmra.mxu0 %v2932
      %v3279 = vpop.f32.mrf.mxu0
      %v3280 = vadd.f32 0.0, %v3279
      %v3281 = vpop.f32.mrf.mxu0
      %v3282 = vadd.f32 0.0, %v3281
      %3283 = vmatprep.mubr.f32.mxu0 0.0
      %3284 = vmatmul.mubr.f32.gmra.mxu0 %v2935
      %v3285 = vpop.f32.mrf.mxu0
      %v3286 = vadd.f32 0.0, %v3285
      %v3287 = vpop.f32.mrf.mxu0
      %v3288 = vadd.f32 0.0, %v3287
      %3289 = vmatprep.mubr.f32.mxu0 0.0
      %3290 = vmatmul.mubr.f32.gmra.mxu0 %v2938
      %v3291 = vpop.f32.mrf.mxu0
      %v3292 = vadd.f32 0.0, %v3291
      %v3293 = vpop.f32.mrf.mxu0
      %v3294 = vadd.f32 0.0, %v3293
      %3295 = vdwg.mxu0
      %v3296 = vadd.f32 %v2561, %v3031
      %v3297 = vadd.f32 %v2563, %v3033
      %v3298 = vadd.f32 %v2644, %v3114
      %v3299 = vadd.f32 %v2646, %v3116
      %v3300 = vadd.f32 %v2727, %v3197
      %v3301 = vadd.f32 %v2729, %v3199
      %v3302 = vadd.f32 %v2810, %v3280
      %v3303 = vadd.f32 %v2812, %v3282
      %v3304 = vadd.f32 %v2567, %v3037
      %v3305 = vadd.f32 %v2569, %v3039
      %v3306 = vadd.f32 %v2650, %v3120
      %v3307 = vadd.f32 %v2652, %v3122
      %v3308 = vadd.f32 %v2733, %v3203
      %v3309 = vadd.f32 %v2735, %v3205
      %v3310 = vadd.f32 %v2816, %v3286
      %v3311 = vadd.f32 %v2818, %v3288
      %v3312 = vadd.f32 %v2573, %v3043
      %v3313 = vadd.f32 %v2575, %v3045
      %v3314 = vadd.f32 %v2656, %v3126
      %v3315 = vadd.f32 %v2658, %v3128
      %v3316 = vadd.f32 %v2739, %v3209
      %v3317 = vadd.f32 %v2741, %v3211
      %v3318 = vadd.f32 %v2822, %v3292
      %v3319 = vadd.f32 %v2824, %v3294
      %3320 = vrot.lane.b32.xlu0 %v1967, 96
      %v3321 = vpop.permute.xlu0 %3320
      %3322 = vrot.lane.b32.xlu0 %v1968, 96
      %v3323 = vpop.permute.xlu0 %3322
      %3324 = vrot.lane.b32.xlu0 %v1969, 96
      %v3325 = vpop.permute.xlu0 %3324
      %3326 = vrot.lane.b32.xlu0 %v1970, 96
      %v3327 = vpop.permute.xlu0 %3326
      %3328 = vrot.lane.b32.xlu0 %v1971, 96
      %v3329 = vpop.permute.xlu0 %3328
      %3330 = vrot.lane.b32.xlu0 %v1972, 96
      %v3331 = vpop.permute.xlu0 %3330
      %3332 = vrot.lane.b32.xlu0 %v1973, 96
      %v3333 = vpop.permute.xlu0 %3332
      %3334 = vrot.lane.b32.xlu0 %v1974, 96
      %v3335 = vpop.permute.xlu0 %3334
      %3336 = vrot.lane.b32.xlu0 %v2018, 96
      %v3337 = vpop.permute.xlu0 %3336
      %3338 = vrot.lane.b32.xlu0 %v1975, 96
      %v3339 = vpop.permute.xlu0 %3338
      %3340 = vrot.lane.b32.xlu0 %v1976, 96
      %v3341 = vpop.permute.xlu0 %3340
      %3342 = vrot.lane.b32.xlu0 %v1977, 96
      %v3343 = vpop.permute.xlu0 %3342
      %3344 = vrot.lane.b32.xlu0 %v1978, 96
      %v3345 = vpop.permute.xlu0 %3344
      %3346 = vrot.lane.b32.xlu0 %v1979, 96
      %v3347 = vpop.permute.xlu0 %3346
      %3348 = vrot.lane.b32.xlu0 %v1980, 96
      %v3349 = vpop.permute.xlu0 %3348
      %3350 = vrot.lane.b32.xlu0 %v1981, 96
      %v3351 = vpop.permute.xlu0 %3350
      %3352 = vrot.lane.b32.xlu0 %v1982, 96
      %v3353 = vpop.permute.xlu0 %3352
      %3354 = vrot.lane.b32.xlu0 %v2019, 96
      %v3355 = vpop.permute.xlu0 %3354
      %vm3356 = vcmask 785408
      %v3357 = vsel %vm3356, %v3321, %v3323
      %v3358 = vsel %vm3356, %v3323, %v3325
      %v3359 = vsel %vm3356, %v3325, %v3327
      %v3360 = vsel %vm3356, %v3327, %v3329
      %v3361 = vsel %vm3356, %v3329, %v3331
      %v3362 = vsel %vm3356, %v3331, %v3333
      %v3363 = vsel %vm3356, %v3333, %v3335
      %v3364 = vsel %vm3356, %v3335, %v3337
      %v3365 = vsel %vm3356, %v3339, %v3341
      %v3366 = vsel %vm3356, %v3341, %v3343
      %v3367 = vsel %vm3356, %v3343, %v3345
      %v3368 = vsel %vm3356, %v3345, %v3347
      %v3369 = vsel %vm3356, %v3347, %v3349
      %v3370 = vsel %vm3356, %v3349, %v3351
      %v3371 = vsel %vm3356, %v3351, %v3353
      %v3372 = vsel %vm3356, %v3353, %v3355
      %v3389 = vsel %vm1991, %v3357, 0.0
      %v3390 = vsel %vm1992, %v3358, 0.0
      %v3391 = vsel %vm1993, %v3359, 0.0
      %v3392 = vsel %vm1994, %v3360, 0.0
      %v3393 = vsel %vm1995, %v3361, 0.0
      %v3394 = vsel %vm1996, %v3362, 0.0
      %v3395 = vsel %vm1997, %v3363, 0.0
      %v3396 = vsel %vm1998, %v3364, 0.0
      %v3397 = vsel %vm1991, %v3365, 0.0
      %v3398 = vsel %vm1992, %v3366, 0.0
      %v3399 = vsel %vm1993, %v3367, 0.0
      %v3400 = vsel %vm1994, %v3368, 0.0
      %v3401 = vsel %vm1995, %v3369, 0.0
      %v3402 = vsel %vm1996, %v3370, 0.0
      %v3403 = vsel %vm1997, %v3371, 0.0
      %v3404 = vsel %vm1998, %v3372, 0.0
      %s3405 = scalar_lea.vmem %s2, 72
      %v3406 = vld [vmem:[%s3405] sm:$0xff]
      %v3407 = vld [vmem:[%s3405 + $0x8] sm:$0xff]
      %v3408 = vld [vmem:[%s3405 + $0x10] sm:$0xff]
      %v3410 = vsel %vm2103, %v3406, 0
      %v3413 = vsel %vm2103, %v3407, 0
      %v3416 = vsel %vm2103, %v3408, 0
      %v3419 = vsel %vm387, %v3397, 0
      %v3422 = vsel %vm387, %v3398, 0
      %v3425 = vsel %vm387, %v3399, 0
      %v3428 = vsel %vm387, %v3400, 0
      %v3431 = vsel %vm387, %v3401, 0
      %v3434 = vsel %vm387, %v3402, 0
      %v3437 = vsel %vm387, %v3403, 0
      %v3440 = vsel %vm387, %v3404, 0
      %3442 = vmatprep.subr.mxu0 0.0
      %3443 = vmatpush1.msra.mxu0 0.0
      %3444 = vmatprep.subr.mxu0 0.0
      %3445 = vmatpush1.msra.mxu0 0.0
      %3446 = vmatprep.subr.mxu0 0.0
      %3447 = vmatpush1.msra.mxu0 0.0
      %3448 = vmatprep.subr.mxu0 0.0
      %3449 = vmatpush1.msra.mxu0 0.0
      %3450 = vmatprep.subr.mxu0 0.0
      %3451 = vmatpush1.msra.mxu0 0.0
      %3452 = vmatprep.subr.mxu0 0.0
      %3453 = vmatpush1.msra.mxu0 0.0
      %3454 = vmatprep.subr.mxu0 0.0
      %3455 = vmatpush1.msra.mxu0 0.0
      %3456 = vmatprep.subr.mxu0 0.0
      %3457 = vmatpush1.msra.mxu0 0.0
      %3458 = vmatprep.subr.mxu0 0.0
      %3459 = vmatpush1.msra.mxu0 0.0
      %3460 = vmatprep.subr.mxu0 0.0
      %3461 = vmatpush1.msra.mxu0 0.0
      %3462 = vmatprep.subr.mxu0 0.0
      %3463 = vmatpush1.msra.mxu0 0.0
      %3464 = vmatprep.subr.mxu0 0.0
      %3465 = vmatpush1.msra.mxu0 0.0
      %3466 = vmatprep.subr.mxu0 0.0
      %3467 = vmatpush1.msra.mxu0 0.0
      %3468 = vmatprep.subr.mxu0 0.0
      %3469 = vmatpush1.msra.mxu0 0.0
      %3470 = vmatprep.subr.mxu0 %v3422
      %3471 = vmatpush1.msra.mxu0 %v3419
      %3472 = vmatprep.subr.mxu0 %v3390
      %3473 = vmatpush1.msra.mxu0 %v3389
      %3474 = vmatprep.subr.mxu0 0.0
      %3475 = vmatpush2.msra.mxu0 0.0
      %3476 = vmatprep.subr.mxu0 0.0
      %3477 = vmatpush2.msra.mxu0 0.0
      %3478 = vmatprep.subr.mxu0 0.0
      %3479 = vmatpush2.msra.mxu0 0.0
      %3480 = vmatprep.subr.mxu0 0.0
      %3481 = vmatpush2.msra.mxu0 0.0
      %3482 = vmatprep.subr.mxu0 0.0
      %3483 = vmatpush2.msra.mxu0 0.0
      %3484 = vmatprep.subr.mxu0 0.0
      %3485 = vmatpush2.msra.mxu0 0.0
      %3486 = vmatprep.subr.mxu0 0.0
      %3487 = vmatpush2.msra.mxu0 0.0
      %3488 = vmatprep.subr.mxu0 0.0
      %3489 = vmatpush2.msra.mxu0 0.0
      %3490 = vmatprep.subr.mxu0 0.0
      %3491 = vmatpush2.msra.mxu0 0.0
      %3492 = vmatprep.subr.mxu0 0.0
      %3493 = vmatpush2.msra.mxu0 0.0
      %3494 = vmatprep.subr.mxu0 0.0
      %3495 = vmatpush2.msra.mxu0 0.0
      %3496 = vmatprep.subr.mxu0 0.0
      %3497 = vmatpush2.msra.mxu0 0.0
      %3498 = vmatprep.subr.mxu0 0.0
      %3499 = vmatpush2.msra.mxu0 0.0
      %3500 = vmatprep.subr.mxu0 0.0
      %3501 = vmatpush2.msra.mxu0 0.0
      %3502 = vmatprep.subr.mxu0 0.0
      %3503 = vmatpush2.msra.mxu0 0.0
      %3504 = vmatprep.subr.mxu0 0.0
      %3505 = vmatpush2.msra.mxu0 0.0
      %3506 = vmatprep.mubr.f32.mxu0 0.0
      %3507 = vmatmul.mubr.f32.gmra.mxu0 %v3410
      %v3508 = vpop.f32.mrf.mxu0
      %v3509 = vadd.f32 0.0, %v3508
      %v3510 = vpop.f32.mrf.mxu0
      %v3511 = vadd.f32 0.0, %v3510
      %3512 = vmatprep.mubr.f32.mxu0 0.0
      %3513 = vmatmul.mubr.f32.gmra.mxu0 %v3413
      %v3514 = vpop.f32.mrf.mxu0
      %v3515 = vadd.f32 0.0, %v3514
      %v3516 = vpop.f32.mrf.mxu0
      %v3517 = vadd.f32 0.0, %v3516
      %3518 = vmatprep.mubr.f32.mxu0 0.0
      %3519 = vmatmul.mubr.f32.gmra.mxu0 %v3416
      %v3520 = vpop.f32.mrf.mxu0
      %v3521 = vadd.f32 0.0, %v3520
      %v3522 = vpop.f32.mrf.mxu0
      %v3523 = vadd.f32 0.0, %v3522
      %3524 = vdwg.mxu0
      %3525 = vmatprep.subr.mxu0 0.0
      %3526 = vmatpush1.msra.mxu0 0.0
      %3527 = vmatprep.subr.mxu0 0.0
      %3528 = vmatpush1.msra.mxu0 0.0
      %3529 = vmatprep.subr.mxu0 0.0
      %3530 = vmatpush1.msra.mxu0 0.0
      %3531 = vmatprep.subr.mxu0 0.0
      %3532 = vmatpush1.msra.mxu0 0.0
      %3533 = vmatprep.subr.mxu0 0.0
      %3534 = vmatpush1.msra.mxu0 0.0
      %3535 = vmatprep.subr.mxu0 0.0
      %3536 = vmatpush1.msra.mxu0 0.0
      %3537 = vmatprep.subr.mxu0 0.0
      %3538 = vmatpush1.msra.mxu0 0.0
      %3539 = vmatprep.subr.mxu0 0.0
      %3540 = vmatpush1.msra.mxu0 0.0
      %3541 = vmatprep.subr.mxu0 0.0
      %3542 = vmatpush1.msra.mxu0 0.0
      %3543 = vmatprep.subr.mxu0 0.0
      %3544 = vmatpush1.msra.mxu0 0.0
      %3545 = vmatprep.subr.mxu0 0.0
      %3546 = vmatpush1.msra.mxu0 0.0
      %3547 = vmatprep.subr.mxu0 0.0
      %3548 = vmatpush1.msra.mxu0 0.0
      %3549 = vmatprep.subr.mxu0 0.0
      %3550 = vmatpush1.msra.mxu0 0.0
      %3551 = vmatprep.subr.mxu0 0.0
      %3552 = vmatpush1.msra.mxu0 0.0
      %3553 = vmatprep.subr.mxu0 %v3428
      %3554 = vmatpush1.msra.mxu0 %v3425
      %3555 = vmatprep.subr.mxu0 %v3392
      %3556 = vmatpush1.msra.mxu0 %v3391
      %3557 = vmatprep.subr.mxu0 0.0
      %3558 = vmatpush2.msra.mxu0 0.0
      %3559 = vmatprep.subr.mxu0 0.0
      %3560 = vmatpush2.msra.mxu0 0.0
      %3561 = vmatprep.subr.mxu0 0.0
      %3562 = vmatpush2.msra.mxu0 0.0
      %3563 = vmatprep.subr.mxu0 0.0
      %3564 = vmatpush2.msra.mxu0 0.0
      %3565 = vmatprep.subr.mxu0 0.0
      %3566 = vmatpush2.msra.mxu0 0.0
      %3567 = vmatprep.subr.mxu0 0.0
      %3568 = vmatpush2.msra.mxu0 0.0
      %3569 = vmatprep.subr.mxu0 0.0
      %3570 = vmatpush2.msra.mxu0 0.0
      %3571 = vmatprep.subr.mxu0 0.0
      %3572 = vmatpush2.msra.mxu0 0.0
      %3573 = vmatprep.subr.mxu0 0.0
      %3574 = vmatpush2.msra.mxu0 0.0
      %3575 = vmatprep.subr.mxu0 0.0
      %3576 = vmatpush2.msra.mxu0 0.0
      %3577 = vmatprep.subr.mxu0 0.0
      %3578 = vmatpush2.msra.mxu0 0.0
      %3579 = vmatprep.subr.mxu0 0.0
      %3580 = vmatpush2.msra.mxu0 0.0
      %3581 = vmatprep.subr.mxu0 0.0
      %3582 = vmatpush2.msra.mxu0 0.0
      %3583 = vmatprep.subr.mxu0 0.0
      %3584 = vmatpush2.msra.mxu0 0.0
      %3585 = vmatprep.subr.mxu0 0.0
      %3586 = vmatpush2.msra.mxu0 0.0
      %3587 = vmatprep.subr.mxu0 0.0
      %3588 = vmatpush2.msra.mxu0 0.0
      %3589 = vmatprep.mubr.f32.mxu0 0.0
      %3590 = vmatmul.mubr.f32.gmra.mxu0 %v3410
      %v3591 = vpop.f32.mrf.mxu0
      %v3592 = vadd.f32 0.0, %v3591
      %v3593 = vpop.f32.mrf.mxu0
      %v3594 = vadd.f32 0.0, %v3593
      %3595 = vmatprep.mubr.f32.mxu0 0.0
      %3596 = vmatmul.mubr.f32.gmra.mxu0 %v3413
      %v3597 = vpop.f32.mrf.mxu0
      %v3598 = vadd.f32 0.0, %v3597
      %v3599 = vpop.f32.mrf.mxu0
      %v3600 = vadd.f32 0.0, %v3599
      %3601 = vmatprep.mubr.f32.mxu0 0.0
      %3602 = vmatmul.mubr.f32.gmra.mxu0 %v3416
      %v3603 = vpop.f32.mrf.mxu0
      %v3604 = vadd.f32 0.0, %v3603
      %v3605 = vpop.f32.mrf.mxu0
      %v3606 = vadd.f32 0.0, %v3605
      %3607 = vdwg.mxu0
      %3608 = vmatprep.subr.mxu0 0.0
      %3609 = vmatpush1.msra.mxu0 0.0
      %3610 = vmatprep.subr.mxu0 0.0
      %3611 = vmatpush1.msra.mxu0 0.0
      %3612 = vmatprep.subr.mxu0 0.0
      %3613 = vmatpush1.msra.mxu0 0.0
      %3614 = vmatprep.subr.mxu0 0.0
      %3615 = vmatpush1.msra.mxu0 0.0
      %3616 = vmatprep.subr.mxu0 0.0
      %3617 = vmatpush1.msra.mxu0 0.0
      %3618 = vmatprep.subr.mxu0 0.0
      %3619 = vmatpush1.msra.mxu0 0.0
      %3620 = vmatprep.subr.mxu0 0.0
      %3621 = vmatpush1.msra.mxu0 0.0
      %3622 = vmatprep.subr.mxu0 0.0
      %3623 = vmatpush1.msra.mxu0 0.0
      %3624 = vmatprep.subr.mxu0 0.0
      %3625 = vmatpush1.msra.mxu0 0.0
      %3626 = vmatprep.subr.mxu0 0.0
      %3627 = vmatpush1.msra.mxu0 0.0
      %3628 = vmatprep.subr.mxu0 0.0
      %3629 = vmatpush1.msra.mxu0 0.0
      %3630 = vmatprep.subr.mxu0 0.0
      %3631 = vmatpush1.msra.mxu0 0.0
      %3632 = vmatprep.subr.mxu0 0.0
      %3633 = vmatpush1.msra.mxu0 0.0
      %3634 = vmatprep.subr.mxu0 0.0
      %3635 = vmatpush1.msra.mxu0 0.0
      %3636 = vmatprep.subr.mxu0 %v3434
      %3637 = vmatpush1.msra.mxu0 %v3431
      %3638 = vmatprep.subr.mxu0 %v3394
      %3639 = vmatpush1.msra.mxu0 %v3393
      %3640 = vmatprep.subr.mxu0 0.0
      %3641 = vmatpush2.msra.mxu0 0.0
      %3642 = vmatprep.subr.mxu0 0.0
      %3643 = vmatpush2.msra.mxu0 0.0
      %3644 = vmatprep.subr.mxu0 0.0
      %3645 = vmatpush2.msra.mxu0 0.0
      %3646 = vmatprep.subr.mxu0 0.0
      %3647 = vmatpush2.msra.mxu0 0.0
      %3648 = vmatprep.subr.mxu0 0.0
      %3649 = vmatpush2.msra.mxu0 0.0
      %3650 = vmatprep.subr.mxu0 0.0
      %3651 = vmatpush2.msra.mxu0 0.0
      %3652 = vmatprep.subr.mxu0 0.0
      %3653 = vmatpush2.msra.mxu0 0.0
      %3654 = vmatprep.subr.mxu0 0.0
      %3655 = vmatpush2.msra.mxu0 0.0
      %3656 = vmatprep.subr.mxu0 0.0
      %3657 = vmatpush2.msra.mxu0 0.0
      %3658 = vmatprep.subr.mxu0 0.0
      %3659 = vmatpush2.msra.mxu0 0.0
      %3660 = vmatprep.subr.mxu0 0.0
      %3661 = vmatpush2.msra.mxu0 0.0
      %3662 = vmatprep.subr.mxu0 0.0
      %3663 = vmatpush2.msra.mxu0 0.0
      %3664 = vmatprep.subr.mxu0 0.0
      %3665 = vmatpush2.msra.mxu0 0.0
      %3666 = vmatprep.subr.mxu0 0.0
      %3667 = vmatpush2.msra.mxu0 0.0
      %3668 = vmatprep.subr.mxu0 0.0
      %3669 = vmatpush2.msra.mxu0 0.0
      %3670 = vmatprep.subr.mxu0 0.0
      %3671 = vmatpush2.msra.mxu0 0.0
      %3672 = vmatprep.mubr.f32.mxu0 0.0
      %3673 = vmatmul.mubr.f32.gmra.mxu0 %v3410
      %v3674 = vpop.f32.mrf.mxu0
      %v3675 = vadd.f32 0.0, %v3674
      %v3676 = vpop.f32.mrf.mxu0
      %v3677 = vadd.f32 0.0, %v3676
      %3678 = vmatprep.mubr.f32.mxu0 0.0
      %3679 = vmatmul.mubr.f32.gmra.mxu0 %v3413
      %v3680 = vpop.f32.mrf.mxu0
      %v3681 = vadd.f32 0.0, %v3680
      %v3682 = vpop.f32.mrf.mxu0
      %v3683 = vadd.f32 0.0, %v3682
      %3684 = vmatprep.mubr.f32.mxu0 0.0
      %3685 = vmatmul.mubr.f32.gmra.mxu0 %v3416
      %v3686 = vpop.f32.mrf.mxu0
      %v3687 = vadd.f32 0.0, %v3686
      %v3688 = vpop.f32.mrf.mxu0
      %v3689 = vadd.f32 0.0, %v3688
      %3690 = vdwg.mxu0
      %3691 = vmatprep.subr.mxu0 0.0
      %3692 = vmatpush1.msra.mxu0 0.0
      %3693 = vmatprep.subr.mxu0 0.0
      %3694 = vmatpush1.msra.mxu0 0.0
      %3695 = vmatprep.subr.mxu0 0.0
      %3696 = vmatpush1.msra.mxu0 0.0
      %3697 = vmatprep.subr.mxu0 0.0
      %3698 = vmatpush1.msra.mxu0 0.0
      %3699 = vmatprep.subr.mxu0 0.0
      %3700 = vmatpush1.msra.mxu0 0.0
      %3701 = vmatprep.subr.mxu0 0.0
      %3702 = vmatpush1.msra.mxu0 0.0
      %3703 = vmatprep.subr.mxu0 0.0
      %3704 = vmatpush1.msra.mxu0 0.0
      %3705 = vmatprep.subr.mxu0 0.0
      %3706 = vmatpush1.msra.mxu0 0.0
      %3707 = vmatprep.subr.mxu0 0.0
      %3708 = vmatpush1.msra.mxu0 0.0
      %3709 = vmatprep.subr.mxu0 0.0
      %3710 = vmatpush1.msra.mxu0 0.0
      %3711 = vmatprep.subr.mxu0 0.0
      %3712 = vmatpush1.msra.mxu0 0.0
      %3713 = vmatprep.subr.mxu0 0.0
      %3714 = vmatpush1.msra.mxu0 0.0
      %3715 = vmatprep.subr.mxu0 0.0
      %3716 = vmatpush1.msra.mxu0 0.0
      %3717 = vmatprep.subr.mxu0 0.0
      %3718 = vmatpush1.msra.mxu0 0.0
      %3719 = vmatprep.subr.mxu0 %v3440
      %3720 = vmatpush1.msra.mxu0 %v3437
      %3721 = vmatprep.subr.mxu0 %v3396
      %3722 = vmatpush1.msra.mxu0 %v3395
      %3723 = vmatprep.subr.mxu0 0.0
      %3724 = vmatpush2.msra.mxu0 0.0
      %3725 = vmatprep.subr.mxu0 0.0
      %3726 = vmatpush2.msra.mxu0 0.0
      %3727 = vmatprep.subr.mxu0 0.0
      %3728 = vmatpush2.msra.mxu0 0.0
      %3729 = vmatprep.subr.mxu0 0.0
      %3730 = vmatpush2.msra.mxu0 0.0
      %3731 = vmatprep.subr.mxu0 0.0
      %3732 = vmatpush2.msra.mxu0 0.0
      %3733 = vmatprep.subr.mxu0 0.0
      %3734 = vmatpush2.msra.mxu0 0.0
      %3735 = vmatprep.subr.mxu0 0.0
      %3736 = vmatpush2.msra.mxu0 0.0
      %3737 = vmatprep.subr.mxu0 0.0
      %3738 = vmatpush2.msra.mxu0 0.0
      %3739 = vmatprep.subr.mxu0 0.0
      %3740 = vmatpush2.msra.mxu0 0.0
      %3741 = vmatprep.subr.mxu0 0.0
      %3742 = vmatpush2.msra.mxu0 0.0
      %3743 = vmatprep.subr.mxu0 0.0
      %3744 = vmatpush2.msra.mxu0 0.0
      %3745 = vmatprep.subr.mxu0 0.0
      %3746 = vmatpush2.msra.mxu0 0.0
      %3747 = vmatprep.subr.mxu0 0.0
      %3748 = vmatpush2.msra.mxu0 0.0
      %3749 = vmatprep.subr.mxu0 0.0
      %3750 = vmatpush2.msra.mxu0 0.0
      %3751 = vmatprep.subr.mxu0 0.0
      %3752 = vmatpush2.msra.mxu0 0.0
      %3753 = vmatprep.subr.mxu0 0.0
      %3754 = vmatpush2.msra.mxu0 0.0
      %3755 = vmatprep.mubr.f32.mxu0 0.0
      %3756 = vmatmul.mubr.f32.gmra.mxu0 %v3410
      %v3757 = vpop.f32.mrf.mxu0
      %v3758 = vadd.f32 0.0, %v3757
      %v3759 = vpop.f32.mrf.mxu0
      %v3760 = vadd.f32 0.0, %v3759
      %3761 = vmatprep.mubr.f32.mxu0 0.0
      %3762 = vmatmul.mubr.f32.gmra.mxu0 %v3413
      %v3763 = vpop.f32.mrf.mxu0
      %v3764 = vadd.f32 0.0, %v3763
      %v3765 = vpop.f32.mrf.mxu0
      %v3766 = vadd.f32 0.0, %v3765
      %3767 = vmatprep.mubr.f32.mxu0 0.0
      %3768 = vmatmul.mubr.f32.gmra.mxu0 %v3416
      %v3769 = vpop.f32.mrf.mxu0
      %v3770 = vadd.f32 0.0, %v3769
      %v3771 = vpop.f32.mrf.mxu0
      %v3772 = vadd.f32 0.0, %v3771
      %3773 = vdwg.mxu0
      %v3774 = vadd.f32 %v3296, %v3509
      %v3775 = vadd.f32 %v3297, %v3511
      %v3776 = vadd.f32 %v3298, %v3592
      %v3777 = vadd.f32 %v3299, %v3594
      %v3778 = vadd.f32 %v3300, %v3675
      %v3779 = vadd.f32 %v3301, %v3677
      %v3780 = vadd.f32 %v3302, %v3758
      %v3781 = vadd.f32 %v3303, %v3760
      %v3782 = vadd.f32 %v3304, %v3515
      %v3783 = vadd.f32 %v3305, %v3517
      %v3784 = vadd.f32 %v3306, %v3598
      %v3785 = vadd.f32 %v3307, %v3600
      %v3786 = vadd.f32 %v3308, %v3681
      %v3787 = vadd.f32 %v3309, %v3683
      %v3788 = vadd.f32 %v3310, %v3764
      %v3789 = vadd.f32 %v3311, %v3766
      %v3790 = vadd.f32 %v3312, %v3521
      %v3791 = vadd.f32 %v3313, %v3523
      %v3792 = vadd.f32 %v3314, %v3604
      %v3793 = vadd.f32 %v3315, %v3606
      %v3794 = vadd.f32 %v3316, %v3687
      %v3795 = vadd.f32 %v3317, %v3689
      %v3796 = vadd.f32 %v3318, %v3770
      %v3797 = vadd.f32 %v3319, %v3772
      %s3798 = scalar_lea.vmem %s2, 96
      %v3799 = vld [vmem:[%s3798] sm:$0xff]
      %v3800 = vld [vmem:[%s3798 + $0x8] sm:$0xff]
      %v3801 = vld [vmem:[%s3798 + $0x10] sm:$0xff]
      %3802 = vrot.lane.b32.xlu0 %v1967, 95
      %v3803 = vpop.permute.xlu0 %3802
      %3804 = vrot.lane.b32.xlu0 %v1968, 95
      %v3805 = vpop.permute.xlu0 %3804
      %3806 = vrot.lane.b32.xlu0 %v1969, 95
      %v3807 = vpop.permute.xlu0 %3806
      %3808 = vrot.lane.b32.xlu0 %v1970, 95
      %v3809 = vpop.permute.xlu0 %3808
      %3810 = vrot.lane.b32.xlu0 %v1971, 95
      %v3811 = vpop.permute.xlu0 %3810
      %3812 = vrot.lane.b32.xlu0 %v1972, 95
      %v3813 = vpop.permute.xlu0 %3812
      %3814 = vrot.lane.b32.xlu0 %v1973, 95
      %v3815 = vpop.permute.xlu0 %3814
      %3816 = vrot.lane.b32.xlu0 %v1974, 95
      %v3817 = vpop.permute.xlu0 %3816
      %3818 = vrot.lane.b32.xlu0 %v2018, 95
      %v3819 = vpop.permute.xlu0 %3818
      %3820 = vrot.lane.b32.xlu0 %v1975, 95
      %v3821 = vpop.permute.xlu0 %3820
      %3822 = vrot.lane.b32.xlu0 %v1976, 95
      %v3823 = vpop.permute.xlu0 %3822
      %3824 = vrot.lane.b32.xlu0 %v1977, 95
      %v3825 = vpop.permute.xlu0 %3824
      %3826 = vrot.lane.b32.xlu0 %v1978, 95
      %v3827 = vpop.permute.xlu0 %3826
      %3828 = vrot.lane.b32.xlu0 %v1979, 95
      %v3829 = vpop.permute.xlu0 %3828
      %3830 = vrot.lane.b32.xlu0 %v1980, 95
      %v3831 = vpop.permute.xlu0 %3830
      %3832 = vrot.lane.b32.xlu0 %v1981, 95
      %v3833 = vpop.permute.xlu0 %3832
      %3834 = vrot.lane.b32.xlu0 %v1982, 95
      %v3835 = vpop.permute.xlu0 %3834
      %3836 = vrot.lane.b32.xlu0 %v2019, 95
      %v3837 = vpop.permute.xlu0 %3836
      %vm3838 = vcmask 777216
      %v3839 = vsel %vm3838, %v3803, %v3805
      %v3840 = vsel %vm3838, %v3805, %v3807
      %v3841 = vsel %vm3838, %v3807, %v3809
      %v3842 = vsel %vm3838, %v3809, %v3811
      %v3843 = vsel %vm3838, %v3811, %v3813
      %v3844 = vsel %vm3838, %v3813, %v3815
      %v3845 = vsel %vm3838, %v3815, %v3817
      %v3846 = vsel %vm3838, %v3817, %v3819
      %v3847 = vsel %vm3838, %v3821, %v3823
      %v3848 = vsel %vm3838, %v3823, %v3825
      %v3849 = vsel %vm3838, %v3825, %v3827
      %v3850 = vsel %vm3838, %v3827, %v3829
      %v3851 = vsel %vm3838, %v3829, %v3831
      %v3852 = vsel %vm3838, %v3831, %v3833
      %v3853 = vsel %vm3838, %v3833, %v3835
      %v3854 = vsel %vm3838, %v3835, %v3837
      %v3864 = vsel %vm2103, %v3799, 0
      %v3867 = vsel %vm2103, %v3800, 0
      %v3870 = vsel %vm2103, %v3801, 0
      %v3872 = vsel %vm387, %v3847, 0
      %v3874 = vsel %vm387, %v3848, 0
      %v3876 = vsel %vm387, %v3849, 0
      %v3878 = vsel %vm387, %v3850, 0
      %v3880 = vsel %vm387, %v3851, 0
      %v3882 = vsel %vm387, %v3852, 0
      %v3884 = vsel %vm387, %v3853, 0
      %v3886 = vsel %vm387, %v3854, 0
      %3888 = vmatprep.subr.mxu0 0.0
      %3889 = vmatpush1.msra.mxu0 0.0
      %3890 = vmatprep.subr.mxu0 0.0
      %3891 = vmatpush1.msra.mxu0 0.0
      %3892 = vmatprep.subr.mxu0 0.0
      %3893 = vmatpush1.msra.mxu0 0.0
      %3894 = vmatprep.subr.mxu0 0.0
      %3895 = vmatpush1.msra.mxu0 0.0
      %3896 = vmatprep.subr.mxu0 0.0
      %3897 = vmatpush1.msra.mxu0 0.0
      %3898 = vmatprep.subr.mxu0 0.0
      %3899 = vmatpush1.msra.mxu0 0.0
      %3900 = vmatprep.subr.mxu0 0.0
      %3901 = vmatpush1.msra.mxu0 0.0
      %3902 = vmatprep.subr.mxu0 0.0
      %3903 = vmatpush1.msra.mxu0 0.0
      %3904 = vmatprep.subr.mxu0 0.0
      %3905 = vmatpush1.msra.mxu0 0.0
      %3906 = vmatprep.subr.mxu0 0.0
      %3907 = vmatpush1.msra.mxu0 0.0
      %3908 = vmatprep.subr.mxu0 0.0
      %3909 = vmatpush1.msra.mxu0 0.0
      %3910 = vmatprep.subr.mxu0 0.0
      %3911 = vmatpush1.msra.mxu0 0.0
      %3912 = vmatprep.subr.mxu0 0.0
      %3913 = vmatpush1.msra.mxu0 0.0
      %3914 = vmatprep.subr.mxu0 0.0
      %3915 = vmatpush1.msra.mxu0 0.0
      %3916 = vmatprep.subr.mxu0 %v3874
      %3917 = vmatpush1.msra.mxu0 %v3872
      %3918 = vmatprep.subr.mxu0 %v3840
      %3919 = vmatpush1.msra.mxu0 %v3839
      %3920 = vmatprep.subr.mxu0 0.0
      %3921 = vmatpush2.msra.mxu0 0.0
      %3922 = vmatprep.subr.mxu0 0.0
      %3923 = vmatpush2.msra.mxu0 0.0
      %3924 = vmatprep.subr.mxu0 0.0
      %3925 = vmatpush2.msra.mxu0 0.0
      %3926 = vmatprep.subr.mxu0 0.0
      %3927 = vmatpush2.msra.mxu0 0.0
      %3928 = vmatprep.subr.mxu0 0.0
      %3929 = vmatpush2.msra.mxu0 0.0
      %3930 = vmatprep.subr.mxu0 0.0
      %3931 = vmatpush2.msra.mxu0 0.0
      %3932 = vmatprep.subr.mxu0 0.0
      %3933 = vmatpush2.msra.mxu0 0.0
      %3934 = vmatprep.subr.mxu0 0.0
      %3935 = vmatpush2.msra.mxu0 0.0
      %3936 = vmatprep.subr.mxu0 0.0
      %3937 = vmatpush2.msra.mxu0 0.0
      %3938 = vmatprep.subr.mxu0 0.0
      %3939 = vmatpush2.msra.mxu0 0.0
      %3940 = vmatprep.subr.mxu0 0.0
      %3941 = vmatpush2.msra.mxu0 0.0
      %3942 = vmatprep.subr.mxu0 0.0
      %3943 = vmatpush2.msra.mxu0 0.0
      %3944 = vmatprep.subr.mxu0 0.0
      %3945 = vmatpush2.msra.mxu0 0.0
      %3946 = vmatprep.subr.mxu0 0.0
      %3947 = vmatpush2.msra.mxu0 0.0
      %3948 = vmatprep.subr.mxu0 0.0
      %3949 = vmatpush2.msra.mxu0 0.0
      %3950 = vmatprep.subr.mxu0 0.0
      %3951 = vmatpush2.msra.mxu0 0.0
      %3952 = vmatprep.mubr.f32.mxu0 0.0
      %3953 = vmatmul.mubr.f32.gmra.mxu0 %v3864
      %v3954 = vpop.f32.mrf.mxu0
      %v3955 = vadd.f32 0.0, %v3954
      %v3956 = vpop.f32.mrf.mxu0
      %v3957 = vadd.f32 0.0, %v3956
      %3958 = vmatprep.mubr.f32.mxu0 0.0
      %3959 = vmatmul.mubr.f32.gmra.mxu0 %v3867
      %v3960 = vpop.f32.mrf.mxu0
      %v3961 = vadd.f32 0.0, %v3960
      %v3962 = vpop.f32.mrf.mxu0
      %v3963 = vadd.f32 0.0, %v3962
      %3964 = vmatprep.mubr.f32.mxu0 0.0
      %3965 = vmatmul.mubr.f32.gmra.mxu0 %v3870
      %v3966 = vpop.f32.mrf.mxu0
      %v3967 = vadd.f32 0.0, %v3966
      %v3968 = vpop.f32.mrf.mxu0
      %v3969 = vadd.f32 0.0, %v3968
      %3970 = vdwg.mxu0
      %3971 = vmatprep.subr.mxu0 0.0
      %3972 = vmatpush1.msra.mxu0 0.0
      %3973 = vmatprep.subr.mxu0 0.0
      %3974 = vmatpush1.msra.mxu0 0.0
      %3975 = vmatprep.subr.mxu0 0.0
      %3976 = vmatpush1.msra.mxu0 0.0
      %3977 = vmatprep.subr.mxu0 0.0
      %3978 = vmatpush1.msra.mxu0 0.0
      %3979 = vmatprep.subr.mxu0 0.0
      %3980 = vmatpush1.msra.mxu0 0.0
      %3981 = vmatprep.subr.mxu0 0.0
      %3982 = vmatpush1.msra.mxu0 0.0
      %3983 = vmatprep.subr.mxu0 0.0
      %3984 = vmatpush1.msra.mxu0 0.0
      %3985 = vmatprep.subr.mxu0 0.0
      %3986 = vmatpush1.msra.mxu0 0.0
      %3987 = vmatprep.subr.mxu0 0.0
      %3988 = vmatpush1.msra.mxu0 0.0
      %3989 = vmatprep.subr.mxu0 0.0
      %3990 = vmatpush1.msra.mxu0 0.0
      %3991 = vmatprep.subr.mxu0 0.0
      %3992 = vmatpush1.msra.mxu0 0.0
      %3993 = vmatprep.subr.mxu0 0.0
      %3994 = vmatpush1.msra.mxu0 0.0
      %3995 = vmatprep.subr.mxu0 0.0
      %3996 = vmatpush1.msra.mxu0 0.0
      %3997 = vmatprep.subr.mxu0 0.0
      %3998 = vmatpush1.msra.mxu0 0.0
      %3999 = vmatprep.subr.mxu0 %v3878
      %4000 = vmatpush1.msra.mxu0 %v3876
      %4001 = vmatprep.subr.mxu0 %v3842
      %4002 = vmatpush1.msra.mxu0 %v3841
      %4003 = vmatprep.subr.mxu0 0.0
      %4004 = vmatpush2.msra.mxu0 0.0
      %4005 = vmatprep.subr.mxu0 0.0
      %4006 = vmatpush2.msra.mxu0 0.0
      %4007 = vmatprep.subr.mxu0 0.0
      %4008 = vmatpush2.msra.mxu0 0.0
      %4009 = vmatprep.subr.mxu0 0.0
      %4010 = vmatpush2.msra.mxu0 0.0
      %4011 = vmatprep.subr.mxu0 0.0
      %4012 = vmatpush2.msra.mxu0 0.0
      %4013 = vmatprep.subr.mxu0 0.0
      %4014 = vmatpush2.msra.mxu0 0.0
      %4015 = vmatprep.subr.mxu0 0.0
      %4016 = vmatpush2.msra.mxu0 0.0
      %4017 = vmatprep.subr.mxu0 0.0
      %4018 = vmatpush2.msra.mxu0 0.0
      %4019 = vmatprep.subr.mxu0 0.0
      %4020 = vmatpush2.msra.mxu0 0.0
      %4021 = vmatprep.subr.mxu0 0.0
      %4022 = vmatpush2.msra.mxu0 0.0
      %4023 = vmatprep.subr.mxu0 0.0
      %4024 = vmatpush2.msra.mxu0 0.0
      %4025 = vmatprep.subr.mxu0 0.0
      %4026 = vmatpush2.msra.mxu0 0.0
      %4027 = vmatprep.subr.mxu0 0.0
      %4028 = vmatpush2.msra.mxu0 0.0
      %4029 = vmatprep.subr.mxu0 0.0
      %4030 = vmatpush2.msra.mxu0 0.0
      %4031 = vmatprep.subr.mxu0 0.0
      %4032 = vmatpush2.msra.mxu0 0.0
      %4033 = vmatprep.subr.mxu0 0.0
      %4034 = vmatpush2.msra.mxu0 0.0
      %4035 = vmatprep.mubr.f32.mxu0 0.0
      %4036 = vmatmul.mubr.f32.gmra.mxu0 %v3864
      %v4037 = vpop.f32.mrf.mxu0
      %v4038 = vadd.f32 0.0, %v4037
      %v4039 = vpop.f32.mrf.mxu0
      %v4040 = vadd.f32 0.0, %v4039
      %4041 = vmatprep.mubr.f32.mxu0 0.0
      %4042 = vmatmul.mubr.f32.gmra.mxu0 %v3867
      %v4043 = vpop.f32.mrf.mxu0
      %v4044 = vadd.f32 0.0, %v4043
      %v4045 = vpop.f32.mrf.mxu0
      %v4046 = vadd.f32 0.0, %v4045
      %4047 = vmatprep.mubr.f32.mxu0 0.0
      %4048 = vmatmul.mubr.f32.gmra.mxu0 %v3870
      %v4049 = vpop.f32.mrf.mxu0
      %v4050 = vadd.f32 0.0, %v4049
      %v4051 = vpop.f32.mrf.mxu0
      %v4052 = vadd.f32 0.0, %v4051
      %4053 = vdwg.mxu0
      %4054 = vmatprep.subr.mxu0 0.0
      %4055 = vmatpush1.msra.mxu0 0.0
      %4056 = vmatprep.subr.mxu0 0.0
      %4057 = vmatpush1.msra.mxu0 0.0
      %4058 = vmatprep.subr.mxu0 0.0
      %4059 = vmatpush1.msra.mxu0 0.0
      %4060 = vmatprep.subr.mxu0 0.0
      %4061 = vmatpush1.msra.mxu0 0.0
      %4062 = vmatprep.subr.mxu0 0.0
      %4063 = vmatpush1.msra.mxu0 0.0
      %4064 = vmatprep.subr.mxu0 0.0
      %4065 = vmatpush1.msra.mxu0 0.0
      %4066 = vmatprep.subr.mxu0 0.0
      %4067 = vmatpush1.msra.mxu0 0.0
      %4068 = vmatprep.subr.mxu0 0.0
      %4069 = vmatpush1.msra.mxu0 0.0
      %4070 = vmatprep.subr.mxu0 0.0
      %4071 = vmatpush1.msra.mxu0 0.0
      %4072 = vmatprep.subr.mxu0 0.0
      %4073 = vmatpush1.msra.mxu0 0.0
      %4074 = vmatprep.subr.mxu0 0.0
      %4075 = vmatpush1.msra.mxu0 0.0
      %4076 = vmatprep.subr.mxu0 0.0
      %4077 = vmatpush1.msra.mxu0 0.0
      %4078 = vmatprep.subr.mxu0 0.0
      %4079 = vmatpush1.msra.mxu0 0.0
      %4080 = vmatprep.subr.mxu0 0.0
      %4081 = vmatpush1.msra.mxu0 0.0
      %4082 = vmatprep.subr.mxu0 %v3882
      %4083 = vmatpush1.msra.mxu0 %v3880
      %4084 = vmatprep.subr.mxu0 %v3844
      %4085 = vmatpush1.msra.mxu0 %v3843
      %4086 = vmatprep.subr.mxu0 0.0
      %4087 = vmatpush2.msra.mxu0 0.0
      %4088 = vmatprep.subr.mxu0 0.0
      %4089 = vmatpush2.msra.mxu0 0.0
      %4090 = vmatprep.subr.mxu0 0.0
      %4091 = vmatpush2.msra.mxu0 0.0
      %4092 = vmatprep.subr.mxu0 0.0
      %4093 = vmatpush2.msra.mxu0 0.0
      %4094 = vmatprep.subr.mxu0 0.0
      %4095 = vmatpush2.msra.mxu0 0.0
      %4096 = vmatprep.subr.mxu0 0.0
      %4097 = vmatpush2.msra.mxu0 0.0
      %4098 = vmatprep.subr.mxu0 0.0
      %4099 = vmatpush2.msra.mxu0 0.0
      %4100 = vmatprep.subr.mxu0 0.0
      %4101 = vmatpush2.msra.mxu0 0.0
      %4102 = vmatprep.subr.mxu0 0.0
      %4103 = vmatpush2.msra.mxu0 0.0
      %4104 = vmatprep.subr.mxu0 0.0
      %4105 = vmatpush2.msra.mxu0 0.0
      %4106 = vmatprep.subr.mxu0 0.0
      %4107 = vmatpush2.msra.mxu0 0.0
      %4108 = vmatprep.subr.mxu0 0.0
      %4109 = vmatpush2.msra.mxu0 0.0
      %4110 = vmatprep.subr.mxu0 0.0
      %4111 = vmatpush2.msra.mxu0 0.0
      %4112 = vmatprep.subr.mxu0 0.0
      %4113 = vmatpush2.msra.mxu0 0.0
      %4114 = vmatprep.subr.mxu0 0.0
      %4115 = vmatpush2.msra.mxu0 0.0
      %4116 = vmatprep.subr.mxu0 0.0
      %4117 = vmatpush2.msra.mxu0 0.0
      %4118 = vmatprep.mubr.f32.mxu0 0.0
      %4119 = vmatmul.mubr.f32.gmra.mxu0 %v3864
      %v4120 = vpop.f32.mrf.mxu0
      %v4121 = vadd.f32 0.0, %v4120
      %v4122 = vpop.f32.mrf.mxu0
      %v4123 = vadd.f32 0.0, %v4122
      %4124 = vmatprep.mubr.f32.mxu0 0.0
      %4125 = vmatmul.mubr.f32.gmra.mxu0 %v3867
      %v4126 = vpop.f32.mrf.mxu0
      %v4127 = vadd.f32 0.0, %v4126
      %v4128 = vpop.f32.mrf.mxu0
      %v4129 = vadd.f32 0.0, %v4128
      %4130 = vmatprep.mubr.f32.mxu0 0.0
      %4131 = vmatmul.mubr.f32.gmra.mxu0 %v3870
      %v4132 = vpop.f32.mrf.mxu0
      %v4133 = vadd.f32 0.0, %v4132
      %v4134 = vpop.f32.mrf.mxu0
      %v4135 = vadd.f32 0.0, %v4134
      %4136 = vdwg.mxu0
      %4137 = vmatprep.subr.mxu0 0.0
      %4138 = vmatpush1.msra.mxu0 0.0
      %4139 = vmatprep.subr.mxu0 0.0
      %4140 = vmatpush1.msra.mxu0 0.0
      %4141 = vmatprep.subr.mxu0 0.0
      %4142 = vmatpush1.msra.mxu0 0.0
      %4143 = vmatprep.subr.mxu0 0.0
      %4144 = vmatpush1.msra.mxu0 0.0
      %4145 = vmatprep.subr.mxu0 0.0
      %4146 = vmatpush1.msra.mxu0 0.0
      %4147 = vmatprep.subr.mxu0 0.0
      %4148 = vmatpush1.msra.mxu0 0.0
      %4149 = vmatprep.subr.mxu0 0.0
      %4150 = vmatpush1.msra.mxu0 0.0
      %4151 = vmatprep.subr.mxu0 0.0
      %4152 = vmatpush1.msra.mxu0 0.0
      %4153 = vmatprep.subr.mxu0 0.0
      %4154 = vmatpush1.msra.mxu0 0.0
      %4155 = vmatprep.subr.mxu0 0.0
      %4156 = vmatpush1.msra.mxu0 0.0
      %4157 = vmatprep.subr.mxu0 0.0
      %4158 = vmatpush1.msra.mxu0 0.0
      %4159 = vmatprep.subr.mxu0 0.0
      %4160 = vmatpush1.msra.mxu0 0.0
      %4161 = vmatprep.subr.mxu0 0.0
      %4162 = vmatpush1.msra.mxu0 0.0
      %4163 = vmatprep.subr.mxu0 0.0
      %4164 = vmatpush1.msra.mxu0 0.0
      %4165 = vmatprep.subr.mxu0 %v3886
      %4166 = vmatpush1.msra.mxu0 %v3884
      %4167 = vmatprep.subr.mxu0 %v3846
      %4168 = vmatpush1.msra.mxu0 %v3845
      %4169 = vmatprep.subr.mxu0 0.0
      %4170 = vmatpush2.msra.mxu0 0.0
      %4171 = vmatprep.subr.mxu0 0.0
      %4172 = vmatpush2.msra.mxu0 0.0
      %4173 = vmatprep.subr.mxu0 0.0
      %4174 = vmatpush2.msra.mxu0 0.0
      %4175 = vmatprep.subr.mxu0 0.0
      %4176 = vmatpush2.msra.mxu0 0.0
      %4177 = vmatprep.subr.mxu0 0.0
      %4178 = vmatpush2.msra.mxu0 0.0
      %4179 = vmatprep.subr.mxu0 0.0
      %4180 = vmatpush2.msra.mxu0 0.0
      %4181 = vmatprep.subr.mxu0 0.0
      %4182 = vmatpush2.msra.mxu0 0.0
      %4183 = vmatprep.subr.mxu0 0.0
      %4184 = vmatpush2.msra.mxu0 0.0
      %4185 = vmatprep.subr.mxu0 0.0
      %4186 = vmatpush2.msra.mxu0 0.0
      %4187 = vmatprep.subr.mxu0 0.0
      %4188 = vmatpush2.msra.mxu0 0.0
      %4189 = vmatprep.subr.mxu0 0.0
      %4190 = vmatpush2.msra.mxu0 0.0
      %4191 = vmatprep.subr.mxu0 0.0
      %4192 = vmatpush2.msra.mxu0 0.0
      %4193 = vmatprep.subr.mxu0 0.0
      %4194 = vmatpush2.msra.mxu0 0.0
      %4195 = vmatprep.subr.mxu0 0.0
      %4196 = vmatpush2.msra.mxu0 0.0
      %4197 = vmatprep.subr.mxu0 0.0
      %4198 = vmatpush2.msra.mxu0 0.0
      %4199 = vmatprep.subr.mxu0 0.0
      %4200 = vmatpush2.msra.mxu0 0.0
      %4201 = vmatprep.mubr.f32.mxu0 0.0
      %4202 = vmatmul.mubr.f32.gmra.mxu0 %v3864
      %v4203 = vpop.f32.mrf.mxu0
      %v4204 = vadd.f32 0.0, %v4203
      %v4205 = vpop.f32.mrf.mxu0
      %v4206 = vadd.f32 0.0, %v4205
      %4207 = vmatprep.mubr.f32.mxu0 0.0
      %4208 = vmatmul.mubr.f32.gmra.mxu0 %v3867
      %v4209 = vpop.f32.mrf.mxu0
      %v4210 = vadd.f32 0.0, %v4209
      %v4211 = vpop.f32.mrf.mxu0
      %v4212 = vadd.f32 0.0, %v4211
      %4213 = vmatprep.mubr.f32.mxu0 0.0
      %4214 = vmatmul.mubr.f32.gmra.mxu0 %v3870
      %v4215 = vpop.f32.mrf.mxu0
      %v4216 = vadd.f32 0.0, %v4215
      %v4217 = vpop.f32.mrf.mxu0
      %v4218 = vadd.f32 0.0, %v4217
      %4219 = vdwg.mxu0
      %v4220 = vadd.f32 %v3774, %v3955
      %v4221 = vadd.f32 %v3775, %v3957
      %v4222 = vadd.f32 %v3776, %v4038
      %v4223 = vadd.f32 %v3777, %v4040
      %v4224 = vadd.f32 %v3778, %v4121
      %v4225 = vadd.f32 %v3779, %v4123
      %v4226 = vadd.f32 %v3780, %v4204
      %v4227 = vadd.f32 %v3781, %v4206
      %v4228 = vadd.f32 %v3782, %v3961
      %v4229 = vadd.f32 %v3783, %v3963
      %v4230 = vadd.f32 %v3784, %v4044
      %v4231 = vadd.f32 %v3785, %v4046
      %v4232 = vadd.f32 %v3786, %v4127
      %v4233 = vadd.f32 %v3787, %v4129
      %v4234 = vadd.f32 %v3788, %v4210
      %v4235 = vadd.f32 %v3789, %v4212
      %v4236 = vadd.f32 %v3790, %v3967
      %v4237 = vadd.f32 %v3791, %v3969
      %v4238 = vadd.f32 %v3792, %v4050
      %v4239 = vadd.f32 %v3793, %v4052
      %v4240 = vadd.f32 %v3794, %v4133
      %v4241 = vadd.f32 %v3795, %v4135
      %v4242 = vadd.f32 %v3796, %v4216
      %v4243 = vadd.f32 %v3797, %v4218
      %4244 = vrot.lane.b32.xlu0 %v1967, 94
      %v4245 = vpop.permute.xlu0 %4244
      %4246 = vrot.lane.b32.xlu0 %v1968, 94
      %v4247 = vpop.permute.xlu0 %4246
      %4248 = vrot.lane.b32.xlu0 %v1969, 94
      %v4249 = vpop.permute.xlu0 %4248
      %4250 = vrot.lane.b32.xlu0 %v1970, 94
      %v4251 = vpop.permute.xlu0 %4250
      %4252 = vrot.lane.b32.xlu0 %v1971, 94
      %v4253 = vpop.permute.xlu0 %4252
      %4254 = vrot.lane.b32.xlu0 %v1972, 94
      %v4255 = vpop.permute.xlu0 %4254
      %4256 = vrot.lane.b32.xlu0 %v1973, 94
      %v4257 = vpop.permute.xlu0 %4256
      %4258 = vrot.lane.b32.xlu0 %v1974, 94
      %v4259 = vpop.permute.xlu0 %4258
      %4260 = vrot.lane.b32.xlu0 %v2018, 94
      %v4261 = vpop.permute.xlu0 %4260
      %4262 = vrot.lane.b32.xlu0 %v1975, 94
      %v4263 = vpop.permute.xlu0 %4262
      %4264 = vrot.lane.b32.xlu0 %v1976, 94
      %v4265 = vpop.permute.xlu0 %4264
      %4266 = vrot.lane.b32.xlu0 %v1977, 94
      %v4267 = vpop.permute.xlu0 %4266
      %4268 = vrot.lane.b32.xlu0 %v1978, 94
      %v4269 = vpop.permute.xlu0 %4268
      %4270 = vrot.lane.b32.xlu0 %v1979, 94
      %v4271 = vpop.permute.xlu0 %4270
      %4272 = vrot.lane.b32.xlu0 %v1980, 94
      %v4273 = vpop.permute.xlu0 %4272
      %4274 = vrot.lane.b32.xlu0 %v1981, 94
      %v4275 = vpop.permute.xlu0 %4274
      %4276 = vrot.lane.b32.xlu0 %v1982, 94
      %v4277 = vpop.permute.xlu0 %4276
      %4278 = vrot.lane.b32.xlu0 %v2019, 94
      %v4279 = vpop.permute.xlu0 %4278
      %vm4280 = vcmask 769024
      %v4281 = vsel %vm4280, %v4245, %v4247
      %v4282 = vsel %vm4280, %v4247, %v4249
      %v4283 = vsel %vm4280, %v4249, %v4251
      %v4284 = vsel %vm4280, %v4251, %v4253
      %v4285 = vsel %vm4280, %v4253, %v4255
      %v4286 = vsel %vm4280, %v4255, %v4257
      %v4287 = vsel %vm4280, %v4257, %v4259
      %v4288 = vsel %vm4280, %v4259, %v4261
      %v4289 = vsel %vm4280, %v4263, %v4265
      %v4290 = vsel %vm4280, %v4265, %v4267
      %v4291 = vsel %vm4280, %v4267, %v4269
      %v4292 = vsel %vm4280, %v4269, %v4271
      %v4293 = vsel %vm4280, %v4271, %v4273
      %v4294 = vsel %vm4280, %v4273, %v4275
      %v4295 = vsel %vm4280, %v4275, %v4277
      %v4296 = vsel %vm4280, %v4277, %v4279
      %v4313 = vsel %vm2834, %v4281, 0.0
      %v4314 = vsel %vm2835, %v4282, 0.0
      %v4315 = vsel %vm2836, %v4283, 0.0
      %v4316 = vsel %vm2837, %v4284, 0.0
      %v4317 = vsel %vm2838, %v4285, 0.0
      %v4318 = vsel %vm2839, %v4286, 0.0
      %v4319 = vsel %vm2840, %v4287, 0.0
      %v4320 = vsel %vm2841, %v4288, 0.0
      %v4321 = vsel %vm2834, %v4289, 0.0
      %v4322 = vsel %vm2835, %v4290, 0.0
      %v4323 = vsel %vm2836, %v4291, 0.0
      %v4324 = vsel %vm2837, %v4292, 0.0
      %v4325 = vsel %vm2838, %v4293, 0.0
      %v4326 = vsel %vm2839, %v4294, 0.0
      %v4327 = vsel %vm2840, %v4295, 0.0
      %v4328 = vsel %vm2841, %v4296, 0.0
      %s4329 = scalar_lea.vmem %s2, 120
      %v4330 = vld [vmem:[%s4329] sm:$0xff]
      %v4331 = vld [vmem:[%s4329 + $0x8] sm:$0xff]
      %v4332 = vld [vmem:[%s4329 + $0x10] sm:$0xff]
      %v4334 = vsel %vm2103, %v4330, 0
      %v4337 = vsel %vm2103, %v4331, 0
      %v4340 = vsel %vm2103, %v4332, 0
      %v4343 = vsel %vm387, %v4321, 0
      %v4346 = vsel %vm387, %v4322, 0
      %v4349 = vsel %vm387, %v4323, 0
      %v4352 = vsel %vm387, %v4324, 0
      %v4355 = vsel %vm387, %v4325, 0
      %v4358 = vsel %vm387, %v4326, 0
      %v4361 = vsel %vm387, %v4327, 0
      %v4364 = vsel %vm387, %v4328, 0
      %4366 = vmatprep.subr.mxu0 0.0
      %4367 = vmatpush1.msra.mxu0 0.0
      %4368 = vmatprep.subr.mxu0 0.0
      %4369 = vmatpush1.msra.mxu0 0.0
      %4370 = vmatprep.subr.mxu0 0.0
      %4371 = vmatpush1.msra.mxu0 0.0
      %4372 = vmatprep.subr.mxu0 0.0
      %4373 = vmatpush1.msra.mxu0 0.0
      %4374 = vmatprep.subr.mxu0 0.0
      %4375 = vmatpush1.msra.mxu0 0.0
      %4376 = vmatprep.subr.mxu0 0.0
      %4377 = vmatpush1.msra.mxu0 0.0
      %4378 = vmatprep.subr.mxu0 0.0
      %4379 = vmatpush1.msra.mxu0 0.0
      %4380 = vmatprep.subr.mxu0 0.0
      %4381 = vmatpush1.msra.mxu0 0.0
      %4382 = vmatprep.subr.mxu0 0.0
      %4383 = vmatpush1.msra.mxu0 0.0
      %4384 = vmatprep.subr.mxu0 0.0
      %4385 = vmatpush1.msra.mxu0 0.0
      %4386 = vmatprep.subr.mxu0 0.0
      %4387 = vmatpush1.msra.mxu0 0.0
      %4388 = vmatprep.subr.mxu0 0.0
      %4389 = vmatpush1.msra.mxu0 0.0
      %4390 = vmatprep.subr.mxu0 0.0
      %4391 = vmatpush1.msra.mxu0 0.0
      %4392 = vmatprep.subr.mxu0 0.0
      %4393 = vmatpush1.msra.mxu0 0.0
      %4394 = vmatprep.subr.mxu0 %v4346
      %4395 = vmatpush1.msra.mxu0 %v4343
      %4396 = vmatprep.subr.mxu0 %v4314
      %4397 = vmatpush1.msra.mxu0 %v4313
      %4398 = vmatprep.subr.mxu0 0.0
      %4399 = vmatpush2.msra.mxu0 0.0
      %4400 = vmatprep.subr.mxu0 0.0
      %4401 = vmatpush2.msra.mxu0 0.0
      %4402 = vmatprep.subr.mxu0 0.0
      %4403 = vmatpush2.msra.mxu0 0.0
      %4404 = vmatprep.subr.mxu0 0.0
      %4405 = vmatpush2.msra.mxu0 0.0
      %4406 = vmatprep.subr.mxu0 0.0
      %4407 = vmatpush2.msra.mxu0 0.0
      %4408 = vmatprep.subr.mxu0 0.0
      %4409 = vmatpush2.msra.mxu0 0.0
      %4410 = vmatprep.subr.mxu0 0.0
      %4411 = vmatpush2.msra.mxu0 0.0
      %4412 = vmatprep.subr.mxu0 0.0
      %4413 = vmatpush2.msra.mxu0 0.0
      %4414 = vmatprep.subr.mxu0 0.0
      %4415 = vmatpush2.msra.mxu0 0.0
      %4416 = vmatprep.subr.mxu0 0.0
      %4417 = vmatpush2.msra.mxu0 0.0
      %4418 = vmatprep.subr.mxu0 0.0
      %4419 = vmatpush2.msra.mxu0 0.0
      %4420 = vmatprep.subr.mxu0 0.0
      %4421 = vmatpush2.msra.mxu0 0.0
      %4422 = vmatprep.subr.mxu0 0.0
      %4423 = vmatpush2.msra.mxu0 0.0
      %4424 = vmatprep.subr.mxu0 0.0
      %4425 = vmatpush2.msra.mxu0 0.0
      %4426 = vmatprep.subr.mxu0 0.0
      %4427 = vmatpush2.msra.mxu0 0.0
      %4428 = vmatprep.subr.mxu0 0.0
      %4429 = vmatpush2.msra.mxu0 0.0
      %4430 = vmatprep.mubr.f32.mxu0 0.0
      %4431 = vmatmul.mubr.f32.gmra.mxu0 %v4334
      %v4432 = vpop.f32.mrf.mxu0
      %v4433 = vadd.f32 0.0, %v4432
      %v4434 = vpop.f32.mrf.mxu0
      %v4435 = vadd.f32 0.0, %v4434
      %4436 = vmatprep.mubr.f32.mxu0 0.0
      %4437 = vmatmul.mubr.f32.gmra.mxu0 %v4337
      %v4438 = vpop.f32.mrf.mxu0
      %v4439 = vadd.f32 0.0, %v4438
      %v4440 = vpop.f32.mrf.mxu0
      %v4441 = vadd.f32 0.0, %v4440
      %4442 = vmatprep.mubr.f32.mxu0 0.0
      %4443 = vmatmul.mubr.f32.gmra.mxu0 %v4340
      %v4444 = vpop.f32.mrf.mxu0
      %v4445 = vadd.f32 0.0, %v4444
      %v4446 = vpop.f32.mrf.mxu0
      %v4447 = vadd.f32 0.0, %v4446
      %4448 = vdwg.mxu0
      %4449 = vmatprep.subr.mxu0 0.0
      %4450 = vmatpush1.msra.mxu0 0.0
      %4451 = vmatprep.subr.mxu0 0.0
      %4452 = vmatpush1.msra.mxu0 0.0
      %4453 = vmatprep.subr.mxu0 0.0
      %4454 = vmatpush1.msra.mxu0 0.0
      %4455 = vmatprep.subr.mxu0 0.0
      %4456 = vmatpush1.msra.mxu0 0.0
      %4457 = vmatprep.subr.mxu0 0.0
      %4458 = vmatpush1.msra.mxu0 0.0
      %4459 = vmatprep.subr.mxu0 0.0
      %4460 = vmatpush1.msra.mxu0 0.0
      %4461 = vmatprep.subr.mxu0 0.0
      %4462 = vmatpush1.msra.mxu0 0.0
      %4463 = vmatprep.subr.mxu0 0.0
      %4464 = vmatpush1.msra.mxu0 0.0
      %4465 = vmatprep.subr.mxu0 0.0
      %4466 = vmatpush1.msra.mxu0 0.0
      %4467 = vmatprep.subr.mxu0 0.0
      %4468 = vmatpush1.msra.mxu0 0.0
      %4469 = vmatprep.subr.mxu0 0.0
      %4470 = vmatpush1.msra.mxu0 0.0
      %4471 = vmatprep.subr.mxu0 0.0
      %4472 = vmatpush1.msra.mxu0 0.0
      %4473 = vmatprep.subr.mxu0 0.0
      %4474 = vmatpush1.msra.mxu0 0.0
      %4475 = vmatprep.subr.mxu0 0.0
      %4476 = vmatpush1.msra.mxu0 0.0
      %4477 = vmatprep.subr.mxu0 %v4352
      %4478 = vmatpush1.msra.mxu0 %v4349
      %4479 = vmatprep.subr.mxu0 %v4316
      %4480 = vmatpush1.msra.mxu0 %v4315
      %4481 = vmatprep.subr.mxu0 0.0
      %4482 = vmatpush2.msra.mxu0 0.0
      %4483 = vmatprep.subr.mxu0 0.0
      %4484 = vmatpush2.msra.mxu0 0.0
      %4485 = vmatprep.subr.mxu0 0.0
      %4486 = vmatpush2.msra.mxu0 0.0
      %4487 = vmatprep.subr.mxu0 0.0
      %4488 = vmatpush2.msra.mxu0 0.0
      %4489 = vmatprep.subr.mxu0 0.0
      %4490 = vmatpush2.msra.mxu0 0.0
      %4491 = vmatprep.subr.mxu0 0.0
      %4492 = vmatpush2.msra.mxu0 0.0
      %4493 = vmatprep.subr.mxu0 0.0
      %4494 = vmatpush2.msra.mxu0 0.0
      %4495 = vmatprep.subr.mxu0 0.0
      %4496 = vmatpush2.msra.mxu0 0.0
      %4497 = vmatprep.subr.mxu0 0.0
      %4498 = vmatpush2.msra.mxu0 0.0
      %4499 = vmatprep.subr.mxu0 0.0
      %4500 = vmatpush2.msra.mxu0 0.0
      %4501 = vmatprep.subr.mxu0 0.0
      %4502 = vmatpush2.msra.mxu0 0.0
      %4503 = vmatprep.subr.mxu0 0.0
      %4504 = vmatpush2.msra.mxu0 0.0
      %4505 = vmatprep.subr.mxu0 0.0
      %4506 = vmatpush2.msra.mxu0 0.0
      %4507 = vmatprep.subr.mxu0 0.0
      %4508 = vmatpush2.msra.mxu0 0.0
      %4509 = vmatprep.subr.mxu0 0.0
      %4510 = vmatpush2.msra.mxu0 0.0
      %4511 = vmatprep.subr.mxu0 0.0
      %4512 = vmatpush2.msra.mxu0 0.0
      %4513 = vmatprep.mubr.f32.mxu0 0.0
      %4514 = vmatmul.mubr.f32.gmra.mxu0 %v4334
      %v4515 = vpop.f32.mrf.mxu0
      %v4516 = vadd.f32 0.0, %v4515
      %v4517 = vpop.f32.mrf.mxu0
      %v4518 = vadd.f32 0.0, %v4517
      %4519 = vmatprep.mubr.f32.mxu0 0.0
      %4520 = vmatmul.mubr.f32.gmra.mxu0 %v4337
      %v4521 = vpop.f32.mrf.mxu0
      %v4522 = vadd.f32 0.0, %v4521
      %v4523 = vpop.f32.mrf.mxu0
      %v4524 = vadd.f32 0.0, %v4523
      %4525 = vmatprep.mubr.f32.mxu0 0.0
      %4526 = vmatmul.mubr.f32.gmra.mxu0 %v4340
      %v4527 = vpop.f32.mrf.mxu0
      %v4528 = vadd.f32 0.0, %v4527
      %v4529 = vpop.f32.mrf.mxu0
      %v4530 = vadd.f32 0.0, %v4529
      %4531 = vdwg.mxu0
      %4532 = vmatprep.subr.mxu0 0.0
      %4533 = vmatpush1.msra.mxu0 0.0
      %4534 = vmatprep.subr.mxu0 0.0
      %4535 = vmatpush1.msra.mxu0 0.0
      %4536 = vmatprep.subr.mxu0 0.0
      %4537 = vmatpush1.msra.mxu0 0.0
      %4538 = vmatprep.subr.mxu0 0.0
      %4539 = vmatpush1.msra.mxu0 0.0
      %4540 = vmatprep.subr.mxu0 0.0
      %4541 = vmatpush1.msra.mxu0 0.0
      %4542 = vmatprep.subr.mxu0 0.0
      %4543 = vmatpush1.msra.mxu0 0.0
      %4544 = vmatprep.subr.mxu0 0.0
      %4545 = vmatpush1.msra.mxu0 0.0
      %4546 = vmatprep.subr.mxu0 0.0
      %4547 = vmatpush1.msra.mxu0 0.0
      %4548 = vmatprep.subr.mxu0 0.0
      %4549 = vmatpush1.msra.mxu0 0.0
      %4550 = vmatprep.subr.mxu0 0.0
      %4551 = vmatpush1.msra.mxu0 0.0
      %4552 = vmatprep.subr.mxu0 0.0
      %4553 = vmatpush1.msra.mxu0 0.0
      %4554 = vmatprep.subr.mxu0 0.0
      %4555 = vmatpush1.msra.mxu0 0.0
      %4556 = vmatprep.subr.mxu0 0.0
      %4557 = vmatpush1.msra.mxu0 0.0
      %4558 = vmatprep.subr.mxu0 0.0
      %4559 = vmatpush1.msra.mxu0 0.0
      %4560 = vmatprep.subr.mxu0 %v4358
      %4561 = vmatpush1.msra.mxu0 %v4355
      %4562 = vmatprep.subr.mxu0 %v4318
      %4563 = vmatpush1.msra.mxu0 %v4317
      %4564 = vmatprep.subr.mxu0 0.0
      %4565 = vmatpush2.msra.mxu0 0.0
      %4566 = vmatprep.subr.mxu0 0.0
      %4567 = vmatpush2.msra.mxu0 0.0
      %4568 = vmatprep.subr.mxu0 0.0
      %4569 = vmatpush2.msra.mxu0 0.0
      %4570 = vmatprep.subr.mxu0 0.0
      %4571 = vmatpush2.msra.mxu0 0.0
      %4572 = vmatprep.subr.mxu0 0.0
      %4573 = vmatpush2.msra.mxu0 0.0
      %4574 = vmatprep.subr.mxu0 0.0
      %4575 = vmatpush2.msra.mxu0 0.0
      %4576 = vmatprep.subr.mxu0 0.0
      %4577 = vmatpush2.msra.mxu0 0.0
      %4578 = vmatprep.subr.mxu0 0.0
      %4579 = vmatpush2.msra.mxu0 0.0
      %4580 = vmatprep.subr.mxu0 0.0
      %4581 = vmatpush2.msra.mxu0 0.0
      %4582 = vmatprep.subr.mxu0 0.0
      %4583 = vmatpush2.msra.mxu0 0.0
      %4584 = vmatprep.subr.mxu0 0.0
      %4585 = vmatpush2.msra.mxu0 0.0
      %4586 = vmatprep.subr.mxu0 0.0
      %4587 = vmatpush2.msra.mxu0 0.0
      %4588 = vmatprep.subr.mxu0 0.0
      %4589 = vmatpush2.msra.mxu0 0.0
      %4590 = vmatprep.subr.mxu0 0.0
      %4591 = vmatpush2.msra.mxu0 0.0
      %4592 = vmatprep.subr.mxu0 0.0
      %4593 = vmatpush2.msra.mxu0 0.0
      %4594 = vmatprep.subr.mxu0 0.0
      %4595 = vmatpush2.msra.mxu0 0.0
      %4596 = vmatprep.mubr.f32.mxu0 0.0
      %4597 = vmatmul.mubr.f32.gmra.mxu0 %v4334
      %v4598 = vpop.f32.mrf.mxu0
      %v4599 = vadd.f32 0.0, %v4598
      %v4600 = vpop.f32.mrf.mxu0
      %v4601 = vadd.f32 0.0, %v4600
      %4602 = vmatprep.mubr.f32.mxu0 0.0
      %4603 = vmatmul.mubr.f32.gmra.mxu0 %v4337
      %v4604 = vpop.f32.mrf.mxu0
      %v4605 = vadd.f32 0.0, %v4604
      %v4606 = vpop.f32.mrf.mxu0
      %v4607 = vadd.f32 0.0, %v4606
      %4608 = vmatprep.mubr.f32.mxu0 0.0
      %4609 = vmatmul.mubr.f32.gmra.mxu0 %v4340
      %v4610 = vpop.f32.mrf.mxu0
      %v4611 = vadd.f32 0.0, %v4610
      %v4612 = vpop.f32.mrf.mxu0
      %v4613 = vadd.f32 0.0, %v4612
      %4614 = vdwg.mxu0
      %4615 = vmatprep.subr.mxu0 0.0
      %4616 = vmatpush1.msra.mxu0 0.0
      %4617 = vmatprep.subr.mxu0 0.0
      %4618 = vmatpush1.msra.mxu0 0.0
      %4619 = vmatprep.subr.mxu0 0.0
      %4620 = vmatpush1.msra.mxu0 0.0
      %4621 = vmatprep.subr.mxu0 0.0
      %4622 = vmatpush1.msra.mxu0 0.0
      %4623 = vmatprep.subr.mxu0 0.0
      %4624 = vmatpush1.msra.mxu0 0.0
      %4625 = vmatprep.subr.mxu0 0.0
      %4626 = vmatpush1.msra.mxu0 0.0
      %4627 = vmatprep.subr.mxu0 0.0
      %4628 = vmatpush1.msra.mxu0 0.0
      %4629 = vmatprep.subr.mxu0 0.0
      %4630 = vmatpush1.msra.mxu0 0.0
      %4631 = vmatprep.subr.mxu0 0.0
      %4632 = vmatpush1.msra.mxu0 0.0
      %4633 = vmatprep.subr.mxu0 0.0
      %4634 = vmatpush1.msra.mxu0 0.0
      %4635 = vmatprep.subr.mxu0 0.0
      %4636 = vmatpush1.msra.mxu0 0.0
      %4637 = vmatprep.subr.mxu0 0.0
      %4638 = vmatpush1.msra.mxu0 0.0
      %4639 = vmatprep.subr.mxu0 0.0
      %4640 = vmatpush1.msra.mxu0 0.0
      %4641 = vmatprep.subr.mxu0 0.0
      %4642 = vmatpush1.msra.mxu0 0.0
      %4643 = vmatprep.subr.mxu0 %v4364
      %4644 = vmatpush1.msra.mxu0 %v4361
      %4645 = vmatprep.subr.mxu0 %v4320
      %4646 = vmatpush1.msra.mxu0 %v4319
      %4647 = vmatprep.subr.mxu0 0.0
      %4648 = vmatpush2.msra.mxu0 0.0
      %4649 = vmatprep.subr.mxu0 0.0
      %4650 = vmatpush2.msra.mxu0 0.0
      %4651 = vmatprep.subr.mxu0 0.0
      %4652 = vmatpush2.msra.mxu0 0.0
      %4653 = vmatprep.subr.mxu0 0.0
      %4654 = vmatpush2.msra.mxu0 0.0
      %4655 = vmatprep.subr.mxu0 0.0
      %4656 = vmatpush2.msra.mxu0 0.0
      %4657 = vmatprep.subr.mxu0 0.0
      %4658 = vmatpush2.msra.mxu0 0.0
      %4659 = vmatprep.subr.mxu0 0.0
      %4660 = vmatpush2.msra.mxu0 0.0
      %4661 = vmatprep.subr.mxu0 0.0
      %4662 = vmatpush2.msra.mxu0 0.0
      %4663 = vmatprep.subr.mxu0 0.0
      %4664 = vmatpush2.msra.mxu0 0.0
      %4665 = vmatprep.subr.mxu0 0.0
      %4666 = vmatpush2.msra.mxu0 0.0
      %4667 = vmatprep.subr.mxu0 0.0
      %4668 = vmatpush2.msra.mxu0 0.0
      %4669 = vmatprep.subr.mxu0 0.0
      %4670 = vmatpush2.msra.mxu0 0.0
      %4671 = vmatprep.subr.mxu0 0.0
      %4672 = vmatpush2.msra.mxu0 0.0
      %4673 = vmatprep.subr.mxu0 0.0
      %4674 = vmatpush2.msra.mxu0 0.0
      %4675 = vmatprep.subr.mxu0 0.0
      %4676 = vmatpush2.msra.mxu0 0.0
      %4677 = vmatprep.subr.mxu0 0.0
      %4678 = vmatpush2.msra.mxu0 0.0
      %4679 = vmatprep.mubr.f32.mxu0 0.0
      %4680 = vmatmul.mubr.f32.gmra.mxu0 %v4334
      %v4681 = vpop.f32.mrf.mxu0
      %v4682 = vadd.f32 0.0, %v4681
      %v4683 = vpop.f32.mrf.mxu0
      %v4684 = vadd.f32 0.0, %v4683
      %4685 = vmatprep.mubr.f32.mxu0 0.0
      %4686 = vmatmul.mubr.f32.gmra.mxu0 %v4337
      %v4687 = vpop.f32.mrf.mxu0
      %v4688 = vadd.f32 0.0, %v4687
      %v4689 = vpop.f32.mrf.mxu0
      %v4690 = vadd.f32 0.0, %v4689
      %4691 = vmatprep.mubr.f32.mxu0 0.0
      %4692 = vmatmul.mubr.f32.gmra.mxu0 %v4340
      %v4693 = vpop.f32.mrf.mxu0
      %v4694 = vadd.f32 0.0, %v4693
      %v4695 = vpop.f32.mrf.mxu0
      %v4696 = vadd.f32 0.0, %v4695
      %4697 = vdwg.mxu0
      %v4698 = vadd.f32 %v4220, %v4433
      %v4699 = vadd.f32 %v4221, %v4435
      %v4700 = vadd.f32 %v4222, %v4516
      %v4701 = vadd.f32 %v4223, %v4518
      %v4702 = vadd.f32 %v4224, %v4599
      %v4703 = vadd.f32 %v4225, %v4601
      %v4704 = vadd.f32 %v4226, %v4682
      %v4705 = vadd.f32 %v4227, %v4684
      %v4706 = vadd.f32 %v4228, %v4439
      %v4707 = vadd.f32 %v4229, %v4441
      %v4708 = vadd.f32 %v4230, %v4522
      %v4709 = vadd.f32 %v4231, %v4524
      %v4710 = vadd.f32 %v4232, %v4605
      %v4711 = vadd.f32 %v4233, %v4607
      %v4712 = vadd.f32 %v4234, %v4688
      %v4713 = vadd.f32 %v4235, %v4690
      %v4714 = vadd.f32 %v4236, %v4445
      %v4715 = vadd.f32 %v4237, %v4447
      %v4716 = vadd.f32 %v4238, %v4528
      %v4717 = vadd.f32 %v4239, %v4530
      %v4718 = vadd.f32 %v4240, %v4611
      %v4719 = vadd.f32 %v4241, %v4613
      %v4720 = vadd.f32 %v4242, %v4694
      %v4721 = vadd.f32 %v4243, %v4696
      %4722 = vrot.lane.b32.xlu0 %v1967, 64
      %v4723 = vpop.permute.xlu0 %4722
      %4724 = vrot.lane.b32.xlu0 %v1968, 64
      %v4725 = vpop.permute.xlu0 %4724
      %4726 = vrot.lane.b32.xlu0 %v1969, 64
      %v4727 = vpop.permute.xlu0 %4726
      %4728 = vrot.lane.b32.xlu0 %v1970, 64
      %v4729 = vpop.permute.xlu0 %4728
      %4730 = vrot.lane.b32.xlu0 %v1971, 64
      %v4731 = vpop.permute.xlu0 %4730
      %4732 = vrot.lane.b32.xlu0 %v1972, 64
      %v4733 = vpop.permute.xlu0 %4732
      %4734 = vrot.lane.b32.xlu0 %v1973, 64
      %v4735 = vpop.permute.xlu0 %4734
      %4736 = vrot.lane.b32.xlu0 %v1974, 64
      %v4737 = vpop.permute.xlu0 %4736
      %4738 = vrot.lane.b32.xlu0 %v2018, 64
      %v4739 = vpop.permute.xlu0 %4738
      %4740 = vrot.lane.b32.xlu0 %v1975, 64
      %v4741 = vpop.permute.xlu0 %4740
      %4742 = vrot.lane.b32.xlu0 %v1976, 64
      %v4743 = vpop.permute.xlu0 %4742
      %4744 = vrot.lane.b32.xlu0 %v1977, 64
      %v4745 = vpop.permute.xlu0 %4744
      %4746 = vrot.lane.b32.xlu0 %v1978, 64
      %v4747 = vpop.permute.xlu0 %4746
      %4748 = vrot.lane.b32.xlu0 %v1979, 64
      %v4749 = vpop.permute.xlu0 %4748
      %4750 = vrot.lane.b32.xlu0 %v1980, 64
      %v4751 = vpop.permute.xlu0 %4750
      %4752 = vrot.lane.b32.xlu0 %v1981, 64
      %v4753 = vpop.permute.xlu0 %4752
      %4754 = vrot.lane.b32.xlu0 %v1982, 64
      %v4755 = vpop.permute.xlu0 %4754
      %4756 = vrot.lane.b32.xlu0 %v2019, 64
      %v4757 = vpop.permute.xlu0 %4756
      %vm4758 = vcmask 523264
      %v4759 = vsel %vm4758, %v4723, %v4725
      %v4760 = vsel %vm4758, %v4725, %v4727
      %v4761 = vsel %vm4758, %v4727, %v4729
      %v4762 = vsel %vm4758, %v4729, %v4731
      %v4763 = vsel %vm4758, %v4731, %v4733
      %v4764 = vsel %vm4758, %v4733, %v4735
      %v4765 = vsel %vm4758, %v4735, %v4737
      %v4766 = vsel %vm4758, %v4737, %v4739
      %v4767 = vsel %vm4758, %v4741, %v4743
      %v4768 = vsel %vm4758, %v4743, %v4745
      %v4769 = vsel %vm4758, %v4745, %v4747
      %v4770 = vsel %vm4758, %v4747, %v4749
      %v4771 = vsel %vm4758, %v4749, %v4751
      %v4772 = vsel %vm4758, %v4751, %v4753
      %v4773 = vsel %vm4758, %v4753, %v4755
      %v4774 = vsel %vm4758, %v4755, %v4757
      %v4791 = vsel %vm1991, %v4759, 0.0
      %v4792 = vsel %vm1992, %v4760, 0.0
      %v4793 = vsel %vm1993, %v4761, 0.0
      %v4794 = vsel %vm1994, %v4762, 0.0
      %v4795 = vsel %vm1995, %v4763, 0.0
      %v4796 = vsel %vm1996, %v4764, 0.0
      %v4797 = vsel %vm1997, %v4765, 0.0
      %v4798 = vsel %vm1998, %v4766, 0.0
      %v4799 = vsel %vm1991, %v4767, 0.0
      %v4800 = vsel %vm1992, %v4768, 0.0
      %v4801 = vsel %vm1993, %v4769, 0.0
      %v4802 = vsel %vm1994, %v4770, 0.0
      %v4803 = vsel %vm1995, %v4771, 0.0
      %v4804 = vsel %vm1996, %v4772, 0.0
      %v4805 = vsel %vm1997, %v4773, 0.0
      %v4806 = vsel %vm1998, %v4774, 0.0
      %s4807 = scalar_lea.vmem %s2, 144
      %v4808 = vld [vmem:[%s4807] sm:$0xff]
      %v4809 = vld [vmem:[%s4807 + $0x8] sm:$0xff]
      %v4810 = vld [vmem:[%s4807 + $0x10] sm:$0xff]
      %v4812 = vsel %vm2103, %v4808, 0
      %v4815 = vsel %vm2103, %v4809, 0
      %v4818 = vsel %vm2103, %v4810, 0
      %v4821 = vsel %vm387, %v4799, 0
      %v4824 = vsel %vm387, %v4800, 0
      %v4827 = vsel %vm387, %v4801, 0
      %v4830 = vsel %vm387, %v4802, 0
      %v4833 = vsel %vm387, %v4803, 0
      %v4836 = vsel %vm387, %v4804, 0
      %v4839 = vsel %vm387, %v4805, 0
      %v4842 = vsel %vm387, %v4806, 0
      %4844 = vmatprep.subr.mxu0 0.0
      %4845 = vmatpush1.msra.mxu0 0.0
      %4846 = vmatprep.subr.mxu0 0.0
      %4847 = vmatpush1.msra.mxu0 0.0
      %4848 = vmatprep.subr.mxu0 0.0
      %4849 = vmatpush1.msra.mxu0 0.0
      %4850 = vmatprep.subr.mxu0 0.0
      %4851 = vmatpush1.msra.mxu0 0.0
      %4852 = vmatprep.subr.mxu0 0.0
      %4853 = vmatpush1.msra.mxu0 0.0
      %4854 = vmatprep.subr.mxu0 0.0
      %4855 = vmatpush1.msra.mxu0 0.0
      %4856 = vmatprep.subr.mxu0 0.0
      %4857 = vmatpush1.msra.mxu0 0.0
      %4858 = vmatprep.subr.mxu0 0.0
      %4859 = vmatpush1.msra.mxu0 0.0
      %4860 = vmatprep.subr.mxu0 0.0
      %4861 = vmatpush1.msra.mxu0 0.0
      %4862 = vmatprep.subr.mxu0 0.0
      %4863 = vmatpush1.msra.mxu0 0.0
      %4864 = vmatprep.subr.mxu0 0.0
      %4865 = vmatpush1.msra.mxu0 0.0
      %4866 = vmatprep.subr.mxu0 0.0
      %4867 = vmatpush1.msra.mxu0 0.0
      %4868 = vmatprep.subr.mxu0 0.0
      %4869 = vmatpush1.msra.mxu0 0.0
      %4870 = vmatprep.subr.mxu0 0.0
      %4871 = vmatpush1.msra.mxu0 0.0
      %4872 = vmatprep.subr.mxu0 %v4824
      %4873 = vmatpush1.msra.mxu0 %v4821
      %4874 = vmatprep.subr.mxu0 %v4792
      %4875 = vmatpush1.msra.mxu0 %v4791
      %4876 = vmatprep.subr.mxu0 0.0
      %4877 = vmatpush2.msra.mxu0 0.0
      %4878 = vmatprep.subr.mxu0 0.0
      %4879 = vmatpush2.msra.mxu0 0.0
      %4880 = vmatprep.subr.mxu0 0.0
      %4881 = vmatpush2.msra.mxu0 0.0
      %4882 = vmatprep.subr.mxu0 0.0
      %4883 = vmatpush2.msra.mxu0 0.0
      %4884 = vmatprep.subr.mxu0 0.0
      %4885 = vmatpush2.msra.mxu0 0.0
      %4886 = vmatprep.subr.mxu0 0.0
      %4887 = vmatpush2.msra.mxu0 0.0
      %4888 = vmatprep.subr.mxu0 0.0
      %4889 = vmatpush2.msra.mxu0 0.0
      %4890 = vmatprep.subr.mxu0 0.0
      %4891 = vmatpush2.msra.mxu0 0.0
      %4892 = vmatprep.subr.mxu0 0.0
      %4893 = vmatpush2.msra.mxu0 0.0
      %4894 = vmatprep.subr.mxu0 0.0
      %4895 = vmatpush2.msra.mxu0 0.0
      %4896 = vmatprep.subr.mxu0 0.0
      %4897 = vmatpush2.msra.mxu0 0.0
      %4898 = vmatprep.subr.mxu0 0.0
      %4899 = vmatpush2.msra.mxu0 0.0
      %4900 = vmatprep.subr.mxu0 0.0
      %4901 = vmatpush2.msra.mxu0 0.0
      %4902 = vmatprep.subr.mxu0 0.0
      %4903 = vmatpush2.msra.mxu0 0.0
      %4904 = vmatprep.subr.mxu0 0.0
      %4905 = vmatpush2.msra.mxu0 0.0
      %4906 = vmatprep.subr.mxu0 0.0
      %4907 = vmatpush2.msra.mxu0 0.0
      %4908 = vmatprep.mubr.f32.mxu0 0.0
      %4909 = vmatmul.mubr.f32.gmra.mxu0 %v4812
      %v4910 = vpop.f32.mrf.mxu0
      %v4911 = vadd.f32 0.0, %v4910
      %v4912 = vpop.f32.mrf.mxu0
      %v4913 = vadd.f32 0.0, %v4912
      %4914 = vmatprep.mubr.f32.mxu0 0.0
      %4915 = vmatmul.mubr.f32.gmra.mxu0 %v4815
      %v4916 = vpop.f32.mrf.mxu0
      %v4917 = vadd.f32 0.0, %v4916
      %v4918 = vpop.f32.mrf.mxu0
      %v4919 = vadd.f32 0.0, %v4918
      %4920 = vmatprep.mubr.f32.mxu0 0.0
      %4921 = vmatmul.mubr.f32.gmra.mxu0 %v4818
      %v4922 = vpop.f32.mrf.mxu0
      %v4923 = vadd.f32 0.0, %v4922
      %v4924 = vpop.f32.mrf.mxu0
      %v4925 = vadd.f32 0.0, %v4924
      %4926 = vdwg.mxu0
      %4927 = vmatprep.subr.mxu0 0.0
      %4928 = vmatpush1.msra.mxu0 0.0
      %4929 = vmatprep.subr.mxu0 0.0
      %4930 = vmatpush1.msra.mxu0 0.0
      %4931 = vmatprep.subr.mxu0 0.0
      %4932 = vmatpush1.msra.mxu0 0.0
      %4933 = vmatprep.subr.mxu0 0.0
      %4934 = vmatpush1.msra.mxu0 0.0
      %4935 = vmatprep.subr.mxu0 0.0
      %4936 = vmatpush1.msra.mxu0 0.0
      %4937 = vmatprep.subr.mxu0 0.0
      %4938 = vmatpush1.msra.mxu0 0.0
      %4939 = vmatprep.subr.mxu0 0.0
      %4940 = vmatpush1.msra.mxu0 0.0
      %4941 = vmatprep.subr.mxu0 0.0
      %4942 = vmatpush1.msra.mxu0 0.0
      %4943 = vmatprep.subr.mxu0 0.0
      %4944 = vmatpush1.msra.mxu0 0.0
      %4945 = vmatprep.subr.mxu0 0.0
      %4946 = vmatpush1.msra.mxu0 0.0
      %4947 = vmatprep.subr.mxu0 0.0
      %4948 = vmatpush1.msra.mxu0 0.0
      %4949 = vmatprep.subr.mxu0 0.0
      %4950 = vmatpush1.msra.mxu0 0.0
      %4951 = vmatprep.subr.mxu0 0.0
      %4952 = vmatpush1.msra.mxu0 0.0
      %4953 = vmatprep.subr.mxu0 0.0
      %4954 = vmatpush1.msra.mxu0 0.0
      %4955 = vmatprep.subr.mxu0 %v4830
      %4956 = vmatpush1.msra.mxu0 %v4827
      %4957 = vmatprep.subr.mxu0 %v4794
      %4958 = vmatpush1.msra.mxu0 %v4793
      %4959 = vmatprep.subr.mxu0 0.0
      %4960 = vmatpush2.msra.mxu0 0.0
      %4961 = vmatprep.subr.mxu0 0.0
      %4962 = vmatpush2.msra.mxu0 0.0
      %4963 = vmatprep.subr.mxu0 0.0
      %4964 = vmatpush2.msra.mxu0 0.0
      %4965 = vmatprep.subr.mxu0 0.0
      %4966 = vmatpush2.msra.mxu0 0.0
      %4967 = vmatprep.subr.mxu0 0.0
      %4968 = vmatpush2.msra.mxu0 0.0
      %4969 = vmatprep.subr.mxu0 0.0
      %4970 = vmatpush2.msra.mxu0 0.0
      %4971 = vmatprep.subr.mxu0 0.0
      %4972 = vmatpush2.msra.mxu0 0.0
      %4973 = vmatprep.subr.mxu0 0.0
      %4974 = vmatpush2.msra.mxu0 0.0
      %4975 = vmatprep.subr.mxu0 0.0
      %4976 = vmatpush2.msra.mxu0 0.0
      %4977 = vmatprep.subr.mxu0 0.0
      %4978 = vmatpush2.msra.mxu0 0.0
      %4979 = vmatprep.subr.mxu0 0.0
      %4980 = vmatpush2.msra.mxu0 0.0
      %4981 = vmatprep.subr.mxu0 0.0
      %4982 = vmatpush2.msra.mxu0 0.0
      %4983 = vmatprep.subr.mxu0 0.0
      %4984 = vmatpush2.msra.mxu0 0.0
      %4985 = vmatprep.subr.mxu0 0.0
      %4986 = vmatpush2.msra.mxu0 0.0
      %4987 = vmatprep.subr.mxu0 0.0
      %4988 = vmatpush2.msra.mxu0 0.0
      %4989 = vmatprep.subr.mxu0 0.0
      %4990 = vmatpush2.msra.mxu0 0.0
      %4991 = vmatprep.mubr.f32.mxu0 0.0
      %4992 = vmatmul.mubr.f32.gmra.mxu0 %v4812
      %v4993 = vpop.f32.mrf.mxu0
      %v4994 = vadd.f32 0.0, %v4993
      %v4995 = vpop.f32.mrf.mxu0
      %v4996 = vadd.f32 0.0, %v4995
      %4997 = vmatprep.mubr.f32.mxu0 0.0
      %4998 = vmatmul.mubr.f32.gmra.mxu0 %v4815
      %v4999 = vpop.f32.mrf.mxu0
      %v5000 = vadd.f32 0.0, %v4999
      %v5001 = vpop.f32.mrf.mxu0
      %v5002 = vadd.f32 0.0, %v5001
      %5003 = vmatprep.mubr.f32.mxu0 0.0
      %5004 = vmatmul.mubr.f32.gmra.mxu0 %v4818
      %v5005 = vpop.f32.mrf.mxu0
      %v5006 = vadd.f32 0.0, %v5005
      %v5007 = vpop.f32.mrf.mxu0
      %v5008 = vadd.f32 0.0, %v5007
      %5009 = vdwg.mxu0
      %5010 = vmatprep.subr.mxu0 0.0
      %5011 = vmatpush1.msra.mxu0 0.0
      %5012 = vmatprep.subr.mxu0 0.0
      %5013 = vmatpush1.msra.mxu0 0.0
      %5014 = vmatprep.subr.mxu0 0.0
      %5015 = vmatpush1.msra.mxu0 0.0
      %5016 = vmatprep.subr.mxu0 0.0
      %5017 = vmatpush1.msra.mxu0 0.0
      %5018 = vmatprep.subr.mxu0 0.0
      %5019 = vmatpush1.msra.mxu0 0.0
      %5020 = vmatprep.subr.mxu0 0.0
      %5021 = vmatpush1.msra.mxu0 0.0
      %5022 = vmatprep.subr.mxu0 0.0
      %5023 = vmatpush1.msra.mxu0 0.0
      %5024 = vmatprep.subr.mxu0 0.0
      %5025 = vmatpush1.msra.mxu0 0.0
      %5026 = vmatprep.subr.mxu0 0.0
      %5027 = vmatpush1.msra.mxu0 0.0
      %5028 = vmatprep.subr.mxu0 0.0
      %5029 = vmatpush1.msra.mxu0 0.0
      %5030 = vmatprep.subr.mxu0 0.0
      %5031 = vmatpush1.msra.mxu0 0.0
      %5032 = vmatprep.subr.mxu0 0.0
      %5033 = vmatpush1.msra.mxu0 0.0
      %5034 = vmatprep.subr.mxu0 0.0
      %5035 = vmatpush1.msra.mxu0 0.0
      %5036 = vmatprep.subr.mxu0 0.0
      %5037 = vmatpush1.msra.mxu0 0.0
      %5038 = vmatprep.subr.mxu0 %v4836
      %5039 = vmatpush1.msra.mxu0 %v4833
      %5040 = vmatprep.subr.mxu0 %v4796
      %5041 = vmatpush1.msra.mxu0 %v4795
      %5042 = vmatprep.subr.mxu0 0.0
      %5043 = vmatpush2.msra.mxu0 0.0
      %5044 = vmatprep.subr.mxu0 0.0
      %5045 = vmatpush2.msra.mxu0 0.0
      %5046 = vmatprep.subr.mxu0 0.0
      %5047 = vmatpush2.msra.mxu0 0.0
      %5048 = vmatprep.subr.mxu0 0.0
      %5049 = vmatpush2.msra.mxu0 0.0
      %5050 = vmatprep.subr.mxu0 0.0
      %5051 = vmatpush2.msra.mxu0 0.0
      %5052 = vmatprep.subr.mxu0 0.0
      %5053 = vmatpush2.msra.mxu0 0.0
      %5054 = vmatprep.subr.mxu0 0.0
      %5055 = vmatpush2.msra.mxu0 0.0
      %5056 = vmatprep.subr.mxu0 0.0
      %5057 = vmatpush2.msra.mxu0 0.0
      %5058 = vmatprep.subr.mxu0 0.0
      %5059 = vmatpush2.msra.mxu0 0.0
      %5060 = vmatprep.subr.mxu0 0.0
      %5061 = vmatpush2.msra.mxu0 0.0
      %5062 = vmatprep.subr.mxu0 0.0
      %5063 = vmatpush2.msra.mxu0 0.0
      %5064 = vmatprep.subr.mxu0 0.0
      %5065 = vmatpush2.msra.mxu0 0.0
      %5066 = vmatprep.subr.mxu0 0.0
      %5067 = vmatpush2.msra.mxu0 0.0
      %5068 = vmatprep.subr.mxu0 0.0
      %5069 = vmatpush2.msra.mxu0 0.0
      %5070 = vmatprep.subr.mxu0 0.0
      %5071 = vmatpush2.msra.mxu0 0.0
      %5072 = vmatprep.subr.mxu0 0.0
      %5073 = vmatpush2.msra.mxu0 0.0
      %5074 = vmatprep.mubr.f32.mxu0 0.0
      %5075 = vmatmul.mubr.f32.gmra.mxu0 %v4812
      %v5076 = vpop.f32.mrf.mxu0
      %v5077 = vadd.f32 0.0, %v5076
      %v5078 = vpop.f32.mrf.mxu0
      %v5079 = vadd.f32 0.0, %v5078
      %5080 = vmatprep.mubr.f32.mxu0 0.0
      %5081 = vmatmul.mubr.f32.gmra.mxu0 %v4815
      %v5082 = vpop.f32.mrf.mxu0
      %v5083 = vadd.f32 0.0, %v5082
      %v5084 = vpop.f32.mrf.mxu0
      %v5085 = vadd.f32 0.0, %v5084
      %5086 = vmatprep.mubr.f32.mxu0 0.0
      %5087 = vmatmul.mubr.f32.gmra.mxu0 %v4818
      %v5088 = vpop.f32.mrf.mxu0
      %v5089 = vadd.f32 0.0, %v5088
      %v5090 = vpop.f32.mrf.mxu0
      %v5091 = vadd.f32 0.0, %v5090
      %5092 = vdwg.mxu0
      %5093 = vmatprep.subr.mxu0 0.0
      %5094 = vmatpush1.msra.mxu0 0.0
      %5095 = vmatprep.subr.mxu0 0.0
      %5096 = vmatpush1.msra.mxu0 0.0
      %5097 = vmatprep.subr.mxu0 0.0
      %5098 = vmatpush1.msra.mxu0 0.0
      %5099 = vmatprep.subr.mxu0 0.0
      %5100 = vmatpush1.msra.mxu0 0.0
      %5101 = vmatprep.subr.mxu0 0.0
      %5102 = vmatpush1.msra.mxu0 0.0
      %5103 = vmatprep.subr.mxu0 0.0
      %5104 = vmatpush1.msra.mxu0 0.0
      %5105 = vmatprep.subr.mxu0 0.0
      %5106 = vmatpush1.msra.mxu0 0.0
      %5107 = vmatprep.subr.mxu0 0.0
      %5108 = vmatpush1.msra.mxu0 0.0
      %5109 = vmatprep.subr.mxu0 0.0
      %5110 = vmatpush1.msra.mxu0 0.0
      %5111 = vmatprep.subr.mxu0 0.0
      %5112 = vmatpush1.msra.mxu0 0.0
      %5113 = vmatprep.subr.mxu0 0.0
      %5114 = vmatpush1.msra.mxu0 0.0
      %5115 = vmatprep.subr.mxu0 0.0
      %5116 = vmatpush1.msra.mxu0 0.0
      %5117 = vmatprep.subr.mxu0 0.0
      %5118 = vmatpush1.msra.mxu0 0.0
      %5119 = vmatprep.subr.mxu0 0.0
      %5120 = vmatpush1.msra.mxu0 0.0
      %5121 = vmatprep.subr.mxu0 %v4842
      %5122 = vmatpush1.msra.mxu0 %v4839
      %5123 = vmatprep.subr.mxu0 %v4798
      %5124 = vmatpush1.msra.mxu0 %v4797
      %5125 = vmatprep.subr.mxu0 0.0
      %5126 = vmatpush2.msra.mxu0 0.0
      %5127 = vmatprep.subr.mxu0 0.0
      %5128 = vmatpush2.msra.mxu0 0.0
      %5129 = vmatprep.subr.mxu0 0.0
      %5130 = vmatpush2.msra.mxu0 0.0
      %5131 = vmatprep.subr.mxu0 0.0
      %5132 = vmatpush2.msra.mxu0 0.0
      %5133 = vmatprep.subr.mxu0 0.0
      %5134 = vmatpush2.msra.mxu0 0.0
      %5135 = vmatprep.subr.mxu0 0.0
      %5136 = vmatpush2.msra.mxu0 0.0
      %5137 = vmatprep.subr.mxu0 0.0
      %5138 = vmatpush2.msra.mxu0 0.0
      %5139 = vmatprep.subr.mxu0 0.0
      %5140 = vmatpush2.msra.mxu0 0.0
      %5141 = vmatprep.subr.mxu0 0.0
      %5142 = vmatpush2.msra.mxu0 0.0
      %5143 = vmatprep.subr.mxu0 0.0
      %5144 = vmatpush2.msra.mxu0 0.0
      %5145 = vmatprep.subr.mxu0 0.0
      %5146 = vmatpush2.msra.mxu0 0.0
      %5147 = vmatprep.subr.mxu0 0.0
      %5148 = vmatpush2.msra.mxu0 0.0
      %5149 = vmatprep.subr.mxu0 0.0
      %5150 = vmatpush2.msra.mxu0 0.0
      %5151 = vmatprep.subr.mxu0 0.0
      %5152 = vmatpush2.msra.mxu0 0.0
      %5153 = vmatprep.subr.mxu0 0.0
      %5154 = vmatpush2.msra.mxu0 0.0
      %5155 = vmatprep.subr.mxu0 0.0
      %5156 = vmatpush2.msra.mxu0 0.0
      %5157 = vmatprep.mubr.f32.mxu0 0.0
      %5158 = vmatmul.mubr.f32.gmra.mxu0 %v4812
      %v5159 = vpop.f32.mrf.mxu0
      %v5160 = vadd.f32 0.0, %v5159
      %v5161 = vpop.f32.mrf.mxu0
      %v5162 = vadd.f32 0.0, %v5161
      %5163 = vmatprep.mubr.f32.mxu0 0.0
      %5164 = vmatmul.mubr.f32.gmra.mxu0 %v4815
      %v5165 = vpop.f32.mrf.mxu0
      %v5166 = vadd.f32 0.0, %v5165
      %v5167 = vpop.f32.mrf.mxu0
      %v5168 = vadd.f32 0.0, %v5167
      %5169 = vmatprep.mubr.f32.mxu0 0.0
      %5170 = vmatmul.mubr.f32.gmra.mxu0 %v4818
      %v5171 = vpop.f32.mrf.mxu0
      %v5172 = vadd.f32 0.0, %v5171
      %v5173 = vpop.f32.mrf.mxu0
      %v5174 = vadd.f32 0.0, %v5173
      %5175 = vdwg.mxu0
      %v5176 = vadd.f32 %v4698, %v4911
      %v5177 = vadd.f32 %v4699, %v4913
      %v5178 = vadd.f32 %v4700, %v4994
      %v5179 = vadd.f32 %v4701, %v4996
      %v5180 = vadd.f32 %v4702, %v5077
      %v5181 = vadd.f32 %v4703, %v5079
      %v5182 = vadd.f32 %v4704, %v5160
      %v5183 = vadd.f32 %v4705, %v5162
      %v5184 = vadd.f32 %v4706, %v4917
      %v5185 = vadd.f32 %v4707, %v4919
      %v5186 = vadd.f32 %v4708, %v5000
      %v5187 = vadd.f32 %v4709, %v5002
      %v5188 = vadd.f32 %v4710, %v5083
      %v5189 = vadd.f32 %v4711, %v5085
      %v5190 = vadd.f32 %v4712, %v5166
      %v5191 = vadd.f32 %v4713, %v5168
      %v5192 = vadd.f32 %v4714, %v4923
      %v5193 = vadd.f32 %v4715, %v4925
      %v5194 = vadd.f32 %v4716, %v5006
      %v5195 = vadd.f32 %v4717, %v5008
      %v5196 = vadd.f32 %v4718, %v5089
      %v5197 = vadd.f32 %v4719, %v5091
      %v5198 = vadd.f32 %v4720, %v5172
      %v5199 = vadd.f32 %v4721, %v5174
      %s5200 = scalar_lea.vmem %s2, 168
      %v5201 = vld [vmem:[%s5200] sm:$0xff]
      %v5202 = vld [vmem:[%s5200 + $0x8] sm:$0xff]
      %v5203 = vld [vmem:[%s5200 + $0x10] sm:$0xff]
      %5204 = vrot.lane.b32.xlu0 %v1967, 63
      %v5205 = vpop.permute.xlu0 %5204
      %5206 = vrot.lane.b32.xlu0 %v1968, 63
      %v5207 = vpop.permute.xlu0 %5206
      %5208 = vrot.lane.b32.xlu0 %v1969, 63
      %v5209 = vpop.permute.xlu0 %5208
      %5210 = vrot.lane.b32.xlu0 %v1970, 63
      %v5211 = vpop.permute.xlu0 %5210
      %5212 = vrot.lane.b32.xlu0 %v1971, 63
      %v5213 = vpop.permute.xlu0 %5212
      %5214 = vrot.lane.b32.xlu0 %v1972, 63
      %v5215 = vpop.permute.xlu0 %5214
      %5216 = vrot.lane.b32.xlu0 %v1973, 63
      %v5217 = vpop.permute.xlu0 %5216
      %5218 = vrot.lane.b32.xlu0 %v1974, 63
      %v5219 = vpop.permute.xlu0 %5218
      %5220 = vrot.lane.b32.xlu0 %v2018, 63
      %v5221 = vpop.permute.xlu0 %5220
      %5222 = vrot.lane.b32.xlu0 %v1975, 63
      %v5223 = vpop.permute.xlu0 %5222
      %5224 = vrot.lane.b32.xlu0 %v1976, 63
      %v5225 = vpop.permute.xlu0 %5224
      %5226 = vrot.lane.b32.xlu0 %v1977, 63
      %v5227 = vpop.permute.xlu0 %5226
      %5228 = vrot.lane.b32.xlu0 %v1978, 63
      %v5229 = vpop.permute.xlu0 %5228
      %5230 = vrot.lane.b32.xlu0 %v1979, 63
      %v5231 = vpop.permute.xlu0 %5230
      %5232 = vrot.lane.b32.xlu0 %v1980, 63
      %v5233 = vpop.permute.xlu0 %5232
      %5234 = vrot.lane.b32.xlu0 %v1981, 63
      %v5235 = vpop.permute.xlu0 %5234
      %5236 = vrot.lane.b32.xlu0 %v1982, 63
      %v5237 = vpop.permute.xlu0 %5236
      %5238 = vrot.lane.b32.xlu0 %v2019, 63
      %v5239 = vpop.permute.xlu0 %5238
      %vm5240 = vcmask 515072
      %v5241 = vsel %vm5240, %v5205, %v5207
      %v5242 = vsel %vm5240, %v5207, %v5209
      %v5243 = vsel %vm5240, %v5209, %v5211
      %v5244 = vsel %vm5240, %v5211, %v5213
      %v5245 = vsel %vm5240, %v5213, %v5215
      %v5246 = vsel %vm5240, %v5215, %v5217
      %v5247 = vsel %vm5240, %v5217, %v5219
      %v5248 = vsel %vm5240, %v5219, %v5221
      %v5249 = vsel %vm5240, %v5223, %v5225
      %v5250 = vsel %vm5240, %v5225, %v5227
      %v5251 = vsel %vm5240, %v5227, %v5229
      %v5252 = vsel %vm5240, %v5229, %v5231
      %v5253 = vsel %vm5240, %v5231, %v5233
      %v5254 = vsel %vm5240, %v5233, %v5235
      %v5255 = vsel %vm5240, %v5235, %v5237
      %v5256 = vsel %vm5240, %v5237, %v5239
      %v5266 = vsel %vm2103, %v5201, 0
      %v5269 = vsel %vm2103, %v5202, 0
      %v5272 = vsel %vm2103, %v5203, 0
      %v5274 = vsel %vm387, %v5249, 0
      %v5276 = vsel %vm387, %v5250, 0
      %v5278 = vsel %vm387, %v5251, 0
      %v5280 = vsel %vm387, %v5252, 0
      %v5282 = vsel %vm387, %v5253, 0
      %v5284 = vsel %vm387, %v5254, 0
      %v5286 = vsel %vm387, %v5255, 0
      %v5288 = vsel %vm387, %v5256, 0
      %5290 = vmatprep.subr.mxu0 0.0
      %5291 = vmatpush1.msra.mxu0 0.0
      %5292 = vmatprep.subr.mxu0 0.0
      %5293 = vmatpush1.msra.mxu0 0.0
      %5294 = vmatprep.subr.mxu0 0.0
      %5295 = vmatpush1.msra.mxu0 0.0
      %5296 = vmatprep.subr.mxu0 0.0
      %5297 = vmatpush1.msra.mxu0 0.0
      %5298 = vmatprep.subr.mxu0 0.0
      %5299 = vmatpush1.msra.mxu0 0.0
      %5300 = vmatprep.subr.mxu0 0.0
      %5301 = vmatpush1.msra.mxu0 0.0
      %5302 = vmatprep.subr.mxu0 0.0
      %5303 = vmatpush1.msra.mxu0 0.0
      %5304 = vmatprep.subr.mxu0 0.0
      %5305 = vmatpush1.msra.mxu0 0.0
      %5306 = vmatprep.subr.mxu0 0.0
      %5307 = vmatpush1.msra.mxu0 0.0
      %5308 = vmatprep.subr.mxu0 0.0
      %5309 = vmatpush1.msra.mxu0 0.0
      %5310 = vmatprep.subr.mxu0 0.0
      %5311 = vmatpush1.msra.mxu0 0.0
      %5312 = vmatprep.subr.mxu0 0.0
      %5313 = vmatpush1.msra.mxu0 0.0
      %5314 = vmatprep.subr.mxu0 0.0
      %5315 = vmatpush1.msra.mxu0 0.0
      %5316 = vmatprep.subr.mxu0 0.0
      %5317 = vmatpush1.msra.mxu0 0.0
      %5318 = vmatprep.subr.mxu0 %v5276
      %5319 = vmatpush1.msra.mxu0 %v5274
      %5320 = vmatprep.subr.mxu0 %v5242
      %5321 = vmatpush1.msra.mxu0 %v5241
      %5322 = vmatprep.subr.mxu0 0.0
      %5323 = vmatpush2.msra.mxu0 0.0
      %5324 = vmatprep.subr.mxu0 0.0
      %5325 = vmatpush2.msra.mxu0 0.0
      %5326 = vmatprep.subr.mxu0 0.0
      %5327 = vmatpush2.msra.mxu0 0.0
      %5328 = vmatprep.subr.mxu0 0.0
      %5329 = vmatpush2.msra.mxu0 0.0
      %5330 = vmatprep.subr.mxu0 0.0
      %5331 = vmatpush2.msra.mxu0 0.0
      %5332 = vmatprep.subr.mxu0 0.0
      %5333 = vmatpush2.msra.mxu0 0.0
      %5334 = vmatprep.subr.mxu0 0.0
      %5335 = vmatpush2.msra.mxu0 0.0
      %5336 = vmatprep.subr.mxu0 0.0
      %5337 = vmatpush2.msra.mxu0 0.0
      %5338 = vmatprep.subr.mxu0 0.0
      %5339 = vmatpush2.msra.mxu0 0.0
      %5340 = vmatprep.subr.mxu0 0.0
      %5341 = vmatpush2.msra.mxu0 0.0
      %5342 = vmatprep.subr.mxu0 0.0
      %5343 = vmatpush2.msra.mxu0 0.0
      %5344 = vmatprep.subr.mxu0 0.0
      %5345 = vmatpush2.msra.mxu0 0.0
      %5346 = vmatprep.subr.mxu0 0.0
      %5347 = vmatpush2.msra.mxu0 0.0
      %5348 = vmatprep.subr.mxu0 0.0
      %5349 = vmatpush2.msra.mxu0 0.0
      %5350 = vmatprep.subr.mxu0 0.0
      %5351 = vmatpush2.msra.mxu0 0.0
      %5352 = vmatprep.subr.mxu0 0.0
      %5353 = vmatpush2.msra.mxu0 0.0
      %5354 = vmatprep.mubr.f32.mxu0 0.0
      %5355 = vmatmul.mubr.f32.gmra.mxu0 %v5266
      %v5356 = vpop.f32.mrf.mxu0
      %v5357 = vadd.f32 0.0, %v5356
      %v5358 = vpop.f32.mrf.mxu0
      %v5359 = vadd.f32 0.0, %v5358
      %5360 = vmatprep.mubr.f32.mxu0 0.0
      %5361 = vmatmul.mubr.f32.gmra.mxu0 %v5269
      %v5362 = vpop.f32.mrf.mxu0
      %v5363 = vadd.f32 0.0, %v5362
      %v5364 = vpop.f32.mrf.mxu0
      %v5365 = vadd.f32 0.0, %v5364
      %5366 = vmatprep.mubr.f32.mxu0 0.0
      %5367 = vmatmul.mubr.f32.gmra.mxu0 %v5272
      %v5368 = vpop.f32.mrf.mxu0
      %v5369 = vadd.f32 0.0, %v5368
      %v5370 = vpop.f32.mrf.mxu0
      %v5371 = vadd.f32 0.0, %v5370
      %5372 = vdwg.mxu0
      %5373 = vmatprep.subr.mxu0 0.0
      %5374 = vmatpush1.msra.mxu0 0.0
      %5375 = vmatprep.subr.mxu0 0.0
      %5376 = vmatpush1.msra.mxu0 0.0
      %5377 = vmatprep.subr.mxu0 0.0
      %5378 = vmatpush1.msra.mxu0 0.0
      %5379 = vmatprep.subr.mxu0 0.0
      %5380 = vmatpush1.msra.mxu0 0.0
      %5381 = vmatprep.subr.mxu0 0.0
      %5382 = vmatpush1.msra.mxu0 0.0
      %5383 = vmatprep.subr.mxu0 0.0
      %5384 = vmatpush1.msra.mxu0 0.0
      %5385 = vmatprep.subr.mxu0 0.0
      %5386 = vmatpush1.msra.mxu0 0.0
      %5387 = vmatprep.subr.mxu0 0.0
      %5388 = vmatpush1.msra.mxu0 0.0
      %5389 = vmatprep.subr.mxu0 0.0
      %5390 = vmatpush1.msra.mxu0 0.0
      %5391 = vmatprep.subr.mxu0 0.0
      %5392 = vmatpush1.msra.mxu0 0.0
      %5393 = vmatprep.subr.mxu0 0.0
      %5394 = vmatpush1.msra.mxu0 0.0
      %5395 = vmatprep.subr.mxu0 0.0
      %5396 = vmatpush1.msra.mxu0 0.0
      %5397 = vmatprep.subr.mxu0 0.0
      %5398 = vmatpush1.msra.mxu0 0.0
      %5399 = vmatprep.subr.mxu0 0.0
      %5400 = vmatpush1.msra.mxu0 0.0
      %5401 = vmatprep.subr.mxu0 %v5280
      %5402 = vmatpush1.msra.mxu0 %v5278
      %5403 = vmatprep.subr.mxu0 %v5244
      %5404 = vmatpush1.msra.mxu0 %v5243
      %5405 = vmatprep.subr.mxu0 0.0
      %5406 = vmatpush2.msra.mxu0 0.0
      %5407 = vmatprep.subr.mxu0 0.0
      %5408 = vmatpush2.msra.mxu0 0.0
      %5409 = vmatprep.subr.mxu0 0.0
      %5410 = vmatpush2.msra.mxu0 0.0
      %5411 = vmatprep.subr.mxu0 0.0
      %5412 = vmatpush2.msra.mxu0 0.0
      %5413 = vmatprep.subr.mxu0 0.0
      %5414 = vmatpush2.msra.mxu0 0.0
      %5415 = vmatprep.subr.mxu0 0.0
      %5416 = vmatpush2.msra.mxu0 0.0
      %5417 = vmatprep.subr.mxu0 0.0
      %5418 = vmatpush2.msra.mxu0 0.0
      %5419 = vmatprep.subr.mxu0 0.0
      %5420 = vmatpush2.msra.mxu0 0.0
      %5421 = vmatprep.subr.mxu0 0.0
      %5422 = vmatpush2.msra.mxu0 0.0
      %5423 = vmatprep.subr.mxu0 0.0
      %5424 = vmatpush2.msra.mxu0 0.0
      %5425 = vmatprep.subr.mxu0 0.0
      %5426 = vmatpush2.msra.mxu0 0.0
      %5427 = vmatprep.subr.mxu0 0.0
      %5428 = vmatpush2.msra.mxu0 0.0
      %5429 = vmatprep.subr.mxu0 0.0
      %5430 = vmatpush2.msra.mxu0 0.0
      %5431 = vmatprep.subr.mxu0 0.0
      %5432 = vmatpush2.msra.mxu0 0.0
      %5433 = vmatprep.subr.mxu0 0.0
      %5434 = vmatpush2.msra.mxu0 0.0
      %5435 = vmatprep.subr.mxu0 0.0
      %5436 = vmatpush2.msra.mxu0 0.0
      %5437 = vmatprep.mubr.f32.mxu0 0.0
      %5438 = vmatmul.mubr.f32.gmra.mxu0 %v5266
      %v5439 = vpop.f32.mrf.mxu0
      %v5440 = vadd.f32 0.0, %v5439
      %v5441 = vpop.f32.mrf.mxu0
      %v5442 = vadd.f32 0.0, %v5441
      %5443 = vmatprep.mubr.f32.mxu0 0.0
      %5444 = vmatmul.mubr.f32.gmra.mxu0 %v5269
      %v5445 = vpop.f32.mrf.mxu0
      %v5446 = vadd.f32 0.0, %v5445
      %v5447 = vpop.f32.mrf.mxu0
      %v5448 = vadd.f32 0.0, %v5447
      %5449 = vmatprep.mubr.f32.mxu0 0.0
      %5450 = vmatmul.mubr.f32.gmra.mxu0 %v5272
      %v5451 = vpop.f32.mrf.mxu0
      %v5452 = vadd.f32 0.0, %v5451
      %v5453 = vpop.f32.mrf.mxu0
      %v5454 = vadd.f32 0.0, %v5453
      %5455 = vdwg.mxu0
      %5456 = vmatprep.subr.mxu0 0.0
      %5457 = vmatpush1.msra.mxu0 0.0
      %5458 = vmatprep.subr.mxu0 0.0
      %5459 = vmatpush1.msra.mxu0 0.0
      %5460 = vmatprep.subr.mxu0 0.0
      %5461 = vmatpush1.msra.mxu0 0.0
      %5462 = vmatprep.subr.mxu0 0.0
      %5463 = vmatpush1.msra.mxu0 0.0
      %5464 = vmatprep.subr.mxu0 0.0
      %5465 = vmatpush1.msra.mxu0 0.0
      %5466 = vmatprep.subr.mxu0 0.0
      %5467 = vmatpush1.msra.mxu0 0.0
      %5468 = vmatprep.subr.mxu0 0.0
      %5469 = vmatpush1.msra.mxu0 0.0
      %5470 = vmatprep.subr.mxu0 0.0
      %5471 = vmatpush1.msra.mxu0 0.0
      %5472 = vmatprep.subr.mxu0 0.0
      %5473 = vmatpush1.msra.mxu0 0.0
      %5474 = vmatprep.subr.mxu0 0.0
      %5475 = vmatpush1.msra.mxu0 0.0
      %5476 = vmatprep.subr.mxu0 0.0
      %5477 = vmatpush1.msra.mxu0 0.0
      %5478 = vmatprep.subr.mxu0 0.0
      %5479 = vmatpush1.msra.mxu0 0.0
      %5480 = vmatprep.subr.mxu0 0.0
      %5481 = vmatpush1.msra.mxu0 0.0
      %5482 = vmatprep.subr.mxu0 0.0
      %5483 = vmatpush1.msra.mxu0 0.0
      %5484 = vmatprep.subr.mxu0 %v5284
      %5485 = vmatpush1.msra.mxu0 %v5282
      %5486 = vmatprep.subr.mxu0 %v5246
      %5487 = vmatpush1.msra.mxu0 %v5245
      %5488 = vmatprep.subr.mxu0 0.0
      %5489 = vmatpush2.msra.mxu0 0.0
      %5490 = vmatprep.subr.mxu0 0.0
      %5491 = vmatpush2.msra.mxu0 0.0
      %5492 = vmatprep.subr.mxu0 0.0
      %5493 = vmatpush2.msra.mxu0 0.0
      %5494 = vmatprep.subr.mxu0 0.0
      %5495 = vmatpush2.msra.mxu0 0.0
      %5496 = vmatprep.subr.mxu0 0.0
      %5497 = vmatpush2.msra.mxu0 0.0
      %5498 = vmatprep.subr.mxu0 0.0
      %5499 = vmatpush2.msra.mxu0 0.0
      %5500 = vmatprep.subr.mxu0 0.0
      %5501 = vmatpush2.msra.mxu0 0.0
      %5502 = vmatprep.subr.mxu0 0.0
      %5503 = vmatpush2.msra.mxu0 0.0
      %5504 = vmatprep.subr.mxu0 0.0
      %5505 = vmatpush2.msra.mxu0 0.0
      %5506 = vmatprep.subr.mxu0 0.0
      %5507 = vmatpush2.msra.mxu0 0.0
      %5508 = vmatprep.subr.mxu0 0.0
      %5509 = vmatpush2.msra.mxu0 0.0
      %5510 = vmatprep.subr.mxu0 0.0
      %5511 = vmatpush2.msra.mxu0 0.0
      %5512 = vmatprep.subr.mxu0 0.0
      %5513 = vmatpush2.msra.mxu0 0.0
      %5514 = vmatprep.subr.mxu0 0.0
      %5515 = vmatpush2.msra.mxu0 0.0
      %5516 = vmatprep.subr.mxu0 0.0
      %5517 = vmatpush2.msra.mxu0 0.0
      %5518 = vmatprep.subr.mxu0 0.0
      %5519 = vmatpush2.msra.mxu0 0.0
      %5520 = vmatprep.mubr.f32.mxu0 0.0
      %5521 = vmatmul.mubr.f32.gmra.mxu0 %v5266
      %v5522 = vpop.f32.mrf.mxu0
      %v5523 = vadd.f32 0.0, %v5522
      %v5524 = vpop.f32.mrf.mxu0
      %v5525 = vadd.f32 0.0, %v5524
      %5526 = vmatprep.mubr.f32.mxu0 0.0
      %5527 = vmatmul.mubr.f32.gmra.mxu0 %v5269
      %v5528 = vpop.f32.mrf.mxu0
      %v5529 = vadd.f32 0.0, %v5528
      %v5530 = vpop.f32.mrf.mxu0
      %v5531 = vadd.f32 0.0, %v5530
      %5532 = vmatprep.mubr.f32.mxu0 0.0
      %5533 = vmatmul.mubr.f32.gmra.mxu0 %v5272
      %v5534 = vpop.f32.mrf.mxu0
      %v5535 = vadd.f32 0.0, %v5534
      %v5536 = vpop.f32.mrf.mxu0
      %v5537 = vadd.f32 0.0, %v5536
      %5538 = vdwg.mxu0
      %5539 = vmatprep.subr.mxu0 0.0
      %5540 = vmatpush1.msra.mxu0 0.0
      %5541 = vmatprep.subr.mxu0 0.0
      %5542 = vmatpush1.msra.mxu0 0.0
      %5543 = vmatprep.subr.mxu0 0.0
      %5544 = vmatpush1.msra.mxu0 0.0
      %5545 = vmatprep.subr.mxu0 0.0
      %5546 = vmatpush1.msra.mxu0 0.0
      %5547 = vmatprep.subr.mxu0 0.0
      %5548 = vmatpush1.msra.mxu0 0.0
      %5549 = vmatprep.subr.mxu0 0.0
      %5550 = vmatpush1.msra.mxu0 0.0
      %5551 = vmatprep.subr.mxu0 0.0
      %5552 = vmatpush1.msra.mxu0 0.0
      %5553 = vmatprep.subr.mxu0 0.0
      %5554 = vmatpush1.msra.mxu0 0.0
      %5555 = vmatprep.subr.mxu0 0.0
      %5556 = vmatpush1.msra.mxu0 0.0
      %5557 = vmatprep.subr.mxu0 0.0
      %5558 = vmatpush1.msra.mxu0 0.0
      %5559 = vmatprep.subr.mxu0 0.0
      %5560 = vmatpush1.msra.mxu0 0.0
      %5561 = vmatprep.subr.mxu0 0.0
      %5562 = vmatpush1.msra.mxu0 0.0
      %5563 = vmatprep.subr.mxu0 0.0
      %5564 = vmatpush1.msra.mxu0 0.0
      %5565 = vmatprep.subr.mxu0 0.0
      %5566 = vmatpush1.msra.mxu0 0.0
      %5567 = vmatprep.subr.mxu0 %v5288
      %5568 = vmatpush1.msra.mxu0 %v5286
      %5569 = vmatprep.subr.mxu0 %v5248
      %5570 = vmatpush1.msra.mxu0 %v5247
      %5571 = vmatprep.subr.mxu0 0.0
      %5572 = vmatpush2.msra.mxu0 0.0
      %5573 = vmatprep.subr.mxu0 0.0
      %5574 = vmatpush2.msra.mxu0 0.0
      %5575 = vmatprep.subr.mxu0 0.0
      %5576 = vmatpush2.msra.mxu0 0.0
      %5577 = vmatprep.subr.mxu0 0.0
      %5578 = vmatpush2.msra.mxu0 0.0
      %5579 = vmatprep.subr.mxu0 0.0
      %5580 = vmatpush2.msra.mxu0 0.0
      %5581 = vmatprep.subr.mxu0 0.0
      %5582 = vmatpush2.msra.mxu0 0.0
      %5583 = vmatprep.subr.mxu0 0.0
      %5584 = vmatpush2.msra.mxu0 0.0
      %5585 = vmatprep.subr.mxu0 0.0
      %5586 = vmatpush2.msra.mxu0 0.0
      %5587 = vmatprep.subr.mxu0 0.0
      %5588 = vmatpush2.msra.mxu0 0.0
      %5589 = vmatprep.subr.mxu0 0.0
      %5590 = vmatpush2.msra.mxu0 0.0
      %5591 = vmatprep.subr.mxu0 0.0
      %5592 = vmatpush2.msra.mxu0 0.0
      %5593 = vmatprep.subr.mxu0 0.0
      %5594 = vmatpush2.msra.mxu0 0.0
      %5595 = vmatprep.subr.mxu0 0.0
      %5596 = vmatpush2.msra.mxu0 0.0
      %5597 = vmatprep.subr.mxu0 0.0
      %5598 = vmatpush2.msra.mxu0 0.0
      %5599 = vmatprep.subr.mxu0 0.0
      %5600 = vmatpush2.msra.mxu0 0.0
      %5601 = vmatprep.subr.mxu0 0.0
      %5602 = vmatpush2.msra.mxu0 0.0
      %5603 = vmatprep.mubr.f32.mxu0 0.0
      %5604 = vmatmul.mubr.f32.gmra.mxu0 %v5266
      %v5605 = vpop.f32.mrf.mxu0
      %v5606 = vadd.f32 0.0, %v5605
      %v5607 = vpop.f32.mrf.mxu0
      %v5608 = vadd.f32 0.0, %v5607
      %5609 = vmatprep.mubr.f32.mxu0 0.0
      %5610 = vmatmul.mubr.f32.gmra.mxu0 %v5269
      %v5611 = vpop.f32.mrf.mxu0
      %v5612 = vadd.f32 0.0, %v5611
      %v5613 = vpop.f32.mrf.mxu0
      %v5614 = vadd.f32 0.0, %v5613
      %5615 = vmatprep.mubr.f32.mxu0 0.0
      %5616 = vmatmul.mubr.f32.gmra.mxu0 %v5272
      %v5617 = vpop.f32.mrf.mxu0
      %v5618 = vadd.f32 0.0, %v5617
      %v5619 = vpop.f32.mrf.mxu0
      %v5620 = vadd.f32 0.0, %v5619
      %5621 = vdwg.mxu0
      %v5622 = vadd.f32 %v5176, %v5357
      %v5623 = vadd.f32 %v5177, %v5359
      %v5624 = vadd.f32 %v5178, %v5440
      %v5625 = vadd.f32 %v5179, %v5442
      %v5626 = vadd.f32 %v5180, %v5523
      %v5627 = vadd.f32 %v5181, %v5525
      %v5628 = vadd.f32 %v5182, %v5606
      %v5629 = vadd.f32 %v5183, %v5608
      %v5630 = vadd.f32 %v5184, %v5363
      %v5631 = vadd.f32 %v5185, %v5365
      %v5632 = vadd.f32 %v5186, %v5446
      %v5633 = vadd.f32 %v5187, %v5448
      %v5634 = vadd.f32 %v5188, %v5529
      %v5635 = vadd.f32 %v5189, %v5531
      %v5636 = vadd.f32 %v5190, %v5612
      %v5637 = vadd.f32 %v5191, %v5614
      %v5638 = vadd.f32 %v5192, %v5369
      %v5639 = vadd.f32 %v5193, %v5371
      %v5640 = vadd.f32 %v5194, %v5452
      %v5641 = vadd.f32 %v5195, %v5454
      %v5642 = vadd.f32 %v5196, %v5535
      %v5643 = vadd.f32 %v5197, %v5537
      %v5644 = vadd.f32 %v5198, %v5618
      %v5645 = vadd.f32 %v5199, %v5620
      %5646 = vrot.lane.b32.xlu0 %v1967, 62
      %v5647 = vpop.permute.xlu0 %5646
      %5648 = vrot.lane.b32.xlu0 %v1968, 62
      %v5649 = vpop.permute.xlu0 %5648
      %5650 = vrot.lane.b32.xlu0 %v1969, 62
      %v5651 = vpop.permute.xlu0 %5650
      %5652 = vrot.lane.b32.xlu0 %v1970, 62
      %v5653 = vpop.permute.xlu0 %5652
      %5654 = vrot.lane.b32.xlu0 %v1971, 62
      %v5655 = vpop.permute.xlu0 %5654
      %5656 = vrot.lane.b32.xlu0 %v1972, 62
      %v5657 = vpop.permute.xlu0 %5656
      %5658 = vrot.lane.b32.xlu0 %v1973, 62
      %v5659 = vpop.permute.xlu0 %5658
      %5660 = vrot.lane.b32.xlu0 %v1974, 62
      %v5661 = vpop.permute.xlu0 %5660
      %5662 = vrot.lane.b32.xlu0 %v2018, 62
      %v5663 = vpop.permute.xlu0 %5662
      %5664 = vrot.lane.b32.xlu0 %v1975, 62
      %v5665 = vpop.permute.xlu0 %5664
      %5666 = vrot.lane.b32.xlu0 %v1976, 62
      %v5667 = vpop.permute.xlu0 %5666
      %5668 = vrot.lane.b32.xlu0 %v1977, 62
      %v5669 = vpop.permute.xlu0 %5668
      %5670 = vrot.lane.b32.xlu0 %v1978, 62
      %v5671 = vpop.permute.xlu0 %5670
      %5672 = vrot.lane.b32.xlu0 %v1979, 62
      %v5673 = vpop.permute.xlu0 %5672
      %5674 = vrot.lane.b32.xlu0 %v1980, 62
      %v5675 = vpop.permute.xlu0 %5674
      %5676 = vrot.lane.b32.xlu0 %v1981, 62
      %v5677 = vpop.permute.xlu0 %5676
      %5678 = vrot.lane.b32.xlu0 %v1982, 62
      %v5679 = vpop.permute.xlu0 %5678
      %5680 = vrot.lane.b32.xlu0 %v2019, 62
      %v5681 = vpop.permute.xlu0 %5680
      %vm5682 = vcmask 506880
      %v5683 = vsel %vm5682, %v5647, %v5649
      %v5684 = vsel %vm5682, %v5649, %v5651
      %v5685 = vsel %vm5682, %v5651, %v5653
      %v5686 = vsel %vm5682, %v5653, %v5655
      %v5687 = vsel %vm5682, %v5655, %v5657
      %v5688 = vsel %vm5682, %v5657, %v5659
      %v5689 = vsel %vm5682, %v5659, %v5661
      %v5690 = vsel %vm5682, %v5661, %v5663
      %v5691 = vsel %vm5682, %v5665, %v5667
      %v5692 = vsel %vm5682, %v5667, %v5669
      %v5693 = vsel %vm5682, %v5669, %v5671
      %v5694 = vsel %vm5682, %v5671, %v5673
      %v5695 = vsel %vm5682, %v5673, %v5675
      %v5696 = vsel %vm5682, %v5675, %v5677
      %v5697 = vsel %vm5682, %v5677, %v5679
      %v5698 = vsel %vm5682, %v5679, %v5681
      %v5715 = vsel %vm2834, %v5683, 0.0
      %v5716 = vsel %vm2835, %v5684, 0.0
      %v5717 = vsel %vm2836, %v5685, 0.0
      %v5718 = vsel %vm2837, %v5686, 0.0
      %v5719 = vsel %vm2838, %v5687, 0.0
      %v5720 = vsel %vm2839, %v5688, 0.0
      %v5721 = vsel %vm2840, %v5689, 0.0
      %v5722 = vsel %vm2841, %v5690, 0.0
      %v5723 = vsel %vm2834, %v5691, 0.0
      %v5724 = vsel %vm2835, %v5692, 0.0
      %v5725 = vsel %vm2836, %v5693, 0.0
      %v5726 = vsel %vm2837, %v5694, 0.0
      %v5727 = vsel %vm2838, %v5695, 0.0
      %v5728 = vsel %vm2839, %v5696, 0.0
      %v5729 = vsel %vm2840, %v5697, 0.0
      %v5730 = vsel %vm2841, %v5698, 0.0
      %s5731 = scalar_lea.vmem %s2, 192
      %v5732 = vld [vmem:[%s5731] sm:$0xff]
      %v5733 = vld [vmem:[%s5731 + $0x8] sm:$0xff]
      %v5734 = vld [vmem:[%s5731 + $0x10] sm:$0xff]
      %v5736 = vsel %vm2103, %v5732, 0
      %v5739 = vsel %vm2103, %v5733, 0
      %v5742 = vsel %vm2103, %v5734, 0
      %v5745 = vsel %vm387, %v5723, 0
      %v5748 = vsel %vm387, %v5724, 0
      %v5751 = vsel %vm387, %v5725, 0
      %v5754 = vsel %vm387, %v5726, 0
      %v5757 = vsel %vm387, %v5727, 0
      %v5760 = vsel %vm387, %v5728, 0
      %v5763 = vsel %vm387, %v5729, 0
      %v5766 = vsel %vm387, %v5730, 0
      %5768 = vmatprep.subr.mxu0 0.0
      %5769 = vmatpush1.msra.mxu0 0.0
      %5770 = vmatprep.subr.mxu0 0.0
      %5771 = vmatpush1.msra.mxu0 0.0
      %5772 = vmatprep.subr.mxu0 0.0
      %5773 = vmatpush1.msra.mxu0 0.0
      %5774 = vmatprep.subr.mxu0 0.0
      %5775 = vmatpush1.msra.mxu0 0.0
      %5776 = vmatprep.subr.mxu0 0.0
      %5777 = vmatpush1.msra.mxu0 0.0
      %5778 = vmatprep.subr.mxu0 0.0
      %5779 = vmatpush1.msra.mxu0 0.0
      %5780 = vmatprep.subr.mxu0 0.0
      %5781 = vmatpush1.msra.mxu0 0.0
      %5782 = vmatprep.subr.mxu0 0.0
      %5783 = vmatpush1.msra.mxu0 0.0
      %5784 = vmatprep.subr.mxu0 0.0
      %5785 = vmatpush1.msra.mxu0 0.0
      %5786 = vmatprep.subr.mxu0 0.0
      %5787 = vmatpush1.msra.mxu0 0.0
      %5788 = vmatprep.subr.mxu0 0.0
      %5789 = vmatpush1.msra.mxu0 0.0
      %5790 = vmatprep.subr.mxu0 0.0
      %5791 = vmatpush1.msra.mxu0 0.0
      %5792 = vmatprep.subr.mxu0 0.0
      %5793 = vmatpush1.msra.mxu0 0.0
      %5794 = vmatprep.subr.mxu0 0.0
      %5795 = vmatpush1.msra.mxu0 0.0
      %5796 = vmatprep.subr.mxu0 %v5748
      %5797 = vmatpush1.msra.mxu0 %v5745
      %5798 = vmatprep.subr.mxu0 %v5716
      %5799 = vmatpush1.msra.mxu0 %v5715
      %5800 = vmatprep.subr.mxu0 0.0
      %5801 = vmatpush2.msra.mxu0 0.0
      %5802 = vmatprep.subr.mxu0 0.0
      %5803 = vmatpush2.msra.mxu0 0.0
      %5804 = vmatprep.subr.mxu0 0.0
      %5805 = vmatpush2.msra.mxu0 0.0
      %5806 = vmatprep.subr.mxu0 0.0
      %5807 = vmatpush2.msra.mxu0 0.0
      %5808 = vmatprep.subr.mxu0 0.0
      %5809 = vmatpush2.msra.mxu0 0.0
      %5810 = vmatprep.subr.mxu0 0.0
      %5811 = vmatpush2.msra.mxu0 0.0
      %5812 = vmatprep.subr.mxu0 0.0
      %5813 = vmatpush2.msra.mxu0 0.0
      %5814 = vmatprep.subr.mxu0 0.0
      %5815 = vmatpush2.msra.mxu0 0.0
      %5816 = vmatprep.subr.mxu0 0.0
      %5817 = vmatpush2.msra.mxu0 0.0
      %5818 = vmatprep.subr.mxu0 0.0
      %5819 = vmatpush2.msra.mxu0 0.0
      %5820 = vmatprep.subr.mxu0 0.0
      %5821 = vmatpush2.msra.mxu0 0.0
      %5822 = vmatprep.subr.mxu0 0.0
      %5823 = vmatpush2.msra.mxu0 0.0
      %5824 = vmatprep.subr.mxu0 0.0
      %5825 = vmatpush2.msra.mxu0 0.0
      %5826 = vmatprep.subr.mxu0 0.0
      %5827 = vmatpush2.msra.mxu0 0.0
      %5828 = vmatprep.subr.mxu0 0.0
      %5829 = vmatpush2.msra.mxu0 0.0
      %5830 = vmatprep.subr.mxu0 0.0
      %5831 = vmatpush2.msra.mxu0 0.0
      %5832 = vmatprep.mubr.f32.mxu0 0.0
      %5833 = vmatmul.mubr.f32.gmra.mxu0 %v5736
      %v5834 = vpop.f32.mrf.mxu0
      %v5835 = vadd.f32 0.0, %v5834
      %v5836 = vpop.f32.mrf.mxu0
      %v5837 = vadd.f32 0.0, %v5836
      %5838 = vmatprep.mubr.f32.mxu0 0.0
      %5839 = vmatmul.mubr.f32.gmra.mxu0 %v5739
      %v5840 = vpop.f32.mrf.mxu0
      %v5841 = vadd.f32 0.0, %v5840
      %v5842 = vpop.f32.mrf.mxu0
      %v5843 = vadd.f32 0.0, %v5842
      %5844 = vmatprep.mubr.f32.mxu0 0.0
      %5845 = vmatmul.mubr.f32.gmra.mxu0 %v5742
      %v5846 = vpop.f32.mrf.mxu0
      %v5847 = vadd.f32 0.0, %v5846
      %v5848 = vpop.f32.mrf.mxu0
      %v5849 = vadd.f32 0.0, %v5848
      %5850 = vdwg.mxu0
      %5851 = vmatprep.subr.mxu0 0.0
      %5852 = vmatpush1.msra.mxu0 0.0
      %5853 = vmatprep.subr.mxu0 0.0
      %5854 = vmatpush1.msra.mxu0 0.0
      %5855 = vmatprep.subr.mxu0 0.0
      %5856 = vmatpush1.msra.mxu0 0.0
      %5857 = vmatprep.subr.mxu0 0.0
      %5858 = vmatpush1.msra.mxu0 0.0
      %5859 = vmatprep.subr.mxu0 0.0
      %5860 = vmatpush1.msra.mxu0 0.0
      %5861 = vmatprep.subr.mxu0 0.0
      %5862 = vmatpush1.msra.mxu0 0.0
      %5863 = vmatprep.subr.mxu0 0.0
      %5864 = vmatpush1.msra.mxu0 0.0
      %5865 = vmatprep.subr.mxu0 0.0
      %5866 = vmatpush1.msra.mxu0 0.0
      %5867 = vmatprep.subr.mxu0 0.0
      %5868 = vmatpush1.msra.mxu0 0.0
      %5869 = vmatprep.subr.mxu0 0.0
      %5870 = vmatpush1.msra.mxu0 0.0
      %5871 = vmatprep.subr.mxu0 0.0
      %5872 = vmatpush1.msra.mxu0 0.0
      %5873 = vmatprep.subr.mxu0 0.0
      %5874 = vmatpush1.msra.mxu0 0.0
      %5875 = vmatprep.subr.mxu0 0.0
      %5876 = vmatpush1.msra.mxu0 0.0
      %5877 = vmatprep.subr.mxu0 0.0
      %5878 = vmatpush1.msra.mxu0 0.0
      %5879 = vmatprep.subr.mxu0 %v5754
      %5880 = vmatpush1.msra.mxu0 %v5751
      %5881 = vmatprep.subr.mxu0 %v5718
      %5882 = vmatpush1.msra.mxu0 %v5717
      %5883 = vmatprep.subr.mxu0 0.0
      %5884 = vmatpush2.msra.mxu0 0.0
      %5885 = vmatprep.subr.mxu0 0.0
      %5886 = vmatpush2.msra.mxu0 0.0
      %5887 = vmatprep.subr.mxu0 0.0
      %5888 = vmatpush2.msra.mxu0 0.0
      %5889 = vmatprep.subr.mxu0 0.0
      %5890 = vmatpush2.msra.mxu0 0.0
      %5891 = vmatprep.subr.mxu0 0.0
      %5892 = vmatpush2.msra.mxu0 0.0
      %5893 = vmatprep.subr.mxu0 0.0
      %5894 = vmatpush2.msra.mxu0 0.0
      %5895 = vmatprep.subr.mxu0 0.0
      %5896 = vmatpush2.msra.mxu0 0.0
      %5897 = vmatprep.subr.mxu0 0.0
      %5898 = vmatpush2.msra.mxu0 0.0
      %5899 = vmatprep.subr.mxu0 0.0
      %5900 = vmatpush2.msra.mxu0 0.0
      %5901 = vmatprep.subr.mxu0 0.0
      %5902 = vmatpush2.msra.mxu0 0.0
      %5903 = vmatprep.subr.mxu0 0.0
      %5904 = vmatpush2.msra.mxu0 0.0
      %5905 = vmatprep.subr.mxu0 0.0
      %5906 = vmatpush2.msra.mxu0 0.0
      %5907 = vmatprep.subr.mxu0 0.0
      %5908 = vmatpush2.msra.mxu0 0.0
      %5909 = vmatprep.subr.mxu0 0.0
      %5910 = vmatpush2.msra.mxu0 0.0
      %5911 = vmatprep.subr.mxu0 0.0
      %5912 = vmatpush2.msra.mxu0 0.0
      %5913 = vmatprep.subr.mxu0 0.0
      %5914 = vmatpush2.msra.mxu0 0.0
      %5915 = vmatprep.mubr.f32.mxu0 0.0
      %5916 = vmatmul.mubr.f32.gmra.mxu0 %v5736
      %v5917 = vpop.f32.mrf.mxu0
      %v5918 = vadd.f32 0.0, %v5917
      %v5919 = vpop.f32.mrf.mxu0
      %v5920 = vadd.f32 0.0, %v5919
      %5921 = vmatprep.mubr.f32.mxu0 0.0
      %5922 = vmatmul.mubr.f32.gmra.mxu0 %v5739
      %v5923 = vpop.f32.mrf.mxu0
      %v5924 = vadd.f32 0.0, %v5923
      %v5925 = vpop.f32.mrf.mxu0
      %v5926 = vadd.f32 0.0, %v5925
      %5927 = vmatprep.mubr.f32.mxu0 0.0
      %5928 = vmatmul.mubr.f32.gmra.mxu0 %v5742
      %v5929 = vpop.f32.mrf.mxu0
      %v5930 = vadd.f32 0.0, %v5929
      %v5931 = vpop.f32.mrf.mxu0
      %v5932 = vadd.f32 0.0, %v5931
      %5933 = vdwg.mxu0
      %5934 = vmatprep.subr.mxu0 0.0
      %5935 = vmatpush1.msra.mxu0 0.0
      %5936 = vmatprep.subr.mxu0 0.0
      %5937 = vmatpush1.msra.mxu0 0.0
      %5938 = vmatprep.subr.mxu0 0.0
      %5939 = vmatpush1.msra.mxu0 0.0
      %5940 = vmatprep.subr.mxu0 0.0
      %5941 = vmatpush1.msra.mxu0 0.0
      %5942 = vmatprep.subr.mxu0 0.0
      %5943 = vmatpush1.msra.mxu0 0.0
      %5944 = vmatprep.subr.mxu0 0.0
      %5945 = vmatpush1.msra.mxu0 0.0
      %5946 = vmatprep.subr.mxu0 0.0
      %5947 = vmatpush1.msra.mxu0 0.0
      %5948 = vmatprep.subr.mxu0 0.0
      %5949 = vmatpush1.msra.mxu0 0.0
      %5950 = vmatprep.subr.mxu0 0.0
      %5951 = vmatpush1.msra.mxu0 0.0
      %5952 = vmatprep.subr.mxu0 0.0
      %5953 = vmatpush1.msra.mxu0 0.0
      %5954 = vmatprep.subr.mxu0 0.0
      %5955 = vmatpush1.msra.mxu0 0.0
      %5956 = vmatprep.subr.mxu0 0.0
      %5957 = vmatpush1.msra.mxu0 0.0
      %5958 = vmatprep.subr.mxu0 0.0
      %5959 = vmatpush1.msra.mxu0 0.0
      %5960 = vmatprep.subr.mxu0 0.0
      %5961 = vmatpush1.msra.mxu0 0.0
      %5962 = vmatprep.subr.mxu0 %v5760
      %5963 = vmatpush1.msra.mxu0 %v5757
      %5964 = vmatprep.subr.mxu0 %v5720
      %5965 = vmatpush1.msra.mxu0 %v5719
      %5966 = vmatprep.subr.mxu0 0.0
      %5967 = vmatpush2.msra.mxu0 0.0
      %5968 = vmatprep.subr.mxu0 0.0
      %5969 = vmatpush2.msra.mxu0 0.0
      %5970 = vmatprep.subr.mxu0 0.0
      %5971 = vmatpush2.msra.mxu0 0.0
      %5972 = vmatprep.subr.mxu0 0.0
      %5973 = vmatpush2.msra.mxu0 0.0
      %5974 = vmatprep.subr.mxu0 0.0
      %5975 = vmatpush2.msra.mxu0 0.0
      %5976 = vmatprep.subr.mxu0 0.0
      %5977 = vmatpush2.msra.mxu0 0.0
      %5978 = vmatprep.subr.mxu0 0.0
      %5979 = vmatpush2.msra.mxu0 0.0
      %5980 = vmatprep.subr.mxu0 0.0
      %5981 = vmatpush2.msra.mxu0 0.0
      %5982 = vmatprep.subr.mxu0 0.0
      %5983 = vmatpush2.msra.mxu0 0.0
      %5984 = vmatprep.subr.mxu0 0.0
      %5985 = vmatpush2.msra.mxu0 0.0
      %5986 = vmatprep.subr.mxu0 0.0
      %5987 = vmatpush2.msra.mxu0 0.0
      %5988 = vmatprep.subr.mxu0 0.0
      %5989 = vmatpush2.msra.mxu0 0.0
      %5990 = vmatprep.subr.mxu0 0.0
      %5991 = vmatpush2.msra.mxu0 0.0
      %5992 = vmatprep.subr.mxu0 0.0
      %5993 = vmatpush2.msra.mxu0 0.0
      %5994 = vmatprep.subr.mxu0 0.0
      %5995 = vmatpush2.msra.mxu0 0.0
      %5996 = vmatprep.subr.mxu0 0.0
      %5997 = vmatpush2.msra.mxu0 0.0
      %5998 = vmatprep.mubr.f32.mxu0 0.0
      %5999 = vmatmul.mubr.f32.gmra.mxu0 %v5736
      %v6000 = vpop.f32.mrf.mxu0
      %v6001 = vadd.f32 0.0, %v6000
      %v6002 = vpop.f32.mrf.mxu0
      %v6003 = vadd.f32 0.0, %v6002
      %6004 = vmatprep.mubr.f32.mxu0 0.0
      %6005 = vmatmul.mubr.f32.gmra.mxu0 %v5739
      %v6006 = vpop.f32.mrf.mxu0
      %v6007 = vadd.f32 0.0, %v6006
      %v6008 = vpop.f32.mrf.mxu0
      %v6009 = vadd.f32 0.0, %v6008
      %6010 = vmatprep.mubr.f32.mxu0 0.0
      %6011 = vmatmul.mubr.f32.gmra.mxu0 %v5742
      %v6012 = vpop.f32.mrf.mxu0
      %v6013 = vadd.f32 0.0, %v6012
      %v6014 = vpop.f32.mrf.mxu0
      %v6015 = vadd.f32 0.0, %v6014
      %6016 = vdwg.mxu0
      %6017 = vmatprep.subr.mxu0 0.0
      %6018 = vmatpush1.msra.mxu0 0.0
      %6019 = vmatprep.subr.mxu0 0.0
      %6020 = vmatpush1.msra.mxu0 0.0
      %6021 = vmatprep.subr.mxu0 0.0
      %6022 = vmatpush1.msra.mxu0 0.0
      %6023 = vmatprep.subr.mxu0 0.0
      %6024 = vmatpush1.msra.mxu0 0.0
      %6025 = vmatprep.subr.mxu0 0.0
      %6026 = vmatpush1.msra.mxu0 0.0
      %6027 = vmatprep.subr.mxu0 0.0
      %6028 = vmatpush1.msra.mxu0 0.0
      %6029 = vmatprep.subr.mxu0 0.0
      %6030 = vmatpush1.msra.mxu0 0.0
      %6031 = vmatprep.subr.mxu0 0.0
      %6032 = vmatpush1.msra.mxu0 0.0
      %6033 = vmatprep.subr.mxu0 0.0
      %6034 = vmatpush1.msra.mxu0 0.0
      %6035 = vmatprep.subr.mxu0 0.0
      %6036 = vmatpush1.msra.mxu0 0.0
      %6037 = vmatprep.subr.mxu0 0.0
      %6038 = vmatpush1.msra.mxu0 0.0
      %6039 = vmatprep.subr.mxu0 0.0
      %6040 = vmatpush1.msra.mxu0 0.0
      %6041 = vmatprep.subr.mxu0 0.0
      %6042 = vmatpush1.msra.mxu0 0.0
      %6043 = vmatprep.subr.mxu0 0.0
      %6044 = vmatpush1.msra.mxu0 0.0
      %6045 = vmatprep.subr.mxu0 %v5766
      %6046 = vmatpush1.msra.mxu0 %v5763
      %6047 = vmatprep.subr.mxu0 %v5722
      %6048 = vmatpush1.msra.mxu0 %v5721
      %6049 = vmatprep.subr.mxu0 0.0
      %6050 = vmatpush2.msra.mxu0 0.0
      %6051 = vmatprep.subr.mxu0 0.0
      %6052 = vmatpush2.msra.mxu0 0.0
      %6053 = vmatprep.subr.mxu0 0.0
      %6054 = vmatpush2.msra.mxu0 0.0
      %6055 = vmatprep.subr.mxu0 0.0
      %6056 = vmatpush2.msra.mxu0 0.0
      %6057 = vmatprep.subr.mxu0 0.0
      %6058 = vmatpush2.msra.mxu0 0.0
      %6059 = vmatprep.subr.mxu0 0.0
      %6060 = vmatpush2.msra.mxu0 0.0
      %6061 = vmatprep.subr.mxu0 0.0
      %6062 = vmatpush2.msra.mxu0 0.0
      %6063 = vmatprep.subr.mxu0 0.0
      %6064 = vmatpush2.msra.mxu0 0.0
      %6065 = vmatprep.subr.mxu0 0.0
      %6066 = vmatpush2.msra.mxu0 0.0
      %6067 = vmatprep.subr.mxu0 0.0
      %6068 = vmatpush2.msra.mxu0 0.0
      %6069 = vmatprep.subr.mxu0 0.0
      %6070 = vmatpush2.msra.mxu0 0.0
      %6071 = vmatprep.subr.mxu0 0.0
      %6072 = vmatpush2.msra.mxu0 0.0
      %6073 = vmatprep.subr.mxu0 0.0
      %6074 = vmatpush2.msra.mxu0 0.0
      %6075 = vmatprep.subr.mxu0 0.0
      %6076 = vmatpush2.msra.mxu0 0.0
      %6077 = vmatprep.subr.mxu0 0.0
      %6078 = vmatpush2.msra.mxu0 0.0
      %6079 = vmatprep.subr.mxu0 0.0
      %6080 = vmatpush2.msra.mxu0 0.0
      %6081 = vmatprep.mubr.f32.mxu0 0.0
      %6082 = vmatmul.mubr.f32.gmra.mxu0 %v5736
      %v6083 = vpop.f32.mrf.mxu0
      %v6084 = vadd.f32 0.0, %v6083
      %v6085 = vpop.f32.mrf.mxu0
      %v6086 = vadd.f32 0.0, %v6085
      %6087 = vmatprep.mubr.f32.mxu0 0.0
      %6088 = vmatmul.mubr.f32.gmra.mxu0 %v5739
      %v6089 = vpop.f32.mrf.mxu0
      %v6090 = vadd.f32 0.0, %v6089
      %v6091 = vpop.f32.mrf.mxu0
      %v6092 = vadd.f32 0.0, %v6091
      %6093 = vmatprep.mubr.f32.mxu0 0.0
      %6094 = vmatmul.mubr.f32.gmra.mxu0 %v5742
      %v6095 = vpop.f32.mrf.mxu0
      %v6096 = vadd.f32 0.0, %v6095
      %v6097 = vpop.f32.mrf.mxu0
      %v6098 = vadd.f32 0.0, %v6097
      %6099 = vdwg.mxu0
      %v6100 = vadd.f32 %v5622, %v5835
      %v6101 = vadd.f32 %v5623, %v5837
      %v6102 = vadd.f32 %v5624, %v5918
      %v6103 = vadd.f32 %v5625, %v5920
      %v6104 = vadd.f32 %v5626, %v6001
      %v6105 = vadd.f32 %v5627, %v6003
      %v6106 = vadd.f32 %v5628, %v6084
      %v6107 = vadd.f32 %v5629, %v6086
      %v6108 = vadd.f32 %v5630, %v5841
      %v6109 = vadd.f32 %v5631, %v5843
      %v6110 = vadd.f32 %v5632, %v5924
      %v6111 = vadd.f32 %v5633, %v5926
      %v6112 = vadd.f32 %v5634, %v6007
      %v6113 = vadd.f32 %v5635, %v6009
      %v6114 = vadd.f32 %v5636, %v6090
      %v6115 = vadd.f32 %v5637, %v6092
      %v6116 = vadd.f32 %v5638, %v5847
      %v6117 = vadd.f32 %v5639, %v5849
      %v6118 = vadd.f32 %v5640, %v5930
      %v6119 = vadd.f32 %v5641, %v5932
      %v6120 = vadd.f32 %v5642, %v6013
      %v6121 = vadd.f32 %v5643, %v6015
      %v6122 = vadd.f32 %v5644, %v6096
      %v6123 = vadd.f32 %v5645, %v6098
      %v6124 = vld [vmem:[%s3] sm:$0xff]
      %v6125 = vld [vmem:[%s3 + $0x8] sm:$0xff]
      %v6126 = vld [vmem:[%s3 + $0x10] sm:$0xff]
      %6128 = vset.pattern.permute.xlu0 0
      %6129 = vperm.xlu0 %6128, %v6124
      %v6130 = vpop.permute.xlu0 %6129
      %6133 = vset.pattern.permute.xlu0 0
      %6134 = vperm.xlu0 %6133, %v6125
      %v6135 = vpop.permute.xlu0 %6134
      %6138 = vset.pattern.permute.xlu0 0
      %6139 = vperm.xlu0 %6138, %v6126
      %v6140 = vpop.permute.xlu0 %6139
      %v6142 = vadd.f32 %v6100, %v6130
      %v6143 = vadd.f32 %v6101, %v6130
      %v6144 = vadd.f32 %v6102, %v6130
      %v6145 = vadd.f32 %v6103, %v6130
      %v6146 = vadd.f32 %v6104, %v6130
      %v6147 = vadd.f32 %v6105, %v6130
      %v6148 = vadd.f32 %v6106, %v6130
      %v6149 = vadd.f32 %v6107, %v6130
      %v6150 = vadd.f32 %v6108, %v6135
      %v6151 = vadd.f32 %v6109, %v6135
      %v6152 = vadd.f32 %v6110, %v6135
      %v6153 = vadd.f32 %v6111, %v6135
      %v6154 = vadd.f32 %v6112, %v6135
      %v6155 = vadd.f32 %v6113, %v6135
      %v6156 = vadd.f32 %v6114, %v6135
      %v6157 = vadd.f32 %v6115, %v6135
      %v6158 = vadd.f32 %v6116, %v6140
      %v6159 = vadd.f32 %v6117, %v6140
      %v6160 = vadd.f32 %v6118, %v6140
      %v6161 = vadd.f32 %v6119, %v6140
      %v6162 = vadd.f32 %v6120, %v6140
      %v6163 = vadd.f32 %v6121, %v6140
      %v6164 = vadd.f32 %v6122, %v6140
      %v6165 = vadd.f32 %v6123, %v6140
      %v6166 = vmax.f32 %v6142, 0.0
      %v6167 = vmax.f32 %v6143, 0.0
      %v6168 = vmax.f32 %v6144, 0.0
      %v6169 = vmax.f32 %v6145, 0.0
      %v6170 = vmax.f32 %v6146, 0.0
      %v6171 = vmax.f32 %v6147, 0.0
      %v6172 = vmax.f32 %v6148, 0.0
      %v6173 = vmax.f32 %v6149, 0.0
      %v6174 = vmax.f32 %v6150, 0.0
      %v6175 = vmax.f32 %v6151, 0.0
      %v6176 = vmax.f32 %v6152, 0.0
      %v6177 = vmax.f32 %v6153, 0.0
      %v6178 = vmax.f32 %v6154, 0.0
      %v6179 = vmax.f32 %v6155, 0.0
      %v6180 = vmax.f32 %v6156, 0.0
      %v6181 = vmax.f32 %v6157, 0.0
      %v6182 = vmax.f32 %v6158, 0.0
      %v6183 = vmax.f32 %v6159, 0.0
      %v6184 = vmax.f32 %v6160, 0.0
      %v6185 = vmax.f32 %v6161, 0.0
      %v6186 = vmax.f32 %v6162, 0.0
      %v6187 = vmax.f32 %v6163, 0.0
      %v6188 = vmax.f32 %v6164, 0.0
      %v6189 = vmax.f32 %v6165, 0.0
      %v6190 = vld [vmem:[%s4] sm:$0xff]
      %v6191 = vld [vmem:[%s4 + $0x8] sm:$0xff]
      %v6192 = vld [vmem:[%s4 + $0x10] sm:$0xff]
      %v6193 = vld [vmem:[%s4 + $0x18] sm:$0xff]
      %v6194 = vld [vmem:[%s4 + $0x20] sm:$0xff]
      %v6195 = vld [vmem:[%s4 + $0x28] sm:$0xff]
      %v6196 = vld [vmem:[%s4 + $0x30] sm:$0xff]
      %v6197 = vld [vmem:[%s4 + $0x38] sm:$0xff]
      %v6198 = vld [vmem:[%s4 + $0x40] sm:$0xff]
      %v6199 = vld [vmem:[%s4 + $0x48] sm:$0xff]
      %v6200 = vld [vmem:[%s4 + $0x50] sm:$0xff]
      %v6201 = vld [vmem:[%s4 + $0x58] sm:$0xff]
      %v6202 = vld [vmem:[%s4 + $0x60] sm:$0xff]
      %v6203 = vld [vmem:[%s4 + $0x68] sm:$0xff]
      %v6204 = vld [vmem:[%s4 + $0x70] sm:$0xff]
      %v6205 = vld [vmem:[%s4 + $0x78] sm:$0xff]
      %v6206 = vld [vmem:[%s4 + $0x80] sm:$0xff]
      %v6207 = vld [vmem:[%s4 + $0x88] sm:$0xff]
      %v6208 = vld [vmem:[%s4 + $0x90] sm:$0xff]
      %v6209 = vld [vmem:[%s4 + $0x98] sm:$0xff]
      %v6210 = vld [vmem:[%s4 + $0xa0] sm:$0xff]
      %v6211 = vld [vmem:[%s4 + $0xa8] sm:$0xff]
      %v6212 = vld [vmem:[%s4 + $0xb0] sm:$0xff]
      %v6213 = vld [vmem:[%s4 + $0xb8] sm:$0xff]
      %v6214 = vld [vmem:[%s4 + $0xc0] sm:$0xff]
      %v6215 = vld [vmem:[%s4 + $0xc8] sm:$0xff]
      %v6216 = vld [vmem:[%s4 + $0xd0] sm:$0xff]
      %v6217 = vld [vmem:[%s4 + $0xd8] sm:$0xff]
      %v6218 = vld [vmem:[%s4 + $0xe0] sm:$0xff]
      %v6219 = vld [vmem:[%s4 + $0xe8] sm:$0xff]
      %v6220 = vld [vmem:[%s4 + $0xf0] sm:$0xff]
      %v6221 = vld [vmem:[%s4 + $0xf8] sm:$0xff]
      %v6222 = vld [vmem:[%s4 + $0x100] sm:$0xff]
      %v6223 = vld [vmem:[%s4 + $0x108] sm:$0xff]
      %v6224 = vld [vmem:[%s4 + $0x110] sm:$0xff]
      %v6225 = vld [vmem:[%s4 + $0x118] sm:$0xff]
      %v6226 = vld [vmem:[%s4 + $0x120] sm:$0xff]
      %v6227 = vld [vmem:[%s4 + $0x128] sm:$0xff]
      %v6228 = vld [vmem:[%s4 + $0x130] sm:$0xff]
      %v6229 = vld [vmem:[%s4 + $0x138] sm:$0xff]
      %v6230 = vld [vmem:[%s4 + $0x140] sm:$0xff]
      %v6231 = vld [vmem:[%s4 + $0x148] sm:$0xff]
      %v6232 = vld [vmem:[%s4 + $0x150] sm:$0xff]
      %v6233 = vld [vmem:[%s4 + $0x158] sm:$0xff]
      %v6234 = vld [vmem:[%s4 + $0x160] sm:$0xff]
      %v6235 = vld [vmem:[%s4 + $0x168] sm:$0xff]
      %v6236 = vld [vmem:[%s4 + $0x170] sm:$0xff]
      %v6237 = vld [vmem:[%s4 + $0x178] sm:$0xff]
      %v6238 = vld [vmem:[%s4 + $0x180] sm:$0xff]
      %v6239 = vld [vmem:[%s4 + $0x188] sm:$0xff]
      %v6240 = vld [vmem:[%s4 + $0x190] sm:$0xff]
      %v6241 = vld [vmem:[%s4 + $0x198] sm:$0xff]
      %v6242 = vld [vmem:[%s4 + $0x1a0] sm:$0xff]
      %v6243 = vld [vmem:[%s4 + $0x1a8] sm:$0xff]
      %v6244 = vld [vmem:[%s4 + $0x1b0] sm:$0xff]
      %v6245 = vld [vmem:[%s4 + $0x1b8] sm:$0xff]
      %v6246 = vld [vmem:[%s4 + $0x1c0] sm:$0xff]
      %v6247 = vld [vmem:[%s4 + $0x1c8] sm:$0xff]
      %v6248 = vld [vmem:[%s4 + $0x1d0] sm:$0xff]
      %v6249 = vld [vmem:[%s4 + $0x1d8] sm:$0xff]
      %v6250 = vld [vmem:[%s4 + $0x1e0] sm:$0xff]
      %v6251 = vld [vmem:[%s4 + $0x1e8] sm:$0xff]
      %v6252 = vld [vmem:[%s4 + $0x1f0] sm:$0xff]
      %v6253 = vld [vmem:[%s4 + $0x1f8] sm:$0xff]
      %v6254 = vld [vmem:[%s4 + $0x200] sm:$0xff]
      %v6255 = vld [vmem:[%s4 + $0x208] sm:$0xff]
      %v6256 = vld [vmem:[%s4 + $0x210] sm:$0xff]
      %v6257 = vld [vmem:[%s4 + $0x218] sm:$0xff]
      %v6258 = vld [vmem:[%s4 + $0x220] sm:$0xff]
      %v6259 = vld [vmem:[%s4 + $0x228] sm:$0xff]
      %v6260 = vld [vmem:[%s4 + $0x230] sm:$0xff]
      %v6261 = vld [vmem:[%s4 + $0x238] sm:$0xff]
      %v6262 = vld [vmem:[%s4 + $0x240] sm:$0xff]
      %v6263 = vld [vmem:[%s4 + $0x248] sm:$0xff]
      %v6264 = vld [vmem:[%s4 + $0x250] sm:$0xff]
      %v6265 = vld [vmem:[%s4 + $0x258] sm:$0xff]
      %v6266 = vld [vmem:[%s4 + $0x260] sm:$0xff]
      %v6267 = vld [vmem:[%s4 + $0x268] sm:$0xff]
      %v6268 = vld [vmem:[%s4 + $0x270] sm:$0xff]
      %v6269 = vld [vmem:[%s4 + $0x278] sm:$0xff]
      %v6270 = vld [vmem:[%s4 + $0x280] sm:$0xff]
      %v6271 = vld [vmem:[%s4 + $0x288] sm:$0xff]
      %v6272 = vld [vmem:[%s4 + $0x290] sm:$0xff]
      %v6273 = vld [vmem:[%s4 + $0x298] sm:$0xff]
      %v6274 = vld [vmem:[%s4 + $0x2a0] sm:$0xff]
      %v6275 = vld [vmem:[%s4 + $0x2a8] sm:$0xff]
      %v6276 = vld [vmem:[%s4 + $0x2b0] sm:$0xff]
      %v6277 = vld [vmem:[%s4 + $0x2b8] sm:$0xff]
      %v6278 = vld [vmem:[%s4 + $0x2c0] sm:$0xff]
      %v6279 = vld [vmem:[%s4 + $0x2c8] sm:$0xff]
      %v6280 = vld [vmem:[%s4 + $0x2d0] sm:$0xff]
      %v6281 = vld [vmem:[%s4 + $0x2d8] sm:$0xff]
      %v6282 = vld [vmem:[%s4 + $0x2e0] sm:$0xff]
      %v6283 = vld [vmem:[%s4 + $0x2e8] sm:$0xff]
      %v6284 = vld [vmem:[%s4 + $0x2f0] sm:$0xff]
      %v6285 = vld [vmem:[%s4 + $0x2f8] sm:$0xff]
      %v6286 = vld [vmem:[%s4 + $0x300] sm:$0xff]
      %v6287 = vld [vmem:[%s4 + $0x308] sm:$0xff]
      %v6288 = vld [vmem:[%s4 + $0x310] sm:$0xff]
      %v6289 = vld [vmem:[%s4 + $0x318] sm:$0xff]
      %v6290 = vld [vmem:[%s4 + $0x320] sm:$0xff]
      %v6291 = vld [vmem:[%s4 + $0x328] sm:$0xff]
      %v6292 = vld [vmem:[%s4 + $0x330] sm:$0xff]
      %v6293 = vld [vmem:[%s4 + $0x338] sm:$0xff]
      %v6294 = vld [vmem:[%s4 + $0x340] sm:$0xff]
      %v6295 = vld [vmem:[%s4 + $0x348] sm:$0xff]
      %v6296 = vld [vmem:[%s4 + $0x350] sm:$0xff]
      %v6297 = vld [vmem:[%s4 + $0x358] sm:$0xff]
      %v6298 = vld [vmem:[%s4 + $0x360] sm:$0xff]
      %v6299 = vld [vmem:[%s4 + $0x368] sm:$0xff]
      %v6300 = vld [vmem:[%s4 + $0x370] sm:$0xff]
      %v6301 = vld [vmem:[%s4 + $0x378] sm:$0xff]
      %v6302 = vld [vmem:[%s4 + $0x380] sm:$0xff]
      %v6303 = vld [vmem:[%s4 + $0x388] sm:$0xff]
      %v6304 = vld [vmem:[%s4 + $0x390] sm:$0xff]
      %v6305 = vld [vmem:[%s4 + $0x398] sm:$0xff]
      %v6306 = vld [vmem:[%s4 + $0x3a0] sm:$0xff]
      %v6307 = vld [vmem:[%s4 + $0x3a8] sm:$0xff]
      %v6308 = vld [vmem:[%s4 + $0x3b0] sm:$0xff]
      %v6309 = vld [vmem:[%s4 + $0x3b8] sm:$0xff]
      %v6310 = vmul.f32 %v6190, %v6166
      %v6311 = vmul.f32 %v6191, %v6167
      %v6312 = vmul.f32 %v6192, %v6168
      %v6313 = vmul.f32 %v6193, %v6169
      %v6314 = vmul.f32 %v6194, %v6170
      %v6315 = vmul.f32 %v6195, %v6171
      %v6316 = vmul.f32 %v6196, %v6172
      %v6317 = vmul.f32 %v6197, %v6173
      %v6318 = vmul.f32 %v6198, %v6174
      %v6319 = vmul.f32 %v6199, %v6175
      %v6320 = vmul.f32 %v6200, %v6176
      %v6321 = vmul.f32 %v6201, %v6177
      %v6322 = vmul.f32 %v6202, %v6178
      %v6323 = vmul.f32 %v6203, %v6179
      %v6324 = vmul.f32 %v6204, %v6180
      %v6325 = vmul.f32 %v6205, %v6181
      %v6326 = vmul.f32 %v6206, %v6182
      %v6327 = vmul.f32 %v6207, %v6183
      %v6328 = vmul.f32 %v6208, %v6184
      %v6329 = vmul.f32 %v6209, %v6185
      %v6330 = vmul.f32 %v6210, %v6186
      %v6331 = vmul.f32 %v6211, %v6187
      %v6332 = vmul.f32 %v6212, %v6188
      %v6333 = vmul.f32 %v6213, %v6189
      %v6334 = vmul.f32 %v6214, %v6166
      %v6335 = vmul.f32 %v6215, %v6167
      %v6336 = vmul.f32 %v6216, %v6168
      %v6337 = vmul.f32 %v6217, %v6169
      %v6338 = vmul.f32 %v6218, %v6170
      %v6339 = vmul.f32 %v6219, %v6171
      %v6340 = vmul.f32 %v6220, %v6172
      %v6341 = vmul.f32 %v6221, %v6173
      %v6342 = vmul.f32 %v6222, %v6174
      %v6343 = vmul.f32 %v6223, %v6175
      %v6344 = vmul.f32 %v6224, %v6176
      %v6345 = vmul.f32 %v6225, %v6177
      %v6346 = vmul.f32 %v6226, %v6178
      %v6347 = vmul.f32 %v6227, %v6179
      %v6348 = vmul.f32 %v6228, %v6180
      %v6349 = vmul.f32 %v6229, %v6181
      %v6350 = vmul.f32 %v6230, %v6182
      %v6351 = vmul.f32 %v6231, %v6183
      %v6352 = vmul.f32 %v6232, %v6184
      %v6353 = vmul.f32 %v6233, %v6185
      %v6354 = vmul.f32 %v6234, %v6186
      %v6355 = vmul.f32 %v6235, %v6187
      %v6356 = vmul.f32 %v6236, %v6188
      %v6357 = vmul.f32 %v6237, %v6189
      %v6358 = vmul.f32 %v6238, %v6166
      %v6359 = vmul.f32 %v6239, %v6167
      %v6360 = vmul.f32 %v6240, %v6168
      %v6361 = vmul.f32 %v6241, %v6169
      %v6362 = vmul.f32 %v6242, %v6170
      %v6363 = vmul.f32 %v6243, %v6171
      %v6364 = vmul.f32 %v6244, %v6172
      %v6365 = vmul.f32 %v6245, %v6173
      %v6366 = vmul.f32 %v6246, %v6174
      %v6367 = vmul.f32 %v6247, %v6175
      %v6368 = vmul.f32 %v6248, %v6176
      %v6369 = vmul.f32 %v6249, %v6177
      %v6370 = vmul.f32 %v6250, %v6178
      %v6371 = vmul.f32 %v6251, %v6179
      %v6372 = vmul.f32 %v6252, %v6180
      %v6373 = vmul.f32 %v6253, %v6181
      %v6374 = vmul.f32 %v6254, %v6182
      %v6375 = vmul.f32 %v6255, %v6183
      %v6376 = vmul.f32 %v6256, %v6184
      %v6377 = vmul.f32 %v6257, %v6185
      %v6378 = vmul.f32 %v6258, %v6186
      %v6379 = vmul.f32 %v6259, %v6187
      %v6380 = vmul.f32 %v6260, %v6188
      %v6381 = vmul.f32 %v6261, %v6189
      %v6382 = vmul.f32 %v6262, %v6166
      %v6383 = vmul.f32 %v6263, %v6167
      %v6384 = vmul.f32 %v6264, %v6168
      %v6385 = vmul.f32 %v6265, %v6169
      %v6386 = vmul.f32 %v6266, %v6170
      %v6387 = vmul.f32 %v6267, %v6171
      %v6388 = vmul.f32 %v6268, %v6172
      %v6389 = vmul.f32 %v6269, %v6173
      %v6390 = vmul.f32 %v6270, %v6174
      %v6391 = vmul.f32 %v6271, %v6175
      %v6392 = vmul.f32 %v6272, %v6176
      %v6393 = vmul.f32 %v6273, %v6177
      %v6394 = vmul.f32 %v6274, %v6178
      %v6395 = vmul.f32 %v6275, %v6179
      %v6396 = vmul.f32 %v6276, %v6180
      %v6397 = vmul.f32 %v6277, %v6181
      %v6398 = vmul.f32 %v6278, %v6182
      %v6399 = vmul.f32 %v6279, %v6183
      %v6400 = vmul.f32 %v6280, %v6184
      %v6401 = vmul.f32 %v6281, %v6185
      %v6402 = vmul.f32 %v6282, %v6186
      %v6403 = vmul.f32 %v6283, %v6187
      %v6404 = vmul.f32 %v6284, %v6188
      %v6405 = vmul.f32 %v6285, %v6189
      %v6406 = vmul.f32 %v6286, %v6166
      %v6407 = vmul.f32 %v6287, %v6167
      %v6408 = vmul.f32 %v6288, %v6168
      %v6409 = vmul.f32 %v6289, %v6169
      %v6410 = vmul.f32 %v6290, %v6170
      %v6411 = vmul.f32 %v6291, %v6171
      %v6412 = vmul.f32 %v6292, %v6172
      %v6413 = vmul.f32 %v6293, %v6173
      %v6414 = vmul.f32 %v6294, %v6174
      %v6415 = vmul.f32 %v6295, %v6175
      %v6416 = vmul.f32 %v6296, %v6176
      %v6417 = vmul.f32 %v6297, %v6177
      %v6418 = vmul.f32 %v6298, %v6178
      %v6419 = vmul.f32 %v6299, %v6179
      %v6420 = vmul.f32 %v6300, %v6180
      %v6421 = vmul.f32 %v6301, %v6181
      %v6422 = vmul.f32 %v6302, %v6182
      %v6423 = vmul.f32 %v6303, %v6183
      %v6424 = vmul.f32 %v6304, %v6184
      %v6425 = vmul.f32 %v6305, %v6185
      %v6426 = vmul.f32 %v6306, %v6186
      %v6427 = vmul.f32 %v6307, %v6187
      %v6428 = vmul.f32 %v6308, %v6188
      %v6429 = vmul.f32 %v6309, %v6189
      %v6430 = vadd.f32 %v6310, %v6311
      %v6431 = vadd.f32 %v6430, %v6312
      %v6432 = vadd.f32 %v6431, %v6313
      %v6433 = vadd.f32 %v6432, %v6314
      %v6434 = vadd.f32 %v6433, %v6315
      %v6435 = vadd.f32 %v6434, %v6316
      %v6436 = vadd.f32 %v6435, %v6317
      %6437 = vadd.xlane.f32.xlu0 %v6436
      %v6438 = vpop.xlane.xlu0 %6437
      %v6439 = vadd.f32 %v6318, %v6319
      %v6440 = vadd.f32 %v6439, %v6320
      %v6441 = vadd.f32 %v6440, %v6321
      %v6442 = vadd.f32 %v6441, %v6322
      %v6443 = vadd.f32 %v6442, %v6323
      %v6444 = vadd.f32 %v6443, %v6324
      %v6445 = vadd.f32 %v6444, %v6325
      %6446 = vadd.xlane.f32.xlu0 %v6445
      %v6447 = vpop.xlane.xlu0 %6446
      %v6448 = vadd.f32 %v6326, %v6327
      %v6449 = vadd.f32 %v6448, %v6328
      %v6450 = vadd.f32 %v6449, %v6329
      %v6451 = vadd.f32 %v6450, %v6330
      %v6452 = vadd.f32 %v6451, %v6331
      %v6453 = vadd.f32 %v6452, %v6332
      %v6454 = vadd.f32 %v6453, %v6333
      %6455 = vadd.xlane.f32.xlu0 %v6454
      %v6456 = vpop.xlane.xlu0 %6455
      %v6457 = vadd.f32 %v6334, %v6335
      %v6458 = vadd.f32 %v6457, %v6336
      %v6459 = vadd.f32 %v6458, %v6337
      %v6460 = vadd.f32 %v6459, %v6338
      %v6461 = vadd.f32 %v6460, %v6339
      %v6462 = vadd.f32 %v6461, %v6340
      %v6463 = vadd.f32 %v6462, %v6341
      %6464 = vadd.xlane.f32.xlu0 %v6463
      %v6465 = vpop.xlane.xlu0 %6464
      %v6466 = vadd.f32 %v6342, %v6343
      %v6467 = vadd.f32 %v6466, %v6344
      %v6468 = vadd.f32 %v6467, %v6345
      %v6469 = vadd.f32 %v6468, %v6346
      %v6470 = vadd.f32 %v6469, %v6347
      %v6471 = vadd.f32 %v6470, %v6348
      %v6472 = vadd.f32 %v6471, %v6349
      %6473 = vadd.xlane.f32.xlu0 %v6472
      %v6474 = vpop.xlane.xlu0 %6473
      %v6475 = vadd.f32 %v6350, %v6351
      %v6476 = vadd.f32 %v6475, %v6352
      %v6477 = vadd.f32 %v6476, %v6353
      %v6478 = vadd.f32 %v6477, %v6354
      %v6479 = vadd.f32 %v6478, %v6355
      %v6480 = vadd.f32 %v6479, %v6356
      %v6481 = vadd.f32 %v6480, %v6357
      %6482 = vadd.xlane.f32.xlu0 %v6481
      %v6483 = vpop.xlane.xlu0 %6482
      %v6484 = vadd.f32 %v6358, %v6359
      %v6485 = vadd.f32 %v6484, %v6360
      %v6486 = vadd.f32 %v6485, %v6361
      %v6487 = vadd.f32 %v6486, %v6362
      %v6488 = vadd.f32 %v6487, %v6363
      %v6489 = vadd.f32 %v6488, %v6364
      %v6490 = vadd.f32 %v6489, %v6365
      %6491 = vadd.xlane.f32.xlu0 %v6490
      %v6492 = vpop.xlane.xlu0 %6491
      %v6493 = vadd.f32 %v6366, %v6367
      %v6494 = vadd.f32 %v6493, %v6368
      %v6495 = vadd.f32 %v6494, %v6369
      %v6496 = vadd.f32 %v6495, %v6370
      %v6497 = vadd.f32 %v6496, %v6371
      %v6498 = vadd.f32 %v6497, %v6372
      %v6499 = vadd.f32 %v6498, %v6373
      %6500 = vadd.xlane.f32.xlu0 %v6499
      %v6501 = vpop.xlane.xlu0 %6500
      %v6502 = vadd.f32 %v6374, %v6375
      %v6503 = vadd.f32 %v6502, %v6376
      %v6504 = vadd.f32 %v6503, %v6377
      %v6505 = vadd.f32 %v6504, %v6378
      %v6506 = vadd.f32 %v6505, %v6379
      %v6507 = vadd.f32 %v6506, %v6380
      %v6508 = vadd.f32 %v6507, %v6381
      %6509 = vadd.xlane.f32.xlu0 %v6508
      %v6510 = vpop.xlane.xlu0 %6509
      %v6511 = vadd.f32 %v6382, %v6383
      %v6512 = vadd.f32 %v6511, %v6384
      %v6513 = vadd.f32 %v6512, %v6385
      %v6514 = vadd.f32 %v6513, %v6386
      %v6515 = vadd.f32 %v6514, %v6387
      %v6516 = vadd.f32 %v6515, %v6388
      %v6517 = vadd.f32 %v6516, %v6389
      %6518 = vadd.xlane.f32.xlu0 %v6517
      %v6519 = vpop.xlane.xlu0 %6518
      %v6520 = vadd.f32 %v6390, %v6391
      %v6521 = vadd.f32 %v6520, %v6392
      %v6522 = vadd.f32 %v6521, %v6393
      %v6523 = vadd.f32 %v6522, %v6394
      %v6524 = vadd.f32 %v6523, %v6395
      %v6525 = vadd.f32 %v6524, %v6396
      %v6526 = vadd.f32 %v6525, %v6397
      %6527 = vadd.xlane.f32.xlu0 %v6526
      %v6528 = vpop.xlane.xlu0 %6527
      %v6529 = vadd.f32 %v6398, %v6399
      %v6530 = vadd.f32 %v6529, %v6400
      %v6531 = vadd.f32 %v6530, %v6401
      %v6532 = vadd.f32 %v6531, %v6402
      %v6533 = vadd.f32 %v6532, %v6403
      %v6534 = vadd.f32 %v6533, %v6404
      %v6535 = vadd.f32 %v6534, %v6405
      %6536 = vadd.xlane.f32.xlu0 %v6535
      %v6537 = vpop.xlane.xlu0 %6536
      %v6538 = vadd.f32 %v6406, %v6407
      %v6539 = vadd.f32 %v6538, %v6408
      %v6540 = vadd.f32 %v6539, %v6409
      %v6541 = vadd.f32 %v6540, %v6410
      %v6542 = vadd.f32 %v6541, %v6411
      %v6543 = vadd.f32 %v6542, %v6412
      %v6544 = vadd.f32 %v6543, %v6413
      %6545 = vadd.xlane.f32.xlu0 %v6544
      %v6546 = vpop.xlane.xlu0 %6545
      %v6547 = vadd.f32 %v6414, %v6415
      %v6548 = vadd.f32 %v6547, %v6416
      %v6549 = vadd.f32 %v6548, %v6417
      %v6550 = vadd.f32 %v6549, %v6418
      %v6551 = vadd.f32 %v6550, %v6419
      %v6552 = vadd.f32 %v6551, %v6420
      %v6553 = vadd.f32 %v6552, %v6421
      %6554 = vadd.xlane.f32.xlu0 %v6553
      %v6555 = vpop.xlane.xlu0 %6554
      %v6556 = vadd.f32 %v6422, %v6423
      %v6557 = vadd.f32 %v6556, %v6424
      %v6558 = vadd.f32 %v6557, %v6425
      %v6559 = vadd.f32 %v6558, %v6426
      %v6560 = vadd.f32 %v6559, %v6427
      %v6561 = vadd.f32 %v6560, %v6428
      %v6562 = vadd.f32 %v6561, %v6429
      %6563 = vadd.xlane.f32.xlu0 %v6562
      %v6564 = vpop.xlane.xlu0 %6563
      %v6580 = vlaneseq
      %v6581 = vshrl.u32 %v6580, 7
      %v6582 = vsub.s32 %v1935, %v6581
      %v6583 = vrot.slane %v6438, %v6582
      %v6584 = vadd.s32 %v1935, 4294967288
      %v6585 = vlaneseq
      %v6586 = vshrl.u32 %v6585, 7
      %v6587 = vsub.s32 %v6584, %v6586
      %v6588 = vrot.slane %v6447, %v6587
      %vm6589 = vcmask 130112
      %v6590 = vsel %vm6589, %v6588, %v6583
      %v6591 = vadd.s32 %v1935, 4294967280
      %v6592 = vlaneseq
      %v6593 = vshrl.u32 %v6592, 7
      %v6594 = vsub.s32 %v6591, %v6593
      %v6595 = vrot.slane %v6456, %v6594
      %vm6596 = vcmask 195712
      %v6597 = vsel %vm6596, %v6595, %v6590
      %v6598 = vlaneseq
      %v6599 = vshrl.u32 %v6598, 7
      %v6600 = vsub.s32 %v1935, %v6599
      %v6601 = vrot.slane %v6465, %v6600
      %v6602 = vlaneseq
      %v6603 = vshrl.u32 %v6602, 7
      %v6604 = vsub.s32 %v6584, %v6603
      %v6605 = vrot.slane %v6474, %v6604
      %v6606 = vsel %vm6589, %v6605, %v6601
      %v6607 = vlaneseq
      %v6608 = vshrl.u32 %v6607, 7
      %v6609 = vsub.s32 %v6591, %v6608
      %v6610 = vrot.slane %v6483, %v6609
      %v6611 = vsel %vm6596, %v6610, %v6606
      %v6612 = vlaneseq
      %v6613 = vshrl.u32 %v6612, 7
      %v6614 = vsub.s32 %v1935, %v6613
      %v6615 = vrot.slane %v6492, %v6614
      %v6616 = vlaneseq
      %v6617 = vshrl.u32 %v6616, 7
      %v6618 = vsub.s32 %v6584, %v6617
      %v6619 = vrot.slane %v6501, %v6618
      %v6620 = vsel %vm6589, %v6619, %v6615
      %v6621 = vlaneseq
      %v6622 = vshrl.u32 %v6621, 7
      %v6623 = vsub.s32 %v6591, %v6622
      %v6624 = vrot.slane %v6510, %v6623
      %v6625 = vsel %vm6596, %v6624, %v6620
      %v6626 = vlaneseq
      %v6627 = vshrl.u32 %v6626, 7
      %v6628 = vsub.s32 %v1935, %v6627
      %v6629 = vrot.slane %v6519, %v6628
      %v6630 = vlaneseq
      %v6631 = vshrl.u32 %v6630, 7
      %v6632 = vsub.s32 %v6584, %v6631
      %v6633 = vrot.slane %v6528, %v6632
      %v6634 = vsel %vm6589, %v6633, %v6629
      %v6635 = vlaneseq
      %v6636 = vshrl.u32 %v6635, 7
      %v6637 = vsub.s32 %v6591, %v6636
      %v6638 = vrot.slane %v6537, %v6637
      %v6639 = vsel %vm6596, %v6638, %v6634
      %v6640 = vlaneseq
      %v6641 = vshrl.u32 %v6640, 7
      %v6642 = vsub.s32 %v1935, %v6641
      %v6643 = vrot.slane %v6546, %v6642
      %v6644 = vlaneseq
      %v6645 = vshrl.u32 %v6644, 7
      %v6646 = vsub.s32 %v6584, %v6645
      %v6647 = vrot.slane %v6555, %v6646
      %v6648 = vsel %vm6589, %v6647, %v6643
      %v6649 = vlaneseq
      %v6650 = vshrl.u32 %v6649, 7
      %v6651 = vsub.s32 %v6591, %v6650
      %v6652 = vrot.slane %v6564, %v6651
      %v6653 = vsel %vm6596, %v6652, %v6648
      %vm6654 = vcmask 1041409
      %v6655 = vsel %vm6654, %v6611, %v6597
      %vm6656 = vcmask 1042434
      %v6657 = vsel %vm6656, %v6625, %v6655
      %vm6658 = vcmask 1043459
      %v6659 = vsel %vm6658, %v6639, %v6657
      %vm6660 = vcmask 1044484
      %v6661 = vsel %vm6660, %v6653, %v6659
      %vm6663 = vcmask 192512
      %v6664 = vsel %vm6663, %v6661, 0.0
      %6665 = vadd.xlane.f32.xlu0 %v6664
      %v6666 = vpop.xlane.xlu0 %6665
      %v6667 = vld [vmem:[%s5] sm:$0x1f]
      %v6668 = vadd.f32 %v6666, %v6667
      %vm6669 = vcmask 4096
      %6670 = vst.msk [vmem:[%s249] sm:$0x1f] %vm6669, %v6668
      %p6671 = scmp.lt.s32.totalorder %s17, 1
      %s6672 = scalar_select %p6671, %s17, 1
      %s6673 = smul.addr %s6672, 8
      %s6674 = scalar_lea.vmem %s6, %s6673
      // Predicated region
      $region45: #{tpu_custom_call.1} parent=43 // pred_check
        %p6675 = pneg %p166
      $region46: #{tpu_custom_call.1} parent=43 // pred_check_branch
        %6677 = sbr.rel (%p6675) target = $region48
      $region47: #{tpu_custom_call.1} parent=43 // pred_region
        _
      $region48: #{tpu_custom_call.1} parent=43 // pred_fallthru
        _
    $region44: #{tpu_custom_call.1} parent=5 // pred_fallthru
      _
    %p6678 = scmp.le.s32.totalorder 2, %s12
    // Predicated region
    $region49: #{tpu_custom_call.1} parent=5 // pred_check
      %p6679 = pneg %p6678
    $region50: #{tpu_custom_call.1} parent=5 // pred_check_branch
      %6681 = sbr.rel (%p6679) target = $region52
    $region51: #{tpu_custom_call.1} parent=5 // pred_region
      %s6682 = ssub.s32 %s12, 2
      // Predicated region
      $region53: #{tpu_custom_call.1} parent=51 // pred_check
        %p6683 = pneg %p172
      $region54: #{tpu_custom_call.1} parent=51 // pred_check_branch
        %6685 = sbr.rel (%p6683) target = $region56
      $region55: #{tpu_custom_call.1} parent=51 // pred_region
        %p6686 = scmp.lt.s32.totalorder %s18, 1
        %s6687 = scalar_select %p6686, %s18, 1
        %s6688 = smul.addr %s6687, 8
        %s6689 = scalar_lea.vmem %s6, %s6688
      $region56: #{tpu_custom_call.1} parent=51 // pred_fallthru
        _
    $region52: #{tpu_custom_call.1} parent=5 // pred_fallthru
      _
  $region6: #{tpu_custom_call.1} parent=0 // loop_footer
    %s16 = sadd.s32 1, %s12
  $region7: #{tpu_custom_call.1} parent=0 // loop_footer_branch
    %11 = sbr.rel target = $region3
  $region8: #{tpu_custom_call.1} parent=0 // loop_exit
    _

</llo_original>
